<compile_context>
chip_gen: v7x
topology: tpu7x:2x2x1
jax: 0.10.0
libtpu: 0.0.40
codegen_flags: <defaults>
</compile_context>

<pallas_src>
import functools

import jax
import jax.numpy as jnp
from jax.experimental import pallas as pl
from jax.experimental.pallas import tpu as pltpu


# ----------------------------------------------------------------------------
# Fused Pallas GEMM kernels (bf16 operands, f32 accumulate + epilogue)
# ----------------------------------------------------------------------------
def _mm_relu_kernel(x_ref, w_ref, b_ref, o_ref, *, alpha):
    y = jnp.dot(x_ref[...], w_ref[...], preferred_element_type=jnp.float32)
    y = jnp.maximum(y + b_ref[...], 0.0)
    if alpha != 1.0:                      # static: folds the "/100" layers
        y = y * alpha
    o_ref[...] = y.astype(o_ref.dtype)


def _mm_relu_bn_kernel(x_ref, w_ref, b_ref, s_ref, t_ref, o_ref):
    y = jnp.dot(x_ref[...], w_ref[...], preferred_element_type=jnp.float32)
    y = jnp.maximum(y + b_ref[...], 0.0)
    o_ref[...] = (y * s_ref[...] + t_ref[...]).astype(o_ref.dtype)


_BM_MAX = 512   # M-tile: multiple of 8, keeps per-block VMEM tiny even on v7x


def fused_matmul_relu(x, w, b, scale=None, shift=None, alpha=1.0,
                      out_dtype=jnp.bfloat16):
    """out = BN(relu(x @ w + b) * alpha) with a single M-tiled Pallas call."""
    M, K = x.shape
    K2, N = w.shape
    assert K == K2
    x = x.astype(jnp.bfloat16)            # no-op when already bf16
    w = w.astype(jnp.bfloat16)
    b = b.reshape(1, N).astype(jnp.float32)

    # Single full-dim block for small M (always legal), otherwise 512-row tiles
    # (divisible by 8; partial last block handled by Pallas).
    bm = M if M <= _BM_MAX else _BM_MAX
    grid_m = pl.cdiv(M, bm)

    x_spec = pl.BlockSpec((bm, K), lambda i: (i, 0))
    w_spec = pl.BlockSpec((K, N), lambda i: (0, 0))
    row_spec = pl.BlockSpec((1, N), lambda i: (0, 0))
    out_spec = pl.BlockSpec((bm, N), lambda i: (i, 0))

    out_bytes = M * N * jnp.dtype(out_dtype).itemsize
    cost = pl.CostEstimate(
        flops=2 * M * K * N,
        transcendentals=0,
        bytes_accessed=int(2 * (M * K + K * N) + 12 * N + out_bytes),
    )

    if scale is not None:
        if alpha != 1.0:                  # fold alpha into scale (never hit)
            scale = scale * alpha
        kernel = _mm_relu_bn_kernel
        operands = (x, w, b,
                    scale.reshape(1, N).astype(jnp.float32),
                    shift.reshape(1, N).astype(jnp.float32))
        in_specs = [x_spec, w_spec, row_spec, row_spec, row_spec]
    else:
        kernel = functools.partial(_mm_relu_kernel, alpha=float(alpha))
        operands = (x, w, b)
        in_specs = [x_spec, w_spec, row_spec]

    return pl.pallas_call(
        kernel,
        out_shape=jax.ShapeDtypeStruct((M, N), out_dtype),
        grid=(grid_m,),
        in_specs=in_specs,
        out_specs=out_spec,
        compiler_params=pltpu.CompilerParams(
            dimension_semantics=("parallel",),
            vmem_limit_bytes=32 * 1024 * 1024,
        ),
        cost_estimate=cost,
    )(*operands)


# ----------------------------------------------------------------------------
# Conv / pool glue (patch extraction, padding, reshape) in plain JAX (bf16)
# ----------------------------------------------------------------------------
def _im2col(x, kh, kw, dh, dw):
    # TODO(synk): fuse im2col into the Pallas kernel (tap-loop with pl.ds reads)
    # to avoid materializing the kh*kw-expanded patches in HBM.
    N, H, W, C = x.shape
    Ho = H - (kh - 1) * dh
    Wo = W - (kw - 1) * dw
    taps = []
    for i in range(kh):
        for j in range(kw):
            taps.append(x[:, i * dh:i * dh + Ho, j * dw:j * dw + Wo, :])
    patches = jnp.stack(taps, axis=3)               # (N, Ho, Wo, kh*kw, C)
    return patches.reshape(N * Ho * Wo, kh * kw * C), (N, Ho, Wo)


def conv2d_fused(x_nhwc, layer, kh, kw, dilation=(1, 1), padding="valid",
                 alpha=1.0):
    """ReLU conv (+ optional /100 and folded eval BatchNorm) via Pallas GEMM."""
    dh, dw = dilation
    if padding == "same":
        # PyTorch 'same': floor pad on the low side, ceil on the high side.
        th, tw = dh * (kh - 1), dw * (kw - 1)
        x_nhwc = jnp.pad(
            x_nhwc,
            ((0, 0), (th // 2, th - th // 2), (tw // 2, tw - tw // 2), (0, 0)))
    patches, (N, Ho, Wo) = _im2col(x_nhwc, kh, kw, dh, dw)
    y = fused_matmul_relu(patches, layer["w"], layer["b"],
                          scale=layer.get("scale"), shift=layer.get("shift"),
                          alpha=alpha)
    Cout = layer["w"].shape[1]
    return y.reshape(N, Ho, Wo, Cout)


def max_pool_2x2(x_nhwc):
    N, H, W, C = x_nhwc.shape
    return x_nhwc.reshape(N, H // 2, 2, W // 2, 2, C).max(axis=(2, 4))


def _flatten_nchw(x_nhwc):
    # matches torch .reshape on an NCHW tensor
    n = x_nhwc.shape[0]
    return jnp.transpose(x_nhwc, (0, 3, 1, 2)).reshape(n, -1)


# ----------------------------------------------------------------------------
# GEDDnet configuration (scaled-down, structure-preserving) and parameters
# ----------------------------------------------------------------------------
RF = [[2, 2], [3, 3], [5, 5], [11, 11]]       # face dilations
R = [[2, 2], [3, 3], [4, 5], [5, 11]]         # eye dilations
NUM_FACE = [8, 16, 8, 8, 16, 32, 16]
NUM_EYE = [8, 16, 8, 8, 16, 32]
NUM_COMB1 = 32
FACE_HW = (24, 24)                            # -> 6x6 feature map before FC
EYE_HW = (16, 24)                             # -> 2x6 feature map before FC
NUM_SUBJ = 1
USE_PBIAS = False


def init_params(key):
    # Synthetic weights (VGG16 .npy loading is replaced with deterministic init).
    keys = iter(jax.random.split(key, 256))

    def nrm(shape, scale=0.1):
        return scale * jax.random.normal(next(keys), shape, dtype=jnp.float32)

    def conv(cin, cout, kh=3, kw=3):
        return {"w": nrm((cout, cin, kh, kw)), "b": nrm((cout,), 0.01)}

    def lin(fin, fout):
        return {"w": nrm((fin, fout), 0.05), "b": nrm((fout,), 0.01)}

    def bn(c):
        gamma = 1.0 + nrm((c,), 0.1)
        beta = nrm((c,), 0.1)
        mean = nrm((c,), 0.1)
        var = 0.5 + jax.random.uniform(next(keys), (c,), dtype=jnp.float32)
        return (gamma, beta, mean, var)

    nf, ne = NUM_FACE, NUM_EYE
    fh = (FACE_HW[0] - 4) // 2 - 4
    fw = (FACE_HW[1] - 4) // 2 - 4
    eh = (EYE_HW[0] - 4) // 2 - 4
    ew = (EYE_HW[1] - 4) // 2 - 4

    return {
        # face trunk
        "f11": conv(3, nf[0]), "f12": conv(nf[0], nf[0]),
        "f21": conv(nf[0], nf[1]), "f22": conv(nf[1], nf[1]),
        "f23": conv(nf[1], nf[2], 1, 1), "f23_bn": bn(nf[2]),
        "f31": conv(nf[2], nf[3]), "f31_bn": bn(nf[3]),
        "f32": conv(nf[3], nf[3]), "f32_bn": bn(nf[3]),
        "f41": conv(nf[3], nf[4]), "f41_bn": bn(nf[4]),
        "f42": conv(nf[4], nf[4]), "f42_bn": bn(nf[4]),
        "face_fc1": lin(fh * fw * nf[4], nf[5]),
        "face_fc2": lin(nf[5], nf[6]),
        # shared eye trunk
        "e11": conv(3, ne[0]), "e12": conv(ne[0], ne[0]),
        "e21": conv(ne[0], ne[1]), "e22": conv(ne[1], ne[1]),
        "e23": conv(ne[1], ne[2], 1, 1), "e23_bn": bn(ne[2]),
        "e31": conv(ne[2], ne[3]), "e31_bn": bn(ne[3]),
        "e32": conv(ne[3], ne[3]), "e32_bn": bn(ne[3]),
        "e41": conv(ne[3], ne[4]), "e41_bn": bn(ne[4]),
        "e42": conv(ne[4], ne[4], 2, 2), "e42_bn": bn(ne[4]),
        "eyel_fc1": lin(eh * ew * ne[4], ne[5]),
        "eyer_fc1": lin(eh * ew * ne[4], ne[5]),
        # head
        "comb_fc1": lin(nf[6] + 2 * ne[5], NUM_COMB1),
        "comb_fc2": lin(NUM_COMB1, 2),
        "bias_w_fc": jax.random.uniform(next(keys), (NUM_SUBJ, 2),
                                        dtype=jnp.float32),
    }


# ----------------------------------------------------------------------------
# One-time (outside jit) conversion to GEMM-ready kernel parameters:
#   conv weight (O,I,kh,kw) -> im2col matrix (kh*kw*I, O) in bf16
#   BatchNorm (eval)        -> per-channel scale/shift rows in f32
#   eyel_fc1 / eyer_fc1     -> single fused (K, 2*Ne) weight
# ----------------------------------------------------------------------------
def _conv_gemm(w_oihw, b):
    cout, cin, kh, kw = w_oihw.shape
    wm = jnp.transpose(w_oihw, (2, 3, 1, 0)).reshape(kh * kw * cin, cout)
    return wm.astype(jnp.bfloat16), b.reshape(1, cout).astype(jnp.float32)


def _bn_affine(bn):
    gamma, beta, mean, var = bn
    scale = gamma / jnp.sqrt(var + 1e-5)
    shift = beta - mean * scale
    return (scale.reshape(1, -1).astype(jnp.float32),
            shift.reshape(1, -1).astype(jnp.float32))


def prepare_params(raw):
    p = {}
    conv_names = ["f11", "f12", "f21", "f22", "f23", "f31", "f32", "f41", "f42",
                  "e11", "e12", "e21", "e22", "e23", "e31", "e32", "e41", "e42"]
    for name in conv_names:
        w, b = _conv_gemm(raw[name]["w"], raw[name]["b"])
        entry = {"w": w, "b": b}
        bn_key = name + "_bn"
        if bn_key in raw:
            s, t = _bn_affine(raw[bn_key])
            entry["scale"], entry["shift"] = s, t
        p[name] = entry
    for name in ["face_fc1", "face_fc2", "comb_fc1", "comb_fc2"]:
        p[name] = {"w": raw[name]["w"].astype(jnp.bfloat16),
                   "b": raw[name]["b"].reshape(1, -1).astype(jnp.float32)}
    # fuse the two eye FC heads along the output dim
    p["eye_fc"] = {
        "w": jnp.concatenate([raw["eyel_fc1"]["w"], raw["eyer_fc1"]["w"]],
                             axis=1).astype(jnp.bfloat16),
        "b": jnp.concatenate([raw["eyel_fc1"]["b"], raw["eyer_fc1"]["b"]]
                             ).reshape(1, -1).astype(jnp.float32),
    }
    p["bias_w_fc"] = raw["bias_w_fc"]
    return p


# ----------------------------------------------------------------------------
# Forward pass
# ----------------------------------------------------------------------------
def _face_branch(p, x):
    x = conv2d_fused(x, p["f11"], 3, 3)
    x = conv2d_fused(x, p["f12"], 3, 3)
    x = max_pool_2x2(x)
    x = conv2d_fused(x, p["f21"], 3, 3)
    x = conv2d_fused(x, p["f22"], 3, 3, alpha=0.01)          # relu(.)/100
    x = conv2d_fused(x, p["f23"], 1, 1)                       # +BN
    x = conv2d_fused(x, p["f31"], 3, 3, dilation=tuple(RF[0]), padding="same")
    x = conv2d_fused(x, p["f32"], 3, 3, dilation=tuple(RF[1]), padding="same")
    x = conv2d_fused(x, p["f41"], 3, 3, dilation=tuple(RF[2]), padding="same")
    x = conv2d_fused(x, p["f42"], 3, 3, dilation=tuple(RF[3]), padding="same")
    x = fused_matmul_relu(_flatten_nchw(x), p["face_fc1"]["w"], p["face_fc1"]["b"])
    # dropout: eval mode -> identity
    x = fused_matmul_relu(x, p["face_fc2"]["w"], p["face_fc2"]["b"])
    return x


def _eye_trunk(p, x):
    x = conv2d_fused(x, p["e11"], 3, 3)
    x = conv2d_fused(x, p["e12"], 3, 3)
    x = max_pool_2x2(x)
    x = conv2d_fused(x, p["e21"], 3, 3)
    x = conv2d_fused(x, p["e22"], 3, 3, alpha=0.01)           # relu(.)/100
    x = conv2d_fused(x, p["e23"], 1, 1)                       # +BN
    x = conv2d_fused(x, p["e31"], 3, 3, dilation=tuple(R[0]), padding="same")
    x = conv2d_fused(x, p["e32"], 3, 3, dilation=tuple(R[1]), padding="same")
    x = conv2d_fused(x, p["e41"], 3, 3, dilation=tuple(R[2]), padding="same")
    x = conv2d_fused(x, p["e42"], 2, 2, dilation=tuple(R[3]), padding="same")
    return _flatten_nchw(x)


def geddnet_forward(params, x_face, x_leye, x_reye, subj_id):
    B = x_leye.shape[0]
    ne5 = NUM_EYE[5]

    # NCHW (PyTorch) -> NHWC bf16 (internal)
    xf = jnp.transpose(x_face, (0, 2, 3, 1)).astype(jnp.bfloat16)
    xe = jnp.concatenate([x_leye, x_reye], axis=0)            # shared eye trunk
    xe = jnp.transpose(xe, (0, 2, 3, 1)).astype(jnp.bfloat16)

    xf = _face_branch(params, xf)

    eye_feat = _eye_trunk(params, xe)                         # (2B, K_eye)
    y = fused_matmul_relu(eye_feat, params["eye_fc"]["w"], params["eye_fc"]["b"])
    xl = y[:B, :ne5]                                          # eyel_fc1
    xr = y[B:, ne5:]                                          # eyer_fc1

    xc = jnp.concatenate([xf, xl, xr], axis=1)
    # dropout: eval mode -> identity
    xc = fused_matmul_relu(xc, params["comb_fc1"]["w"], params["comb_fc1"]["b"])
    t_hat = fused_matmul_relu(xc, params["comb_fc2"]["w"], params["comb_fc2"]["b"],
                              out_dtype=jnp.float32)
    g_hat = t_hat
    if USE_PBIAS:
        g_hat = g_hat + subj_id @ params["bias_w_fc"]
    return g_hat, t_hat
    # TODO(synk): train-mode Dropout / BatchNorm batch statistics are not
    # reproduced; forward is implemented in eval-mode semantics.


# ----------------------------------------------------------------------------
if __name__ == "__main__":
    key = jax.random.PRNGKey(0)
    k_p, k_f, k_l, k_r = jax.random.split(key, 4)

    # One-time parameter preparation OUTSIDE the jitted forward (no per-call
    # weight padding / transposition inside the graph).
    params = prepare_params(init_params(k_p))

    batch = 2
    x_face = jax.random.normal(k_f, (batch, 3, FACE_HW[0], FACE_HW[1]), jnp.float32)
    x_leye = jax.random.normal(k_l, (batch, 3, EYE_HW[0], EYE_HW[1]), jnp.float32)
    x_reye = jax.random.normal(k_r, (batch, 3, EYE_HW[0], EYE_HW[1]), jnp.float32)
    subj_id = jnp.ones((batch, NUM_SUBJ), jnp.float32)

    fwd = jax.jit(geddnet_forward)
    g_hat, t_hat = fwd(params, x_face, x_leye, x_reye, subj_id)
    jax.block_until_ready((g_hat, t_hat))

    assert g_hat.shape == (batch, 2) and t_hat.shape == (batch, 2)
    assert bool(jnp.isfinite(g_hat).all()) and bool(jnp.isfinite(t_hat).all())
    print("KERNEL_OK")
</pallas_src>

<mosaic_0001>
module attributes {stable_mosaic.version = 11 : i64} {
  func.func @_mm_relu_kernel(%arg0: i32, %arg1: memref<512x27xbf16, #tpu.memory_space<vmem>>, %arg2: memref<27x8xbf16, #tpu.memory_space<vmem>>, %arg3: memref<1x8xf32, #tpu.memory_space<vmem>>, %arg4: memref<512x8xbf16, #tpu.memory_space<vmem>>) attributes {dimension_semantics = [#tpu.dimension_semantics<parallel>], iteration_bounds = array<i64: 2>, scalar_prefetch = 0 : i64, scratch_operands = 0 : i64, tpu.core_type = #tpu.core_type<tc>, window_params = [{transform_indices = @transform_0, window_bounds = array<i64: 512, 27>}, {pipeline_mode = #tpu.pipeline_mode<synchronous>, transform_indices = @transform_1, window_bounds = array<i64: 27, 8>}, {pipeline_mode = #tpu.pipeline_mode<synchronous>, transform_indices = @transform_2, window_bounds = array<i64: 1, 8>}, {transform_indices = @transform_3, window_bounds = array<i64: 512, 8>}]} {
    %c0 = arith.constant 0 : index
    %c0_0 = arith.constant 0 : index
    %0 = vector.load %arg1[%c0, %c0_0] : memref<512x27xbf16, #tpu.memory_space<vmem>>, vector<512x27xbf16>
    %c0_1 = arith.constant 0 : index
    %c0_2 = arith.constant 0 : index
    %1 = vector.load %arg2[%c0_1, %c0_2] : memref<27x8xbf16, #tpu.memory_space<vmem>>, vector<27x8xbf16>
    %cst = arith.constant dense<0.000000e+00> : vector<512x8xf32>
    %2 = tpu.matmul %0, %1, %cst {dimension_numbers = #tpu.dot_dimension_numbers<[1], [0], [0], [1], [0, 0, 1, 1], [], []>} : vector<512x27xbf16>, vector<27x8xbf16>, vector<512x8xf32> -> vector<512x8xf32>
    %c0_3 = arith.constant 0 : index
    %c0_4 = arith.constant 0 : index
    %3 = vector.load %arg3[%c0_3, %c0_4] : memref<1x8xf32, #tpu.memory_space<vmem>>, vector<1x8xf32>
    %4 = vector.broadcast %3 : vector<1x8xf32> to vector<512x8xf32>
    %5 = arith.addf %2, %4 : vector<512x8xf32>
    %cst_5 = arith.constant 0.000000e+00 : f32
    %6 = vector.broadcast %cst_5 : f32 to vector<512x8xf32>
    %7 = arith.maximumf %5, %6 : vector<512x8xf32>
    %8 = arith.truncf %7 : vector<512x8xf32> to vector<512x8xbf16>
    %c0_6 = arith.constant 0 : index
    %c0_7 = arith.constant 0 : index
    %9 = vector.load %arg4[%c0_6, %c0_7] : memref<512x8xbf16, #tpu.memory_space<vmem>>, vector<512x8xbf16>
    tpu.vector_store %arg4[%c0_6, %c0_7], %8 {strides = array<i32>} : memref<512x8xbf16, #tpu.memory_space<vmem>>, vector<512x8xbf16>,
    return
  }
  func.func @transform_0(%arg0: i32) -> (i32, i32) {
    %c0_i32 = arith.constant 0 : i32
    %c0_i32_0 = arith.constant 0 : i32
    return %arg0, %c0_i32 : i32, i32
  }
  func.func @transform_1(%arg0: i32) -> (i32, i32) {
    %c0_i32 = arith.constant 0 : i32
    %c0_i32_0 = arith.constant 0 : i32
    %c0_i32_1 = arith.constant 0 : i32
    return %c0_i32, %c0_i32_0 : i32, i32
  }
  func.func @transform_2(%arg0: i32) -> (i32, i32) {
    %c0_i32 = arith.constant 0 : i32
    %c0_i32_0 = arith.constant 0 : i32
    %c0_i32_1 = arith.constant 0 : i32
    return %c0_i32, %c0_i32_0 : i32, i32
  }
  func.func @transform_3(%arg0: i32) -> (i32, i32) {
    %c0_i32 = arith.constant 0 : i32
    %c0_i32_0 = arith.constant 0 : i32
    return %arg0, %c0_i32 : i32, i32
  }
}

module attributes {stable_mosaic.version = 11 : i64} {
  func.func @_mm_relu_kernel(%arg0: i32, %arg1: memref<512x72xbf16, #tpu.memory_space<vmem>>, %arg2: memref<72x8xbf16, #tpu.memory_space<vmem>>, %arg3: memref<1x8xf32, #tpu.memory_space<vmem>>, %arg4: memref<512x8xbf16, #tpu.memory_space<vmem>>) attributes {dimension_semantics = [#tpu.dimension_semantics<parallel>], iteration_bounds = array<i64: 2>, scalar_prefetch = 0 : i64, scratch_operands = 0 : i64, tpu.core_type = #tpu.core_type<tc>, window_params = [{transform_indices = @transform_0, window_bounds = array<i64: 512, 72>}, {pipeline_mode = #tpu.pipeline_mode<synchronous>, transform_indices = @transform_1, window_bounds = array<i64: 72, 8>}, {pipeline_mode = #tpu.pipeline_mode<synchronous>, transform_indices = @transform_2, window_bounds = array<i64: 1, 8>}, {transform_indices = @transform_3, window_bounds = array<i64: 512, 8>}]} {
    %c0 = arith.constant 0 : index
    %c0_0 = arith.constant 0 : index
    %0 = vector.load %arg1[%c0, %c0_0] : memref<512x72xbf16, #tpu.memory_space<vmem>>, vector<512x72xbf16>
    %c0_1 = arith.constant 0 : index
    %c0_2 = arith.constant 0 : index
    %1 = vector.load %arg2[%c0_1, %c0_2] : memref<72x8xbf16, #tpu.memory_space<vmem>>, vector<72x8xbf16>
    %cst = arith.constant dense<0.000000e+00> : vector<512x8xf32>
    %2 = tpu.matmul %0, %1, %cst {dimension_numbers = #tpu.dot_dimension_numbers<[1], [0], [0], [1], [0, 0, 1, 1], [], []>} : vector<512x72xbf16>, vector<72x8xbf16>, vector<512x8xf32> -> vector<512x8xf32>
    %c0_3 = arith.constant 0 : index
    %c0_4 = arith.constant 0 : index
    %3 = vector.load %arg3[%c0_3, %c0_4] : memref<1x8xf32, #tpu.memory_space<vmem>>, vector<1x8xf32>
    %4 = vector.broadcast %3 : vector<1x8xf32> to vector<512x8xf32>
    %5 = arith.addf %2, %4 : vector<512x8xf32>
    %cst_5 = arith.constant 0.000000e+00 : f32
    %6 = vector.broadcast %cst_5 : f32 to vector<512x8xf32>
    %7 = arith.maximumf %5, %6 : vector<512x8xf32>
    %8 = arith.truncf %7 : vector<512x8xf32> to vector<512x8xbf16>
    %c0_6 = arith.constant 0 : index
    %c0_7 = arith.constant 0 : index
    %9 = vector.load %arg4[%c0_6, %c0_7] : memref<512x8xbf16, #tpu.memory_space<vmem>>, vector<512x8xbf16>
    tpu.vector_store %arg4[%c0_6, %c0_7], %8 {strides = array<i32>} : memref<512x8xbf16, #tpu.memory_space<vmem>>, vector<512x8xbf16>,
    return
  }
  func.func @transform_0(%arg0: i32) -> (i32, i32) {
    %c0_i32 = arith.constant 0 : i32
    %c0_i32_0 = arith.constant 0 : i32
    return %arg0, %c0_i32 : i32, i32
  }
  func.func @transform_1(%arg0: i32) -> (i32, i32) {
    %c0_i32 = arith.constant 0 : i32
    %c0_i32_0 = arith.constant 0 : i32
    %c0_i32_1 = arith.constant 0 : i32
    return %c0_i32, %c0_i32_0 : i32, i32
  }
  func.func @transform_2(%arg0: i32) -> (i32, i32) {
    %c0_i32 = arith.constant 0 : i32
    %c0_i32_0 = arith.constant 0 : i32
    %c0_i32_1 = arith.constant 0 : i32
    return %c0_i32, %c0_i32_0 : i32, i32
  }
  func.func @transform_3(%arg0: i32) -> (i32, i32) {
    %c0_i32 = arith.constant 0 : i32
    %c0_i32_0 = arith.constant 0 : i32
    return %arg0, %c0_i32 : i32, i32
  }
}

module attributes {stable_mosaic.version = 11 : i64} {
  func.func @_mm_relu_kernel(%arg0: i32, %arg1: memref<128x72xbf16, #tpu.memory_space<vmem>>, %arg2: memref<72x16xbf16, #tpu.memory_space<vmem>>, %arg3: memref<1x16xf32, #tpu.memory_space<vmem>>, %arg4: memref<128x16xbf16, #tpu.memory_space<vmem>>) attributes {dimension_semantics = [#tpu.dimension_semantics<parallel>], iteration_bounds = array<i64: 1>, scalar_prefetch = 0 : i64, scratch_operands = 0 : i64, tpu.core_type = #tpu.core_type<tc>, window_params = [{transform_indices = @transform_0, window_bounds = array<i64: 128, 72>}, {pipeline_mode = #tpu.pipeline_mode<synchronous>, transform_indices = @transform_1, window_bounds = array<i64: 72, 16>}, {pipeline_mode = #tpu.pipeline_mode<synchronous>, transform_indices = @transform_2, window_bounds = array<i64: 1, 16>}, {transform_indices = @transform_3, window_bounds = array<i64: 128, 16>}]} {
    %c0 = arith.constant 0 : index
    %c0_0 = arith.constant 0 : index
    %0 = vector.load %arg1[%c0, %c0_0] : memref<128x72xbf16, #tpu.memory_space<vmem>>, vector<128x72xbf16>
    %c0_1 = arith.constant 0 : index
    %c0_2 = arith.constant 0 : index
    %1 = vector.load %arg2[%c0_1, %c0_2] : memref<72x16xbf16, #tpu.memory_space<vmem>>, vector<72x16xbf16>
    %cst = arith.constant dense<0.000000e+00> : vector<128x16xf32>
    %2 = tpu.matmul %0, %1, %cst {dimension_numbers = #tpu.dot_dimension_numbers<[1], [0], [0], [1], [0, 0, 1, 1], [], []>} : vector<128x72xbf16>, vector<72x16xbf16>, vector<128x16xf32> -> vector<128x16xf32>
    %c0_3 = arith.constant 0 : index
    %c0_4 = arith.constant 0 : index
    %3 = vector.load %arg3[%c0_3, %c0_4] : memref<1x16xf32, #tpu.memory_space<vmem>>, vector<1x16xf32>
    %4 = vector.broadcast %3 : vector<1x16xf32> to vector<128x16xf32>
    %5 = arith.addf %2, %4 : vector<128x16xf32>
    %cst_5 = arith.constant 0.000000e+00 : f32
    %6 = vector.broadcast %cst_5 : f32 to vector<128x16xf32>
    %7 = arith.maximumf %5, %6 : vector<128x16xf32>
    %8 = arith.truncf %7 : vector<128x16xf32> to vector<128x16xbf16>
    %c0_6 = arith.constant 0 : index
    %c0_7 = arith.constant 0 : index
    %9 = vector.load %arg4[%c0_6, %c0_7] : memref<128x16xbf16, #tpu.memory_space<vmem>>, vector<128x16xbf16>
    tpu.vector_store %arg4[%c0_6, %c0_7], %8 {strides = array<i32>} : memref<128x16xbf16, #tpu.memory_space<vmem>>, vector<128x16xbf16>,
    return
  }
  func.func @transform_0(%arg0: i32) -> (i32, i32) {
    %c0_i32 = arith.constant 0 : i32
    %c0_i32_0 = arith.constant 0 : i32
    return %arg0, %c0_i32 : i32, i32
  }
  func.func @transform_1(%arg0: i32) -> (i32, i32) {
    %c0_i32 = arith.constant 0 : i32
    %c0_i32_0 = arith.constant 0 : i32
    %c0_i32_1 = arith.constant 0 : i32
    return %c0_i32, %c0_i32_0 : i32, i32
  }
  func.func @transform_2(%arg0: i32) -> (i32, i32) {
    %c0_i32 = arith.constant 0 : i32
    %c0_i32_0 = arith.constant 0 : i32
    %c0_i32_1 = arith.constant 0 : i32
    return %c0_i32, %c0_i32_0 : i32, i32
  }
  func.func @transform_3(%arg0: i32) -> (i32, i32) {
    %c0_i32 = arith.constant 0 : i32
    %c0_i32_0 = arith.constant 0 : i32
    return %arg0, %c0_i32 : i32, i32
  }
}

module attributes {stable_mosaic.version = 11 : i64} {
  func.func @_mm_relu_kernel(%arg0: i32, %arg1: memref<72x144xbf16, #tpu.memory_space<vmem>>, %arg2: memref<144x16xbf16, #tpu.memory_space<vmem>>, %arg3: memref<1x16xf32, #tpu.memory_space<vmem>>, %arg4: memref<72x16xbf16, #tpu.memory_space<vmem>>) attributes {dimension_semantics = [#tpu.dimension_semantics<parallel>], iteration_bounds = array<i64: 1>, scalar_prefetch = 0 : i64, scratch_operands = 0 : i64, tpu.core_type = #tpu.core_type<tc>, window_params = [{transform_indices = @transform_0, window_bounds = array<i64: 72, 144>}, {pipeline_mode = #tpu.pipeline_mode<synchronous>, transform_indices = @transform_1, window_bounds = array<i64: 144, 16>}, {pipeline_mode = #tpu.pipeline_mode<synchronous>, transform_indices = @transform_2, window_bounds = array<i64: 1, 16>}, {transform_indices = @transform_3, window_bounds = array<i64: 72, 16>}]} {
    %c0 = arith.constant 0 : index
    %c0_0 = arith.constant 0 : index
    %0 = vector.load %arg1[%c0, %c0_0] : memref<72x144xbf16, #tpu.memory_space<vmem>>, vector<72x144xbf16>
    %c0_1 = arith.constant 0 : index
    %c0_2 = arith.constant 0 : index
    %1 = vector.load %arg2[%c0_1, %c0_2] : memref<144x16xbf16, #tpu.memory_space<vmem>>, vector<144x16xbf16>
    %cst = arith.constant dense<0.000000e+00> : vector<72x16xf32>
    %2 = tpu.matmul %0, %1, %cst {dimension_numbers = #tpu.dot_dimension_numbers<[1], [0], [0], [1], [0, 0, 1, 1], [], []>} : vector<72x144xbf16>, vector<144x16xbf16>, vector<72x16xf32> -> vector<72x16xf32>
    %c0_3 = arith.constant 0 : index
    %c0_4 = arith.constant 0 : index
    %3 = vector.load %arg3[%c0_3, %c0_4] : memref<1x16xf32, #tpu.memory_space<vmem>>, vector<1x16xf32>
    %4 = vector.broadcast %3 : vector<1x16xf32> to vector<72x16xf32>
    %5 = arith.addf %2, %4 : vector<72x16xf32>
    %cst_5 = arith.constant 0.000000e+00 : f32
    %6 = vector.broadcast %cst_5 : f32 to vector<72x16xf32>
    %7 = arith.maximumf %5, %6 : vector<72x16xf32>
    %cst_6 = arith.constant 0.00999999977 : f32
    %8 = vector.broadcast %cst_6 : f32 to vector<72x16xf32>
    %9 = arith.mulf %7, %8 : vector<72x16xf32>
    %10 = arith.truncf %9 : vector<72x16xf32> to vector<72x16xbf16>
    %c0_7 = arith.constant 0 : index
    %c0_8 = arith.constant 0 : index
    %11 = vector.load %arg4[%c0_7, %c0_8] : memref<72x16xbf16, #tpu.memory_space<vmem>>, vector<72x16xbf16>
    tpu.vector_store %arg4[%c0_7, %c0_8], %10 {strides = array<i32>} : memref<72x16xbf16, #tpu.memory_space<vmem>>, vector<72x16xbf16>,
    return
  }
  func.func @transform_0(%arg0: i32) -> (i32, i32) {
    %c0_i32 = arith.constant 0 : i32
    %c0_i32_0 = arith.constant 0 : i32
    return %arg0, %c0_i32 : i32, i32
  }
  func.func @transform_1(%arg0: i32) -> (i32, i32) {
    %c0_i32 = arith.constant 0 : i32
    %c0_i32_0 = arith.constant 0 : i32
    %c0_i32_1 = arith.constant 0 : i32
    return %c0_i32, %c0_i32_0 : i32, i32
  }
  func.func @transform_2(%arg0: i32) -> (i32, i32) {
    %c0_i32 = arith.constant 0 : i32
    %c0_i32_0 = arith.constant 0 : i32
    %c0_i32_1 = arith.constant 0 : i32
    return %c0_i32, %c0_i32_0 : i32, i32
  }
  func.func @transform_3(%arg0: i32) -> (i32, i32) {
    %c0_i32 = arith.constant 0 : i32
    %c0_i32_0 = arith.constant 0 : i32
    return %arg0, %c0_i32 : i32, i32
  }
}

module attributes {stable_mosaic.version = 11 : i64} {
  func.func @_mm_relu_bn_kernel(%arg0: i32, %arg1: memref<72x16xbf16, #tpu.memory_space<vmem>>, %arg2: memref<16x8xbf16, #tpu.memory_space<vmem>>, %arg3: memref<1x8xf32, #tpu.memory_space<vmem>>, %arg4: memref<1x8xf32, #tpu.memory_space<vmem>>, %arg5: memref<1x8xf32, #tpu.memory_space<vmem>>, %arg6: memref<72x8xbf16, #tpu.memory_space<vmem>>) attributes {dimension_semantics = [#tpu.dimension_semantics<parallel>], iteration_bounds = array<i64: 1>, scalar_prefetch = 0 : i64, scratch_operands = 0 : i64, tpu.core_type = #tpu.core_type<tc>, window_params = [{transform_indices = @transform_0, window_bounds = array<i64: 72, 16>}, {pipeline_mode = #tpu.pipeline_mode<synchronous>, transform_indices = @transform_1, window_bounds = array<i64: 16, 8>}, {pipeline_mode = #tpu.pipeline_mode<synchronous>, transform_indices = @transform_2, window_bounds = array<i64: 1, 8>}, {pipeline_mode = #tpu.pipeline_mode<synchronous>, transform_indices = @transform_3, window_bounds = array<i64: 1, 8>}, {pipeline_mode = #tpu.pipeline_mode<synchronous>, transform_indices = @transform_4, window_bounds = array<i64: 1, 8>}, {transform_indices = @transform_5, window_bounds = array<i64: 72, 8>}]} {
    %c0 = arith.constant 0 : index
    %c0_0 = arith.constant 0 : index
    %0 = vector.load %arg1[%c0, %c0_0] : memref<72x16xbf16, #tpu.memory_space<vmem>>, vector<72x16xbf16>
    %c0_1 = arith.constant 0 : index
    %c0_2 = arith.constant 0 : index
    %1 = vector.load %arg2[%c0_1, %c0_2] : memref<16x8xbf16, #tpu.memory_space<vmem>>, vector<16x8xbf16>
    %cst = arith.constant dense<0.000000e+00> : vector<72x8xf32>
    %2 = tpu.matmul %0, %1, %cst {dimension_numbers = #tpu.dot_dimension_numbers<[1], [0], [0], [1], [0, 0, 1, 1], [], []>} : vector<72x16xbf16>, vector<16x8xbf16>, vector<72x8xf32> -> vector<72x8xf32>
    %c0_3 = arith.constant 0 : index
    %c0_4 = arith.constant 0 : index
    %3 = vector.load %arg3[%c0_3, %c0_4] : memref<1x8xf32, #tpu.memory_space<vmem>>, vector<1x8xf32>
    %4 = vector.broadcast %3 : vector<1x8xf32> to vector<72x8xf32>
    %5 = arith.addf %2, %4 : vector<72x8xf32>
    %cst_5 = arith.constant 0.000000e+00 : f32
    %6 = vector.broadcast %cst_5 : f32 to vector<72x8xf32>
    %7 = arith.maximumf %5, %6 : vector<72x8xf32>
    %c0_6 = arith.constant 0 : index
    %c0_7 = arith.constant 0 : index
    %8 = vector.load %arg4[%c0_6, %c0_7] : memref<1x8xf32, #tpu.memory_space<vmem>>, vector<1x8xf32>
    %9 = vector.broadcast %8 : vector<1x8xf32> to vector<72x8xf32>
    %10 = arith.mulf %7, %9 : vector<72x8xf32>
    %c0_8 = arith.constant 0 : index
    %c0_9 = arith.constant 0 : index
    %11 = vector.load %arg5[%c0_8, %c0_9] : memref<1x8xf32, #tpu.memory_space<vmem>>, vector<1x8xf32>
    %12 = vector.broadcast %11 : vector<1x8xf32> to vector<72x8xf32>
    %13 = arith.addf %10, %12 : vector<72x8xf32>
    %14 = arith.truncf %13 : vector<72x8xf32> to vector<72x8xbf16>
    %c0_10 = arith.constant 0 : index
    %c0_11 = arith.constant 0 : index
    %15 = vector.load %arg6[%c0_10, %c0_11] : memref<72x8xbf16, #tpu.memory_space<vmem>>, vector<72x8xbf16>
    tpu.vector_store %arg6[%c0_10, %c0_11], %14 {strides = array<i32>} : memref<72x8xbf16, #tpu.memory_space<vmem>>, vector<72x8xbf16>,
    return
  }
  func.func @transform_0(%arg0: i32) -> (i32, i32) {
    %c0_i32 = arith.constant 0 : i32
    %c0_i32_0 = arith.constant 0 : i32
    return %arg0, %c0_i32 : i32, i32
  }
  func.func @transform_1(%arg0: i32) -> (i32, i32) {
    %c0_i32 = arith.constant 0 : i32
    %c0_i32_0 = arith.constant 0 : i32
    %c0_i32_1 = arith.constant 0 : i32
    return %c0_i32, %c0_i32_0 : i32, i32
  }
  func.func @transform_2(%arg0: i32) -> (i32, i32) {
    %c0_i32 = arith.constant 0 : i32
    %c0_i32_0 = arith.constant 0 : i32
    %c0_i32_1 = arith.constant 0 : i32
    return %c0_i32, %c0_i32_0 : i32, i32
  }
  func.func @transform_3(%arg0: i32) -> (i32, i32) {
    %c0_i32 = arith.constant 0 : i32
    %c0_i32_0 = arith.constant 0 : i32
    %c0_i32_1 = arith.constant 0 : i32
    return %c0_i32, %c0_i32_0 : i32, i32
  }
  func.func @transform_4(%arg0: i32) -> (i32, i32) {
    %c0_i32 = arith.constant 0 : i32
    %c0_i32_0 = arith.constant 0 : i32
    %c0_i32_1 = arith.constant 0 : i32
    return %c0_i32, %c0_i32_0 : i32, i32
  }
  func.func @transform_5(%arg0: i32) -> (i32, i32) {
    %c0_i32 = arith.constant 0 : i32
    %c0_i32_0 = arith.constant 0 : i32
    return %arg0, %c0_i32 : i32, i32
  }
}

module attributes {stable_mosaic.version = 11 : i64} {
  func.func @_mm_relu_bn_kernel(%arg0: i32, %arg1: memref<72x72xbf16, #tpu.memory_space<vmem>>, %arg2: memref<72x8xbf16, #tpu.memory_space<vmem>>, %arg3: memref<1x8xf32, #tpu.memory_space<vmem>>, %arg4: memref<1x8xf32, #tpu.memory_space<vmem>>, %arg5: memref<1x8xf32, #tpu.memory_space<vmem>>, %arg6: memref<72x8xbf16, #tpu.memory_space<vmem>>) attributes {dimension_semantics = [#tpu.dimension_semantics<parallel>], iteration_bounds = array<i64: 1>, scalar_prefetch = 0 : i64, scratch_operands = 0 : i64, tpu.core_type = #tpu.core_type<tc>, window_params = [{transform_indices = @transform_0, window_bounds = array<i64: 72, 72>}, {pipeline_mode = #tpu.pipeline_mode<synchronous>, transform_indices = @transform_1, window_bounds = array<i64: 72, 8>}, {pipeline_mode = #tpu.pipeline_mode<synchronous>, transform_indices = @transform_2, window_bounds = array<i64: 1, 8>}, {pipeline_mode = #tpu.pipeline_mode<synchronous>, transform_indices = @transform_3, window_bounds = array<i64: 1, 8>}, {pipeline_mode = #tpu.pipeline_mode<synchronous>, transform_indices = @transform_4, window_bounds = array<i64: 1, 8>}, {transform_indices = @transform_5, window_bounds = array<i64: 72, 8>}]} {
    %c0 = arith.constant 0 : index
    %c0_0 = arith.constant 0 : index
    %0 = vector.load %arg1[%c0, %c0_0] : memref<72x72xbf16, #tpu.memory_space<vmem>>, vector<72x72xbf16>
    %c0_1 = arith.constant 0 : index
    %c0_2 = arith.constant 0 : index
    %1 = vector.load %arg2[%c0_1, %c0_2] : memref<72x8xbf16, #tpu.memory_space<vmem>>, vector<72x8xbf16>
    %cst = arith.constant dense<0.000000e+00> : vector<72x8xf32>
    %2 = tpu.matmul %0, %1, %cst {dimension_numbers = #tpu.dot_dimension_numbers<[1], [0], [0], [1], [0, 0, 1, 1], [], []>} : vector<72x72xbf16>, vector<72x8xbf16>, vector<72x8xf32> -> vector<72x8xf32>
    %c0_3 = arith.constant 0 : index
    %c0_4 = arith.constant 0 : index
    %3 = vector.load %arg3[%c0_3, %c0_4] : memref<1x8xf32, #tpu.memory_space<vmem>>, vector<1x8xf32>
    %4 = vector.broadcast %3 : vector<1x8xf32> to vector<72x8xf32>
    %5 = arith.addf %2, %4 : vector<72x8xf32>
    %cst_5 = arith.constant 0.000000e+00 : f32
    %6 = vector.broadcast %cst_5 : f32 to vector<72x8xf32>
    %7 = arith.maximumf %5, %6 : vector<72x8xf32>
    %c0_6 = arith.constant 0 : index
    %c0_7 = arith.constant 0 : index
    %8 = vector.load %arg4[%c0_6, %c0_7] : memref<1x8xf32, #tpu.memory_space<vmem>>, vector<1x8xf32>
    %9 = vector.broadcast %8 : vector<1x8xf32> to vector<72x8xf32>
    %10 = arith.mulf %7, %9 : vector<72x8xf32>
    %c0_8 = arith.constant 0 : index
    %c0_9 = arith.constant 0 : index
    %11 = vector.load %arg5[%c0_8, %c0_9] : memref<1x8xf32, #tpu.memory_space<vmem>>, vector<1x8xf32>
    %12 = vector.broadcast %11 : vector<1x8xf32> to vector<72x8xf32>
    %13 = arith.addf %10, %12 : vector<72x8xf32>
    %14 = arith.truncf %13 : vector<72x8xf32> to vector<72x8xbf16>
    %c0_10 = arith.constant 0 : index
    %c0_11 = arith.constant 0 : index
    %15 = vector.load %arg6[%c0_10, %c0_11] : memref<72x8xbf16, #tpu.memory_space<vmem>>, vector<72x8xbf16>
    tpu.vector_store %arg6[%c0_10, %c0_11], %14 {strides = array<i32>} : memref<72x8xbf16, #tpu.memory_space<vmem>>, vector<72x8xbf16>,
    return
  }
  func.func @transform_0(%arg0: i32) -> (i32, i32) {
    %c0_i32 = arith.constant 0 : i32
    %c0_i32_0 = arith.constant 0 : i32
    return %arg0, %c0_i32 : i32, i32
  }
  func.func @transform_1(%arg0: i32) -> (i32, i32) {
    %c0_i32 = arith.constant 0 : i32
    %c0_i32_0 = arith.constant 0 : i32
    %c0_i32_1 = arith.constant 0 : i32
    return %c0_i32, %c0_i32_0 : i32, i32
  }
  func.func @transform_2(%arg0: i32) -> (i32, i32) {
    %c0_i32 = arith.constant 0 : i32
    %c0_i32_0 = arith.constant 0 : i32
    %c0_i32_1 = arith.constant 0 : i32
    return %c0_i32, %c0_i32_0 : i32, i32
  }
  func.func @transform_3(%arg0: i32) -> (i32, i32) {
    %c0_i32 = arith.constant 0 : i32
    %c0_i32_0 = arith.constant 0 : i32
    %c0_i32_1 = arith.constant 0 : i32
    return %c0_i32, %c0_i32_0 : i32, i32
  }
  func.func @transform_4(%arg0: i32) -> (i32, i32) {
    %c0_i32 = arith.constant 0 : i32
    %c0_i32_0 = arith.constant 0 : i32
    %c0_i32_1 = arith.constant 0 : i32
    return %c0_i32, %c0_i32_0 : i32, i32
  }
  func.func @transform_5(%arg0: i32) -> (i32, i32) {
    %c0_i32 = arith.constant 0 : i32
    %c0_i32_0 = arith.constant 0 : i32
    return %arg0, %c0_i32 : i32, i32
  }
}

module attributes {stable_mosaic.version = 11 : i64} {
  func.func @_mm_relu_bn_kernel(%arg0: i32, %arg1: memref<72x72xbf16, #tpu.memory_space<vmem>>, %arg2: memref<72x16xbf16, #tpu.memory_space<vmem>>, %arg3: memref<1x16xf32, #tpu.memory_space<vmem>>, %arg4: memref<1x16xf32, #tpu.memory_space<vmem>>, %arg5: memref<1x16xf32, #tpu.memory_space<vmem>>, %arg6: memref<72x16xbf16, #tpu.memory_space<vmem>>) attributes {dimension_semantics = [#tpu.dimension_semantics<parallel>], iteration_bounds = array<i64: 1>, scalar_prefetch = 0 : i64, scratch_operands = 0 : i64, tpu.core_type = #tpu.core_type<tc>, window_params = [{transform_indices = @transform_0, window_bounds = array<i64: 72, 72>}, {pipeline_mode = #tpu.pipeline_mode<synchronous>, transform_indices = @transform_1, window_bounds = array<i64: 72, 16>}, {pipeline_mode = #tpu.pipeline_mode<synchronous>, transform_indices = @transform_2, window_bounds = array<i64: 1, 16>}, {pipeline_mode = #tpu.pipeline_mode<synchronous>, transform_indices = @transform_3, window_bounds = array<i64: 1, 16>}, {pipeline_mode = #tpu.pipeline_mode<synchronous>, transform_indices = @transform_4, window_bounds = array<i64: 1, 16>}, {transform_indices = @transform_5, window_bounds = array<i64: 72, 16>}]} {
    %c0 = arith.constant 0 : index
    %c0_0 = arith.constant 0 : index
    %0 = vector.load %arg1[%c0, %c0_0] : memref<72x72xbf16, #tpu.memory_space<vmem>>, vector<72x72xbf16>
    %c0_1 = arith.constant 0 : index
    %c0_2 = arith.constant 0 : index
    %1 = vector.load %arg2[%c0_1, %c0_2] : memref<72x16xbf16, #tpu.memory_space<vmem>>, vector<72x16xbf16>
    %cst = arith.constant dense<0.000000e+00> : vector<72x16xf32>
    %2 = tpu.matmul %0, %1, %cst {dimension_numbers = #tpu.dot_dimension_numbers<[1], [0], [0], [1], [0, 0, 1, 1], [], []>} : vector<72x72xbf16>, vector<72x16xbf16>, vector<72x16xf32> -> vector<72x16xf32>
    %c0_3 = arith.constant 0 : index
    %c0_4 = arith.constant 0 : index
    %3 = vector.load %arg3[%c0_3, %c0_4] : memref<1x16xf32, #tpu.memory_space<vmem>>, vector<1x16xf32>
    %4 = vector.broadcast %3 : vector<1x16xf32> to vector<72x16xf32>
    %5 = arith.addf %2, %4 : vector<72x16xf32>
    %cst_5 = arith.constant 0.000000e+00 : f32
    %6 = vector.broadcast %cst_5 : f32 to vector<72x16xf32>
    %7 = arith.maximumf %5, %6 : vector<72x16xf32>
    %c0_6 = arith.constant 0 : index
    %c0_7 = arith.constant 0 : index
    %8 = vector.load %arg4[%c0_6, %c0_7] : memref<1x16xf32, #tpu.memory_space<vmem>>, vector<1x16xf32>
    %9 = vector.broadcast %8 : vector<1x16xf32> to vector<72x16xf32>
    %10 = arith.mulf %7, %9 : vector<72x16xf32>
    %c0_8 = arith.constant 0 : index
    %c0_9 = arith.constant 0 : index
    %11 = vector.load %arg5[%c0_8, %c0_9] : memref<1x16xf32, #tpu.memory_space<vmem>>, vector<1x16xf32>
    %12 = vector.broadcast %11 : vector<1x16xf32> to vector<72x16xf32>
    %13 = arith.addf %10, %12 : vector<72x16xf32>
    %14 = arith.truncf %13 : vector<72x16xf32> to vector<72x16xbf16>
    %c0_10 = arith.constant 0 : index
    %c0_11 = arith.constant 0 : index
    %15 = vector.load %arg6[%c0_10, %c0_11] : memref<72x16xbf16, #tpu.memory_space<vmem>>, vector<72x16xbf16>
    tpu.vector_store %arg6[%c0_10, %c0_11], %14 {strides = array<i32>} : memref<72x16xbf16, #tpu.memory_space<vmem>>, vector<72x16xbf16>,
    return
  }
  func.func @transform_0(%arg0: i32) -> (i32, i32) {
    %c0_i32 = arith.constant 0 : i32
    %c0_i32_0 = arith.constant 0 : i32
    return %arg0, %c0_i32 : i32, i32
  }
  func.func @transform_1(%arg0: i32) -> (i32, i32) {
    %c0_i32 = arith.constant 0 : i32
    %c0_i32_0 = arith.constant 0 : i32
    %c0_i32_1 = arith.constant 0 : i32
    return %c0_i32, %c0_i32_0 : i32, i32
  }
  func.func @transform_2(%arg0: i32) -> (i32, i32) {
    %c0_i32 = arith.constant 0 : i32
    %c0_i32_0 = arith.constant 0 : i32
    %c0_i32_1 = arith.constant 0 : i32
    return %c0_i32, %c0_i32_0 : i32, i32
  }
  func.func @transform_3(%arg0: i32) -> (i32, i32) {
    %c0_i32 = arith.constant 0 : i32
    %c0_i32_0 = arith.constant 0 : i32
    %c0_i32_1 = arith.constant 0 : i32
    return %c0_i32, %c0_i32_0 : i32, i32
  }
  func.func @transform_4(%arg0: i32) -> (i32, i32) {
    %c0_i32 = arith.constant 0 : i32
    %c0_i32_0 = arith.constant 0 : i32
    %c0_i32_1 = arith.constant 0 : i32
    return %c0_i32, %c0_i32_0 : i32, i32
  }
  func.func @transform_5(%arg0: i32) -> (i32, i32) {
    %c0_i32 = arith.constant 0 : i32
    %c0_i32_0 = arith.constant 0 : i32
    return %arg0, %c0_i32 : i32, i32
  }
}

module attributes {stable_mosaic.version = 11 : i64} {
  func.func @_mm_relu_bn_kernel(%arg0: i32, %arg1: memref<72x144xbf16, #tpu.memory_space<vmem>>, %arg2: memref<144x16xbf16, #tpu.memory_space<vmem>>, %arg3: memref<1x16xf32, #tpu.memory_space<vmem>>, %arg4: memref<1x16xf32, #tpu.memory_space<vmem>>, %arg5: memref<1x16xf32, #tpu.memory_space<vmem>>, %arg6: memref<72x16xbf16, #tpu.memory_space<vmem>>) attributes {dimension_semantics = [#tpu.dimension_semantics<parallel>], iteration_bounds = array<i64: 1>, scalar_prefetch = 0 : i64, scratch_operands = 0 : i64, tpu.core_type = #tpu.core_type<tc>, window_params = [{transform_indices = @transform_0, window_bounds = array<i64: 72, 144>}, {pipeline_mode = #tpu.pipeline_mode<synchronous>, transform_indices = @transform_1, window_bounds = array<i64: 144, 16>}, {pipeline_mode = #tpu.pipeline_mode<synchronous>, transform_indices = @transform_2, window_bounds = array<i64: 1, 16>}, {pipeline_mode = #tpu.pipeline_mode<synchronous>, transform_indices = @transform_3, window_bounds = array<i64: 1, 16>}, {pipeline_mode = #tpu.pipeline_mode<synchronous>, transform_indices = @transform_4, window_bounds = array<i64: 1, 16>}, {transform_indices = @transform_5, window_bounds = array<i64: 72, 16>}]} {
    %c0 = arith.constant 0 : index
    %c0_0 = arith.constant 0 : index
    %0 = vector.load %arg1[%c0, %c0_0] : memref<72x144xbf16, #tpu.memory_space<vmem>>, vector<72x144xbf16>
    %c0_1 = arith.constant 0 : index
    %c0_2 = arith.constant 0 : index
    %1 = vector.load %arg2[%c0_1, %c0_2] : memref<144x16xbf16, #tpu.memory_space<vmem>>, vector<144x16xbf16>
    %cst = arith.constant dense<0.000000e+00> : vector<72x16xf32>
    %2 = tpu.matmul %0, %1, %cst {dimension_numbers = #tpu.dot_dimension_numbers<[1], [0], [0], [1], [0, 0, 1, 1], [], []>} : vector<72x144xbf16>, vector<144x16xbf16>, vector<72x16xf32> -> vector<72x16xf32>
    %c0_3 = arith.constant 0 : index
    %c0_4 = arith.constant 0 : index
    %3 = vector.load %arg3[%c0_3, %c0_4] : memref<1x16xf32, #tpu.memory_space<vmem>>, vector<1x16xf32>
    %4 = vector.broadcast %3 : vector<1x16xf32> to vector<72x16xf32>
    %5 = arith.addf %2, %4 : vector<72x16xf32>
    %cst_5 = arith.constant 0.000000e+00 : f32
    %6 = vector.broadcast %cst_5 : f32 to vector<72x16xf32>
    %7 = arith.maximumf %5, %6 : vector<72x16xf32>
    %c0_6 = arith.constant 0 : index
    %c0_7 = arith.constant 0 : index
    %8 = vector.load %arg4[%c0_6, %c0_7] : memref<1x16xf32, #tpu.memory_space<vmem>>, vector<1x16xf32>
    %9 = vector.broadcast %8 : vector<1x16xf32> to vector<72x16xf32>
    %10 = arith.mulf %7, %9 : vector<72x16xf32>
    %c0_8 = arith.constant 0 : index
    %c0_9 = arith.constant 0 : index
    %11 = vector.load %arg5[%c0_8, %c0_9] : memref<1x16xf32, #tpu.memory_space<vmem>>, vector<1x16xf32>
    %12 = vector.broadcast %11 : vector<1x16xf32> to vector<72x16xf32>
    %13 = arith.addf %10, %12 : vector<72x16xf32>
    %14 = arith.truncf %13 : vector<72x16xf32> to vector<72x16xbf16>
    %c0_10 = arith.constant 0 : index
    %c0_11 = arith.constant 0 : index
    %15 = vector.load %arg6[%c0_10, %c0_11] : memref<72x16xbf16, #tpu.memory_space<vmem>>, vector<72x16xbf16>
    tpu.vector_store %arg6[%c0_10, %c0_11], %14 {strides = array<i32>} : memref<72x16xbf16, #tpu.memory_space<vmem>>, vector<72x16xbf16>,
    return
  }
  func.func @transform_0(%arg0: i32) -> (i32, i32) {
    %c0_i32 = arith.constant 0 : i32
    %c0_i32_0 = arith.constant 0 : i32
    return %arg0, %c0_i32 : i32, i32
  }
  func.func @transform_1(%arg0: i32) -> (i32, i32) {
    %c0_i32 = arith.constant 0 : i32
    %c0_i32_0 = arith.constant 0 : i32
    %c0_i32_1 = arith.constant 0 : i32
    return %c0_i32, %c0_i32_0 : i32, i32
  }
  func.func @transform_2(%arg0: i32) -> (i32, i32) {
    %c0_i32 = arith.constant 0 : i32
    %c0_i32_0 = arith.constant 0 : i32
    %c0_i32_1 = arith.constant 0 : i32
    return %c0_i32, %c0_i32_0 : i32, i32
  }
  func.func @transform_3(%arg0: i32) -> (i32, i32) {
    %c0_i32 = arith.constant 0 : i32
    %c0_i32_0 = arith.constant 0 : i32
    %c0_i32_1 = arith.constant 0 : i32
    return %c0_i32, %c0_i32_0 : i32, i32
  }
  func.func @transform_4(%arg0: i32) -> (i32, i32) {
    %c0_i32 = arith.constant 0 : i32
    %c0_i32_0 = arith.constant 0 : i32
    %c0_i32_1 = arith.constant 0 : i32
    return %c0_i32, %c0_i32_0 : i32, i32
  }
  func.func @transform_5(%arg0: i32) -> (i32, i32) {
    %c0_i32 = arith.constant 0 : i32
    %c0_i32_0 = arith.constant 0 : i32
    return %arg0, %c0_i32 : i32, i32
  }
}

module attributes {stable_mosaic.version = 11 : i64} {
  func.func @_mm_relu_kernel(%arg0: i32, %arg1: memref<2x576xbf16, #tpu.memory_space<vmem>>, %arg2: memref<576x32xbf16, #tpu.memory_space<vmem>>, %arg3: memref<1x32xf32, #tpu.memory_space<vmem>>, %arg4: memref<2x32xbf16, #tpu.memory_space<vmem>>) attributes {dimension_semantics = [#tpu.dimension_semantics<parallel>], iteration_bounds = array<i64: 1>, scalar_prefetch = 0 : i64, scratch_operands = 0 : i64, tpu.core_type = #tpu.core_type<tc>, window_params = [{transform_indices = @transform_0, window_bounds = array<i64: 2, 576>}, {pipeline_mode = #tpu.pipeline_mode<synchronous>, transform_indices = @transform_1, window_bounds = array<i64: 576, 32>}, {pipeline_mode = #tpu.pipeline_mode<synchronous>, transform_indices = @transform_2, window_bounds = array<i64: 1, 32>}, {transform_indices = @transform_3, window_bounds = array<i64: 2, 32>}]} {
    %c0 = arith.constant 0 : index
    %c0_0 = arith.constant 0 : index
    %0 = vector.load %arg1[%c0, %c0_0] : memref<2x576xbf16, #tpu.memory_space<vmem>>, vector<2x576xbf16>
    %c0_1 = arith.constant 0 : index
    %c0_2 = arith.constant 0 : index
    %1 = vector.load %arg2[%c0_1, %c0_2] : memref<576x32xbf16, #tpu.memory_space<vmem>>, vector<576x32xbf16>
    %cst = arith.constant dense<0.000000e+00> : vector<2x32xf32>
    %2 = tpu.matmul %0, %1, %cst {dimension_numbers = #tpu.dot_dimension_numbers<[1], [0], [0], [1], [0, 0, 1, 1], [], []>} : vector<2x576xbf16>, vector<576x32xbf16>, vector<2x32xf32> -> vector<2x32xf32>
    %c0_3 = arith.constant 0 : index
    %c0_4 = arith.constant 0 : index
    %3 = vector.load %arg3[%c0_3, %c0_4] : memref<1x32xf32, #tpu.memory_space<vmem>>, vector<1x32xf32>
    %4 = vector.broadcast %3 : vector<1x32xf32> to vector<2x32xf32>
    %5 = arith.addf %2, %4 : vector<2x32xf32>
    %cst_5 = arith.constant 0.000000e+00 : f32
    %6 = vector.broadcast %cst_5 : f32 to vector<2x32xf32>
    %7 = arith.maximumf %5, %6 : vector<2x32xf32>
    %8 = arith.truncf %7 : vector<2x32xf32> to vector<2x32xbf16>
    %c0_6 = arith.constant 0 : index
    %c0_7 = arith.constant 0 : index
    %9 = vector.load %arg4[%c0_6, %c0_7] : memref<2x32xbf16, #tpu.memory_space<vmem>>, vector<2x32xbf16>
    tpu.vector_store %arg4[%c0_6, %c0_7], %8 {strides = array<i32>} : memref<2x32xbf16, #tpu.memory_space<vmem>>, vector<2x32xbf16>,
    return
  }
  func.func @transform_0(%arg0: i32) -> (i32, i32) {
    %c0_i32 = arith.constant 0 : i32
    %c0_i32_0 = arith.constant 0 : i32
    return %arg0, %c0_i32 : i32, i32
  }
  func.func @transform_1(%arg0: i32) -> (i32, i32) {
    %c0_i32 = arith.constant 0 : i32
    %c0_i32_0 = arith.constant 0 : i32
    %c0_i32_1 = arith.constant 0 : i32
    return %c0_i32, %c0_i32_0 : i32, i32
  }
  func.func @transform_2(%arg0: i32) -> (i32, i32) {
    %c0_i32 = arith.constant 0 : i32
    %c0_i32_0 = arith.constant 0 : i32
    %c0_i32_1 = arith.constant 0 : i32
    return %c0_i32, %c0_i32_0 : i32, i32
  }
  func.func @transform_3(%arg0: i32) -> (i32, i32) {
    %c0_i32 = arith.constant 0 : i32
    %c0_i32_0 = arith.constant 0 : i32
    return %arg0, %c0_i32 : i32, i32
  }
}

module attributes {stable_mosaic.version = 11 : i64} {
  func.func @_mm_relu_kernel(%arg0: i32, %arg1: memref<2x32xbf16, #tpu.memory_space<vmem>>, %arg2: memref<32x16xbf16, #tpu.memory_space<vmem>>, %arg3: memref<1x16xf32, #tpu.memory_space<vmem>>, %arg4: memref<2x16xbf16, #tpu.memory_space<vmem>>) attributes {dimension_semantics = [#tpu.dimension_semantics<parallel>], iteration_bounds = array<i64: 1>, scalar_prefetch = 0 : i64, scratch_operands = 0 : i64, tpu.core_type = #tpu.core_type<tc>, window_params = [{transform_indices = @transform_0, window_bounds = array<i64: 2, 32>}, {pipeline_mode = #tpu.pipeline_mode<synchronous>, transform_indices = @transform_1, window_bounds = array<i64: 32, 16>}, {pipeline_mode = #tpu.pipeline_mode<synchronous>, transform_indices = @transform_2, window_bounds = array<i64: 1, 16>}, {transform_indices = @transform_3, window_bounds = array<i64: 2, 16>}]} {
    %c0 = arith.constant 0 : index
    %c0_0 = arith.constant 0 : index
    %0 = vector.load %arg1[%c0, %c0_0] : memref<2x32xbf16, #tpu.memory_space<vmem>>, vector<2x32xbf16>
    %c0_1 = arith.constant 0 : index
    %c0_2 = arith.constant 0 : index
    %1 = vector.load %arg2[%c0_1, %c0_2] : memref<32x16xbf16, #tpu.memory_space<vmem>>, vector<32x16xbf16>
    %cst = arith.constant dense<0.000000e+00> : vector<2x16xf32>
    %2 = tpu.matmul %0, %1, %cst {dimension_numbers = #tpu.dot_dimension_numbers<[1], [0], [0], [1], [0, 0, 1, 1], [], []>} : vector<2x32xbf16>, vector<32x16xbf16>, vector<2x16xf32> -> vector<2x16xf32>
    %c0_3 = arith.constant 0 : index
    %c0_4 = arith.constant 0 : index
    %3 = vector.load %arg3[%c0_3, %c0_4] : memref<1x16xf32, #tpu.memory_space<vmem>>, vector<1x16xf32>
    %4 = vector.broadcast %3 : vector<1x16xf32> to vector<2x16xf32>
    %5 = arith.addf %2, %4 : vector<2x16xf32>
    %cst_5 = arith.constant 0.000000e+00 : f32
    %6 = vector.broadcast %cst_5 : f32 to vector<2x16xf32>
    %7 = arith.maximumf %5, %6 : vector<2x16xf32>
    %8 = arith.truncf %7 : vector<2x16xf32> to vector<2x16xbf16>
    %c0_6 = arith.constant 0 : index
    %c0_7 = arith.constant 0 : index
    %9 = vector.load %arg4[%c0_6, %c0_7] : memref<2x16xbf16, #tpu.memory_space<vmem>>, vector<2x16xbf16>
    tpu.vector_store %arg4[%c0_6, %c0_7], %8 {strides = array<i32>} : memref<2x16xbf16, #tpu.memory_space<vmem>>, vector<2x16xbf16>,
    return
  }
  func.func @transform_0(%arg0: i32) -> (i32, i32) {
    %c0_i32 = arith.constant 0 : i32
    %c0_i32_0 = arith.constant 0 : i32
    return %arg0, %c0_i32 : i32, i32
  }
  func.func @transform_1(%arg0: i32) -> (i32, i32) {
    %c0_i32 = arith.constant 0 : i32
    %c0_i32_0 = arith.constant 0 : i32
    %c0_i32_1 = arith.constant 0 : i32
    return %c0_i32, %c0_i32_0 : i32, i32
  }
  func.func @transform_2(%arg0: i32) -> (i32, i32) {
    %c0_i32 = arith.constant 0 : i32
    %c0_i32_0 = arith.constant 0 : i32
    %c0_i32_1 = arith.constant 0 : i32
    return %c0_i32, %c0_i32_0 : i32, i32
  }
  func.func @transform_3(%arg0: i32) -> (i32, i32) {
    %c0_i32 = arith.constant 0 : i32
    %c0_i32_0 = arith.constant 0 : i32
    return %arg0, %c0_i32 : i32, i32
  }
}

module attributes {stable_mosaic.version = 11 : i64} {
  func.func @_mm_relu_bn_kernel(%arg0: i32, %arg1: memref<48x64xbf16, #tpu.memory_space<vmem>>, %arg2: memref<64x16xbf16, #tpu.memory_space<vmem>>, %arg3: memref<1x16xf32, #tpu.memory_space<vmem>>, %arg4: memref<1x16xf32, #tpu.memory_space<vmem>>, %arg5: memref<1x16xf32, #tpu.memory_space<vmem>>, %arg6: memref<48x16xbf16, #tpu.memory_space<vmem>>) attributes {dimension_semantics = [#tpu.dimension_semantics<parallel>], iteration_bounds = array<i64: 1>, scalar_prefetch = 0 : i64, scratch_operands = 0 : i64, tpu.core_type = #tpu.core_type<tc>, window_params = [{transform_indices = @transform_0, window_bounds = array<i64: 48, 64>}, {pipeline_mode = #tpu.pipeline_mode<synchronous>, transform_indices = @transform_1, window_bounds = array<i64: 64, 16>}, {pipeline_mode = #tpu.pipeline_mode<synchronous>, transform_indices = @transform_2, window_bounds = array<i64: 1, 16>}, {pipeline_mode = #tpu.pipeline_mode<synchronous>, transform_indices = @transform_3, window_bounds = array<i64: 1, 16>}, {pipeline_mode = #tpu.pipeline_mode<synchronous>, transform_indices = @transform_4, window_bounds = array<i64: 1, 16>}, {transform_indices = @transform_5, window_bounds = array<i64: 48, 16>}]} {
    %c0 = arith.constant 0 : index
    %c0_0 = arith.constant 0 : index
    %0 = vector.load %arg1[%c0, %c0_0] : memref<48x64xbf16, #tpu.memory_space<vmem>>, vector<48x64xbf16>
    %c0_1 = arith.constant 0 : index
    %c0_2 = arith.constant 0 : index
    %1 = vector.load %arg2[%c0_1, %c0_2] : memref<64x16xbf16, #tpu.memory_space<vmem>>, vector<64x16xbf16>
    %cst = arith.constant dense<0.000000e+00> : vector<48x16xf32>
    %2 = tpu.matmul %0, %1, %cst {dimension_numbers = #tpu.dot_dimension_numbers<[1], [0], [0], [1], [0, 0, 1, 1], [], []>} : vector<48x64xbf16>, vector<64x16xbf16>, vector<48x16xf32> -> vector<48x16xf32>
    %c0_3 = arith.constant 0 : index
    %c0_4 = arith.constant 0 : index
    %3 = vector.load %arg3[%c0_3, %c0_4] : memref<1x16xf32, #tpu.memory_space<vmem>>, vector<1x16xf32>
    %4 = vector.broadcast %3 : vector<1x16xf32> to vector<48x16xf32>
    %5 = arith.addf %2, %4 : vector<48x16xf32>
    %cst_5 = arith.constant 0.000000e+00 : f32
    %6 = vector.broadcast %cst_5 : f32 to vector<48x16xf32>
    %7 = arith.maximumf %5, %6 : vector<48x16xf32>
    %c0_6 = arith.constant 0 : index
    %c0_7 = arith.constant 0 : index
    %8 = vector.load %arg4[%c0_6, %c0_7] : memref<1x16xf32, #tpu.memory_space<vmem>>, vector<1x16xf32>
    %9 = vector.broadcast %8 : vector<1x16xf32> to vector<48x16xf32>
    %10 = arith.mulf %7, %9 : vector<48x16xf32>
    %c0_8 = arith.constant 0 : index
    %c0_9 = arith.constant 0 : index
    %11 = vector.load %arg5[%c0_8, %c0_9] : memref<1x16xf32, #tpu.memory_space<vmem>>, vector<1x16xf32>
    %12 = vector.broadcast %11 : vector<1x16xf32> to vector<48x16xf32>
    %13 = arith.addf %10, %12 : vector<48x16xf32>
    %14 = arith.truncf %13 : vector<48x16xf32> to vector<48x16xbf16>
    %c0_10 = arith.constant 0 : index
    %c0_11 = arith.constant 0 : index
    %15 = vector.load %arg6[%c0_10, %c0_11] : memref<48x16xbf16, #tpu.memory_space<vmem>>, vector<48x16xbf16>
    tpu.vector_store %arg6[%c0_10, %c0_11], %14 {strides = array<i32>} : memref<48x16xbf16, #tpu.memory_space<vmem>>, vector<48x16xbf16>,
    return
  }
  func.func @transform_0(%arg0: i32) -> (i32, i32) {
    %c0_i32 = arith.constant 0 : i32
    %c0_i32_0 = arith.constant 0 : i32
    return %arg0, %c0_i32 : i32, i32
  }
  func.func @transform_1(%arg0: i32) -> (i32, i32) {
    %c0_i32 = arith.constant 0 : i32
    %c0_i32_0 = arith.constant 0 : i32
    %c0_i32_1 = arith.constant 0 : i32
    return %c0_i32, %c0_i32_0 : i32, i32
  }
  func.func @transform_2(%arg0: i32) -> (i32, i32) {
    %c0_i32 = arith.constant 0 : i32
    %c0_i32_0 = arith.constant 0 : i32
    %c0_i32_1 = arith.constant 0 : i32
    return %c0_i32, %c0_i32_0 : i32, i32
  }
  func.func @transform_3(%arg0: i32) -> (i32, i32) {
    %c0_i32 = arith.constant 0 : i32
    %c0_i32_0 = arith.constant 0 : i32
    %c0_i32_1 = arith.constant 0 : i32
    return %c0_i32, %c0_i32_0 : i32, i32
  }
  func.func @transform_4(%arg0: i32) -> (i32, i32) {
    %c0_i32 = arith.constant 0 : i32
    %c0_i32_0 = arith.constant 0 : i32
    %c0_i32_1 = arith.constant 0 : i32
    return %c0_i32, %c0_i32_0 : i32, i32
  }
  func.func @transform_5(%arg0: i32) -> (i32, i32) {
    %c0_i32 = arith.constant 0 : i32
    %c0_i32_0 = arith.constant 0 : i32
    return %arg0, %c0_i32 : i32, i32
  }
}

module attributes {stable_mosaic.version = 11 : i64} {
  func.func @_mm_relu_kernel(%arg0: i32, %arg1: memref<4x192xbf16, #tpu.memory_space<vmem>>, %arg2: memref<192x64xbf16, #tpu.memory_space<vmem>>, %arg3: memref<1x64xf32, #tpu.memory_space<vmem>>, %arg4: memref<4x64xbf16, #tpu.memory_space<vmem>>) attributes {dimension_semantics = [#tpu.dimension_semantics<parallel>], iteration_bounds = array<i64: 1>, scalar_prefetch = 0 : i64, scratch_operands = 0 : i64, tpu.core_type = #tpu.core_type<tc>, window_params = [{transform_indices = @transform_0, window_bounds = array<i64: 4, 192>}, {pipeline_mode = #tpu.pipeline_mode<synchronous>, transform_indices = @transform_1, window_bounds = array<i64: 192, 64>}, {pipeline_mode = #tpu.pipeline_mode<synchronous>, transform_indices = @transform_2, window_bounds = array<i64: 1, 64>}, {transform_indices = @transform_3, window_bounds = array<i64: 4, 64>}]} {
    %c0 = arith.constant 0 : index
    %c0_0 = arith.constant 0 : index
    %0 = vector.load %arg1[%c0, %c0_0] : memref<4x192xbf16, #tpu.memory_space<vmem>>, vector<4x192xbf16>
    %c0_1 = arith.constant 0 : index
    %c0_2 = arith.constant 0 : index
    %1 = vector.load %arg2[%c0_1, %c0_2] : memref<192x64xbf16, #tpu.memory_space<vmem>>, vector<192x64xbf16>
    %cst = arith.constant dense<0.000000e+00> : vector<4x64xf32>
    %2 = tpu.matmul %0, %1, %cst {dimension_numbers = #tpu.dot_dimension_numbers<[1], [0], [0], [1], [0, 0, 1, 1], [], []>} : vector<4x192xbf16>, vector<192x64xbf16>, vector<4x64xf32> -> vector<4x64xf32>
    %c0_3 = arith.constant 0 : index
    %c0_4 = arith.constant 0 : index
    %3 = vector.load %arg3[%c0_3, %c0_4] : memref<1x64xf32, #tpu.memory_space<vmem>>, vector<1x64xf32>
    %4 = vector.broadcast %3 : vector<1x64xf32> to vector<4x64xf32>
    %5 = arith.addf %2, %4 : vector<4x64xf32>
    %cst_5 = arith.constant 0.000000e+00 : f32
    %6 = vector.broadcast %cst_5 : f32 to vector<4x64xf32>
    %7 = arith.maximumf %5, %6 : vector<4x64xf32>
    %8 = arith.truncf %7 : vector<4x64xf32> to vector<4x64xbf16>
    %c0_6 = arith.constant 0 : index
    %c0_7 = arith.constant 0 : index
    %9 = vector.load %arg4[%c0_6, %c0_7] : memref<4x64xbf16, #tpu.memory_space<vmem>>, vector<4x64xbf16>
    tpu.vector_store %arg4[%c0_6, %c0_7], %8 {strides = array<i32>} : memref<4x64xbf16, #tpu.memory_space<vmem>>, vector<4x64xbf16>,
    return
  }
  func.func @transform_0(%arg0: i32) -> (i32, i32) {
    %c0_i32 = arith.constant 0 : i32
    %c0_i32_0 = arith.constant 0 : i32
    return %arg0, %c0_i32 : i32, i32
  }
  func.func @transform_1(%arg0: i32) -> (i32, i32) {
    %c0_i32 = arith.constant 0 : i32
    %c0_i32_0 = arith.constant 0 : i32
    %c0_i32_1 = arith.constant 0 : i32
    return %c0_i32, %c0_i32_0 : i32, i32
  }
  func.func @transform_2(%arg0: i32) -> (i32, i32) {
    %c0_i32 = arith.constant 0 : i32
    %c0_i32_0 = arith.constant 0 : i32
    %c0_i32_1 = arith.constant 0 : i32
    return %c0_i32, %c0_i32_0 : i32, i32
  }
  func.func @transform_3(%arg0: i32) -> (i32, i32) {
    %c0_i32 = arith.constant 0 : i32
    %c0_i32_0 = arith.constant 0 : i32
    return %arg0, %c0_i32 : i32, i32
  }
}

module attributes {stable_mosaic.version = 11 : i64} {
  func.func @_mm_relu_kernel(%arg0: i32, %arg1: memref<2x80xbf16, #tpu.memory_space<vmem>>, %arg2: memref<80x32xbf16, #tpu.memory_space<vmem>>, %arg3: memref<1x32xf32, #tpu.memory_space<vmem>>, %arg4: memref<2x32xbf16, #tpu.memory_space<vmem>>) attributes {dimension_semantics = [#tpu.dimension_semantics<parallel>], iteration_bounds = array<i64: 1>, scalar_prefetch = 0 : i64, scratch_operands = 0 : i64, tpu.core_type = #tpu.core_type<tc>, window_params = [{transform_indices = @transform_0, window_bounds = array<i64: 2, 80>}, {pipeline_mode = #tpu.pipeline_mode<synchronous>, transform_indices = @transform_1, window_bounds = array<i64: 80, 32>}, {pipeline_mode = #tpu.pipeline_mode<synchronous>, transform_indices = @transform_2, window_bounds = array<i64: 1, 32>}, {transform_indices = @transform_3, window_bounds = array<i64: 2, 32>}]} {
    %c0 = arith.constant 0 : index
    %c0_0 = arith.constant 0 : index
    %0 = vector.load %arg1[%c0, %c0_0] : memref<2x80xbf16, #tpu.memory_space<vmem>>, vector<2x80xbf16>
    %c0_1 = arith.constant 0 : index
    %c0_2 = arith.constant 0 : index
    %1 = vector.load %arg2[%c0_1, %c0_2] : memref<80x32xbf16, #tpu.memory_space<vmem>>, vector<80x32xbf16>
    %cst = arith.constant dense<0.000000e+00> : vector<2x32xf32>
    %2 = tpu.matmul %0, %1, %cst {dimension_numbers = #tpu.dot_dimension_numbers<[1], [0], [0], [1], [0, 0, 1, 1], [], []>} : vector<2x80xbf16>, vector<80x32xbf16>, vector<2x32xf32> -> vector<2x32xf32>
    %c0_3 = arith.constant 0 : index
    %c0_4 = arith.constant 0 : index
    %3 = vector.load %arg3[%c0_3, %c0_4] : memref<1x32xf32, #tpu.memory_space<vmem>>, vector<1x32xf32>
    %4 = vector.broadcast %3 : vector<1x32xf32> to vector<2x32xf32>
    %5 = arith.addf %2, %4 : vector<2x32xf32>
    %cst_5 = arith.constant 0.000000e+00 : f32
    %6 = vector.broadcast %cst_5 : f32 to vector<2x32xf32>
    %7 = arith.maximumf %5, %6 : vector<2x32xf32>
    %8 = arith.truncf %7 : vector<2x32xf32> to vector<2x32xbf16>
    %c0_6 = arith.constant 0 : index
    %c0_7 = arith.constant 0 : index
    %9 = vector.load %arg4[%c0_6, %c0_7] : memref<2x32xbf16, #tpu.memory_space<vmem>>, vector<2x32xbf16>
    tpu.vector_store %arg4[%c0_6, %c0_7], %8 {strides = array<i32>} : memref<2x32xbf16, #tpu.memory_space<vmem>>, vector<2x32xbf16>,
    return
  }
  func.func @transform_0(%arg0: i32) -> (i32, i32) {
    %c0_i32 = arith.constant 0 : i32
    %c0_i32_0 = arith.constant 0 : i32
    return %arg0, %c0_i32 : i32, i32
  }
  func.func @transform_1(%arg0: i32) -> (i32, i32) {
    %c0_i32 = arith.constant 0 : i32
    %c0_i32_0 = arith.constant 0 : i32
    %c0_i32_1 = arith.constant 0 : i32
    return %c0_i32, %c0_i32_0 : i32, i32
  }
  func.func @transform_2(%arg0: i32) -> (i32, i32) {
    %c0_i32 = arith.constant 0 : i32
    %c0_i32_0 = arith.constant 0 : i32
    %c0_i32_1 = arith.constant 0 : i32
    return %c0_i32, %c0_i32_0 : i32, i32
  }
  func.func @transform_3(%arg0: i32) -> (i32, i32) {
    %c0_i32 = arith.constant 0 : i32
    %c0_i32_0 = arith.constant 0 : i32
    return %arg0, %c0_i32 : i32, i32
  }
}

module attributes {stable_mosaic.version = 11 : i64} {
  func.func @_mm_relu_kernel(%arg0: i32, %arg1: memref<2x32xbf16, #tpu.memory_space<vmem>>, %arg2: memref<32x2xbf16, #tpu.memory_space<vmem>>, %arg3: memref<1x2xf32, #tpu.memory_space<vmem>>, %arg4: memref<2x2xf32, #tpu.memory_space<vmem>>) attributes {dimension_semantics = [#tpu.dimension_semantics<parallel>], iteration_bounds = array<i64: 1>, scalar_prefetch = 0 : i64, scratch_operands = 0 : i64, tpu.core_type = #tpu.core_type<tc>, window_params = [{transform_indices = @transform_0, window_bounds = array<i64: 2, 32>}, {pipeline_mode = #tpu.pipeline_mode<synchronous>, transform_indices = @transform_1, window_bounds = array<i64: 32, 2>}, {pipeline_mode = #tpu.pipeline_mode<synchronous>, transform_indices = @transform_2, window_bounds = array<i64: 1, 2>}, {transform_indices = @transform_3, window_bounds = array<i64: 2, 2>}]} {
    %c0 = arith.constant 0 : index
    %c0_0 = arith.constant 0 : index
    %0 = vector.load %arg1[%c0, %c0_0] : memref<2x32xbf16, #tpu.memory_space<vmem>>, vector<2x32xbf16>
    %c0_1 = arith.constant 0 : index
    %c0_2 = arith.constant 0 : index
    %1 = vector.load %arg2[%c0_1, %c0_2] : memref<32x2xbf16, #tpu.memory_space<vmem>>, vector<32x2xbf16>
    %cst = arith.constant dense<0.000000e+00> : vector<2x2xf32>
    %2 = tpu.matmul %0, %1, %cst {dimension_numbers = #tpu.dot_dimension_numbers<[1], [0], [0], [1], [0, 0, 1, 1], [], []>} : vector<2x32xbf16>, vector<32x2xbf16>, vector<2x2xf32> -> vector<2x2xf32>
    %c0_3 = arith.constant 0 : index
    %c0_4 = arith.constant 0 : index
    %3 = vector.load %arg3[%c0_3, %c0_4] : memref<1x2xf32, #tpu.memory_space<vmem>>, vector<1x2xf32>
    %4 = vector.broadcast %3 : vector<1x2xf32> to vector<2x2xf32>
    %5 = arith.addf %2, %4 : vector<2x2xf32>
    %cst_5 = arith.constant 0.000000e+00 : f32
    %6 = vector.broadcast %cst_5 : f32 to vector<2x2xf32>
    %7 = arith.maximumf %5, %6 : vector<2x2xf32>
    %c0_6 = arith.constant 0 : index
    %c0_7 = arith.constant 0 : index
    %8 = vector.load %arg4[%c0_6, %c0_7] : memref<2x2xf32, #tpu.memory_space<vmem>>, vector<2x2xf32>
    tpu.vector_store %arg4[%c0_6, %c0_7], %7 {strides = array<i32>} : memref<2x2xf32, #tpu.memory_space<vmem>>, vector<2x2xf32>,
    return
  }
  func.func @transform_0(%arg0: i32) -> (i32, i32) {
    %c0_i32 = arith.constant 0 : i32
    %c0_i32_0 = arith.constant 0 : i32
    return %arg0, %c0_i32 : i32, i32
  }
  func.func @transform_1(%arg0: i32) -> (i32, i32) {
    %c0_i32 = arith.constant 0 : i32
    %c0_i32_0 = arith.constant 0 : i32
    %c0_i32_1 = arith.constant 0 : i32
    return %c0_i32, %c0_i32_0 : i32, i32
  }
  func.func @transform_2(%arg0: i32) -> (i32, i32) {
    %c0_i32 = arith.constant 0 : i32
    %c0_i32_0 = arith.constant 0 : i32
    %c0_i32_1 = arith.constant 0 : i32
    return %c0_i32, %c0_i32_0 : i32, i32
  }
  func.func @transform_3(%arg0: i32) -> (i32, i32) {
    %c0_i32 = arith.constant 0 : i32
    %c0_i32_0 = arith.constant 0 : i32
    return %arg0, %c0_i32 : i32, i32
  }
}

</mosaic_0001>

<llo_original>
// kernel: geddnet_forward.23
$region0: #{geddnet_forward.23}
  #allocation0 [shape = 'u32[]', space=smem, size = 0x4, offset = 0x4, fixed_abs, tag = 'smem constant byte address 0x4 - core index']
  #allocation1 [shape = 'u32[144,128]{1,0:T(1,128)}', space=vmem, size = 0x12000, scoped, tag = 'internal scratch']
  %s0 = inlined_call_operand.vmem [shape: bf16[968,27], index: 0, kind: input, shape index: {}]
  %s1 = inlined_call_operand.vmem [shape: bf16[27,8], index: 1, kind: input, shape index: {}]
  %s2 = inlined_call_operand.vmem [shape: f32[1,8], index: 2, kind: input, shape index: {}]
  %s3 = inlined_call_operand.vmem [shape: bf16[968,8], index: 3, kind: output, shape index: {}]
  %s4 = sld [smem:[#allocation0]]
  $region89: #{geddnet_forward.23} parent=0
    _
  %s6 = ssub.s32 1, %s4
  %s7 = scalar_select 0, %s6, %s4
  $region1: #{geddnet_forward.23} parent=0
    #allocation2 [shape = 'u8[262144]{0}', space=vmem, size = 0x40000, scoped, tag = 'output window, operand 0']
    loop: start=0, step=1, limit=4
    $region2: #{geddnet_forward.23} parent=1 // loop_pre_header
      _
    $region3: #{geddnet_forward.23} parent=1 // loop_header
      %s9 = sphi 0, %s13
      %p10 = scmp.ge.s32.totalorder %s9, 4
      %s19 = sphi 0, %s21
      %s22 = sphi 0, %s19
      %s23 = sphi 0, %s22
      %s39 = sphi 0, %s23
      %s43 = sphi 0, %s43
      %s45 = sphi 0, %s43
      %s46 = sphi 0, %s45
      %s60 = sphi 0, %s46
      %s64 = sphi 0, %s64
      %s66 = sphi 0, %s64
      %s67 = sphi 0, %s66
      %s81 = sphi 0, %s67
      %s87 = sphi 0, %s89
      %s90 = sphi 0, %s87
      %s91 = sphi 0, %s90
      %s107 = sphi 0, %s91
    $region4: #{geddnet_forward.23} parent=1 // loop_header_branch
      %12 = sbr.rel (%p10) target = $region8
    $region5: #{geddnet_forward.23} parent=1 // loop_body
      %s14 = ssub.s32 %s9, 1
      %s15 = ssub.s32 %s9, 2
      %s16 = sadd.s32 %s9, 1
      %s17 = ssub.s32 %s9, %s16
      %p18 = scmp.eq.s32.totalorder %s17, 0
      %s20 = sadd.s32 %s19, 1
      %s21 = scalar_select %p18, %s19, %s20
      %p24 = pneg %p18
      %p25 = scmp.eq.s32.totalorder %s9, 1
      %p26 = por %p24, %p25
      %p27 = scmp.ne.s32.totalorder %s19, %s22
      %p28 = scmp.eq.s32.totalorder %s9, 0
      %p29 = por %p27, %p28
      %p30 = scmp.ne.s32.totalorder %s19, %s22
      %p31 = scmp.eq.s32.totalorder %s14, 1
      %p32 = por %p30, %p31
      %p33 = scmp.ne.s32.totalorder %s22, %s23
      %p34 = scmp.eq.s32.totalorder %s14, 0
      %p35 = por %p33, %p34
      %p36 = scmp.ne.s32.totalorder %s22, %s23
      %p37 = scmp.eq.s32.totalorder %s15, 1
      %p38 = por %p36, %p37
      %p40 = scmp.ne.s32.totalorder %s23, %s39
      %p41 = scmp.eq.s32.totalorder %s15, 0
      %p42 = por %p40, %p41
      %s44 = sadd.s32 %s43, 1
      %p47 = scmp.eq.s32.totalorder %s9, 1
      %p48 = scmp.ne.s32.totalorder %s43, %s45
      %p49 = scmp.eq.s32.totalorder %s9, 0
      %p50 = por %p48, %p49
      %p51 = scmp.ne.s32.totalorder %s43, %s45
      %p52 = scmp.eq.s32.totalorder %s14, 1
      %p53 = por %p51, %p52
      %p54 = scmp.ne.s32.totalorder %s45, %s46
      %p55 = scmp.eq.s32.totalorder %s14, 0
      %p56 = por %p54, %p55
      %p57 = scmp.ne.s32.totalorder %s45, %s46
      %p58 = scmp.eq.s32.totalorder %s15, 1
      %p59 = por %p57, %p58
      %p61 = scmp.ne.s32.totalorder %s46, %s60
      %p62 = scmp.eq.s32.totalorder %s15, 0
      %p63 = por %p61, %p62
      %s65 = sadd.s32 %s64, 1
      %p68 = scmp.eq.s32.totalorder %s9, 1
      %p69 = scmp.ne.s32.totalorder %s64, %s66
      %p70 = scmp.eq.s32.totalorder %s9, 0
      %p71 = por %p69, %p70
      %p72 = scmp.ne.s32.totalorder %s64, %s66
      %p73 = scmp.eq.s32.totalorder %s14, 1
      %p74 = por %p72, %p73
      %p75 = scmp.ne.s32.totalorder %s66, %s67
      %p76 = scmp.eq.s32.totalorder %s14, 0
      %p77 = por %p75, %p76
      %p78 = scmp.ne.s32.totalorder %s66, %s67
      %p79 = scmp.eq.s32.totalorder %s15, 1
      %p80 = por %p78, %p79
      %p82 = scmp.ne.s32.totalorder %s67, %s81
      %p83 = scmp.eq.s32.totalorder %s15, 0
      %p84 = por %p82, %p83
      %s85 = ssub.s32 %s9, %s16
      %p86 = scmp.eq.s32.totalorder %s85, 0
      %s88 = sadd.s32 %s87, 1
      %s89 = scalar_select %p86, %s87, %s88
      %p92 = pneg %p86
      %p93 = scmp.eq.s32.totalorder %s9, 1
      %p94 = por %p92, %p93
      %p95 = scmp.ne.s32.totalorder %s87, %s90
      %p96 = scmp.eq.s32.totalorder %s9, 0
      %p97 = por %p95, %p96
      %p98 = scmp.ne.s32.totalorder %s87, %s90
      %p99 = scmp.eq.s32.totalorder %s14, 1
      %p100 = por %p98, %p99
      %p101 = scmp.ne.s32.totalorder %s90, %s91
      %p102 = scmp.eq.s32.totalorder %s14, 0
      %p103 = por %p101, %p102
      %p104 = scmp.ne.s32.totalorder %s90, %s91
      %p105 = scmp.eq.s32.totalorder %s15, 1
      %p106 = por %p104, %p105
      %p108 = scmp.ne.s32.totalorder %s91, %s107
      %p109 = scmp.eq.s32.totalorder %s15, 0
      %p110 = por %p108, %p109
      %p111 = scmp.le.s32.totalorder 1, %s9
      %p112 = scmp.lt.s32.totalorder %s9, 3
      %p113 = pnand %p111, %p112
      %p114 = pneg %p113
      // Predicated region
      $region9: #{geddnet_forward.23} parent=5 // pred_check
        _
      $region10: #{geddnet_forward.23} parent=5 // pred_check_branch
        %116 = sbr.rel (%p113) target = $region12
      $region11: #{geddnet_forward.23} parent=5 // pred_region
        %s117 = ssub.s32 %s9, 1
        // Predicated region
        $region13: #{geddnet_forward.23} parent=11 // pred_check
          %p118 = pneg %p56
        $region14: #{geddnet_forward.23} parent=11 // pred_check_branch
          %120 = sbr.rel (%p118) target = $region16
        $region15: #{geddnet_forward.23} parent=11 // pred_region
          _
        $region16: #{geddnet_forward.23} parent=11 // pred_fallthru
          _
        // Predicated region
        $region17: #{geddnet_forward.23} parent=11 // pred_check
          %p121 = pneg %p77
        $region18: #{geddnet_forward.23} parent=11 // pred_check_branch
          %123 = sbr.rel (%p121) target = $region20
        $region19: #{geddnet_forward.23} parent=11 // pred_region
          _
        $region20: #{geddnet_forward.23} parent=11 // pred_fallthru
          _
      $region12: #{geddnet_forward.23} parent=5 // pred_fallthru
        _
      %p124 = scmp.lt.s32.totalorder %s9, 2
      // Predicated region
      $region21: #{geddnet_forward.23} parent=5 // pred_check
        %p125 = pneg %p124
      $region22: #{geddnet_forward.23} parent=5 // pred_check_branch
        %127 = sbr.rel (%p125) target = $region24
      $region23: #{geddnet_forward.23} parent=5 // pred_region
        // Predicated region
        $region25: #{geddnet_forward.23} parent=23 // pred_check
          %p128 = pneg %p29
        $region26: #{geddnet_forward.23} parent=23 // pred_check_branch
          %130 = sbr.rel (%p128) target = $region28
        $region27: #{geddnet_forward.23} parent=23 // pred_region
          %s131 = smul.u32 64, %s9
          %s132 = ssub.s32 121, %s131
          %p133 = scmp.lt.s32.totalorder %s132, 64
          %s134 = scalar_select %p133, %s132, 64
          %s135 = smul.u32 64, %s134
          %p136 = scmp.lt.s32.totalorder %s131, 120
          %s137 = scalar_select %p136, %s131, 120
          %s138 = smul.addr %s137, 4
          %s139 = scalar_lea.vmem %s0, %s138
          %s140 = smul.u32 64, %s9
          %s141 = ssub.s32 121, %s140
          %p142 = scmp.lt.s32.totalorder %s141, 64
          %s143 = scalar_select %p142, %s141, 64
          %s144 = smul.u32 64, %s143
        $region28: #{geddnet_forward.23} parent=23 // pred_fallthru
          _
      $region24: #{geddnet_forward.23} parent=5 // pred_fallthru
        _
      %p145 = scmp.le.s32.totalorder 1, %s9
      %p146 = scmp.lt.s32.totalorder %s9, 3
      %p147 = pnand %p145, %p146
      %p148 = pneg %p147
      // Predicated region
      $region29: #{geddnet_forward.23} parent=5 // pred_check
        _
      $region30: #{geddnet_forward.23} parent=5 // pred_check_branch
        %150 = sbr.rel (%p147) target = $region32
      $region31: #{geddnet_forward.23} parent=5 // pred_region
        %s151 = ssub.s32 %s9, 1
        %s152 = smul.u32 64, %s14
        %s153 = ssub.s32 121, %s152
        %p154 = scmp.lt.s32.totalorder %s153, 64
        %s155 = scalar_select %p154, %s153, 64
        %s156 = smul.u32 64, %s155
        %p157 = scmp.lt.s32.totalorder %s152, 120
        %s158 = scalar_select %p157, %s152, 120
        %s159 = smul.addr %s158, 4
        %s160 = scalar_lea.vmem %s0, %s159
        %p161 = pneg %p35
        %p162 = pneg %p32
        %p163 = pneg %p56
        %p164 = pneg %p53
        %p165 = pneg %p77
        %p166 = pneg %p74
        %p167 = pneg %p103
        %p168 = pneg %p100
        %s169 = sand.u32 %s90, 1
        %s170 = sand.u32 %s90, 1
        %s171 = smul.addr %s170, 256
        %s172 = scalar_lea.vmem [#allocation2], %s171
        %s173 = smul.u32 64, %s14
        %s174 = ssub.s32 121, %s173
        %p175 = scmp.lt.s32.totalorder %s174, 64
        %s176 = scalar_select %p175, %s174, 64
        %s177 = smul.u32 64, %s176
        %p178 = scmp.lt.s32.totalorder %s173, 120
        %s179 = scalar_select %p178, %s173, 120
        %s180 = smul.addr %s179, 4
        %s181 = scalar_lea.vmem %s0, %s180
        %s182 = smul.u32 64, %s14
        %s183 = ssub.s32 121, %s182
        %p184 = scmp.lt.s32.totalorder %s183, 64
        %s185 = scalar_select %p184, %s183, 64
        %s186 = smul.u32 64, %s185
        %s187 = smul.u32 64, %s14
        %s188 = ssub.s32 121, %s187
        %p189 = scmp.lt.s32.totalorder %s188, 64
        %s190 = scalar_select %p189, %s188, 64
        %s191 = smul.u32 64, %s190
        %v193 = vld [vmem:[%s181] sm:$0xf]
        %v194 = vld [vmem:[%s181 + $0x4] sm:$0xf]
        %v195 = vld [vmem:[%s181 + $0x8] sm:$0xf]
        %v196 = vld [vmem:[%s181 + $0xc] sm:$0xf]
        %v197 = vld [vmem:[%s181 + $0x10] sm:$0xf]
        %v198 = vld [vmem:[%s181 + $0x14] sm:$0xf]
        %v199 = vld [vmem:[%s181 + $0x18] sm:$0xf]
        %v200 = vld [vmem:[%s181 + $0x1c] sm:$0xf]
        %v201 = vld [vmem:[%s181 + $0x20] sm:$0xf]
        %v202 = vld [vmem:[%s181 + $0x24] sm:$0xf]
        %v203 = vld [vmem:[%s181 + $0x28] sm:$0xf]
        %v204 = vld [vmem:[%s181 + $0x2c] sm:$0xf]
        %v205 = vld [vmem:[%s181 + $0x30] sm:$0xf]
        %v206 = vld [vmem:[%s181 + $0x34] sm:$0xf]
        %v207 = vld [vmem:[%s181 + $0x38] sm:$0xf]
        %v208 = vld [vmem:[%s181 + $0x3c] sm:$0xf]
        %v209 = vld [vmem:[%s181 + $0x40] sm:$0xf]
        %v210 = vld [vmem:[%s181 + $0x44] sm:$0xf]
        %v211 = vld [vmem:[%s181 + $0x48] sm:$0xf]
        %v212 = vld [vmem:[%s181 + $0x4c] sm:$0xf]
        %v213 = vld [vmem:[%s181 + $0x50] sm:$0xf]
        %v214 = vld [vmem:[%s181 + $0x54] sm:$0xf]
        %v215 = vld [vmem:[%s181 + $0x58] sm:$0xf]
        %v216 = vld [vmem:[%s181 + $0x5c] sm:$0xf]
        %v217 = vld [vmem:[%s181 + $0x60] sm:$0xf]
        %v218 = vld [vmem:[%s181 + $0x64] sm:$0xf]
        %v219 = vld [vmem:[%s181 + $0x68] sm:$0xf]
        %v220 = vld [vmem:[%s181 + $0x6c] sm:$0xf]
        %v221 = vld [vmem:[%s181 + $0x70] sm:$0xf]
        %v222 = vld [vmem:[%s181 + $0x74] sm:$0xf]
        %v223 = vld [vmem:[%s181 + $0x78] sm:$0xf]
        %v224 = vld [vmem:[%s181 + $0x7c] sm:$0xf]
        %v225 = vld [vmem:[%s181 + $0x80] sm:$0xf]
        %v226 = vld [vmem:[%s181 + $0x84] sm:$0xf]
        %v227 = vld [vmem:[%s181 + $0x88] sm:$0xf]
        %v228 = vld [vmem:[%s181 + $0x8c] sm:$0xf]
        %v229 = vld [vmem:[%s181 + $0x90] sm:$0xf]
        %v230 = vld [vmem:[%s181 + $0x94] sm:$0xf]
        %v231 = vld [vmem:[%s181 + $0x98] sm:$0xf]
        %v232 = vld [vmem:[%s181 + $0x9c] sm:$0xf]
        %v233 = vld [vmem:[%s181 + $0xa0] sm:$0xf]
        %v234 = vld [vmem:[%s181 + $0xa4] sm:$0xf]
        %v235 = vld [vmem:[%s181 + $0xa8] sm:$0xf]
        %v236 = vld [vmem:[%s181 + $0xac] sm:$0xf]
        %v237 = vld [vmem:[%s181 + $0xb0] sm:$0xf]
        %v238 = vld [vmem:[%s181 + $0xb4] sm:$0xf]
        %v239 = vld [vmem:[%s181 + $0xb8] sm:$0xf]
        %v240 = vld [vmem:[%s181 + $0xbc] sm:$0xf]
        %v241 = vld [vmem:[%s181 + $0xc0] sm:$0xf]
        %v242 = vld [vmem:[%s181 + $0xc4] sm:$0xf]
        %v243 = vld [vmem:[%s181 + $0xc8] sm:$0xf]
        %v244 = vld [vmem:[%s181 + $0xcc] sm:$0xf]
        %v245 = vld [vmem:[%s181 + $0xd0] sm:$0xf]
        %v246 = vld [vmem:[%s181 + $0xd4] sm:$0xf]
        %v247 = vld [vmem:[%s181 + $0xd8] sm:$0xf]
        %v248 = vld [vmem:[%s181 + $0xdc] sm:$0xf]
        %v249 = vld [vmem:[%s181 + $0xe0] sm:$0xf]
        %v250 = vld [vmem:[%s181 + $0xe4] sm:$0xf]
        %v251 = vld [vmem:[%s181 + $0xe8] sm:$0xf]
        %v252 = vld [vmem:[%s181 + $0xec] sm:$0xf]
        %v253 = vld [vmem:[%s181 + $0xf0] sm:$0xf]
        %v254 = vld [vmem:[%s181 + $0xf4] sm:$0xf]
        %v255 = vld [vmem:[%s181 + $0xf8] sm:$0xf]
        %v256 = vld [vmem:[%s181 + $0xfc] sm:$0xf]
        %v257 = vld [vmem:[%s1] sm:$0xf]
        %v258 = vld [vmem:[%s1 + $0x4] sm:$0xf]
        %v259 = vld [vmem:[%s1 + $0x8] sm:$0xf]
        %v260 = vld [vmem:[%s1 + $0xc] sm:$0x3]
        %v261 = vld [vmem:[%s2] sm:$0x1]
        %v263 = vlaneseq
        %v264 = vshrl.u32 %v263, 7
        %v265 = vsub.s32 0, %v264
        %v266 = vrot.slane %v261, %v265
        %v332 = vunpack.c.l.b16 %v193
        %v333 = vunpack.c.l.b16 %v194
        %v334 = vunpack.c.l.b16 %v195
        %v335 = vunpack.c.l.b16 %v196
        %v336 = vunpack.c.l.b16 %v197
        %v337 = vunpack.c.l.b16 %v198
        %v338 = vunpack.c.l.b16 %v199
        %v339 = vunpack.c.l.b16 %v200
        %v340 = vunpack.c.l.b16 %v201
        %v341 = vunpack.c.l.b16 %v202
        %v342 = vunpack.c.l.b16 %v203
        %v343 = vunpack.c.l.b16 %v204
        %v344 = vunpack.c.l.b16 %v205
        %v345 = vunpack.c.l.b16 %v206
        %v346 = vunpack.c.l.b16 %v207
        %v347 = vunpack.c.l.b16 %v208
        %v348 = vunpack.c.l.b16 %v209
        %v349 = vunpack.c.l.b16 %v210
        %v350 = vunpack.c.l.b16 %v211
        %v351 = vunpack.c.l.b16 %v212
        %v352 = vunpack.c.l.b16 %v213
        %v353 = vunpack.c.l.b16 %v214
        %v354 = vunpack.c.l.b16 %v215
        %v355 = vunpack.c.l.b16 %v216
        %v356 = vunpack.c.l.b16 %v217
        %v357 = vunpack.c.l.b16 %v218
        %v358 = vunpack.c.l.b16 %v219
        %v359 = vunpack.c.l.b16 %v220
        %v360 = vunpack.c.l.b16 %v221
        %v361 = vunpack.c.l.b16 %v222
        %v362 = vunpack.c.l.b16 %v223
        %v363 = vunpack.c.l.b16 %v224
        %v364 = vunpack.c.l.b16 %v225
        %v365 = vunpack.c.l.b16 %v226
        %v366 = vunpack.c.l.b16 %v227
        %v367 = vunpack.c.l.b16 %v228
        %v368 = vunpack.c.l.b16 %v229
        %v369 = vunpack.c.l.b16 %v230
        %v370 = vunpack.c.l.b16 %v231
        %v371 = vunpack.c.l.b16 %v232
        %v372 = vunpack.c.l.b16 %v233
        %v373 = vunpack.c.l.b16 %v234
        %v374 = vunpack.c.l.b16 %v235
        %v375 = vunpack.c.l.b16 %v236
        %v376 = vunpack.c.l.b16 %v237
        %v377 = vunpack.c.l.b16 %v238
        %v378 = vunpack.c.l.b16 %v239
        %v379 = vunpack.c.l.b16 %v240
        %v380 = vunpack.c.l.b16 %v241
        %v381 = vunpack.c.l.b16 %v242
        %v382 = vunpack.c.l.b16 %v243
        %v383 = vunpack.c.l.b16 %v244
        %v384 = vunpack.c.l.b16 %v245
        %v385 = vunpack.c.l.b16 %v246
        %v386 = vunpack.c.l.b16 %v247
        %v387 = vunpack.c.l.b16 %v248
        %v388 = vunpack.c.l.b16 %v249
        %v389 = vunpack.c.l.b16 %v250
        %v390 = vunpack.c.l.b16 %v251
        %v391 = vunpack.c.l.b16 %v252
        %v392 = vunpack.c.l.b16 %v253
        %v393 = vunpack.c.l.b16 %v254
        %v394 = vunpack.c.l.b16 %v255
        %v395 = vunpack.c.l.b16 %v256
        %v396 = vpack.c.b16 %v333, %v332
        %v397 = vpack.c.b16 %v335, %v334
        %v398 = vpack.c.b16 %v337, %v336
        %v399 = vpack.c.b16 %v339, %v338
        %v400 = vpack.c.b16 %v341, %v340
        %v401 = vpack.c.b16 %v343, %v342
        %v402 = vpack.c.b16 %v345, %v344
        %v403 = vpack.c.b16 %v347, %v346
        %v404 = vpack.c.b16 %v349, %v348
        %v405 = vpack.c.b16 %v351, %v350
        %v406 = vpack.c.b16 %v353, %v352
        %v407 = vpack.c.b16 %v355, %v354
        %v408 = vpack.c.b16 %v357, %v356
        %v409 = vpack.c.b16 %v359, %v358
        %v410 = vpack.c.b16 %v361, %v360
        %v411 = vpack.c.b16 %v363, %v362
        %v412 = vpack.c.b16 %v365, %v364
        %v413 = vpack.c.b16 %v367, %v366
        %v414 = vpack.c.b16 %v369, %v368
        %v415 = vpack.c.b16 %v371, %v370
        %v416 = vpack.c.b16 %v373, %v372
        %v417 = vpack.c.b16 %v375, %v374
        %v418 = vpack.c.b16 %v377, %v376
        %v419 = vpack.c.b16 %v379, %v378
        %v420 = vpack.c.b16 %v381, %v380
        %v421 = vpack.c.b16 %v383, %v382
        %v422 = vpack.c.b16 %v385, %v384
        %v423 = vpack.c.b16 %v387, %v386
        %v424 = vpack.c.b16 %v389, %v388
        %v425 = vpack.c.b16 %v391, %v390
        %v426 = vpack.c.b16 %v393, %v392
        %v427 = vpack.c.b16 %v395, %v394
        %v432 = vunpack.c.l.b16 %v257
        %v433 = vunpack.c.l.b16 %v258
        %v434 = vunpack.c.l.b16 %v259
        %v435 = vunpack.c.l.b16 %v260
        %v436 = vpack.c.b16 %v433, %v432
        %v437 = vpack.c.b16 %v435, %v434
        %vm439 = vcmask 220160
        %v441 = vsel %vm439, %v396, 0
        %v444 = vsel %vm439, %v397, 0
        %v447 = vsel %vm439, %v398, 0
        %v450 = vsel %vm439, %v399, 0
        %v453 = vsel %vm439, %v400, 0
        %v456 = vsel %vm439, %v401, 0
        %v459 = vsel %vm439, %v402, 0
        %v462 = vsel %vm439, %v403, 0
        %v465 = vsel %vm439, %v404, 0
        %v468 = vsel %vm439, %v405, 0
        %v471 = vsel %vm439, %v406, 0
        %v474 = vsel %vm439, %v407, 0
        %v477 = vsel %vm439, %v408, 0
        %v480 = vsel %vm439, %v409, 0
        %v483 = vsel %vm439, %v410, 0
        %v486 = vsel %vm439, %v411, 0
        %v489 = vsel %vm439, %v412, 0
        %v492 = vsel %vm439, %v413, 0
        %v495 = vsel %vm439, %v414, 0
        %v498 = vsel %vm439, %v415, 0
        %v501 = vsel %vm439, %v416, 0
        %v504 = vsel %vm439, %v417, 0
        %v507 = vsel %vm439, %v418, 0
        %v510 = vsel %vm439, %v419, 0
        %v513 = vsel %vm439, %v420, 0
        %v516 = vsel %vm439, %v421, 0
        %v519 = vsel %vm439, %v422, 0
        %v522 = vsel %vm439, %v423, 0
        %v525 = vsel %vm439, %v424, 0
        %v528 = vsel %vm439, %v425, 0
        %v531 = vsel %vm439, %v426, 0
        %v534 = vsel %vm439, %v427, 0
        %vm536 = vcmask 1044480
        %vm537 = vcmask 1045504
        %v538 = vsel %vm536, 4294967295, 65535
        %v539 = vsel %vm537, %v538, 0
        %v541 = vand.u32 %v437, %v539
        %543 = vmatprep.subr.bf16.mxu0 0
        %544 = vmatpush1.bf16.msra.mxu0 %v436
        %545 = vmatprep.subr.bf16.mxu0 0
        %546 = vmatpush1.bf16.msra.mxu0 %v541
        %547 = vmatprep.subr.bf16.mxu0 0
        %548 = vmatpush1.bf16.msra.mxu0 0
        %549 = vmatprep.subr.bf16.mxu0 0
        %550 = vmatpush1.bf16.msra.mxu0 0
        %551 = vmatprep.subr.bf16.mxu0 0
        %552 = vmatpush1.bf16.msra.mxu0 0
        %553 = vmatprep.subr.bf16.mxu0 0
        %554 = vmatpush1.bf16.msra.mxu0 0
        %555 = vmatprep.subr.bf16.mxu0 0
        %556 = vmatpush1.bf16.msra.mxu0 0
        %557 = vmatprep.subr.bf16.mxu0 0
        %558 = vmatpush1.bf16.msra.mxu0 0
        %559 = vmatprep.subr.bf16.mxu0 0
        %560 = vmatpush1.bf16.msra.mxu0 0
        %561 = vmatprep.subr.bf16.mxu0 0
        %562 = vmatpush1.bf16.msra.mxu0 0
        %563 = vmatprep.subr.bf16.mxu0 0
        %564 = vmatpush1.bf16.msra.mxu0 0
        %565 = vmatprep.subr.bf16.mxu0 0
        %566 = vmatpush1.bf16.msra.mxu0 0
        %567 = vmatprep.subr.bf16.mxu0 0
        %568 = vmatpush1.bf16.msra.mxu0 0
        %569 = vmatprep.subr.bf16.mxu0 0
        %570 = vmatpush1.bf16.msra.mxu0 0
        %571 = vmatprep.subr.bf16.mxu0 0
        %572 = vmatpush1.bf16.msra.mxu0 0
        %573 = vmatprep.subr.bf16.mxu0 0
        %574 = vmatpush1.bf16.msra.mxu0 0
        %575 = vmatprep.mubr.bf16.mxu0 0
        %576 = vmatmul.mubr.bf16.gmra.mrb[0].mxu0 %v441
        %v577 = vpop.f32.mrb[0].mxu0
        %v578 = vadd.f32 %v266, %v577
        %v579 = vpop.f32.mrb[0].mxu0
        %v580 = vpop.f32.mrb[0].mxu0
        %v581 = vadd.f32 %v266, %v580
        %v582 = vpop.f32.mrb[0].mxu0
        %583 = vmatprep.mubr.bf16.mxu0 0
        %584 = vmatmul.mubr.bf16.gmra.mrb[0].mxu0 %v444
        %v585 = vpop.f32.mrb[0].mxu0
        %v586 = vadd.f32 %v266, %v585
        %v587 = vpop.f32.mrb[0].mxu0
        %v588 = vpop.f32.mrb[0].mxu0
        %v589 = vadd.f32 %v266, %v588
        %v590 = vpop.f32.mrb[0].mxu0
        %591 = vmatprep.mubr.bf16.mxu0 0
        %592 = vmatmul.mubr.bf16.gmra.mrb[0].mxu0 %v447
        %v593 = vpop.f32.mrb[0].mxu0
        %v594 = vadd.f32 %v266, %v593
        %v595 = vpop.f32.mrb[0].mxu0
        %v596 = vpop.f32.mrb[0].mxu0
        %v597 = vadd.f32 %v266, %v596
        %v598 = vpop.f32.mrb[0].mxu0
        %599 = vmatprep.mubr.bf16.mxu0 0
        %600 = vmatmul.mubr.bf16.gmra.mrb[0].mxu0 %v450
        %v601 = vpop.f32.mrb[0].mxu0
        %v602 = vadd.f32 %v266, %v601
        %v603 = vpop.f32.mrb[0].mxu0
        %v604 = vpop.f32.mrb[0].mxu0
        %v605 = vadd.f32 %v266, %v604
        %v606 = vpop.f32.mrb[0].mxu0
        %607 = vmatprep.mubr.bf16.mxu0 0
        %608 = vmatmul.mubr.bf16.gmra.mrb[0].mxu0 %v453
        %v609 = vpop.f32.mrb[0].mxu0
        %v610 = vadd.f32 %v266, %v609
        %v611 = vpop.f32.mrb[0].mxu0
        %v612 = vpop.f32.mrb[0].mxu0
        %v613 = vadd.f32 %v266, %v612
        %v614 = vpop.f32.mrb[0].mxu0
        %615 = vmatprep.mubr.bf16.mxu0 0
        %616 = vmatmul.mubr.bf16.gmra.mrb[0].mxu0 %v456
        %v617 = vpop.f32.mrb[0].mxu0
        %v618 = vadd.f32 %v266, %v617
        %v619 = vpop.f32.mrb[0].mxu0
        %v620 = vpop.f32.mrb[0].mxu0
        %v621 = vadd.f32 %v266, %v620
        %v622 = vpop.f32.mrb[0].mxu0
        %623 = vmatprep.mubr.bf16.mxu0 0
        %624 = vmatmul.mubr.bf16.gmra.mrb[0].mxu0 %v459
        %v625 = vpop.f32.mrb[0].mxu0
        %v626 = vadd.f32 %v266, %v625
        %v627 = vpop.f32.mrb[0].mxu0
        %v628 = vpop.f32.mrb[0].mxu0
        %v629 = vadd.f32 %v266, %v628
        %v630 = vpop.f32.mrb[0].mxu0
        %631 = vmatprep.mubr.bf16.mxu0 0
        %632 = vmatmul.mubr.bf16.gmra.mrb[0].mxu0 %v462
        %v633 = vpop.f32.mrb[0].mxu0
        %v634 = vadd.f32 %v266, %v633
        %v635 = vpop.f32.mrb[0].mxu0
        %v636 = vpop.f32.mrb[0].mxu0
        %v637 = vadd.f32 %v266, %v636
        %v638 = vpop.f32.mrb[0].mxu0
        %639 = vmatprep.mubr.bf16.mxu0 0
        %640 = vmatmul.mubr.bf16.gmra.mrb[0].mxu0 %v465
        %v641 = vpop.f32.mrb[0].mxu0
        %v642 = vadd.f32 %v266, %v641
        %v643 = vpop.f32.mrb[0].mxu0
        %v644 = vpop.f32.mrb[0].mxu0
        %v645 = vadd.f32 %v266, %v644
        %v646 = vpop.f32.mrb[0].mxu0
        %647 = vmatprep.mubr.bf16.mxu0 0
        %648 = vmatmul.mubr.bf16.gmra.mrb[0].mxu0 %v468
        %v649 = vpop.f32.mrb[0].mxu0
        %v650 = vadd.f32 %v266, %v649
        %v651 = vpop.f32.mrb[0].mxu0
        %v652 = vpop.f32.mrb[0].mxu0
        %v653 = vadd.f32 %v266, %v652
        %v654 = vpop.f32.mrb[0].mxu0
        %655 = vmatprep.mubr.bf16.mxu0 0
        %656 = vmatmul.mubr.bf16.gmra.mrb[0].mxu0 %v471
        %v657 = vpop.f32.mrb[0].mxu0
        %v658 = vadd.f32 %v266, %v657
        %v659 = vpop.f32.mrb[0].mxu0
        %v660 = vpop.f32.mrb[0].mxu0
        %v661 = vadd.f32 %v266, %v660
        %v662 = vpop.f32.mrb[0].mxu0
        %663 = vmatprep.mubr.bf16.mxu0 0
        %664 = vmatmul.mubr.bf16.gmra.mrb[0].mxu0 %v474
        %v665 = vpop.f32.mrb[0].mxu0
        %v666 = vadd.f32 %v266, %v665
        %v667 = vpop.f32.mrb[0].mxu0
        %v668 = vpop.f32.mrb[0].mxu0
        %v669 = vadd.f32 %v266, %v668
        %v670 = vpop.f32.mrb[0].mxu0
        %671 = vmatprep.mubr.bf16.mxu0 0
        %672 = vmatmul.mubr.bf16.gmra.mrb[0].mxu0 %v477
        %v673 = vpop.f32.mrb[0].mxu0
        %v674 = vadd.f32 %v266, %v673
        %v675 = vpop.f32.mrb[0].mxu0
        %v676 = vpop.f32.mrb[0].mxu0
        %v677 = vadd.f32 %v266, %v676
        %v678 = vpop.f32.mrb[0].mxu0
        %679 = vmatprep.mubr.bf16.mxu0 0
        %680 = vmatmul.mubr.bf16.gmra.mrb[0].mxu0 %v480
        %v681 = vpop.f32.mrb[0].mxu0
        %v682 = vadd.f32 %v266, %v681
        %v683 = vpop.f32.mrb[0].mxu0
        %v684 = vpop.f32.mrb[0].mxu0
        %v685 = vadd.f32 %v266, %v684
        %v686 = vpop.f32.mrb[0].mxu0
        %687 = vmatprep.mubr.bf16.mxu0 0
        %688 = vmatmul.mubr.bf16.gmra.mrb[0].mxu0 %v483
        %v689 = vpop.f32.mrb[0].mxu0
        %v690 = vadd.f32 %v266, %v689
        %v691 = vpop.f32.mrb[0].mxu0
        %v692 = vpop.f32.mrb[0].mxu0
        %v693 = vadd.f32 %v266, %v692
        %v694 = vpop.f32.mrb[0].mxu0
        %695 = vmatprep.mubr.bf16.mxu0 0
        %696 = vmatmul.mubr.bf16.gmra.mrb[0].mxu0 %v486
        %v697 = vpop.f32.mrb[0].mxu0
        %v698 = vadd.f32 %v266, %v697
        %v699 = vpop.f32.mrb[0].mxu0
        %v700 = vpop.f32.mrb[0].mxu0
        %v701 = vadd.f32 %v266, %v700
        %v702 = vpop.f32.mrb[0].mxu0
        %703 = vmatprep.mubr.bf16.mxu0 0
        %704 = vmatmul.mubr.bf16.gmra.mrb[0].mxu0 %v489
        %v705 = vpop.f32.mrb[0].mxu0
        %v706 = vadd.f32 %v266, %v705
        %v707 = vpop.f32.mrb[0].mxu0
        %v708 = vpop.f32.mrb[0].mxu0
        %v709 = vadd.f32 %v266, %v708
        %v710 = vpop.f32.mrb[0].mxu0
        %711 = vmatprep.mubr.bf16.mxu0 0
        %712 = vmatmul.mubr.bf16.gmra.mrb[0].mxu0 %v492
        %v713 = vpop.f32.mrb[0].mxu0
        %v714 = vadd.f32 %v266, %v713
        %v715 = vpop.f32.mrb[0].mxu0
        %v716 = vpop.f32.mrb[0].mxu0
        %v717 = vadd.f32 %v266, %v716
        %v718 = vpop.f32.mrb[0].mxu0
        %719 = vmatprep.mubr.bf16.mxu0 0
        %720 = vmatmul.mubr.bf16.gmra.mrb[0].mxu0 %v495
        %v721 = vpop.f32.mrb[0].mxu0
        %v722 = vadd.f32 %v266, %v721
        %v723 = vpop.f32.mrb[0].mxu0
        %v724 = vpop.f32.mrb[0].mxu0
        %v725 = vadd.f32 %v266, %v724
        %v726 = vpop.f32.mrb[0].mxu0
        %727 = vmatprep.mubr.bf16.mxu0 0
        %728 = vmatmul.mubr.bf16.gmra.mrb[0].mxu0 %v498
        %v729 = vpop.f32.mrb[0].mxu0
        %v730 = vadd.f32 %v266, %v729
        %v731 = vpop.f32.mrb[0].mxu0
        %v732 = vpop.f32.mrb[0].mxu0
        %v733 = vadd.f32 %v266, %v732
        %v734 = vpop.f32.mrb[0].mxu0
        %735 = vmatprep.mubr.bf16.mxu0 0
        %736 = vmatmul.mubr.bf16.gmra.mrb[0].mxu0 %v501
        %v737 = vpop.f32.mrb[0].mxu0
        %v738 = vadd.f32 %v266, %v737
        %v739 = vpop.f32.mrb[0].mxu0
        %v740 = vpop.f32.mrb[0].mxu0
        %v741 = vadd.f32 %v266, %v740
        %v742 = vpop.f32.mrb[0].mxu0
        %743 = vmatprep.mubr.bf16.mxu0 0
        %744 = vmatmul.mubr.bf16.gmra.mrb[0].mxu0 %v504
        %v745 = vpop.f32.mrb[0].mxu0
        %v746 = vadd.f32 %v266, %v745
        %v747 = vpop.f32.mrb[0].mxu0
        %v748 = vpop.f32.mrb[0].mxu0
        %v749 = vadd.f32 %v266, %v748
        %v750 = vpop.f32.mrb[0].mxu0
        %751 = vmatprep.mubr.bf16.mxu0 0
        %752 = vmatmul.mubr.bf16.gmra.mrb[0].mxu0 %v507
        %v753 = vpop.f32.mrb[0].mxu0
        %v754 = vadd.f32 %v266, %v753
        %v755 = vpop.f32.mrb[0].mxu0
        %v756 = vpop.f32.mrb[0].mxu0
        %v757 = vadd.f32 %v266, %v756
        %v758 = vpop.f32.mrb[0].mxu0
        %759 = vmatprep.mubr.bf16.mxu0 0
        %760 = vmatmul.mubr.bf16.gmra.mrb[0].mxu0 %v510
        %v761 = vpop.f32.mrb[0].mxu0
        %v762 = vadd.f32 %v266, %v761
        %v763 = vpop.f32.mrb[0].mxu0
        %v764 = vpop.f32.mrb[0].mxu0
        %v765 = vadd.f32 %v266, %v764
        %v766 = vpop.f32.mrb[0].mxu0
        %767 = vmatprep.mubr.bf16.mxu0 0
        %768 = vmatmul.mubr.bf16.gmra.mrb[0].mxu0 %v513
        %v769 = vpop.f32.mrb[0].mxu0
        %v770 = vadd.f32 %v266, %v769
        %v771 = vpop.f32.mrb[0].mxu0
        %v772 = vpop.f32.mrb[0].mxu0
        %v773 = vadd.f32 %v266, %v772
        %v774 = vpop.f32.mrb[0].mxu0
        %775 = vmatprep.mubr.bf16.mxu0 0
        %776 = vmatmul.mubr.bf16.gmra.mrb[0].mxu0 %v516
        %v777 = vpop.f32.mrb[0].mxu0
        %v778 = vadd.f32 %v266, %v777
        %v779 = vpop.f32.mrb[0].mxu0
        %v780 = vpop.f32.mrb[0].mxu0
        %v781 = vadd.f32 %v266, %v780
        %v782 = vpop.f32.mrb[0].mxu0
        %783 = vmatprep.mubr.bf16.mxu0 0
        %784 = vmatmul.mubr.bf16.gmra.mrb[0].mxu0 %v519
        %v785 = vpop.f32.mrb[0].mxu0
        %v786 = vadd.f32 %v266, %v785
        %v787 = vpop.f32.mrb[0].mxu0
        %v788 = vpop.f32.mrb[0].mxu0
        %v789 = vadd.f32 %v266, %v788
        %v790 = vpop.f32.mrb[0].mxu0
        %791 = vmatprep.mubr.bf16.mxu0 0
        %792 = vmatmul.mubr.bf16.gmra.mrb[0].mxu0 %v522
        %v793 = vpop.f32.mrb[0].mxu0
        %v794 = vadd.f32 %v266, %v793
        %v795 = vpop.f32.mrb[0].mxu0
        %v796 = vpop.f32.mrb[0].mxu0
        %v797 = vadd.f32 %v266, %v796
        %v798 = vpop.f32.mrb[0].mxu0
        %799 = vmatprep.mubr.bf16.mxu0 0
        %800 = vmatmul.mubr.bf16.gmra.mrb[0].mxu0 %v525
        %v801 = vpop.f32.mrb[0].mxu0
        %v802 = vadd.f32 %v266, %v801
        %v803 = vpop.f32.mrb[0].mxu0
        %v804 = vpop.f32.mrb[0].mxu0
        %v805 = vadd.f32 %v266, %v804
        %v806 = vpop.f32.mrb[0].mxu0
        %807 = vmatprep.mubr.bf16.mxu0 0
        %808 = vmatmul.mubr.bf16.gmra.mrb[0].mxu0 %v528
        %v809 = vpop.f32.mrb[0].mxu0
        %v810 = vadd.f32 %v266, %v809
        %v811 = vpop.f32.mrb[0].mxu0
        %v812 = vpop.f32.mrb[0].mxu0
        %v813 = vadd.f32 %v266, %v812
        %v814 = vpop.f32.mrb[0].mxu0
        %815 = vmatprep.mubr.bf16.mxu0 0
        %816 = vmatmul.mubr.bf16.gmra.mrb[0].mxu0 %v531
        %v817 = vpop.f32.mrb[0].mxu0
        %v818 = vadd.f32 %v266, %v817
        %v819 = vpop.f32.mrb[0].mxu0
        %v820 = vpop.f32.mrb[0].mxu0
        %v821 = vadd.f32 %v266, %v820
        %v822 = vpop.f32.mrb[0].mxu0
        %823 = vmatprep.mubr.bf16.mxu0 0
        %824 = vmatmul.mubr.bf16.gmra.mrb[0].mxu0 %v534
        %v825 = vpop.f32.mrb[0].mxu0
        %v826 = vadd.f32 %v266, %v825
        %v827 = vpop.f32.mrb[0].mxu0
        %v828 = vpop.f32.mrb[0].mxu0
        %v829 = vadd.f32 %v266, %v828
        %v830 = vpop.f32.mrb[0].mxu0
        %831 = vdwg.mxu0
        %v832 = vmax.f32 %v578, 0.0
        %v833 = vmax.f32 %v581, 0.0
        %v834 = vmax.f32 %v586, 0.0
        %v835 = vmax.f32 %v589, 0.0
        %v836 = vmax.f32 %v594, 0.0
        %v837 = vmax.f32 %v597, 0.0
        %v838 = vmax.f32 %v602, 0.0
        %v839 = vmax.f32 %v605, 0.0
        %v840 = vmax.f32 %v610, 0.0
        %v841 = vmax.f32 %v613, 0.0
        %v842 = vmax.f32 %v618, 0.0
        %v843 = vmax.f32 %v621, 0.0
        %v844 = vmax.f32 %v626, 0.0
        %v845 = vmax.f32 %v629, 0.0
        %v846 = vmax.f32 %v634, 0.0
        %v847 = vmax.f32 %v637, 0.0
        %v848 = vmax.f32 %v642, 0.0
        %v849 = vmax.f32 %v645, 0.0
        %v850 = vmax.f32 %v650, 0.0
        %v851 = vmax.f32 %v653, 0.0
        %v852 = vmax.f32 %v658, 0.0
        %v853 = vmax.f32 %v661, 0.0
        %v854 = vmax.f32 %v666, 0.0
        %v855 = vmax.f32 %v669, 0.0
        %v856 = vmax.f32 %v674, 0.0
        %v857 = vmax.f32 %v677, 0.0
        %v858 = vmax.f32 %v682, 0.0
        %v859 = vmax.f32 %v685, 0.0
        %v860 = vmax.f32 %v690, 0.0
        %v861 = vmax.f32 %v693, 0.0
        %v862 = vmax.f32 %v698, 0.0
        %v863 = vmax.f32 %v701, 0.0
        %v864 = vmax.f32 %v706, 0.0
        %v865 = vmax.f32 %v709, 0.0
        %v866 = vmax.f32 %v714, 0.0
        %v867 = vmax.f32 %v717, 0.0
        %v868 = vmax.f32 %v722, 0.0
        %v869 = vmax.f32 %v725, 0.0
        %v870 = vmax.f32 %v730, 0.0
        %v871 = vmax.f32 %v733, 0.0
        %v872 = vmax.f32 %v738, 0.0
        %v873 = vmax.f32 %v741, 0.0
        %v874 = vmax.f32 %v746, 0.0
        %v875 = vmax.f32 %v749, 0.0
        %v876 = vmax.f32 %v754, 0.0
        %v877 = vmax.f32 %v757, 0.0
        %v878 = vmax.f32 %v762, 0.0
        %v879 = vmax.f32 %v765, 0.0
        %v880 = vmax.f32 %v770, 0.0
        %v881 = vmax.f32 %v773, 0.0
        %v882 = vmax.f32 %v778, 0.0
        %v883 = vmax.f32 %v781, 0.0
        %v884 = vmax.f32 %v786, 0.0
        %v885 = vmax.f32 %v789, 0.0
        %v886 = vmax.f32 %v794, 0.0
        %v887 = vmax.f32 %v797, 0.0
        %v888 = vmax.f32 %v802, 0.0
        %v889 = vmax.f32 %v805, 0.0
        %v890 = vmax.f32 %v810, 0.0
        %v891 = vmax.f32 %v813, 0.0
        %v892 = vmax.f32 %v818, 0.0
        %v893 = vmax.f32 %v821, 0.0
        %v894 = vmax.f32 %v826, 0.0
        %v895 = vmax.f32 %v829, 0.0
        %v896 = vpack.c.bf16 %v833, %v832
        %v897 = vpack.c.bf16 %v835, %v834
        %v898 = vpack.c.bf16 %v837, %v836
        %v899 = vpack.c.bf16 %v839, %v838
        %v900 = vpack.c.bf16 %v841, %v840
        %v901 = vpack.c.bf16 %v843, %v842
        %v902 = vpack.c.bf16 %v845, %v844
        %v903 = vpack.c.bf16 %v847, %v846
        %v904 = vpack.c.bf16 %v849, %v848
        %v905 = vpack.c.bf16 %v851, %v850
        %v906 = vpack.c.bf16 %v853, %v852
        %v907 = vpack.c.bf16 %v855, %v854
        %v908 = vpack.c.bf16 %v857, %v856
        %v909 = vpack.c.bf16 %v859, %v858
        %v910 = vpack.c.bf16 %v861, %v860
        %v911 = vpack.c.bf16 %v863, %v862
        %v912 = vpack.c.bf16 %v865, %v864
        %v913 = vpack.c.bf16 %v867, %v866
        %v914 = vpack.c.bf16 %v869, %v868
        %v915 = vpack.c.bf16 %v871, %v870
        %v916 = vpack.c.bf16 %v873, %v872
        %v917 = vpack.c.bf16 %v875, %v874
        %v918 = vpack.c.bf16 %v877, %v876
        %v919 = vpack.c.bf16 %v879, %v878
        %v920 = vpack.c.bf16 %v881, %v880
        %v921 = vpack.c.bf16 %v883, %v882
        %v922 = vpack.c.bf16 %v885, %v884
        %v923 = vpack.c.bf16 %v887, %v886
        %v924 = vpack.c.bf16 %v889, %v888
        %v925 = vpack.c.bf16 %v891, %v890
        %v926 = vpack.c.bf16 %v893, %v892
        %v927 = vpack.c.bf16 %v895, %v894
        %v960 = vunpack.c.l.b16 %v896
        %v961 = vunpack.c.h.b16 %v896
        %v962 = vunpack.c.l.b16 %v897
        %v963 = vunpack.c.h.b16 %v897
        %v964 = vunpack.c.l.b16 %v898
        %v965 = vunpack.c.h.b16 %v898
        %v966 = vunpack.c.l.b16 %v899
        %v967 = vunpack.c.h.b16 %v899
        %v968 = vunpack.c.l.b16 %v900
        %v969 = vunpack.c.h.b16 %v900
        %v970 = vunpack.c.l.b16 %v901
        %v971 = vunpack.c.h.b16 %v901
        %v972 = vunpack.c.l.b16 %v902
        %v973 = vunpack.c.h.b16 %v902
        %v974 = vunpack.c.l.b16 %v903
        %v975 = vunpack.c.h.b16 %v903
        %v976 = vunpack.c.l.b16 %v904
        %v977 = vunpack.c.h.b16 %v904
        %v978 = vunpack.c.l.b16 %v905
        %v979 = vunpack.c.h.b16 %v905
        %v980 = vunpack.c.l.b16 %v906
        %v981 = vunpack.c.h.b16 %v906
        %v982 = vunpack.c.l.b16 %v907
        %v983 = vunpack.c.h.b16 %v907
        %v984 = vunpack.c.l.b16 %v908
        %v985 = vunpack.c.h.b16 %v908
        %v986 = vunpack.c.l.b16 %v909
        %v987 = vunpack.c.h.b16 %v909
        %v988 = vunpack.c.l.b16 %v910
        %v989 = vunpack.c.h.b16 %v910
        %v990 = vunpack.c.l.b16 %v911
        %v991 = vunpack.c.h.b16 %v911
        %v992 = vunpack.c.l.b16 %v912
        %v993 = vunpack.c.h.b16 %v912
        %v994 = vunpack.c.l.b16 %v913
        %v995 = vunpack.c.h.b16 %v913
        %v996 = vunpack.c.l.b16 %v914
        %v997 = vunpack.c.h.b16 %v914
        %v998 = vunpack.c.l.b16 %v915
        %v999 = vunpack.c.h.b16 %v915
        %v1000 = vunpack.c.l.b16 %v916
        %v1001 = vunpack.c.h.b16 %v916
        %v1002 = vunpack.c.l.b16 %v917
        %v1003 = vunpack.c.h.b16 %v917
        %v1004 = vunpack.c.l.b16 %v918
        %v1005 = vunpack.c.h.b16 %v918
        %v1006 = vunpack.c.l.b16 %v919
        %v1007 = vunpack.c.h.b16 %v919
        %v1008 = vunpack.c.l.b16 %v920
        %v1009 = vunpack.c.h.b16 %v920
        %v1010 = vunpack.c.l.b16 %v921
        %v1011 = vunpack.c.h.b16 %v921
        %v1012 = vunpack.c.l.b16 %v922
        %v1013 = vunpack.c.h.b16 %v922
        %v1014 = vunpack.c.l.b16 %v923
        %v1015 = vunpack.c.h.b16 %v923
        %v1016 = vunpack.c.l.b16 %v924
        %v1017 = vunpack.c.h.b16 %v924
        %v1018 = vunpack.c.l.b16 %v925
        %v1019 = vunpack.c.h.b16 %v925
        %v1020 = vunpack.c.l.b16 %v926
        %v1021 = vunpack.c.h.b16 %v926
        %v1022 = vunpack.c.l.b16 %v927
        %v1023 = vunpack.c.h.b16 %v927
        %v1024 = vpack.c.b16 %v960, %v960
        %v1025 = vpack.c.b16 %v961, %v961
        %v1026 = vpack.c.b16 %v962, %v962
        %v1027 = vpack.c.b16 %v963, %v963
        %v1028 = vpack.c.b16 %v964, %v964
        %v1029 = vpack.c.b16 %v965, %v965
        %v1030 = vpack.c.b16 %v966, %v966
        %v1031 = vpack.c.b16 %v967, %v967
        %v1032 = vpack.c.b16 %v968, %v968
        %v1033 = vpack.c.b16 %v969, %v969
        %v1034 = vpack.c.b16 %v970, %v970
        %v1035 = vpack.c.b16 %v971, %v971
        %v1036 = vpack.c.b16 %v972, %v972
        %v1037 = vpack.c.b16 %v973, %v973
        %v1038 = vpack.c.b16 %v974, %v974
        %v1039 = vpack.c.b16 %v975, %v975
        %v1040 = vpack.c.b16 %v976, %v976
        %v1041 = vpack.c.b16 %v977, %v977
        %v1042 = vpack.c.b16 %v978, %v978
        %v1043 = vpack.c.b16 %v979, %v979
        %v1044 = vpack.c.b16 %v980, %v980
        %v1045 = vpack.c.b16 %v981, %v981
        %v1046 = vpack.c.b16 %v982, %v982
        %v1047 = vpack.c.b16 %v983, %v983
        %v1048 = vpack.c.b16 %v984, %v984
        %v1049 = vpack.c.b16 %v985, %v985
        %v1050 = vpack.c.b16 %v986, %v986
        %v1051 = vpack.c.b16 %v987, %v987
        %v1052 = vpack.c.b16 %v988, %v988
        %v1053 = vpack.c.b16 %v989, %v989
        %v1054 = vpack.c.b16 %v990, %v990
        %v1055 = vpack.c.b16 %v991, %v991
        %v1056 = vpack.c.b16 %v992, %v992
        %v1057 = vpack.c.b16 %v993, %v993
        %v1058 = vpack.c.b16 %v994, %v994
        %v1059 = vpack.c.b16 %v995, %v995
        %v1060 = vpack.c.b16 %v996, %v996
        %v1061 = vpack.c.b16 %v997, %v997
        %v1062 = vpack.c.b16 %v998, %v998
        %v1063 = vpack.c.b16 %v999, %v999
        %v1064 = vpack.c.b16 %v1000, %v1000
        %v1065 = vpack.c.b16 %v1001, %v1001
        %v1066 = vpack.c.b16 %v1002, %v1002
        %v1067 = vpack.c.b16 %v1003, %v1003
        %v1068 = vpack.c.b16 %v1004, %v1004
        %v1069 = vpack.c.b16 %v1005, %v1005
        %v1070 = vpack.c.b16 %v1006, %v1006
        %v1071 = vpack.c.b16 %v1007, %v1007
        %v1072 = vpack.c.b16 %v1008, %v1008
        %v1073 = vpack.c.b16 %v1009, %v1009
        %v1074 = vpack.c.b16 %v1010, %v1010
        %v1075 = vpack.c.b16 %v1011, %v1011
        %v1076 = vpack.c.b16 %v1012, %v1012
        %v1077 = vpack.c.b16 %v1013, %v1013
        %v1078 = vpack.c.b16 %v1014, %v1014
        %v1079 = vpack.c.b16 %v1015, %v1015
        %v1080 = vpack.c.b16 %v1016, %v1016
        %v1081 = vpack.c.b16 %v1017, %v1017
        %v1082 = vpack.c.b16 %v1018, %v1018
        %v1083 = vpack.c.b16 %v1019, %v1019
        %v1084 = vpack.c.b16 %v1020, %v1020
        %v1085 = vpack.c.b16 %v1021, %v1021
        %v1086 = vpack.c.b16 %v1022, %v1022
        %v1087 = vpack.c.b16 %v1023, %v1023
        %vm1152 = vcmask 60416
        %1153 = vst.msk [vmem:[%s172] sm:$0xf] %vm1152, %v1024
        %1154 = vst.msk [vmem:[%s172 + $0x4] sm:$0xf] %vm1152, %v1025
        %1155 = vst.msk [vmem:[%s172 + $0x8] sm:$0xf] %vm1152, %v1026
        %1156 = vst.msk [vmem:[%s172 + $0xc] sm:$0xf] %vm1152, %v1027
        %1157 = vst.msk [vmem:[%s172 + $0x10] sm:$0xf] %vm1152, %v1028
        %1158 = vst.msk [vmem:[%s172 + $0x14] sm:$0xf] %vm1152, %v1029
        %1159 = vst.msk [vmem:[%s172 + $0x18] sm:$0xf] %vm1152, %v1030
        %1160 = vst.msk [vmem:[%s172 + $0x1c] sm:$0xf] %vm1152, %v1031
        %1161 = vst.msk [vmem:[%s172 + $0x20] sm:$0xf] %vm1152, %v1032
        %1162 = vst.msk [vmem:[%s172 + $0x24] sm:$0xf] %vm1152, %v1033
        %1163 = vst.msk [vmem:[%s172 + $0x28] sm:$0xf] %vm1152, %v1034
        %1164 = vst.msk [vmem:[%s172 + $0x2c] sm:$0xf] %vm1152, %v1035
        %1165 = vst.msk [vmem:[%s172 + $0x30] sm:$0xf] %vm1152, %v1036
        %1166 = vst.msk [vmem:[%s172 + $0x34] sm:$0xf] %vm1152, %v1037
        %1167 = vst.msk [vmem:[%s172 + $0x38] sm:$0xf] %vm1152, %v1038
        %1168 = vst.msk [vmem:[%s172 + $0x3c] sm:$0xf] %vm1152, %v1039
        %1169 = vst.msk [vmem:[%s172 + $0x40] sm:$0xf] %vm1152, %v1040
        %1170 = vst.msk [vmem:[%s172 + $0x44] sm:$0xf] %vm1152, %v1041
        %1171 = vst.msk [vmem:[%s172 + $0x48] sm:$0xf] %vm1152, %v1042
        %1172 = vst.msk [vmem:[%s172 + $0x4c] sm:$0xf] %vm1152, %v1043
        %1173 = vst.msk [vmem:[%s172 + $0x50] sm:$0xf] %vm1152, %v1044
        %1174 = vst.msk [vmem:[%s172 + $0x54] sm:$0xf] %vm1152, %v1045
        %1175 = vst.msk [vmem:[%s172 + $0x58] sm:$0xf] %vm1152, %v1046
        %1176 = vst.msk [vmem:[%s172 + $0x5c] sm:$0xf] %vm1152, %v1047
        %1177 = vst.msk [vmem:[%s172 + $0x60] sm:$0xf] %vm1152, %v1048
        %1178 = vst.msk [vmem:[%s172 + $0x64] sm:$0xf] %vm1152, %v1049
        %1179 = vst.msk [vmem:[%s172 + $0x68] sm:$0xf] %vm1152, %v1050
        %1180 = vst.msk [vmem:[%s172 + $0x6c] sm:$0xf] %vm1152, %v1051
        %1181 = vst.msk [vmem:[%s172 + $0x70] sm:$0xf] %vm1152, %v1052
        %1182 = vst.msk [vmem:[%s172 + $0x74] sm:$0xf] %vm1152, %v1053
        %1183 = vst.msk [vmem:[%s172 + $0x78] sm:$0xf] %vm1152, %v1054
        %1184 = vst.msk [vmem:[%s172 + $0x7c] sm:$0xf] %vm1152, %v1055
        %1185 = vst.msk [vmem:[%s172 + $0x80] sm:$0xf] %vm1152, %v1056
        %1186 = vst.msk [vmem:[%s172 + $0x84] sm:$0xf] %vm1152, %v1057
        %1187 = vst.msk [vmem:[%s172 + $0x88] sm:$0xf] %vm1152, %v1058
        %1188 = vst.msk [vmem:[%s172 + $0x8c] sm:$0xf] %vm1152, %v1059
        %1189 = vst.msk [vmem:[%s172 + $0x90] sm:$0xf] %vm1152, %v1060
        %1190 = vst.msk [vmem:[%s172 + $0x94] sm:$0xf] %vm1152, %v1061
        %1191 = vst.msk [vmem:[%s172 + $0x98] sm:$0xf] %vm1152, %v1062
        %1192 = vst.msk [vmem:[%s172 + $0x9c] sm:$0xf] %vm1152, %v1063
        %1193 = vst.msk [vmem:[%s172 + $0xa0] sm:$0xf] %vm1152, %v1064
        %1194 = vst.msk [vmem:[%s172 + $0xa4] sm:$0xf] %vm1152, %v1065
        %1195 = vst.msk [vmem:[%s172 + $0xa8] sm:$0xf] %vm1152, %v1066
        %1196 = vst.msk [vmem:[%s172 + $0xac] sm:$0xf] %vm1152, %v1067
        %1197 = vst.msk [vmem:[%s172 + $0xb0] sm:$0xf] %vm1152, %v1068
        %1198 = vst.msk [vmem:[%s172 + $0xb4] sm:$0xf] %vm1152, %v1069
        %1199 = vst.msk [vmem:[%s172 + $0xb8] sm:$0xf] %vm1152, %v1070
        %1200 = vst.msk [vmem:[%s172 + $0xbc] sm:$0xf] %vm1152, %v1071
        %1201 = vst.msk [vmem:[%s172 + $0xc0] sm:$0xf] %vm1152, %v1072
        %1202 = vst.msk [vmem:[%s172 + $0xc4] sm:$0xf] %vm1152, %v1073
        %1203 = vst.msk [vmem:[%s172 + $0xc8] sm:$0xf] %vm1152, %v1074
        %1204 = vst.msk [vmem:[%s172 + $0xcc] sm:$0xf] %vm1152, %v1075
        %1205 = vst.msk [vmem:[%s172 + $0xd0] sm:$0xf] %vm1152, %v1076
        %1206 = vst.msk [vmem:[%s172 + $0xd4] sm:$0xf] %vm1152, %v1077
        %1207 = vst.msk [vmem:[%s172 + $0xd8] sm:$0xf] %vm1152, %v1078
        %1208 = vst.msk [vmem:[%s172 + $0xdc] sm:$0xf] %vm1152, %v1079
        %1209 = vst.msk [vmem:[%s172 + $0xe0] sm:$0xf] %vm1152, %v1080
        %1210 = vst.msk [vmem:[%s172 + $0xe4] sm:$0xf] %vm1152, %v1081
        %1211 = vst.msk [vmem:[%s172 + $0xe8] sm:$0xf] %vm1152, %v1082
        %1212 = vst.msk [vmem:[%s172 + $0xec] sm:$0xf] %vm1152, %v1083
        %1213 = vst.msk [vmem:[%s172 + $0xf0] sm:$0xf] %vm1152, %v1084
        %1214 = vst.msk [vmem:[%s172 + $0xf4] sm:$0xf] %vm1152, %v1085
        %1215 = vst.msk [vmem:[%s172 + $0xf8] sm:$0xf] %vm1152, %v1086
        %1216 = vst.msk [vmem:[%s172 + $0xfc] sm:$0xf] %vm1152, %v1087
        %s1217 = sand.u32 %s90, 1
        %s1218 = sand.u32 %s90, 1
        %s1219 = smul.addr %s1218, 256
        %s1220 = scalar_lea.vmem [#allocation2], %s1219
        // Predicated region
        $region33: #{geddnet_forward.23} parent=31 // pred_check
          %p1221 = pneg %p100
        $region34: #{geddnet_forward.23} parent=31 // pred_check_branch
          %1223 = sbr.rel (%p1221) target = $region36
        $region35: #{geddnet_forward.23} parent=31 // pred_region
          %s1224 = smul.u32 64, %s14
          %s1225 = ssub.s32 121, %s1224
          %p1226 = scmp.lt.s32.totalorder %s1225, 64
          %s1227 = scalar_select %p1226, %s1225, 64
          %s1228 = smul.u32 64, %s1227
          %p1229 = scmp.ne.s32.totalorder 0, %s1228
          %s1230 = smul.addr %s1224, 4
          %s1231 = scalar_lea.vmem %s3, %s1230
          // Predicated region
          $region37: #{geddnet_forward.23} parent=35 // pred_check
            %p1232 = pneg %p1229
          $region38: #{geddnet_forward.23} parent=35 // pred_check_branch
            %1234 = sbr.rel (%p1232) target = $region40
          $region39: #{geddnet_forward.23} parent=35 // pred_region
            // Predicated region
            $region41: #{geddnet_forward.23} parent=39 // pred_check
              _
            $region42: #{geddnet_forward.23} parent=39 // pred_check_branch
              %1236 = sbr.rel target = $region44
            $region43: #{geddnet_forward.23} parent=39 // pred_region
              // Predicated region
              $region63: #{geddnet_forward.23} parent=43 // pred_check
                _
              $region64: #{geddnet_forward.23} parent=43 // pred_check_branch
                %1411 = sbr.rel (0) target = $region66
              $region65: #{geddnet_forward.23} parent=43 // pred_region
                %s1413 = sshrl.u32 %s1227, 6
                // While loop
                $region67: #{geddnet_forward.23} parent=65 // loop_pre_header
                  _
                $region68: #{geddnet_forward.23} parent=65 // loop_header
                  %s1415 = sphi 0, %s1417
                  %p1416 = scmp.ge.s32.totalorder %s1415, %s1413
                  %s1420 = sphi 0, %s1553
                  %s1421 = sphi %s1220, %s1556
                  %s1422 = sphi %s1231, %s1557
                $region69: #{geddnet_forward.23} parent=65 // loop_header_branch
                  %1419 = sbr.rel (%p1416) target = $region73
                $region70: #{geddnet_forward.23} parent=65 // loop_body
                  %v1423 = vld [vmem:[%s1421] sm:$0xf]
                  %1424 = vst [vmem:[%s1422] sm:$0xf] %v1423
                  %v1425 = vld [vmem:[%s1421 + $0x4] sm:$0xf]
                  %1426 = vst [vmem:[%s1422 + $0x4] sm:$0xf] %v1425
                  %v1427 = vld [vmem:[%s1421 + $0x8] sm:$0xf]
                  %1428 = vst [vmem:[%s1422 + $0x8] sm:$0xf] %v1427
                  %v1429 = vld [vmem:[%s1421 + $0xc] sm:$0xf]
                  %1430 = vst [vmem:[%s1422 + $0xc] sm:$0xf] %v1429
                  %v1431 = vld [vmem:[%s1421 + $0x10] sm:$0xf]
                  %1432 = vst [vmem:[%s1422 + $0x10] sm:$0xf] %v1431
                  %v1433 = vld [vmem:[%s1421 + $0x14] sm:$0xf]
                  %1434 = vst [vmem:[%s1422 + $0x14] sm:$0xf] %v1433
                  %v1435 = vld [vmem:[%s1421 + $0x18] sm:$0xf]
                  %1436 = vst [vmem:[%s1422 + $0x18] sm:$0xf] %v1435
                  %v1437 = vld [vmem:[%s1421 + $0x1c] sm:$0xf]
                  %1438 = vst [vmem:[%s1422 + $0x1c] sm:$0xf] %v1437
                  %v1439 = vld [vmem:[%s1421 + $0x20] sm:$0xf]
                  %1440 = vst [vmem:[%s1422 + $0x20] sm:$0xf] %v1439
                  %v1441 = vld [vmem:[%s1421 + $0x24] sm:$0xf]
                  %1442 = vst [vmem:[%s1422 + $0x24] sm:$0xf] %v1441
                  %v1443 = vld [vmem:[%s1421 + $0x28] sm:$0xf]
                  %1444 = vst [vmem:[%s1422 + $0x28] sm:$0xf] %v1443
                  %v1445 = vld [vmem:[%s1421 + $0x2c] sm:$0xf]
                  %1446 = vst [vmem:[%s1422 + $0x2c] sm:$0xf] %v1445
                  %v1447 = vld [vmem:[%s1421 + $0x30] sm:$0xf]
                  %1448 = vst [vmem:[%s1422 + $0x30] sm:$0xf] %v1447
                  %v1449 = vld [vmem:[%s1421 + $0x34] sm:$0xf]
                  %1450 = vst [vmem:[%s1422 + $0x34] sm:$0xf] %v1449
                  %v1451 = vld [vmem:[%s1421 + $0x38] sm:$0xf]
                  %1452 = vst [vmem:[%s1422 + $0x38] sm:$0xf] %v1451
                  %v1453 = vld [vmem:[%s1421 + $0x3c] sm:$0xf]
                  %1454 = vst [vmem:[%s1422 + $0x3c] sm:$0xf] %v1453
                  %v1455 = vld [vmem:[%s1421 + $0x40] sm:$0xf]
                  %1456 = vst [vmem:[%s1422 + $0x40] sm:$0xf] %v1455
                  %v1457 = vld [vmem:[%s1421 + $0x44] sm:$0xf]
                  %1458 = vst [vmem:[%s1422 + $0x44] sm:$0xf] %v1457
                  %v1459 = vld [vmem:[%s1421 + $0x48] sm:$0xf]
                  %1460 = vst [vmem:[%s1422 + $0x48] sm:$0xf] %v1459
                  %v1461 = vld [vmem:[%s1421 + $0x4c] sm:$0xf]
                  %1462 = vst [vmem:[%s1422 + $0x4c] sm:$0xf] %v1461
                  %v1463 = vld [vmem:[%s1421 + $0x50] sm:$0xf]
                  %1464 = vst [vmem:[%s1422 + $0x50] sm:$0xf] %v1463
                  %v1465 = vld [vmem:[%s1421 + $0x54] sm:$0xf]
                  %1466 = vst [vmem:[%s1422 + $0x54] sm:$0xf] %v1465
                  %v1467 = vld [vmem:[%s1421 + $0x58] sm:$0xf]
                  %1468 = vst [vmem:[%s1422 + $0x58] sm:$0xf] %v1467
                  %v1469 = vld [vmem:[%s1421 + $0x5c] sm:$0xf]
                  %1470 = vst [vmem:[%s1422 + $0x5c] sm:$0xf] %v1469
                  %v1471 = vld [vmem:[%s1421 + $0x60] sm:$0xf]
                  %1472 = vst [vmem:[%s1422 + $0x60] sm:$0xf] %v1471
                  %v1473 = vld [vmem:[%s1421 + $0x64] sm:$0xf]
                  %1474 = vst [vmem:[%s1422 + $0x64] sm:$0xf] %v1473
                  %v1475 = vld [vmem:[%s1421 + $0x68] sm:$0xf]
                  %1476 = vst [vmem:[%s1422 + $0x68] sm:$0xf] %v1475
                  %v1477 = vld [vmem:[%s1421 + $0x6c] sm:$0xf]
                  %1478 = vst [vmem:[%s1422 + $0x6c] sm:$0xf] %v1477
                  %v1479 = vld [vmem:[%s1421 + $0x70] sm:$0xf]
                  %1480 = vst [vmem:[%s1422 + $0x70] sm:$0xf] %v1479
                  %v1481 = vld [vmem:[%s1421 + $0x74] sm:$0xf]
                  %1482 = vst [vmem:[%s1422 + $0x74] sm:$0xf] %v1481
                  %v1483 = vld [vmem:[%s1421 + $0x78] sm:$0xf]
                  %1484 = vst [vmem:[%s1422 + $0x78] sm:$0xf] %v1483
                  %v1485 = vld [vmem:[%s1421 + $0x7c] sm:$0xf]
                  %1486 = vst [vmem:[%s1422 + $0x7c] sm:$0xf] %v1485
                  %v1487 = vld [vmem:[%s1421 + $0x80] sm:$0xf]
                  %1488 = vst [vmem:[%s1422 + $0x80] sm:$0xf] %v1487
                  %v1489 = vld [vmem:[%s1421 + $0x84] sm:$0xf]
                  %1490 = vst [vmem:[%s1422 + $0x84] sm:$0xf] %v1489
                  %v1491 = vld [vmem:[%s1421 + $0x88] sm:$0xf]
                  %1492 = vst [vmem:[%s1422 + $0x88] sm:$0xf] %v1491
                  %v1493 = vld [vmem:[%s1421 + $0x8c] sm:$0xf]
                  %1494 = vst [vmem:[%s1422 + $0x8c] sm:$0xf] %v1493
                  %v1495 = vld [vmem:[%s1421 + $0x90] sm:$0xf]
                  %1496 = vst [vmem:[%s1422 + $0x90] sm:$0xf] %v1495
                  %v1497 = vld [vmem:[%s1421 + $0x94] sm:$0xf]
                  %1498 = vst [vmem:[%s1422 + $0x94] sm:$0xf] %v1497
                  %v1499 = vld [vmem:[%s1421 + $0x98] sm:$0xf]
                  %1500 = vst [vmem:[%s1422 + $0x98] sm:$0xf] %v1499
                  %v1501 = vld [vmem:[%s1421 + $0x9c] sm:$0xf]
                  %1502 = vst [vmem:[%s1422 + $0x9c] sm:$0xf] %v1501
                  %v1503 = vld [vmem:[%s1421 + $0xa0] sm:$0xf]
                  %1504 = vst [vmem:[%s1422 + $0xa0] sm:$0xf] %v1503
                  %v1505 = vld [vmem:[%s1421 + $0xa4] sm:$0xf]
                  %1506 = vst [vmem:[%s1422 + $0xa4] sm:$0xf] %v1505
                  %v1507 = vld [vmem:[%s1421 + $0xa8] sm:$0xf]
                  %1508 = vst [vmem:[%s1422 + $0xa8] sm:$0xf] %v1507
                  %v1509 = vld [vmem:[%s1421 + $0xac] sm:$0xf]
                  %1510 = vst [vmem:[%s1422 + $0xac] sm:$0xf] %v1509
                  %v1511 = vld [vmem:[%s1421 + $0xb0] sm:$0xf]
                  %1512 = vst [vmem:[%s1422 + $0xb0] sm:$0xf] %v1511
                  %v1513 = vld [vmem:[%s1421 + $0xb4] sm:$0xf]
                  %1514 = vst [vmem:[%s1422 + $0xb4] sm:$0xf] %v1513
                  %v1515 = vld [vmem:[%s1421 + $0xb8] sm:$0xf]
                  %1516 = vst [vmem:[%s1422 + $0xb8] sm:$0xf] %v1515
                  %v1517 = vld [vmem:[%s1421 + $0xbc] sm:$0xf]
                  %1518 = vst [vmem:[%s1422 + $0xbc] sm:$0xf] %v1517
                  %v1519 = vld [vmem:[%s1421 + $0xc0] sm:$0xf]
                  %1520 = vst [vmem:[%s1422 + $0xc0] sm:$0xf] %v1519
                  %v1521 = vld [vmem:[%s1421 + $0xc4] sm:$0xf]
                  %1522 = vst [vmem:[%s1422 + $0xc4] sm:$0xf] %v1521
                  %v1523 = vld [vmem:[%s1421 + $0xc8] sm:$0xf]
                  %1524 = vst [vmem:[%s1422 + $0xc8] sm:$0xf] %v1523
                  %v1525 = vld [vmem:[%s1421 + $0xcc] sm:$0xf]
                  %1526 = vst [vmem:[%s1422 + $0xcc] sm:$0xf] %v1525
                  %v1527 = vld [vmem:[%s1421 + $0xd0] sm:$0xf]
                  %1528 = vst [vmem:[%s1422 + $0xd0] sm:$0xf] %v1527
                  %v1529 = vld [vmem:[%s1421 + $0xd4] sm:$0xf]
                  %1530 = vst [vmem:[%s1422 + $0xd4] sm:$0xf] %v1529
                  %v1531 = vld [vmem:[%s1421 + $0xd8] sm:$0xf]
                  %1532 = vst [vmem:[%s1422 + $0xd8] sm:$0xf] %v1531
                  %v1533 = vld [vmem:[%s1421 + $0xdc] sm:$0xf]
                  %1534 = vst [vmem:[%s1422 + $0xdc] sm:$0xf] %v1533
                  %v1535 = vld [vmem:[%s1421 + $0xe0] sm:$0xf]
                  %1536 = vst [vmem:[%s1422 + $0xe0] sm:$0xf] %v1535
                  %v1537 = vld [vmem:[%s1421 + $0xe4] sm:$0xf]
                  %1538 = vst [vmem:[%s1422 + $0xe4] sm:$0xf] %v1537
                  %v1539 = vld [vmem:[%s1421 + $0xe8] sm:$0xf]
                  %1540 = vst [vmem:[%s1422 + $0xe8] sm:$0xf] %v1539
                  %v1541 = vld [vmem:[%s1421 + $0xec] sm:$0xf]
                  %1542 = vst [vmem:[%s1422 + $0xec] sm:$0xf] %v1541
                  %v1543 = vld [vmem:[%s1421 + $0xf0] sm:$0xf]
                  %1544 = vst [vmem:[%s1422 + $0xf0] sm:$0xf] %v1543
                  %v1545 = vld [vmem:[%s1421 + $0xf4] sm:$0xf]
                  %1546 = vst [vmem:[%s1422 + $0xf4] sm:$0xf] %v1545
                  %v1547 = vld [vmem:[%s1421 + $0xf8] sm:$0xf]
                  %1548 = vst [vmem:[%s1422 + $0xf8] sm:$0xf] %v1547
                  %v1549 = vld [vmem:[%s1421 + $0xfc] sm:$0xf]
                  %1550 = vst [vmem:[%s1422 + $0xfc] sm:$0xf] %v1549
                  %s1551 = sadd.s32 1, %s1420
                  %p1552 = scmp.ge.s32.totalorder %s1551, %s1413
                  %s1553 = scalar_select %p1552, 0, %s1551
                  %s1554 = smul.u32 %s1553, 256
                  %s1555 = smul.u32 %s1553, 256
                  %s1556 = scalar_lea.vmem %s1220, %s1554 [#allocation2]
                  %s1557 = scalar_lea.vmem %s1231, %s1555
                $region71: #{geddnet_forward.23} parent=65 // loop_footer
                  %s1417 = sadd.s32 %s1415, 1
                $region72: #{geddnet_forward.23} parent=65 // loop_footer_branch
                  %1414 = sbr.rel target = $region68
                $region73: #{geddnet_forward.23} parent=65 // loop_exit
                  _
                %s1558 = sshrl.u32 %s1227, 6
                %s1559 = sand.u32 %s1227, 63
                %s1560 = smul.u32 %s1558, 64
                %s1561 = smul.u32 4, %s1560
                %s1562 = scalar_lea.vmem %s1220, %s1561 [#allocation2]
                %s1563 = smul.u32 4, %s1560
                %s1564 = scalar_lea.vmem %s1231, %s1563
                // While loop
                $region74: #{geddnet_forward.23} parent=65 // loop_pre_header
                  _
                $region75: #{geddnet_forward.23} parent=65 // loop_header
                  %s1566 = sphi 0, %s1568
                  %p1567 = scmp.ge.s32.totalorder %s1566, %s1559
                  %s1571 = sphi 0, %s1578
                  %s1572 = sphi %s1562, %s1581
                  %s1573 = sphi %s1564, %s1582
                $region76: #{geddnet_forward.23} parent=65 // loop_header_branch
                  %1570 = sbr.rel (%p1567) target = $region80
                $region77: #{geddnet_forward.23} parent=65 // loop_body
                  %v1574 = vld [vmem:[%s1572] sm:$0xf]
                  %1575 = vst [vmem:[%s1573] sm:$0xf] %v1574
                  %s1576 = sadd.s32 1, %s1571
                  %p1577 = scmp.ge.s32.totalorder %s1576, %s1559
                  %s1578 = scalar_select %p1577, 0, %s1576
                  %s1579 = smul.u32 %s1578, 4
                  %s1580 = smul.u32 %s1578, 4
                  %s1581 = scalar_lea.vmem %s1562, %s1579 [#allocation2]
                  %s1582 = scalar_lea.vmem %s1564, %s1580
                $region78: #{geddnet_forward.23} parent=65 // loop_footer
                  %s1568 = sadd.s32 %s1566, 1
                $region79: #{geddnet_forward.23} parent=65 // loop_footer_branch
                  %1565 = sbr.rel target = $region75
                $region80: #{geddnet_forward.23} parent=65 // loop_exit
                  _
              $region66: #{geddnet_forward.23} parent=43 // pred_fallthru
                _
            $region44: #{geddnet_forward.23} parent=39 // pred_fallthru
              _
            // Predicated region
            $region45: #{geddnet_forward.23} parent=39 // pred_check
              _
            $region46: #{geddnet_forward.23} parent=39 // pred_check_branch
              %1238 = sbr.rel (0) target = $region48
            $region47: #{geddnet_forward.23} parent=39 // pred_region
              %s1240 = sshrl.u32 %s1227, 6
              // While loop
              $region49: #{geddnet_forward.23} parent=47 // loop_pre_header
                _
              $region50: #{geddnet_forward.23} parent=47 // loop_header
                %s1242 = sphi 0, %s1244
                %p1243 = scmp.ge.s32.totalorder %s1242, %s1240
                %s1247 = sphi 0, %s1380
                %s1248 = sphi %s1220, %s1383
                %s1249 = sphi %s1231, %s1384
              $region51: #{geddnet_forward.23} parent=47 // loop_header_branch
                %1246 = sbr.rel (%p1243) target = $region55
              $region52: #{geddnet_forward.23} parent=47 // loop_body
                %v1250 = vld [vmem:[%s1248] sm:$0xf]
                %1251 = vst [vmem:[%s1249] sm:$0xf] %v1250
                %v1252 = vld [vmem:[%s1248 + $0x4] sm:$0xf]
                %1253 = vst [vmem:[%s1249 + $0x4] sm:$0xf] %v1252
                %v1254 = vld [vmem:[%s1248 + $0x8] sm:$0xf]
                %1255 = vst [vmem:[%s1249 + $0x8] sm:$0xf] %v1254
                %v1256 = vld [vmem:[%s1248 + $0xc] sm:$0xf]
                %1257 = vst [vmem:[%s1249 + $0xc] sm:$0xf] %v1256
                %v1258 = vld [vmem:[%s1248 + $0x10] sm:$0xf]
                %1259 = vst [vmem:[%s1249 + $0x10] sm:$0xf] %v1258
                %v1260 = vld [vmem:[%s1248 + $0x14] sm:$0xf]
                %1261 = vst [vmem:[%s1249 + $0x14] sm:$0xf] %v1260
                %v1262 = vld [vmem:[%s1248 + $0x18] sm:$0xf]
                %1263 = vst [vmem:[%s1249 + $0x18] sm:$0xf] %v1262
                %v1264 = vld [vmem:[%s1248 + $0x1c] sm:$0xf]
                %1265 = vst [vmem:[%s1249 + $0x1c] sm:$0xf] %v1264
                %v1266 = vld [vmem:[%s1248 + $0x20] sm:$0xf]
                %1267 = vst [vmem:[%s1249 + $0x20] sm:$0xf] %v1266
                %v1268 = vld [vmem:[%s1248 + $0x24] sm:$0xf]
                %1269 = vst [vmem:[%s1249 + $0x24] sm:$0xf] %v1268
                %v1270 = vld [vmem:[%s1248 + $0x28] sm:$0xf]
                %1271 = vst [vmem:[%s1249 + $0x28] sm:$0xf] %v1270
                %v1272 = vld [vmem:[%s1248 + $0x2c] sm:$0xf]
                %1273 = vst [vmem:[%s1249 + $0x2c] sm:$0xf] %v1272
                %v1274 = vld [vmem:[%s1248 + $0x30] sm:$0xf]
                %1275 = vst [vmem:[%s1249 + $0x30] sm:$0xf] %v1274
                %v1276 = vld [vmem:[%s1248 + $0x34] sm:$0xf]
                %1277 = vst [vmem:[%s1249 + $0x34] sm:$0xf] %v1276
                %v1278 = vld [vmem:[%s1248 + $0x38] sm:$0xf]
                %1279 = vst [vmem:[%s1249 + $0x38] sm:$0xf] %v1278
                %v1280 = vld [vmem:[%s1248 + $0x3c] sm:$0xf]
                %1281 = vst [vmem:[%s1249 + $0x3c] sm:$0xf] %v1280
                %v1282 = vld [vmem:[%s1248 + $0x40] sm:$0xf]
                %1283 = vst [vmem:[%s1249 + $0x40] sm:$0xf] %v1282
                %v1284 = vld [vmem:[%s1248 + $0x44] sm:$0xf]
                %1285 = vst [vmem:[%s1249 + $0x44] sm:$0xf] %v1284
                %v1286 = vld [vmem:[%s1248 + $0x48] sm:$0xf]
                %1287 = vst [vmem:[%s1249 + $0x48] sm:$0xf] %v1286
                %v1288 = vld [vmem:[%s1248 + $0x4c] sm:$0xf]
                %1289 = vst [vmem:[%s1249 + $0x4c] sm:$0xf] %v1288
                %v1290 = vld [vmem:[%s1248 + $0x50] sm:$0xf]
                %1291 = vst [vmem:[%s1249 + $0x50] sm:$0xf] %v1290
                %v1292 = vld [vmem:[%s1248 + $0x54] sm:$0xf]
                %1293 = vst [vmem:[%s1249 + $0x54] sm:$0xf] %v1292
                %v1294 = vld [vmem:[%s1248 + $0x58] sm:$0xf]
                %1295 = vst [vmem:[%s1249 + $0x58] sm:$0xf] %v1294
                %v1296 = vld [vmem:[%s1248 + $0x5c] sm:$0xf]
                %1297 = vst [vmem:[%s1249 + $0x5c] sm:$0xf] %v1296
                %v1298 = vld [vmem:[%s1248 + $0x60] sm:$0xf]
                %1299 = vst [vmem:[%s1249 + $0x60] sm:$0xf] %v1298
                %v1300 = vld [vmem:[%s1248 + $0x64] sm:$0xf]
                %1301 = vst [vmem:[%s1249 + $0x64] sm:$0xf] %v1300
                %v1302 = vld [vmem:[%s1248 + $0x68] sm:$0xf]
                %1303 = vst [vmem:[%s1249 + $0x68] sm:$0xf] %v1302
                %v1304 = vld [vmem:[%s1248 + $0x6c] sm:$0xf]
                %1305 = vst [vmem:[%s1249 + $0x6c] sm:$0xf] %v1304
                %v1306 = vld [vmem:[%s1248 + $0x70] sm:$0xf]
                %1307 = vst [vmem:[%s1249 + $0x70] sm:$0xf] %v1306
                %v1308 = vld [vmem:[%s1248 + $0x74] sm:$0xf]
                %1309 = vst [vmem:[%s1249 + $0x74] sm:$0xf] %v1308
                %v1310 = vld [vmem:[%s1248 + $0x78] sm:$0xf]
                %1311 = vst [vmem:[%s1249 + $0x78] sm:$0xf] %v1310
                %v1312 = vld [vmem:[%s1248 + $0x7c] sm:$0xf]
                %1313 = vst [vmem:[%s1249 + $0x7c] sm:$0xf] %v1312
                %v1314 = vld [vmem:[%s1248 + $0x80] sm:$0xf]
                %1315 = vst [vmem:[%s1249 + $0x80] sm:$0xf] %v1314
                %v1316 = vld [vmem:[%s1248 + $0x84] sm:$0xf]
                %1317 = vst [vmem:[%s1249 + $0x84] sm:$0xf] %v1316
                %v1318 = vld [vmem:[%s1248 + $0x88] sm:$0xf]
                %1319 = vst [vmem:[%s1249 + $0x88] sm:$0xf] %v1318
                %v1320 = vld [vmem:[%s1248 + $0x8c] sm:$0xf]
                %1321 = vst [vmem:[%s1249 + $0x8c] sm:$0xf] %v1320
                %v1322 = vld [vmem:[%s1248 + $0x90] sm:$0xf]
                %1323 = vst [vmem:[%s1249 + $0x90] sm:$0xf] %v1322
                %v1324 = vld [vmem:[%s1248 + $0x94] sm:$0xf]
                %1325 = vst [vmem:[%s1249 + $0x94] sm:$0xf] %v1324
                %v1326 = vld [vmem:[%s1248 + $0x98] sm:$0xf]
                %1327 = vst [vmem:[%s1249 + $0x98] sm:$0xf] %v1326
                %v1328 = vld [vmem:[%s1248 + $0x9c] sm:$0xf]
                %1329 = vst [vmem:[%s1249 + $0x9c] sm:$0xf] %v1328
                %v1330 = vld [vmem:[%s1248 + $0xa0] sm:$0xf]
                %1331 = vst [vmem:[%s1249 + $0xa0] sm:$0xf] %v1330
                %v1332 = vld [vmem:[%s1248 + $0xa4] sm:$0xf]
                %1333 = vst [vmem:[%s1249 + $0xa4] sm:$0xf] %v1332
                %v1334 = vld [vmem:[%s1248 + $0xa8] sm:$0xf]
                %1335 = vst [vmem:[%s1249 + $0xa8] sm:$0xf] %v1334
                %v1336 = vld [vmem:[%s1248 + $0xac] sm:$0xf]
                %1337 = vst [vmem:[%s1249 + $0xac] sm:$0xf] %v1336
                %v1338 = vld [vmem:[%s1248 + $0xb0] sm:$0xf]
                %1339 = vst [vmem:[%s1249 + $0xb0] sm:$0xf] %v1338
                %v1340 = vld [vmem:[%s1248 + $0xb4] sm:$0xf]
                %1341 = vst [vmem:[%s1249 + $0xb4] sm:$0xf] %v1340
                %v1342 = vld [vmem:[%s1248 + $0xb8] sm:$0xf]
                %1343 = vst [vmem:[%s1249 + $0xb8] sm:$0xf] %v1342
                %v1344 = vld [vmem:[%s1248 + $0xbc] sm:$0xf]
                %1345 = vst [vmem:[%s1249 + $0xbc] sm:$0xf] %v1344
                %v1346 = vld [vmem:[%s1248 + $0xc0] sm:$0xf]
                %1347 = vst [vmem:[%s1249 + $0xc0] sm:$0xf] %v1346
                %v1348 = vld [vmem:[%s1248 + $0xc4] sm:$0xf]
                %1349 = vst [vmem:[%s1249 + $0xc4] sm:$0xf] %v1348
                %v1350 = vld [vmem:[%s1248 + $0xc8] sm:$0xf]
                %1351 = vst [vmem:[%s1249 + $0xc8] sm:$0xf] %v1350
                %v1352 = vld [vmem:[%s1248 + $0xcc] sm:$0xf]
                %1353 = vst [vmem:[%s1249 + $0xcc] sm:$0xf] %v1352
                %v1354 = vld [vmem:[%s1248 + $0xd0] sm:$0xf]
                %1355 = vst [vmem:[%s1249 + $0xd0] sm:$0xf] %v1354
                %v1356 = vld [vmem:[%s1248 + $0xd4] sm:$0xf]
                %1357 = vst [vmem:[%s1249 + $0xd4] sm:$0xf] %v1356
                %v1358 = vld [vmem:[%s1248 + $0xd8] sm:$0xf]
                %1359 = vst [vmem:[%s1249 + $0xd8] sm:$0xf] %v1358
                %v1360 = vld [vmem:[%s1248 + $0xdc] sm:$0xf]
                %1361 = vst [vmem:[%s1249 + $0xdc] sm:$0xf] %v1360
                %v1362 = vld [vmem:[%s1248 + $0xe0] sm:$0xf]
                %1363 = vst [vmem:[%s1249 + $0xe0] sm:$0xf] %v1362
                %v1364 = vld [vmem:[%s1248 + $0xe4] sm:$0xf]
                %1365 = vst [vmem:[%s1249 + $0xe4] sm:$0xf] %v1364
                %v1366 = vld [vmem:[%s1248 + $0xe8] sm:$0xf]
                %1367 = vst [vmem:[%s1249 + $0xe8] sm:$0xf] %v1366
                %v1368 = vld [vmem:[%s1248 + $0xec] sm:$0xf]
                %1369 = vst [vmem:[%s1249 + $0xec] sm:$0xf] %v1368
                %v1370 = vld [vmem:[%s1248 + $0xf0] sm:$0xf]
                %1371 = vst [vmem:[%s1249 + $0xf0] sm:$0xf] %v1370
                %v1372 = vld [vmem:[%s1248 + $0xf4] sm:$0xf]
                %1373 = vst [vmem:[%s1249 + $0xf4] sm:$0xf] %v1372
                %v1374 = vld [vmem:[%s1248 + $0xf8] sm:$0xf]
                %1375 = vst [vmem:[%s1249 + $0xf8] sm:$0xf] %v1374
                %v1376 = vld [vmem:[%s1248 + $0xfc] sm:$0xf]
                %1377 = vst [vmem:[%s1249 + $0xfc] sm:$0xf] %v1376
                %s1378 = sadd.s32 1, %s1247
                %p1379 = scmp.ge.s32.totalorder %s1378, %s1240
                %s1380 = scalar_select %p1379, 0, %s1378
                %s1381 = smul.u32 %s1380, 256
                %s1382 = smul.u32 %s1380, 256
                %s1383 = scalar_lea.vmem %s1220, %s1381 [#allocation2]
                %s1384 = scalar_lea.vmem %s1231, %s1382
              $region53: #{geddnet_forward.23} parent=47 // loop_footer
                %s1244 = sadd.s32 %s1242, 1
              $region54: #{geddnet_forward.23} parent=47 // loop_footer_branch
                %1241 = sbr.rel target = $region50
              $region55: #{geddnet_forward.23} parent=47 // loop_exit
                _
              %s1385 = sshrl.u32 %s1227, 6
              %s1386 = sand.u32 %s1227, 63
              %s1387 = smul.u32 %s1385, 64
              %s1388 = smul.u32 4, %s1387
              %s1389 = scalar_lea.vmem %s1220, %s1388 [#allocation2]
              %s1390 = smul.u32 4, %s1387
              %s1391 = scalar_lea.vmem %s1231, %s1390
              // While loop
              $region56: #{geddnet_forward.23} parent=47 // loop_pre_header
                _
              $region57: #{geddnet_forward.23} parent=47 // loop_header
                %s1393 = sphi 0, %s1395
                %p1394 = scmp.ge.s32.totalorder %s1393, %s1386
                %s1398 = sphi 0, %s1405
                %s1399 = sphi %s1389, %s1408
                %s1400 = sphi %s1391, %s1409
              $region58: #{geddnet_forward.23} parent=47 // loop_header_branch
                %1397 = sbr.rel (%p1394) target = $region62
              $region59: #{geddnet_forward.23} parent=47 // loop_body
                %v1401 = vld [vmem:[%s1399] sm:$0xf]
                %1402 = vst [vmem:[%s1400] sm:$0xf] %v1401
                %s1403 = sadd.s32 1, %s1398
                %p1404 = scmp.ge.s32.totalorder %s1403, %s1386
                %s1405 = scalar_select %p1404, 0, %s1403
                %s1406 = smul.u32 %s1405, 4
                %s1407 = smul.u32 %s1405, 4
                %s1408 = scalar_lea.vmem %s1389, %s1406 [#allocation2]
                %s1409 = scalar_lea.vmem %s1391, %s1407
              $region60: #{geddnet_forward.23} parent=47 // loop_footer
                %s1395 = sadd.s32 %s1393, 1
              $region61: #{geddnet_forward.23} parent=47 // loop_footer_branch
                %1392 = sbr.rel target = $region57
              $region62: #{geddnet_forward.23} parent=47 // loop_exit
                _
            $region48: #{geddnet_forward.23} parent=39 // pred_fallthru
              _
          $region40: #{geddnet_forward.23} parent=35 // pred_fallthru
            _
          %1583 = vnop
        $region36: #{geddnet_forward.23} parent=31 // pred_fallthru
          _
      $region32: #{geddnet_forward.23} parent=5 // pred_fallthru
        _
      %p1584 = scmp.le.s32.totalorder 2, %s9
      // Predicated region
      $region81: #{geddnet_forward.23} parent=5 // pred_check
        %p1585 = pneg %p1584
      $region82: #{geddnet_forward.23} parent=5 // pred_check_branch
        %1587 = sbr.rel (%p1585) target = $region84
      $region83: #{geddnet_forward.23} parent=5 // pred_region
        %s1588 = ssub.s32 %s9, 2
        // Predicated region
        $region85: #{geddnet_forward.23} parent=83 // pred_check
          %p1589 = pneg %p106
        $region86: #{geddnet_forward.23} parent=83 // pred_check_branch
          %1591 = sbr.rel (%p1589) target = $region88
        $region87: #{geddnet_forward.23} parent=83 // pred_region
          %s1592 = sand.u32 %s91, 1
          %s1593 = sand.u32 %s91, 1
          %s1594 = smul.addr %s1593, 256
          %s1595 = scalar_lea.vmem [#allocation2], %s1594
        $region88: #{geddnet_forward.23} parent=83 // pred_fallthru
          _
      $region84: #{geddnet_forward.23} parent=5 // pred_fallthru
        _
    $region6: #{geddnet_forward.23} parent=1 // loop_footer
      %s13 = sadd.s32 1, %s9
    $region7: #{geddnet_forward.23} parent=1 // loop_footer_branch
      %8 = sbr.rel target = $region3
    $region8: #{geddnet_forward.23} parent=1 // loop_exit
      _

// kernel: geddnet_forward.24
$region0: #{geddnet_forward.24}
  #allocation0 [shape = 'u32[]', space=smem, size = 0x4, offset = 0x4, fixed_abs, tag = 'smem constant byte address 0x4 - core index']
  #allocation1 [shape = 'u32[144,128]{1,0:T(1,128)}', space=vmem, size = 0x12000, scoped, tag = 'internal scratch']
  %s0 = inlined_call_operand.vmem [shape: bf16[800,72], index: 0, kind: input, shape index: {}]
  %s1 = inlined_call_operand.vmem [shape: bf16[72,8], index: 1, kind: input, shape index: {}]
  %s2 = inlined_call_operand.vmem [shape: f32[1,8], index: 2, kind: input, shape index: {}]
  %s3 = inlined_call_operand.vmem [shape: bf16[800,8], index: 3, kind: output, shape index: {}]
  %s4 = sld [smem:[#allocation0]]
  $region89: #{geddnet_forward.24} parent=0
    _
  %s6 = ssub.s32 1, %s4
  %s7 = scalar_select 0, %s6, %s4
  $region1: #{geddnet_forward.24} parent=0
    #allocation2 [shape = 'u8[262144]{0}', space=vmem, size = 0x40000, scoped, tag = 'output window, operand 0']
    loop: start=0, step=1, limit=4
    $region2: #{geddnet_forward.24} parent=1 // loop_pre_header
      _
    $region3: #{geddnet_forward.24} parent=1 // loop_header
      %s9 = sphi 0, %s13
      %p10 = scmp.ge.s32.totalorder %s9, 4
      %s19 = sphi 0, %s21
      %s22 = sphi 0, %s19
      %s23 = sphi 0, %s22
      %s39 = sphi 0, %s23
      %s43 = sphi 0, %s43
      %s45 = sphi 0, %s43
      %s46 = sphi 0, %s45
      %s60 = sphi 0, %s46
      %s64 = sphi 0, %s64
      %s66 = sphi 0, %s64
      %s67 = sphi 0, %s66
      %s81 = sphi 0, %s67
      %s87 = sphi 0, %s89
      %s90 = sphi 0, %s87
      %s91 = sphi 0, %s90
      %s107 = sphi 0, %s91
    $region4: #{geddnet_forward.24} parent=1 // loop_header_branch
      %12 = sbr.rel (%p10) target = $region8
    $region5: #{geddnet_forward.24} parent=1 // loop_body
      %s14 = ssub.s32 %s9, 1
      %s15 = ssub.s32 %s9, 2
      %s16 = sadd.s32 %s9, 1
      %s17 = ssub.s32 %s9, %s16
      %p18 = scmp.eq.s32.totalorder %s17, 0
      %s20 = sadd.s32 %s19, 1
      %s21 = scalar_select %p18, %s19, %s20
      %p24 = pneg %p18
      %p25 = scmp.eq.s32.totalorder %s9, 1
      %p26 = por %p24, %p25
      %p27 = scmp.ne.s32.totalorder %s19, %s22
      %p28 = scmp.eq.s32.totalorder %s9, 0
      %p29 = por %p27, %p28
      %p30 = scmp.ne.s32.totalorder %s19, %s22
      %p31 = scmp.eq.s32.totalorder %s14, 1
      %p32 = por %p30, %p31
      %p33 = scmp.ne.s32.totalorder %s22, %s23
      %p34 = scmp.eq.s32.totalorder %s14, 0
      %p35 = por %p33, %p34
      %p36 = scmp.ne.s32.totalorder %s22, %s23
      %p37 = scmp.eq.s32.totalorder %s15, 1
      %p38 = por %p36, %p37
      %p40 = scmp.ne.s32.totalorder %s23, %s39
      %p41 = scmp.eq.s32.totalorder %s15, 0
      %p42 = por %p40, %p41
      %s44 = sadd.s32 %s43, 1
      %p47 = scmp.eq.s32.totalorder %s9, 1
      %p48 = scmp.ne.s32.totalorder %s43, %s45
      %p49 = scmp.eq.s32.totalorder %s9, 0
      %p50 = por %p48, %p49
      %p51 = scmp.ne.s32.totalorder %s43, %s45
      %p52 = scmp.eq.s32.totalorder %s14, 1
      %p53 = por %p51, %p52
      %p54 = scmp.ne.s32.totalorder %s45, %s46
      %p55 = scmp.eq.s32.totalorder %s14, 0
      %p56 = por %p54, %p55
      %p57 = scmp.ne.s32.totalorder %s45, %s46
      %p58 = scmp.eq.s32.totalorder %s15, 1
      %p59 = por %p57, %p58
      %p61 = scmp.ne.s32.totalorder %s46, %s60
      %p62 = scmp.eq.s32.totalorder %s15, 0
      %p63 = por %p61, %p62
      %s65 = sadd.s32 %s64, 1
      %p68 = scmp.eq.s32.totalorder %s9, 1
      %p69 = scmp.ne.s32.totalorder %s64, %s66
      %p70 = scmp.eq.s32.totalorder %s9, 0
      %p71 = por %p69, %p70
      %p72 = scmp.ne.s32.totalorder %s64, %s66
      %p73 = scmp.eq.s32.totalorder %s14, 1
      %p74 = por %p72, %p73
      %p75 = scmp.ne.s32.totalorder %s66, %s67
      %p76 = scmp.eq.s32.totalorder %s14, 0
      %p77 = por %p75, %p76
      %p78 = scmp.ne.s32.totalorder %s66, %s67
      %p79 = scmp.eq.s32.totalorder %s15, 1
      %p80 = por %p78, %p79
      %p82 = scmp.ne.s32.totalorder %s67, %s81
      %p83 = scmp.eq.s32.totalorder %s15, 0
      %p84 = por %p82, %p83
      %s85 = ssub.s32 %s9, %s16
      %p86 = scmp.eq.s32.totalorder %s85, 0
      %s88 = sadd.s32 %s87, 1
      %s89 = scalar_select %p86, %s87, %s88
      %p92 = pneg %p86
      %p93 = scmp.eq.s32.totalorder %s9, 1
      %p94 = por %p92, %p93
      %p95 = scmp.ne.s32.totalorder %s87, %s90
      %p96 = scmp.eq.s32.totalorder %s9, 0
      %p97 = por %p95, %p96
      %p98 = scmp.ne.s32.totalorder %s87, %s90
      %p99 = scmp.eq.s32.totalorder %s14, 1
      %p100 = por %p98, %p99
      %p101 = scmp.ne.s32.totalorder %s90, %s91
      %p102 = scmp.eq.s32.totalorder %s14, 0
      %p103 = por %p101, %p102
      %p104 = scmp.ne.s32.totalorder %s90, %s91
      %p105 = scmp.eq.s32.totalorder %s15, 1
      %p106 = por %p104, %p105
      %p108 = scmp.ne.s32.totalorder %s91, %s107
      %p109 = scmp.eq.s32.totalorder %s15, 0
      %p110 = por %p108, %p109
      %p111 = scmp.le.s32.totalorder 1, %s9
      %p112 = scmp.lt.s32.totalorder %s9, 3
      %p113 = pnand %p111, %p112
      %p114 = pneg %p113
      // Predicated region
      $region9: #{geddnet_forward.24} parent=5 // pred_check
        _
      $region10: #{geddnet_forward.24} parent=5 // pred_check_branch
        %116 = sbr.rel (%p113) target = $region12
      $region11: #{geddnet_forward.24} parent=5 // pred_region
        %s117 = ssub.s32 %s9, 1
        // Predicated region
        $region13: #{geddnet_forward.24} parent=11 // pred_check
          %p118 = pneg %p56
        $region14: #{geddnet_forward.24} parent=11 // pred_check_branch
          %120 = sbr.rel (%p118) target = $region16
        $region15: #{geddnet_forward.24} parent=11 // pred_region
          _
        $region16: #{geddnet_forward.24} parent=11 // pred_fallthru
          _
        // Predicated region
        $region17: #{geddnet_forward.24} parent=11 // pred_check
          %p121 = pneg %p77
        $region18: #{geddnet_forward.24} parent=11 // pred_check_branch
          %123 = sbr.rel (%p121) target = $region20
        $region19: #{geddnet_forward.24} parent=11 // pred_region
          _
        $region20: #{geddnet_forward.24} parent=11 // pred_fallthru
          _
      $region12: #{geddnet_forward.24} parent=5 // pred_fallthru
        _
      %p124 = scmp.lt.s32.totalorder %s9, 2
      // Predicated region
      $region21: #{geddnet_forward.24} parent=5 // pred_check
        %p125 = pneg %p124
      $region22: #{geddnet_forward.24} parent=5 // pred_check_branch
        %127 = sbr.rel (%p125) target = $region24
      $region23: #{geddnet_forward.24} parent=5 // pred_region
        // Predicated region
        $region25: #{geddnet_forward.24} parent=23 // pred_check
          %p128 = pneg %p29
        $region26: #{geddnet_forward.24} parent=23 // pred_check_branch
          %130 = sbr.rel (%p128) target = $region28
        $region27: #{geddnet_forward.24} parent=23 // pred_region
          %s131 = smul.u32 64, %s9
          %s132 = ssub.s32 100, %s131
          %p133 = scmp.lt.s32.totalorder %s132, 64
          %s134 = scalar_select %p133, %s132, 64
          %s135 = smul.u32 64, %s134
          %p136 = scmp.lt.s32.totalorder %s131, 99
          %s137 = scalar_select %p136, %s131, 99
          %s138 = smul.addr %s137, 4
          %s139 = scalar_lea.vmem %s0, %s138
          %s140 = smul.u32 64, %s9
          %s141 = ssub.s32 100, %s140
          %p142 = scmp.lt.s32.totalorder %s141, 64
          %s143 = scalar_select %p142, %s141, 64
          %s144 = smul.u32 64, %s143
        $region28: #{geddnet_forward.24} parent=23 // pred_fallthru
          _
      $region24: #{geddnet_forward.24} parent=5 // pred_fallthru
        _
      %p145 = scmp.le.s32.totalorder 1, %s9
      %p146 = scmp.lt.s32.totalorder %s9, 3
      %p147 = pnand %p145, %p146
      %p148 = pneg %p147
      // Predicated region
      $region29: #{geddnet_forward.24} parent=5 // pred_check
        _
      $region30: #{geddnet_forward.24} parent=5 // pred_check_branch
        %150 = sbr.rel (%p147) target = $region32
      $region31: #{geddnet_forward.24} parent=5 // pred_region
        %s151 = ssub.s32 %s9, 1
        %s152 = smul.u32 64, %s14
        %s153 = ssub.s32 100, %s152
        %p154 = scmp.lt.s32.totalorder %s153, 64
        %s155 = scalar_select %p154, %s153, 64
        %s156 = smul.u32 64, %s155
        %p157 = scmp.lt.s32.totalorder %s152, 99
        %s158 = scalar_select %p157, %s152, 99
        %s159 = smul.addr %s158, 4
        %s160 = scalar_lea.vmem %s0, %s159
        %p161 = pneg %p35
        %p162 = pneg %p32
        %p163 = pneg %p56
        %p164 = pneg %p53
        %p165 = pneg %p77
        %p166 = pneg %p74
        %p167 = pneg %p103
        %p168 = pneg %p100
        %s169 = sand.u32 %s90, 1
        %s170 = sand.u32 %s90, 1
        %s171 = smul.addr %s170, 256
        %s172 = scalar_lea.vmem [#allocation2], %s171
        %s173 = smul.u32 64, %s14
        %s174 = ssub.s32 100, %s173
        %p175 = scmp.lt.s32.totalorder %s174, 64
        %s176 = scalar_select %p175, %s174, 64
        %s177 = smul.u32 64, %s176
        %p178 = scmp.lt.s32.totalorder %s173, 99
        %s179 = scalar_select %p178, %s173, 99
        %s180 = smul.addr %s179, 4
        %s181 = scalar_lea.vmem %s0, %s180
        %s182 = smul.u32 64, %s14
        %s183 = ssub.s32 100, %s182
        %p184 = scmp.lt.s32.totalorder %s183, 64
        %s185 = scalar_select %p184, %s183, 64
        %s186 = smul.u32 64, %s185
        %s187 = smul.u32 64, %s14
        %s188 = ssub.s32 100, %s187
        %p189 = scmp.lt.s32.totalorder %s188, 64
        %s190 = scalar_select %p189, %s188, 64
        %s191 = smul.u32 64, %s190
        %v193 = vld [vmem:[%s181] sm:$0xf]
        %v194 = vld [vmem:[%s181 + $0x4] sm:$0xf]
        %v195 = vld [vmem:[%s181 + $0x8] sm:$0xf]
        %v196 = vld [vmem:[%s181 + $0xc] sm:$0xf]
        %v197 = vld [vmem:[%s181 + $0x10] sm:$0xf]
        %v198 = vld [vmem:[%s181 + $0x14] sm:$0xf]
        %v199 = vld [vmem:[%s181 + $0x18] sm:$0xf]
        %v200 = vld [vmem:[%s181 + $0x1c] sm:$0xf]
        %v201 = vld [vmem:[%s181 + $0x20] sm:$0xf]
        %v202 = vld [vmem:[%s181 + $0x24] sm:$0xf]
        %v203 = vld [vmem:[%s181 + $0x28] sm:$0xf]
        %v204 = vld [vmem:[%s181 + $0x2c] sm:$0xf]
        %v205 = vld [vmem:[%s181 + $0x30] sm:$0xf]
        %v206 = vld [vmem:[%s181 + $0x34] sm:$0xf]
        %v207 = vld [vmem:[%s181 + $0x38] sm:$0xf]
        %v208 = vld [vmem:[%s181 + $0x3c] sm:$0xf]
        %v209 = vld [vmem:[%s181 + $0x40] sm:$0xf]
        %v210 = vld [vmem:[%s181 + $0x44] sm:$0xf]
        %v211 = vld [vmem:[%s181 + $0x48] sm:$0xf]
        %v212 = vld [vmem:[%s181 + $0x4c] sm:$0xf]
        %v213 = vld [vmem:[%s181 + $0x50] sm:$0xf]
        %v214 = vld [vmem:[%s181 + $0x54] sm:$0xf]
        %v215 = vld [vmem:[%s181 + $0x58] sm:$0xf]
        %v216 = vld [vmem:[%s181 + $0x5c] sm:$0xf]
        %v217 = vld [vmem:[%s181 + $0x60] sm:$0xf]
        %v218 = vld [vmem:[%s181 + $0x64] sm:$0xf]
        %v219 = vld [vmem:[%s181 + $0x68] sm:$0xf]
        %v220 = vld [vmem:[%s181 + $0x6c] sm:$0xf]
        %v221 = vld [vmem:[%s181 + $0x70] sm:$0xf]
        %v222 = vld [vmem:[%s181 + $0x74] sm:$0xf]
        %v223 = vld [vmem:[%s181 + $0x78] sm:$0xf]
        %v224 = vld [vmem:[%s181 + $0x7c] sm:$0xf]
        %v225 = vld [vmem:[%s181 + $0x80] sm:$0xf]
        %v226 = vld [vmem:[%s181 + $0x84] sm:$0xf]
        %v227 = vld [vmem:[%s181 + $0x88] sm:$0xf]
        %v228 = vld [vmem:[%s181 + $0x8c] sm:$0xf]
        %v229 = vld [vmem:[%s181 + $0x90] sm:$0xf]
        %v230 = vld [vmem:[%s181 + $0x94] sm:$0xf]
        %v231 = vld [vmem:[%s181 + $0x98] sm:$0xf]
        %v232 = vld [vmem:[%s181 + $0x9c] sm:$0xf]
        %v233 = vld [vmem:[%s181 + $0xa0] sm:$0xf]
        %v234 = vld [vmem:[%s181 + $0xa4] sm:$0xf]
        %v235 = vld [vmem:[%s181 + $0xa8] sm:$0xf]
        %v236 = vld [vmem:[%s181 + $0xac] sm:$0xf]
        %v237 = vld [vmem:[%s181 + $0xb0] sm:$0xf]
        %v238 = vld [vmem:[%s181 + $0xb4] sm:$0xf]
        %v239 = vld [vmem:[%s181 + $0xb8] sm:$0xf]
        %v240 = vld [vmem:[%s181 + $0xbc] sm:$0xf]
        %v241 = vld [vmem:[%s181 + $0xc0] sm:$0xf]
        %v242 = vld [vmem:[%s181 + $0xc4] sm:$0xf]
        %v243 = vld [vmem:[%s181 + $0xc8] sm:$0xf]
        %v244 = vld [vmem:[%s181 + $0xcc] sm:$0xf]
        %v245 = vld [vmem:[%s181 + $0xd0] sm:$0xf]
        %v246 = vld [vmem:[%s181 + $0xd4] sm:$0xf]
        %v247 = vld [vmem:[%s181 + $0xd8] sm:$0xf]
        %v248 = vld [vmem:[%s181 + $0xdc] sm:$0xf]
        %v249 = vld [vmem:[%s181 + $0xe0] sm:$0xf]
        %v250 = vld [vmem:[%s181 + $0xe4] sm:$0xf]
        %v251 = vld [vmem:[%s181 + $0xe8] sm:$0xf]
        %v252 = vld [vmem:[%s181 + $0xec] sm:$0xf]
        %v253 = vld [vmem:[%s181 + $0xf0] sm:$0xf]
        %v254 = vld [vmem:[%s181 + $0xf4] sm:$0xf]
        %v255 = vld [vmem:[%s181 + $0xf8] sm:$0xf]
        %v256 = vld [vmem:[%s181 + $0xfc] sm:$0xf]
        %v257 = vld [vmem:[%s1] sm:$0xf]
        %v258 = vld [vmem:[%s1 + $0x4] sm:$0xf]
        %v259 = vld [vmem:[%s1 + $0x8] sm:$0xf]
        %v260 = vld [vmem:[%s1 + $0xc] sm:$0xf]
        %v261 = vld [vmem:[%s1 + $0x10] sm:$0xf]
        %v262 = vld [vmem:[%s1 + $0x14] sm:$0xf]
        %v263 = vld [vmem:[%s1 + $0x18] sm:$0xf]
        %v264 = vld [vmem:[%s1 + $0x1c] sm:$0xf]
        %v265 = vld [vmem:[%s1 + $0x20] sm:$0xf]
        %v266 = vld [vmem:[%s2] sm:$0x1]
        %v268 = vlaneseq
        %v269 = vshrl.u32 %v268, 7
        %v270 = vsub.s32 0, %v269
        %v271 = vrot.slane %v266, %v270
        %v337 = vunpack.c.l.b16 %v193
        %v338 = vunpack.c.l.b16 %v194
        %v339 = vunpack.c.l.b16 %v195
        %v340 = vunpack.c.l.b16 %v196
        %v341 = vunpack.c.l.b16 %v197
        %v342 = vunpack.c.l.b16 %v198
        %v343 = vunpack.c.l.b16 %v199
        %v344 = vunpack.c.l.b16 %v200
        %v345 = vunpack.c.l.b16 %v201
        %v346 = vunpack.c.l.b16 %v202
        %v347 = vunpack.c.l.b16 %v203
        %v348 = vunpack.c.l.b16 %v204
        %v349 = vunpack.c.l.b16 %v205
        %v350 = vunpack.c.l.b16 %v206
        %v351 = vunpack.c.l.b16 %v207
        %v352 = vunpack.c.l.b16 %v208
        %v353 = vunpack.c.l.b16 %v209
        %v354 = vunpack.c.l.b16 %v210
        %v355 = vunpack.c.l.b16 %v211
        %v356 = vunpack.c.l.b16 %v212
        %v357 = vunpack.c.l.b16 %v213
        %v358 = vunpack.c.l.b16 %v214
        %v359 = vunpack.c.l.b16 %v215
        %v360 = vunpack.c.l.b16 %v216
        %v361 = vunpack.c.l.b16 %v217
        %v362 = vunpack.c.l.b16 %v218
        %v363 = vunpack.c.l.b16 %v219
        %v364 = vunpack.c.l.b16 %v220
        %v365 = vunpack.c.l.b16 %v221
        %v366 = vunpack.c.l.b16 %v222
        %v367 = vunpack.c.l.b16 %v223
        %v368 = vunpack.c.l.b16 %v224
        %v369 = vunpack.c.l.b16 %v225
        %v370 = vunpack.c.l.b16 %v226
        %v371 = vunpack.c.l.b16 %v227
        %v372 = vunpack.c.l.b16 %v228
        %v373 = vunpack.c.l.b16 %v229
        %v374 = vunpack.c.l.b16 %v230
        %v375 = vunpack.c.l.b16 %v231
        %v376 = vunpack.c.l.b16 %v232
        %v377 = vunpack.c.l.b16 %v233
        %v378 = vunpack.c.l.b16 %v234
        %v379 = vunpack.c.l.b16 %v235
        %v380 = vunpack.c.l.b16 %v236
        %v381 = vunpack.c.l.b16 %v237
        %v382 = vunpack.c.l.b16 %v238
        %v383 = vunpack.c.l.b16 %v239
        %v384 = vunpack.c.l.b16 %v240
        %v385 = vunpack.c.l.b16 %v241
        %v386 = vunpack.c.l.b16 %v242
        %v387 = vunpack.c.l.b16 %v243
        %v388 = vunpack.c.l.b16 %v244
        %v389 = vunpack.c.l.b16 %v245
        %v390 = vunpack.c.l.b16 %v246
        %v391 = vunpack.c.l.b16 %v247
        %v392 = vunpack.c.l.b16 %v248
        %v393 = vunpack.c.l.b16 %v249
        %v394 = vunpack.c.l.b16 %v250
        %v395 = vunpack.c.l.b16 %v251
        %v396 = vunpack.c.l.b16 %v252
        %v397 = vunpack.c.l.b16 %v253
        %v398 = vunpack.c.l.b16 %v254
        %v399 = vunpack.c.l.b16 %v255
        %v400 = vunpack.c.l.b16 %v256
        %v401 = vpack.c.b16 %v338, %v337
        %v402 = vpack.c.b16 %v340, %v339
        %v403 = vpack.c.b16 %v342, %v341
        %v404 = vpack.c.b16 %v344, %v343
        %v405 = vpack.c.b16 %v346, %v345
        %v406 = vpack.c.b16 %v348, %v347
        %v407 = vpack.c.b16 %v350, %v349
        %v408 = vpack.c.b16 %v352, %v351
        %v409 = vpack.c.b16 %v354, %v353
        %v410 = vpack.c.b16 %v356, %v355
        %v411 = vpack.c.b16 %v358, %v357
        %v412 = vpack.c.b16 %v360, %v359
        %v413 = vpack.c.b16 %v362, %v361
        %v414 = vpack.c.b16 %v364, %v363
        %v415 = vpack.c.b16 %v366, %v365
        %v416 = vpack.c.b16 %v368, %v367
        %v417 = vpack.c.b16 %v370, %v369
        %v418 = vpack.c.b16 %v372, %v371
        %v419 = vpack.c.b16 %v374, %v373
        %v420 = vpack.c.b16 %v376, %v375
        %v421 = vpack.c.b16 %v378, %v377
        %v422 = vpack.c.b16 %v380, %v379
        %v423 = vpack.c.b16 %v382, %v381
        %v424 = vpack.c.b16 %v384, %v383
        %v425 = vpack.c.b16 %v386, %v385
        %v426 = vpack.c.b16 %v388, %v387
        %v427 = vpack.c.b16 %v390, %v389
        %v428 = vpack.c.b16 %v392, %v391
        %v429 = vpack.c.b16 %v394, %v393
        %v430 = vpack.c.b16 %v396, %v395
        %v431 = vpack.c.b16 %v398, %v397
        %v432 = vpack.c.b16 %v400, %v399
        %v442 = vunpack.c.l.b16 %v257
        %v443 = vunpack.c.l.b16 %v258
        %v444 = vunpack.c.l.b16 %v259
        %v445 = vunpack.c.l.b16 %v260
        %v446 = vunpack.c.l.b16 %v261
        %v447 = vunpack.c.l.b16 %v262
        %v448 = vunpack.c.l.b16 %v263
        %v449 = vunpack.c.l.b16 %v264
        %v450 = vunpack.c.l.b16 %v265
        %v451 = vpack.c.b16 %v443, %v442
        %v452 = vpack.c.b16 %v445, %v444
        %v453 = vpack.c.b16 %v447, %v446
        %v454 = vpack.c.b16 %v449, %v448
        %v455 = vpack.c.b16 %v450, %v450
        %vm460 = vcmask 588800
        %v462 = vsel %vm460, %v401, 0
        %v465 = vsel %vm460, %v402, 0
        %v468 = vsel %vm460, %v403, 0
        %v471 = vsel %vm460, %v404, 0
        %v474 = vsel %vm460, %v405, 0
        %v477 = vsel %vm460, %v406, 0
        %v480 = vsel %vm460, %v407, 0
        %v483 = vsel %vm460, %v408, 0
        %v486 = vsel %vm460, %v409, 0
        %v489 = vsel %vm460, %v410, 0
        %v492 = vsel %vm460, %v411, 0
        %v495 = vsel %vm460, %v412, 0
        %v498 = vsel %vm460, %v413, 0
        %v501 = vsel %vm460, %v414, 0
        %v504 = vsel %vm460, %v415, 0
        %v507 = vsel %vm460, %v416, 0
        %v510 = vsel %vm460, %v417, 0
        %v513 = vsel %vm460, %v418, 0
        %v516 = vsel %vm460, %v419, 0
        %v519 = vsel %vm460, %v420, 0
        %v522 = vsel %vm460, %v421, 0
        %v525 = vsel %vm460, %v422, 0
        %v528 = vsel %vm460, %v423, 0
        %v531 = vsel %vm460, %v424, 0
        %v534 = vsel %vm460, %v425, 0
        %v537 = vsel %vm460, %v426, 0
        %v540 = vsel %vm460, %v427, 0
        %v543 = vsel %vm460, %v428, 0
        %v546 = vsel %vm460, %v429, 0
        %v549 = vsel %vm460, %v430, 0
        %v552 = vsel %vm460, %v431, 0
        %v555 = vsel %vm460, %v432, 0
        %vm557 = vcmask 1043456
        %v559 = vsel %vm557, %v455, 0
        %561 = vmatprep.subr.bf16.mxu0 0
        %562 = vmatpush1.bf16.msra.mxu0 %v451
        %563 = vmatprep.subr.bf16.mxu0 0
        %564 = vmatpush1.bf16.msra.mxu0 %v452
        %565 = vmatprep.subr.bf16.mxu0 0
        %566 = vmatpush1.bf16.msra.mxu0 %v453
        %567 = vmatprep.subr.bf16.mxu0 0
        %568 = vmatpush1.bf16.msra.mxu0 %v454
        %569 = vmatprep.subr.bf16.mxu0 0
        %570 = vmatpush1.bf16.msra.mxu0 %v559
        %571 = vmatprep.subr.bf16.mxu0 0
        %572 = vmatpush1.bf16.msra.mxu0 0
        %573 = vmatprep.subr.bf16.mxu0 0
        %574 = vmatpush1.bf16.msra.mxu0 0
        %575 = vmatprep.subr.bf16.mxu0 0
        %576 = vmatpush1.bf16.msra.mxu0 0
        %577 = vmatprep.subr.bf16.mxu0 0
        %578 = vmatpush1.bf16.msra.mxu0 0
        %579 = vmatprep.subr.bf16.mxu0 0
        %580 = vmatpush1.bf16.msra.mxu0 0
        %581 = vmatprep.subr.bf16.mxu0 0
        %582 = vmatpush1.bf16.msra.mxu0 0
        %583 = vmatprep.subr.bf16.mxu0 0
        %584 = vmatpush1.bf16.msra.mxu0 0
        %585 = vmatprep.subr.bf16.mxu0 0
        %586 = vmatpush1.bf16.msra.mxu0 0
        %587 = vmatprep.subr.bf16.mxu0 0
        %588 = vmatpush1.bf16.msra.mxu0 0
        %589 = vmatprep.subr.bf16.mxu0 0
        %590 = vmatpush1.bf16.msra.mxu0 0
        %591 = vmatprep.subr.bf16.mxu0 0
        %592 = vmatpush1.bf16.msra.mxu0 0
        %593 = vmatprep.mubr.bf16.mxu0 0
        %594 = vmatmul.mubr.bf16.gmra.mrb[0].mxu0 %v462
        %v595 = vpop.f32.mrb[0].mxu0
        %v596 = vadd.f32 %v271, %v595
        %v597 = vpop.f32.mrb[0].mxu0
        %v598 = vpop.f32.mrb[0].mxu0
        %v599 = vadd.f32 %v271, %v598
        %v600 = vpop.f32.mrb[0].mxu0
        %601 = vmatprep.mubr.bf16.mxu0 0
        %602 = vmatmul.mubr.bf16.gmra.mrb[0].mxu0 %v465
        %v603 = vpop.f32.mrb[0].mxu0
        %v604 = vadd.f32 %v271, %v603
        %v605 = vpop.f32.mrb[0].mxu0
        %v606 = vpop.f32.mrb[0].mxu0
        %v607 = vadd.f32 %v271, %v606
        %v608 = vpop.f32.mrb[0].mxu0
        %609 = vmatprep.mubr.bf16.mxu0 0
        %610 = vmatmul.mubr.bf16.gmra.mrb[0].mxu0 %v468
        %v611 = vpop.f32.mrb[0].mxu0
        %v612 = vadd.f32 %v271, %v611
        %v613 = vpop.f32.mrb[0].mxu0
        %v614 = vpop.f32.mrb[0].mxu0
        %v615 = vadd.f32 %v271, %v614
        %v616 = vpop.f32.mrb[0].mxu0
        %617 = vmatprep.mubr.bf16.mxu0 0
        %618 = vmatmul.mubr.bf16.gmra.mrb[0].mxu0 %v471
        %v619 = vpop.f32.mrb[0].mxu0
        %v620 = vadd.f32 %v271, %v619
        %v621 = vpop.f32.mrb[0].mxu0
        %v622 = vpop.f32.mrb[0].mxu0
        %v623 = vadd.f32 %v271, %v622
        %v624 = vpop.f32.mrb[0].mxu0
        %625 = vmatprep.mubr.bf16.mxu0 0
        %626 = vmatmul.mubr.bf16.gmra.mrb[0].mxu0 %v474
        %v627 = vpop.f32.mrb[0].mxu0
        %v628 = vadd.f32 %v271, %v627
        %v629 = vpop.f32.mrb[0].mxu0
        %v630 = vpop.f32.mrb[0].mxu0
        %v631 = vadd.f32 %v271, %v630
        %v632 = vpop.f32.mrb[0].mxu0
        %633 = vmatprep.mubr.bf16.mxu0 0
        %634 = vmatmul.mubr.bf16.gmra.mrb[0].mxu0 %v477
        %v635 = vpop.f32.mrb[0].mxu0
        %v636 = vadd.f32 %v271, %v635
        %v637 = vpop.f32.mrb[0].mxu0
        %v638 = vpop.f32.mrb[0].mxu0
        %v639 = vadd.f32 %v271, %v638
        %v640 = vpop.f32.mrb[0].mxu0
        %641 = vmatprep.mubr.bf16.mxu0 0
        %642 = vmatmul.mubr.bf16.gmra.mrb[0].mxu0 %v480
        %v643 = vpop.f32.mrb[0].mxu0
        %v644 = vadd.f32 %v271, %v643
        %v645 = vpop.f32.mrb[0].mxu0
        %v646 = vpop.f32.mrb[0].mxu0
        %v647 = vadd.f32 %v271, %v646
        %v648 = vpop.f32.mrb[0].mxu0
        %649 = vmatprep.mubr.bf16.mxu0 0
        %650 = vmatmul.mubr.bf16.gmra.mrb[0].mxu0 %v483
        %v651 = vpop.f32.mrb[0].mxu0
        %v652 = vadd.f32 %v271, %v651
        %v653 = vpop.f32.mrb[0].mxu0
        %v654 = vpop.f32.mrb[0].mxu0
        %v655 = vadd.f32 %v271, %v654
        %v656 = vpop.f32.mrb[0].mxu0
        %657 = vmatprep.mubr.bf16.mxu0 0
        %658 = vmatmul.mubr.bf16.gmra.mrb[0].mxu0 %v486
        %v659 = vpop.f32.mrb[0].mxu0
        %v660 = vadd.f32 %v271, %v659
        %v661 = vpop.f32.mrb[0].mxu0
        %v662 = vpop.f32.mrb[0].mxu0
        %v663 = vadd.f32 %v271, %v662
        %v664 = vpop.f32.mrb[0].mxu0
        %665 = vmatprep.mubr.bf16.mxu0 0
        %666 = vmatmul.mubr.bf16.gmra.mrb[0].mxu0 %v489
        %v667 = vpop.f32.mrb[0].mxu0
        %v668 = vadd.f32 %v271, %v667
        %v669 = vpop.f32.mrb[0].mxu0
        %v670 = vpop.f32.mrb[0].mxu0
        %v671 = vadd.f32 %v271, %v670
        %v672 = vpop.f32.mrb[0].mxu0
        %673 = vmatprep.mubr.bf16.mxu0 0
        %674 = vmatmul.mubr.bf16.gmra.mrb[0].mxu0 %v492
        %v675 = vpop.f32.mrb[0].mxu0
        %v676 = vadd.f32 %v271, %v675
        %v677 = vpop.f32.mrb[0].mxu0
        %v678 = vpop.f32.mrb[0].mxu0
        %v679 = vadd.f32 %v271, %v678
        %v680 = vpop.f32.mrb[0].mxu0
        %681 = vmatprep.mubr.bf16.mxu0 0
        %682 = vmatmul.mubr.bf16.gmra.mrb[0].mxu0 %v495
        %v683 = vpop.f32.mrb[0].mxu0
        %v684 = vadd.f32 %v271, %v683
        %v685 = vpop.f32.mrb[0].mxu0
        %v686 = vpop.f32.mrb[0].mxu0
        %v687 = vadd.f32 %v271, %v686
        %v688 = vpop.f32.mrb[0].mxu0
        %689 = vmatprep.mubr.bf16.mxu0 0
        %690 = vmatmul.mubr.bf16.gmra.mrb[0].mxu0 %v498
        %v691 = vpop.f32.mrb[0].mxu0
        %v692 = vadd.f32 %v271, %v691
        %v693 = vpop.f32.mrb[0].mxu0
        %v694 = vpop.f32.mrb[0].mxu0
        %v695 = vadd.f32 %v271, %v694
        %v696 = vpop.f32.mrb[0].mxu0
        %697 = vmatprep.mubr.bf16.mxu0 0
        %698 = vmatmul.mubr.bf16.gmra.mrb[0].mxu0 %v501
        %v699 = vpop.f32.mrb[0].mxu0
        %v700 = vadd.f32 %v271, %v699
        %v701 = vpop.f32.mrb[0].mxu0
        %v702 = vpop.f32.mrb[0].mxu0
        %v703 = vadd.f32 %v271, %v702
        %v704 = vpop.f32.mrb[0].mxu0
        %705 = vmatprep.mubr.bf16.mxu0 0
        %706 = vmatmul.mubr.bf16.gmra.mrb[0].mxu0 %v504
        %v707 = vpop.f32.mrb[0].mxu0
        %v708 = vadd.f32 %v271, %v707
        %v709 = vpop.f32.mrb[0].mxu0
        %v710 = vpop.f32.mrb[0].mxu0
        %v711 = vadd.f32 %v271, %v710
        %v712 = vpop.f32.mrb[0].mxu0
        %713 = vmatprep.mubr.bf16.mxu0 0
        %714 = vmatmul.mubr.bf16.gmra.mrb[0].mxu0 %v507
        %v715 = vpop.f32.mrb[0].mxu0
        %v716 = vadd.f32 %v271, %v715
        %v717 = vpop.f32.mrb[0].mxu0
        %v718 = vpop.f32.mrb[0].mxu0
        %v719 = vadd.f32 %v271, %v718
        %v720 = vpop.f32.mrb[0].mxu0
        %721 = vmatprep.mubr.bf16.mxu0 0
        %722 = vmatmul.mubr.bf16.gmra.mrb[0].mxu0 %v510
        %v723 = vpop.f32.mrb[0].mxu0
        %v724 = vadd.f32 %v271, %v723
        %v725 = vpop.f32.mrb[0].mxu0
        %v726 = vpop.f32.mrb[0].mxu0
        %v727 = vadd.f32 %v271, %v726
        %v728 = vpop.f32.mrb[0].mxu0
        %729 = vmatprep.mubr.bf16.mxu0 0
        %730 = vmatmul.mubr.bf16.gmra.mrb[0].mxu0 %v513
        %v731 = vpop.f32.mrb[0].mxu0
        %v732 = vadd.f32 %v271, %v731
        %v733 = vpop.f32.mrb[0].mxu0
        %v734 = vpop.f32.mrb[0].mxu0
        %v735 = vadd.f32 %v271, %v734
        %v736 = vpop.f32.mrb[0].mxu0
        %737 = vmatprep.mubr.bf16.mxu0 0
        %738 = vmatmul.mubr.bf16.gmra.mrb[0].mxu0 %v516
        %v739 = vpop.f32.mrb[0].mxu0
        %v740 = vadd.f32 %v271, %v739
        %v741 = vpop.f32.mrb[0].mxu0
        %v742 = vpop.f32.mrb[0].mxu0
        %v743 = vadd.f32 %v271, %v742
        %v744 = vpop.f32.mrb[0].mxu0
        %745 = vmatprep.mubr.bf16.mxu0 0
        %746 = vmatmul.mubr.bf16.gmra.mrb[0].mxu0 %v519
        %v747 = vpop.f32.mrb[0].mxu0
        %v748 = vadd.f32 %v271, %v747
        %v749 = vpop.f32.mrb[0].mxu0
        %v750 = vpop.f32.mrb[0].mxu0
        %v751 = vadd.f32 %v271, %v750
        %v752 = vpop.f32.mrb[0].mxu0
        %753 = vmatprep.mubr.bf16.mxu0 0
        %754 = vmatmul.mubr.bf16.gmra.mrb[0].mxu0 %v522
        %v755 = vpop.f32.mrb[0].mxu0
        %v756 = vadd.f32 %v271, %v755
        %v757 = vpop.f32.mrb[0].mxu0
        %v758 = vpop.f32.mrb[0].mxu0
        %v759 = vadd.f32 %v271, %v758
        %v760 = vpop.f32.mrb[0].mxu0
        %761 = vmatprep.mubr.bf16.mxu0 0
        %762 = vmatmul.mubr.bf16.gmra.mrb[0].mxu0 %v525
        %v763 = vpop.f32.mrb[0].mxu0
        %v764 = vadd.f32 %v271, %v763
        %v765 = vpop.f32.mrb[0].mxu0
        %v766 = vpop.f32.mrb[0].mxu0
        %v767 = vadd.f32 %v271, %v766
        %v768 = vpop.f32.mrb[0].mxu0
        %769 = vmatprep.mubr.bf16.mxu0 0
        %770 = vmatmul.mubr.bf16.gmra.mrb[0].mxu0 %v528
        %v771 = vpop.f32.mrb[0].mxu0
        %v772 = vadd.f32 %v271, %v771
        %v773 = vpop.f32.mrb[0].mxu0
        %v774 = vpop.f32.mrb[0].mxu0
        %v775 = vadd.f32 %v271, %v774
        %v776 = vpop.f32.mrb[0].mxu0
        %777 = vmatprep.mubr.bf16.mxu0 0
        %778 = vmatmul.mubr.bf16.gmra.mrb[0].mxu0 %v531
        %v779 = vpop.f32.mrb[0].mxu0
        %v780 = vadd.f32 %v271, %v779
        %v781 = vpop.f32.mrb[0].mxu0
        %v782 = vpop.f32.mrb[0].mxu0
        %v783 = vadd.f32 %v271, %v782
        %v784 = vpop.f32.mrb[0].mxu0
        %785 = vmatprep.mubr.bf16.mxu0 0
        %786 = vmatmul.mubr.bf16.gmra.mrb[0].mxu0 %v534
        %v787 = vpop.f32.mrb[0].mxu0
        %v788 = vadd.f32 %v271, %v787
        %v789 = vpop.f32.mrb[0].mxu0
        %v790 = vpop.f32.mrb[0].mxu0
        %v791 = vadd.f32 %v271, %v790
        %v792 = vpop.f32.mrb[0].mxu0
        %793 = vmatprep.mubr.bf16.mxu0 0
        %794 = vmatmul.mubr.bf16.gmra.mrb[0].mxu0 %v537
        %v795 = vpop.f32.mrb[0].mxu0
        %v796 = vadd.f32 %v271, %v795
        %v797 = vpop.f32.mrb[0].mxu0
        %v798 = vpop.f32.mrb[0].mxu0
        %v799 = vadd.f32 %v271, %v798
        %v800 = vpop.f32.mrb[0].mxu0
        %801 = vmatprep.mubr.bf16.mxu0 0
        %802 = vmatmul.mubr.bf16.gmra.mrb[0].mxu0 %v540
        %v803 = vpop.f32.mrb[0].mxu0
        %v804 = vadd.f32 %v271, %v803
        %v805 = vpop.f32.mrb[0].mxu0
        %v806 = vpop.f32.mrb[0].mxu0
        %v807 = vadd.f32 %v271, %v806
        %v808 = vpop.f32.mrb[0].mxu0
        %809 = vmatprep.mubr.bf16.mxu0 0
        %810 = vmatmul.mubr.bf16.gmra.mrb[0].mxu0 %v543
        %v811 = vpop.f32.mrb[0].mxu0
        %v812 = vadd.f32 %v271, %v811
        %v813 = vpop.f32.mrb[0].mxu0
        %v814 = vpop.f32.mrb[0].mxu0
        %v815 = vadd.f32 %v271, %v814
        %v816 = vpop.f32.mrb[0].mxu0
        %817 = vmatprep.mubr.bf16.mxu0 0
        %818 = vmatmul.mubr.bf16.gmra.mrb[0].mxu0 %v546
        %v819 = vpop.f32.mrb[0].mxu0
        %v820 = vadd.f32 %v271, %v819
        %v821 = vpop.f32.mrb[0].mxu0
        %v822 = vpop.f32.mrb[0].mxu0
        %v823 = vadd.f32 %v271, %v822
        %v824 = vpop.f32.mrb[0].mxu0
        %825 = vmatprep.mubr.bf16.mxu0 0
        %826 = vmatmul.mubr.bf16.gmra.mrb[0].mxu0 %v549
        %v827 = vpop.f32.mrb[0].mxu0
        %v828 = vadd.f32 %v271, %v827
        %v829 = vpop.f32.mrb[0].mxu0
        %v830 = vpop.f32.mrb[0].mxu0
        %v831 = vadd.f32 %v271, %v830
        %v832 = vpop.f32.mrb[0].mxu0
        %833 = vmatprep.mubr.bf16.mxu0 0
        %834 = vmatmul.mubr.bf16.gmra.mrb[0].mxu0 %v552
        %v835 = vpop.f32.mrb[0].mxu0
        %v836 = vadd.f32 %v271, %v835
        %v837 = vpop.f32.mrb[0].mxu0
        %v838 = vpop.f32.mrb[0].mxu0
        %v839 = vadd.f32 %v271, %v838
        %v840 = vpop.f32.mrb[0].mxu0
        %841 = vmatprep.mubr.bf16.mxu0 0
        %842 = vmatmul.mubr.bf16.gmra.mrb[0].mxu0 %v555
        %v843 = vpop.f32.mrb[0].mxu0
        %v844 = vadd.f32 %v271, %v843
        %v845 = vpop.f32.mrb[0].mxu0
        %v846 = vpop.f32.mrb[0].mxu0
        %v847 = vadd.f32 %v271, %v846
        %v848 = vpop.f32.mrb[0].mxu0
        %849 = vdwg.mxu0
        %v850 = vmax.f32 %v596, 0.0
        %v851 = vmax.f32 %v599, 0.0
        %v852 = vmax.f32 %v604, 0.0
        %v853 = vmax.f32 %v607, 0.0
        %v854 = vmax.f32 %v612, 0.0
        %v855 = vmax.f32 %v615, 0.0
        %v856 = vmax.f32 %v620, 0.0
        %v857 = vmax.f32 %v623, 0.0
        %v858 = vmax.f32 %v628, 0.0
        %v859 = vmax.f32 %v631, 0.0
        %v860 = vmax.f32 %v636, 0.0
        %v861 = vmax.f32 %v639, 0.0
        %v862 = vmax.f32 %v644, 0.0
        %v863 = vmax.f32 %v647, 0.0
        %v864 = vmax.f32 %v652, 0.0
        %v865 = vmax.f32 %v655, 0.0
        %v866 = vmax.f32 %v660, 0.0
        %v867 = vmax.f32 %v663, 0.0
        %v868 = vmax.f32 %v668, 0.0
        %v869 = vmax.f32 %v671, 0.0
        %v870 = vmax.f32 %v676, 0.0
        %v871 = vmax.f32 %v679, 0.0
        %v872 = vmax.f32 %v684, 0.0
        %v873 = vmax.f32 %v687, 0.0
        %v874 = vmax.f32 %v692, 0.0
        %v875 = vmax.f32 %v695, 0.0
        %v876 = vmax.f32 %v700, 0.0
        %v877 = vmax.f32 %v703, 0.0
        %v878 = vmax.f32 %v708, 0.0
        %v879 = vmax.f32 %v711, 0.0
        %v880 = vmax.f32 %v716, 0.0
        %v881 = vmax.f32 %v719, 0.0
        %v882 = vmax.f32 %v724, 0.0
        %v883 = vmax.f32 %v727, 0.0
        %v884 = vmax.f32 %v732, 0.0
        %v885 = vmax.f32 %v735, 0.0
        %v886 = vmax.f32 %v740, 0.0
        %v887 = vmax.f32 %v743, 0.0
        %v888 = vmax.f32 %v748, 0.0
        %v889 = vmax.f32 %v751, 0.0
        %v890 = vmax.f32 %v756, 0.0
        %v891 = vmax.f32 %v759, 0.0
        %v892 = vmax.f32 %v764, 0.0
        %v893 = vmax.f32 %v767, 0.0
        %v894 = vmax.f32 %v772, 0.0
        %v895 = vmax.f32 %v775, 0.0
        %v896 = vmax.f32 %v780, 0.0
        %v897 = vmax.f32 %v783, 0.0
        %v898 = vmax.f32 %v788, 0.0
        %v899 = vmax.f32 %v791, 0.0
        %v900 = vmax.f32 %v796, 0.0
        %v901 = vmax.f32 %v799, 0.0
        %v902 = vmax.f32 %v804, 0.0
        %v903 = vmax.f32 %v807, 0.0
        %v904 = vmax.f32 %v812, 0.0
        %v905 = vmax.f32 %v815, 0.0
        %v906 = vmax.f32 %v820, 0.0
        %v907 = vmax.f32 %v823, 0.0
        %v908 = vmax.f32 %v828, 0.0
        %v909 = vmax.f32 %v831, 0.0
        %v910 = vmax.f32 %v836, 0.0
        %v911 = vmax.f32 %v839, 0.0
        %v912 = vmax.f32 %v844, 0.0
        %v913 = vmax.f32 %v847, 0.0
        %v914 = vpack.c.bf16 %v851, %v850
        %v915 = vpack.c.bf16 %v853, %v852
        %v916 = vpack.c.bf16 %v855, %v854
        %v917 = vpack.c.bf16 %v857, %v856
        %v918 = vpack.c.bf16 %v859, %v858
        %v919 = vpack.c.bf16 %v861, %v860
        %v920 = vpack.c.bf16 %v863, %v862
        %v921 = vpack.c.bf16 %v865, %v864
        %v922 = vpack.c.bf16 %v867, %v866
        %v923 = vpack.c.bf16 %v869, %v868
        %v924 = vpack.c.bf16 %v871, %v870
        %v925 = vpack.c.bf16 %v873, %v872
        %v926 = vpack.c.bf16 %v875, %v874
        %v927 = vpack.c.bf16 %v877, %v876
        %v928 = vpack.c.bf16 %v879, %v878
        %v929 = vpack.c.bf16 %v881, %v880
        %v930 = vpack.c.bf16 %v883, %v882
        %v931 = vpack.c.bf16 %v885, %v884
        %v932 = vpack.c.bf16 %v887, %v886
        %v933 = vpack.c.bf16 %v889, %v888
        %v934 = vpack.c.bf16 %v891, %v890
        %v935 = vpack.c.bf16 %v893, %v892
        %v936 = vpack.c.bf16 %v895, %v894
        %v937 = vpack.c.bf16 %v897, %v896
        %v938 = vpack.c.bf16 %v899, %v898
        %v939 = vpack.c.bf16 %v901, %v900
        %v940 = vpack.c.bf16 %v903, %v902
        %v941 = vpack.c.bf16 %v905, %v904
        %v942 = vpack.c.bf16 %v907, %v906
        %v943 = vpack.c.bf16 %v909, %v908
        %v944 = vpack.c.bf16 %v911, %v910
        %v945 = vpack.c.bf16 %v913, %v912
        %v978 = vunpack.c.l.b16 %v914
        %v979 = vunpack.c.h.b16 %v914
        %v980 = vunpack.c.l.b16 %v915
        %v981 = vunpack.c.h.b16 %v915
        %v982 = vunpack.c.l.b16 %v916
        %v983 = vunpack.c.h.b16 %v916
        %v984 = vunpack.c.l.b16 %v917
        %v985 = vunpack.c.h.b16 %v917
        %v986 = vunpack.c.l.b16 %v918
        %v987 = vunpack.c.h.b16 %v918
        %v988 = vunpack.c.l.b16 %v919
        %v989 = vunpack.c.h.b16 %v919
        %v990 = vunpack.c.l.b16 %v920
        %v991 = vunpack.c.h.b16 %v920
        %v992 = vunpack.c.l.b16 %v921
        %v993 = vunpack.c.h.b16 %v921
        %v994 = vunpack.c.l.b16 %v922
        %v995 = vunpack.c.h.b16 %v922
        %v996 = vunpack.c.l.b16 %v923
        %v997 = vunpack.c.h.b16 %v923
        %v998 = vunpack.c.l.b16 %v924
        %v999 = vunpack.c.h.b16 %v924
        %v1000 = vunpack.c.l.b16 %v925
        %v1001 = vunpack.c.h.b16 %v925
        %v1002 = vunpack.c.l.b16 %v926
        %v1003 = vunpack.c.h.b16 %v926
        %v1004 = vunpack.c.l.b16 %v927
        %v1005 = vunpack.c.h.b16 %v927
        %v1006 = vunpack.c.l.b16 %v928
        %v1007 = vunpack.c.h.b16 %v928
        %v1008 = vunpack.c.l.b16 %v929
        %v1009 = vunpack.c.h.b16 %v929
        %v1010 = vunpack.c.l.b16 %v930
        %v1011 = vunpack.c.h.b16 %v930
        %v1012 = vunpack.c.l.b16 %v931
        %v1013 = vunpack.c.h.b16 %v931
        %v1014 = vunpack.c.l.b16 %v932
        %v1015 = vunpack.c.h.b16 %v932
        %v1016 = vunpack.c.l.b16 %v933
        %v1017 = vunpack.c.h.b16 %v933
        %v1018 = vunpack.c.l.b16 %v934
        %v1019 = vunpack.c.h.b16 %v934
        %v1020 = vunpack.c.l.b16 %v935
        %v1021 = vunpack.c.h.b16 %v935
        %v1022 = vunpack.c.l.b16 %v936
        %v1023 = vunpack.c.h.b16 %v936
        %v1024 = vunpack.c.l.b16 %v937
        %v1025 = vunpack.c.h.b16 %v937
        %v1026 = vunpack.c.l.b16 %v938
        %v1027 = vunpack.c.h.b16 %v938
        %v1028 = vunpack.c.l.b16 %v939
        %v1029 = vunpack.c.h.b16 %v939
        %v1030 = vunpack.c.l.b16 %v940
        %v1031 = vunpack.c.h.b16 %v940
        %v1032 = vunpack.c.l.b16 %v941
        %v1033 = vunpack.c.h.b16 %v941
        %v1034 = vunpack.c.l.b16 %v942
        %v1035 = vunpack.c.h.b16 %v942
        %v1036 = vunpack.c.l.b16 %v943
        %v1037 = vunpack.c.h.b16 %v943
        %v1038 = vunpack.c.l.b16 %v944
        %v1039 = vunpack.c.h.b16 %v944
        %v1040 = vunpack.c.l.b16 %v945
        %v1041 = vunpack.c.h.b16 %v945
        %v1042 = vpack.c.b16 %v978, %v978
        %v1043 = vpack.c.b16 %v979, %v979
        %v1044 = vpack.c.b16 %v980, %v980
        %v1045 = vpack.c.b16 %v981, %v981
        %v1046 = vpack.c.b16 %v982, %v982
        %v1047 = vpack.c.b16 %v983, %v983
        %v1048 = vpack.c.b16 %v984, %v984
        %v1049 = vpack.c.b16 %v985, %v985
        %v1050 = vpack.c.b16 %v986, %v986
        %v1051 = vpack.c.b16 %v987, %v987
        %v1052 = vpack.c.b16 %v988, %v988
        %v1053 = vpack.c.b16 %v989, %v989
        %v1054 = vpack.c.b16 %v990, %v990
        %v1055 = vpack.c.b16 %v991, %v991
        %v1056 = vpack.c.b16 %v992, %v992
        %v1057 = vpack.c.b16 %v993, %v993
        %v1058 = vpack.c.b16 %v994, %v994
        %v1059 = vpack.c.b16 %v995, %v995
        %v1060 = vpack.c.b16 %v996, %v996
        %v1061 = vpack.c.b16 %v997, %v997
        %v1062 = vpack.c.b16 %v998, %v998
        %v1063 = vpack.c.b16 %v999, %v999
        %v1064 = vpack.c.b16 %v1000, %v1000
        %v1065 = vpack.c.b16 %v1001, %v1001
        %v1066 = vpack.c.b16 %v1002, %v1002
        %v1067 = vpack.c.b16 %v1003, %v1003
        %v1068 = vpack.c.b16 %v1004, %v1004
        %v1069 = vpack.c.b16 %v1005, %v1005
        %v1070 = vpack.c.b16 %v1006, %v1006
        %v1071 = vpack.c.b16 %v1007, %v1007
        %v1072 = vpack.c.b16 %v1008, %v1008
        %v1073 = vpack.c.b16 %v1009, %v1009
        %v1074 = vpack.c.b16 %v1010, %v1010
        %v1075 = vpack.c.b16 %v1011, %v1011
        %v1076 = vpack.c.b16 %v1012, %v1012
        %v1077 = vpack.c.b16 %v1013, %v1013
        %v1078 = vpack.c.b16 %v1014, %v1014
        %v1079 = vpack.c.b16 %v1015, %v1015
        %v1080 = vpack.c.b16 %v1016, %v1016
        %v1081 = vpack.c.b16 %v1017, %v1017
        %v1082 = vpack.c.b16 %v1018, %v1018
        %v1083 = vpack.c.b16 %v1019, %v1019
        %v1084 = vpack.c.b16 %v1020, %v1020
        %v1085 = vpack.c.b16 %v1021, %v1021
        %v1086 = vpack.c.b16 %v1022, %v1022
        %v1087 = vpack.c.b16 %v1023, %v1023
        %v1088 = vpack.c.b16 %v1024, %v1024
        %v1089 = vpack.c.b16 %v1025, %v1025
        %v1090 = vpack.c.b16 %v1026, %v1026
        %v1091 = vpack.c.b16 %v1027, %v1027
        %v1092 = vpack.c.b16 %v1028, %v1028
        %v1093 = vpack.c.b16 %v1029, %v1029
        %v1094 = vpack.c.b16 %v1030, %v1030
        %v1095 = vpack.c.b16 %v1031, %v1031
        %v1096 = vpack.c.b16 %v1032, %v1032
        %v1097 = vpack.c.b16 %v1033, %v1033
        %v1098 = vpack.c.b16 %v1034, %v1034
        %v1099 = vpack.c.b16 %v1035, %v1035
        %v1100 = vpack.c.b16 %v1036, %v1036
        %v1101 = vpack.c.b16 %v1037, %v1037
        %v1102 = vpack.c.b16 %v1038, %v1038
        %v1103 = vpack.c.b16 %v1039, %v1039
        %v1104 = vpack.c.b16 %v1040, %v1040
        %v1105 = vpack.c.b16 %v1041, %v1041
        %vm1170 = vcmask 60416
        %1171 = vst.msk [vmem:[%s172] sm:$0xf] %vm1170, %v1042
        %1172 = vst.msk [vmem:[%s172 + $0x4] sm:$0xf] %vm1170, %v1043
        %1173 = vst.msk [vmem:[%s172 + $0x8] sm:$0xf] %vm1170, %v1044
        %1174 = vst.msk [vmem:[%s172 + $0xc] sm:$0xf] %vm1170, %v1045
        %1175 = vst.msk [vmem:[%s172 + $0x10] sm:$0xf] %vm1170, %v1046
        %1176 = vst.msk [vmem:[%s172 + $0x14] sm:$0xf] %vm1170, %v1047
        %1177 = vst.msk [vmem:[%s172 + $0x18] sm:$0xf] %vm1170, %v1048
        %1178 = vst.msk [vmem:[%s172 + $0x1c] sm:$0xf] %vm1170, %v1049
        %1179 = vst.msk [vmem:[%s172 + $0x20] sm:$0xf] %vm1170, %v1050
        %1180 = vst.msk [vmem:[%s172 + $0x24] sm:$0xf] %vm1170, %v1051
        %1181 = vst.msk [vmem:[%s172 + $0x28] sm:$0xf] %vm1170, %v1052
        %1182 = vst.msk [vmem:[%s172 + $0x2c] sm:$0xf] %vm1170, %v1053
        %1183 = vst.msk [vmem:[%s172 + $0x30] sm:$0xf] %vm1170, %v1054
        %1184 = vst.msk [vmem:[%s172 + $0x34] sm:$0xf] %vm1170, %v1055
        %1185 = vst.msk [vmem:[%s172 + $0x38] sm:$0xf] %vm1170, %v1056
        %1186 = vst.msk [vmem:[%s172 + $0x3c] sm:$0xf] %vm1170, %v1057
        %1187 = vst.msk [vmem:[%s172 + $0x40] sm:$0xf] %vm1170, %v1058
        %1188 = vst.msk [vmem:[%s172 + $0x44] sm:$0xf] %vm1170, %v1059
        %1189 = vst.msk [vmem:[%s172 + $0x48] sm:$0xf] %vm1170, %v1060
        %1190 = vst.msk [vmem:[%s172 + $0x4c] sm:$0xf] %vm1170, %v1061
        %1191 = vst.msk [vmem:[%s172 + $0x50] sm:$0xf] %vm1170, %v1062
        %1192 = vst.msk [vmem:[%s172 + $0x54] sm:$0xf] %vm1170, %v1063
        %1193 = vst.msk [vmem:[%s172 + $0x58] sm:$0xf] %vm1170, %v1064
        %1194 = vst.msk [vmem:[%s172 + $0x5c] sm:$0xf] %vm1170, %v1065
        %1195 = vst.msk [vmem:[%s172 + $0x60] sm:$0xf] %vm1170, %v1066
        %1196 = vst.msk [vmem:[%s172 + $0x64] sm:$0xf] %vm1170, %v1067
        %1197 = vst.msk [vmem:[%s172 + $0x68] sm:$0xf] %vm1170, %v1068
        %1198 = vst.msk [vmem:[%s172 + $0x6c] sm:$0xf] %vm1170, %v1069
        %1199 = vst.msk [vmem:[%s172 + $0x70] sm:$0xf] %vm1170, %v1070
        %1200 = vst.msk [vmem:[%s172 + $0x74] sm:$0xf] %vm1170, %v1071
        %1201 = vst.msk [vmem:[%s172 + $0x78] sm:$0xf] %vm1170, %v1072
        %1202 = vst.msk [vmem:[%s172 + $0x7c] sm:$0xf] %vm1170, %v1073
        %1203 = vst.msk [vmem:[%s172 + $0x80] sm:$0xf] %vm1170, %v1074
        %1204 = vst.msk [vmem:[%s172 + $0x84] sm:$0xf] %vm1170, %v1075
        %1205 = vst.msk [vmem:[%s172 + $0x88] sm:$0xf] %vm1170, %v1076
        %1206 = vst.msk [vmem:[%s172 + $0x8c] sm:$0xf] %vm1170, %v1077
        %1207 = vst.msk [vmem:[%s172 + $0x90] sm:$0xf] %vm1170, %v1078
        %1208 = vst.msk [vmem:[%s172 + $0x94] sm:$0xf] %vm1170, %v1079
        %1209 = vst.msk [vmem:[%s172 + $0x98] sm:$0xf] %vm1170, %v1080
        %1210 = vst.msk [vmem:[%s172 + $0x9c] sm:$0xf] %vm1170, %v1081
        %1211 = vst.msk [vmem:[%s172 + $0xa0] sm:$0xf] %vm1170, %v1082
        %1212 = vst.msk [vmem:[%s172 + $0xa4] sm:$0xf] %vm1170, %v1083
        %1213 = vst.msk [vmem:[%s172 + $0xa8] sm:$0xf] %vm1170, %v1084
        %1214 = vst.msk [vmem:[%s172 + $0xac] sm:$0xf] %vm1170, %v1085
        %1215 = vst.msk [vmem:[%s172 + $0xb0] sm:$0xf] %vm1170, %v1086
        %1216 = vst.msk [vmem:[%s172 + $0xb4] sm:$0xf] %vm1170, %v1087
        %1217 = vst.msk [vmem:[%s172 + $0xb8] sm:$0xf] %vm1170, %v1088
        %1218 = vst.msk [vmem:[%s172 + $0xbc] sm:$0xf] %vm1170, %v1089
        %1219 = vst.msk [vmem:[%s172 + $0xc0] sm:$0xf] %vm1170, %v1090
        %1220 = vst.msk [vmem:[%s172 + $0xc4] sm:$0xf] %vm1170, %v1091
        %1221 = vst.msk [vmem:[%s172 + $0xc8] sm:$0xf] %vm1170, %v1092
        %1222 = vst.msk [vmem:[%s172 + $0xcc] sm:$0xf] %vm1170, %v1093
        %1223 = vst.msk [vmem:[%s172 + $0xd0] sm:$0xf] %vm1170, %v1094
        %1224 = vst.msk [vmem:[%s172 + $0xd4] sm:$0xf] %vm1170, %v1095
        %1225 = vst.msk [vmem:[%s172 + $0xd8] sm:$0xf] %vm1170, %v1096
        %1226 = vst.msk [vmem:[%s172 + $0xdc] sm:$0xf] %vm1170, %v1097
        %1227 = vst.msk [vmem:[%s172 + $0xe0] sm:$0xf] %vm1170, %v1098
        %1228 = vst.msk [vmem:[%s172 + $0xe4] sm:$0xf] %vm1170, %v1099
        %1229 = vst.msk [vmem:[%s172 + $0xe8] sm:$0xf] %vm1170, %v1100
        %1230 = vst.msk [vmem:[%s172 + $0xec] sm:$0xf] %vm1170, %v1101
        %1231 = vst.msk [vmem:[%s172 + $0xf0] sm:$0xf] %vm1170, %v1102
        %1232 = vst.msk [vmem:[%s172 + $0xf4] sm:$0xf] %vm1170, %v1103
        %1233 = vst.msk [vmem:[%s172 + $0xf8] sm:$0xf] %vm1170, %v1104
        %1234 = vst.msk [vmem:[%s172 + $0xfc] sm:$0xf] %vm1170, %v1105
        %s1235 = sand.u32 %s90, 1
        %s1236 = sand.u32 %s90, 1
        %s1237 = smul.addr %s1236, 256
        %s1238 = scalar_lea.vmem [#allocation2], %s1237
        // Predicated region
        $region33: #{geddnet_forward.24} parent=31 // pred_check
          %p1239 = pneg %p100
        $region34: #{geddnet_forward.24} parent=31 // pred_check_branch
          %1241 = sbr.rel (%p1239) target = $region36
        $region35: #{geddnet_forward.24} parent=31 // pred_region
          %s1242 = smul.u32 64, %s14
          %s1243 = ssub.s32 100, %s1242
          %p1244 = scmp.lt.s32.totalorder %s1243, 64
          %s1245 = scalar_select %p1244, %s1243, 64
          %s1246 = smul.u32 64, %s1245
          %p1247 = scmp.ne.s32.totalorder 0, %s1246
          %s1248 = smul.addr %s1242, 4
          %s1249 = scalar_lea.vmem %s3, %s1248
          // Predicated region
          $region37: #{geddnet_forward.24} parent=35 // pred_check
            %p1250 = pneg %p1247
          $region38: #{geddnet_forward.24} parent=35 // pred_check_branch
            %1252 = sbr.rel (%p1250) target = $region40
          $region39: #{geddnet_forward.24} parent=35 // pred_region
            // Predicated region
            $region41: #{geddnet_forward.24} parent=39 // pred_check
              _
            $region42: #{geddnet_forward.24} parent=39 // pred_check_branch
              %1254 = sbr.rel target = $region44
            $region43: #{geddnet_forward.24} parent=39 // pred_region
              // Predicated region
              $region63: #{geddnet_forward.24} parent=43 // pred_check
                _
              $region64: #{geddnet_forward.24} parent=43 // pred_check_branch
                %1429 = sbr.rel (0) target = $region66
              $region65: #{geddnet_forward.24} parent=43 // pred_region
                %s1431 = sshrl.u32 %s1245, 6
                // While loop
                $region67: #{geddnet_forward.24} parent=65 // loop_pre_header
                  _
                $region68: #{geddnet_forward.24} parent=65 // loop_header
                  %s1433 = sphi 0, %s1435
                  %p1434 = scmp.ge.s32.totalorder %s1433, %s1431
                  %s1438 = sphi 0, %s1571
                  %s1439 = sphi %s1238, %s1574
                  %s1440 = sphi %s1249, %s1575
                $region69: #{geddnet_forward.24} parent=65 // loop_header_branch
                  %1437 = sbr.rel (%p1434) target = $region73
                $region70: #{geddnet_forward.24} parent=65 // loop_body
                  %v1441 = vld [vmem:[%s1439] sm:$0xf]
                  %1442 = vst [vmem:[%s1440] sm:$0xf] %v1441
                  %v1443 = vld [vmem:[%s1439 + $0x4] sm:$0xf]
                  %1444 = vst [vmem:[%s1440 + $0x4] sm:$0xf] %v1443
                  %v1445 = vld [vmem:[%s1439 + $0x8] sm:$0xf]
                  %1446 = vst [vmem:[%s1440 + $0x8] sm:$0xf] %v1445
                  %v1447 = vld [vmem:[%s1439 + $0xc] sm:$0xf]
                  %1448 = vst [vmem:[%s1440 + $0xc] sm:$0xf] %v1447
                  %v1449 = vld [vmem:[%s1439 + $0x10] sm:$0xf]
                  %1450 = vst [vmem:[%s1440 + $0x10] sm:$0xf] %v1449
                  %v1451 = vld [vmem:[%s1439 + $0x14] sm:$0xf]
                  %1452 = vst [vmem:[%s1440 + $0x14] sm:$0xf] %v1451
                  %v1453 = vld [vmem:[%s1439 + $0x18] sm:$0xf]
                  %1454 = vst [vmem:[%s1440 + $0x18] sm:$0xf] %v1453
                  %v1455 = vld [vmem:[%s1439 + $0x1c] sm:$0xf]
                  %1456 = vst [vmem:[%s1440 + $0x1c] sm:$0xf] %v1455
                  %v1457 = vld [vmem:[%s1439 + $0x20] sm:$0xf]
                  %1458 = vst [vmem:[%s1440 + $0x20] sm:$0xf] %v1457
                  %v1459 = vld [vmem:[%s1439 + $0x24] sm:$0xf]
                  %1460 = vst [vmem:[%s1440 + $0x24] sm:$0xf] %v1459
                  %v1461 = vld [vmem:[%s1439 + $0x28] sm:$0xf]
                  %1462 = vst [vmem:[%s1440 + $0x28] sm:$0xf] %v1461
                  %v1463 = vld [vmem:[%s1439 + $0x2c] sm:$0xf]
                  %1464 = vst [vmem:[%s1440 + $0x2c] sm:$0xf] %v1463
                  %v1465 = vld [vmem:[%s1439 + $0x30] sm:$0xf]
                  %1466 = vst [vmem:[%s1440 + $0x30] sm:$0xf] %v1465
                  %v1467 = vld [vmem:[%s1439 + $0x34] sm:$0xf]
                  %1468 = vst [vmem:[%s1440 + $0x34] sm:$0xf] %v1467
                  %v1469 = vld [vmem:[%s1439 + $0x38] sm:$0xf]
                  %1470 = vst [vmem:[%s1440 + $0x38] sm:$0xf] %v1469
                  %v1471 = vld [vmem:[%s1439 + $0x3c] sm:$0xf]
                  %1472 = vst [vmem:[%s1440 + $0x3c] sm:$0xf] %v1471
                  %v1473 = vld [vmem:[%s1439 + $0x40] sm:$0xf]
                  %1474 = vst [vmem:[%s1440 + $0x40] sm:$0xf] %v1473
                  %v1475 = vld [vmem:[%s1439 + $0x44] sm:$0xf]
                  %1476 = vst [vmem:[%s1440 + $0x44] sm:$0xf] %v1475
                  %v1477 = vld [vmem:[%s1439 + $0x48] sm:$0xf]
                  %1478 = vst [vmem:[%s1440 + $0x48] sm:$0xf] %v1477
                  %v1479 = vld [vmem:[%s1439 + $0x4c] sm:$0xf]
                  %1480 = vst [vmem:[%s1440 + $0x4c] sm:$0xf] %v1479
                  %v1481 = vld [vmem:[%s1439 + $0x50] sm:$0xf]
                  %1482 = vst [vmem:[%s1440 + $0x50] sm:$0xf] %v1481
                  %v1483 = vld [vmem:[%s1439 + $0x54] sm:$0xf]
                  %1484 = vst [vmem:[%s1440 + $0x54] sm:$0xf] %v1483
                  %v1485 = vld [vmem:[%s1439 + $0x58] sm:$0xf]
                  %1486 = vst [vmem:[%s1440 + $0x58] sm:$0xf] %v1485
                  %v1487 = vld [vmem:[%s1439 + $0x5c] sm:$0xf]
                  %1488 = vst [vmem:[%s1440 + $0x5c] sm:$0xf] %v1487
                  %v1489 = vld [vmem:[%s1439 + $0x60] sm:$0xf]
                  %1490 = vst [vmem:[%s1440 + $0x60] sm:$0xf] %v1489
                  %v1491 = vld [vmem:[%s1439 + $0x64] sm:$0xf]
                  %1492 = vst [vmem:[%s1440 + $0x64] sm:$0xf] %v1491
                  %v1493 = vld [vmem:[%s1439 + $0x68] sm:$0xf]
                  %1494 = vst [vmem:[%s1440 + $0x68] sm:$0xf] %v1493
                  %v1495 = vld [vmem:[%s1439 + $0x6c] sm:$0xf]
                  %1496 = vst [vmem:[%s1440 + $0x6c] sm:$0xf] %v1495
                  %v1497 = vld [vmem:[%s1439 + $0x70] sm:$0xf]
                  %1498 = vst [vmem:[%s1440 + $0x70] sm:$0xf] %v1497
                  %v1499 = vld [vmem:[%s1439 + $0x74] sm:$0xf]
                  %1500 = vst [vmem:[%s1440 + $0x74] sm:$0xf] %v1499
                  %v1501 = vld [vmem:[%s1439 + $0x78] sm:$0xf]
                  %1502 = vst [vmem:[%s1440 + $0x78] sm:$0xf] %v1501
                  %v1503 = vld [vmem:[%s1439 + $0x7c] sm:$0xf]
                  %1504 = vst [vmem:[%s1440 + $0x7c] sm:$0xf] %v1503
                  %v1505 = vld [vmem:[%s1439 + $0x80] sm:$0xf]
                  %1506 = vst [vmem:[%s1440 + $0x80] sm:$0xf] %v1505
                  %v1507 = vld [vmem:[%s1439 + $0x84] sm:$0xf]
                  %1508 = vst [vmem:[%s1440 + $0x84] sm:$0xf] %v1507
                  %v1509 = vld [vmem:[%s1439 + $0x88] sm:$0xf]
                  %1510 = vst [vmem:[%s1440 + $0x88] sm:$0xf] %v1509
                  %v1511 = vld [vmem:[%s1439 + $0x8c] sm:$0xf]
                  %1512 = vst [vmem:[%s1440 + $0x8c] sm:$0xf] %v1511
                  %v1513 = vld [vmem:[%s1439 + $0x90] sm:$0xf]
                  %1514 = vst [vmem:[%s1440 + $0x90] sm:$0xf] %v1513
                  %v1515 = vld [vmem:[%s1439 + $0x94] sm:$0xf]
                  %1516 = vst [vmem:[%s1440 + $0x94] sm:$0xf] %v1515
                  %v1517 = vld [vmem:[%s1439 + $0x98] sm:$0xf]
                  %1518 = vst [vmem:[%s1440 + $0x98] sm:$0xf] %v1517
                  %v1519 = vld [vmem:[%s1439 + $0x9c] sm:$0xf]
                  %1520 = vst [vmem:[%s1440 + $0x9c] sm:$0xf] %v1519
                  %v1521 = vld [vmem:[%s1439 + $0xa0] sm:$0xf]
                  %1522 = vst [vmem:[%s1440 + $0xa0] sm:$0xf] %v1521
                  %v1523 = vld [vmem:[%s1439 + $0xa4] sm:$0xf]
                  %1524 = vst [vmem:[%s1440 + $0xa4] sm:$0xf] %v1523
                  %v1525 = vld [vmem:[%s1439 + $0xa8] sm:$0xf]
                  %1526 = vst [vmem:[%s1440 + $0xa8] sm:$0xf] %v1525
                  %v1527 = vld [vmem:[%s1439 + $0xac] sm:$0xf]
                  %1528 = vst [vmem:[%s1440 + $0xac] sm:$0xf] %v1527
                  %v1529 = vld [vmem:[%s1439 + $0xb0] sm:$0xf]
                  %1530 = vst [vmem:[%s1440 + $0xb0] sm:$0xf] %v1529
                  %v1531 = vld [vmem:[%s1439 + $0xb4] sm:$0xf]
                  %1532 = vst [vmem:[%s1440 + $0xb4] sm:$0xf] %v1531
                  %v1533 = vld [vmem:[%s1439 + $0xb8] sm:$0xf]
                  %1534 = vst [vmem:[%s1440 + $0xb8] sm:$0xf] %v1533
                  %v1535 = vld [vmem:[%s1439 + $0xbc] sm:$0xf]
                  %1536 = vst [vmem:[%s1440 + $0xbc] sm:$0xf] %v1535
                  %v1537 = vld [vmem:[%s1439 + $0xc0] sm:$0xf]
                  %1538 = vst [vmem:[%s1440 + $0xc0] sm:$0xf] %v1537
                  %v1539 = vld [vmem:[%s1439 + $0xc4] sm:$0xf]
                  %1540 = vst [vmem:[%s1440 + $0xc4] sm:$0xf] %v1539
                  %v1541 = vld [vmem:[%s1439 + $0xc8] sm:$0xf]
                  %1542 = vst [vmem:[%s1440 + $0xc8] sm:$0xf] %v1541
                  %v1543 = vld [vmem:[%s1439 + $0xcc] sm:$0xf]
                  %1544 = vst [vmem:[%s1440 + $0xcc] sm:$0xf] %v1543
                  %v1545 = vld [vmem:[%s1439 + $0xd0] sm:$0xf]
                  %1546 = vst [vmem:[%s1440 + $0xd0] sm:$0xf] %v1545
                  %v1547 = vld [vmem:[%s1439 + $0xd4] sm:$0xf]
                  %1548 = vst [vmem:[%s1440 + $0xd4] sm:$0xf] %v1547
                  %v1549 = vld [vmem:[%s1439 + $0xd8] sm:$0xf]
                  %1550 = vst [vmem:[%s1440 + $0xd8] sm:$0xf] %v1549
                  %v1551 = vld [vmem:[%s1439 + $0xdc] sm:$0xf]
                  %1552 = vst [vmem:[%s1440 + $0xdc] sm:$0xf] %v1551
                  %v1553 = vld [vmem:[%s1439 + $0xe0] sm:$0xf]
                  %1554 = vst [vmem:[%s1440 + $0xe0] sm:$0xf] %v1553
                  %v1555 = vld [vmem:[%s1439 + $0xe4] sm:$0xf]
                  %1556 = vst [vmem:[%s1440 + $0xe4] sm:$0xf] %v1555
                  %v1557 = vld [vmem:[%s1439 + $0xe8] sm:$0xf]
                  %1558 = vst [vmem:[%s1440 + $0xe8] sm:$0xf] %v1557
                  %v1559 = vld [vmem:[%s1439 + $0xec] sm:$0xf]
                  %1560 = vst [vmem:[%s1440 + $0xec] sm:$0xf] %v1559
                  %v1561 = vld [vmem:[%s1439 + $0xf0] sm:$0xf]
                  %1562 = vst [vmem:[%s1440 + $0xf0] sm:$0xf] %v1561
                  %v1563 = vld [vmem:[%s1439 + $0xf4] sm:$0xf]
                  %1564 = vst [vmem:[%s1440 + $0xf4] sm:$0xf] %v1563
                  %v1565 = vld [vmem:[%s1439 + $0xf8] sm:$0xf]
                  %1566 = vst [vmem:[%s1440 + $0xf8] sm:$0xf] %v1565
                  %v1567 = vld [vmem:[%s1439 + $0xfc] sm:$0xf]
                  %1568 = vst [vmem:[%s1440 + $0xfc] sm:$0xf] %v1567
                  %s1569 = sadd.s32 1, %s1438
                  %p1570 = scmp.ge.s32.totalorder %s1569, %s1431
                  %s1571 = scalar_select %p1570, 0, %s1569
                  %s1572 = smul.u32 %s1571, 256
                  %s1573 = smul.u32 %s1571, 256
                  %s1574 = scalar_lea.vmem %s1238, %s1572 [#allocation2]
                  %s1575 = scalar_lea.vmem %s1249, %s1573
                $region71: #{geddnet_forward.24} parent=65 // loop_footer
                  %s1435 = sadd.s32 %s1433, 1
                $region72: #{geddnet_forward.24} parent=65 // loop_footer_branch
                  %1432 = sbr.rel target = $region68
                $region73: #{geddnet_forward.24} parent=65 // loop_exit
                  _
                %s1576 = sshrl.u32 %s1245, 6
                %s1577 = sand.u32 %s1245, 63
                %s1578 = smul.u32 %s1576, 64
                %s1579 = smul.u32 4, %s1578
                %s1580 = scalar_lea.vmem %s1238, %s1579 [#allocation2]
                %s1581 = smul.u32 4, %s1578
                %s1582 = scalar_lea.vmem %s1249, %s1581
                // While loop
                $region74: #{geddnet_forward.24} parent=65 // loop_pre_header
                  _
                $region75: #{geddnet_forward.24} parent=65 // loop_header
                  %s1584 = sphi 0, %s1586
                  %p1585 = scmp.ge.s32.totalorder %s1584, %s1577
                  %s1589 = sphi 0, %s1596
                  %s1590 = sphi %s1580, %s1599
                  %s1591 = sphi %s1582, %s1600
                $region76: #{geddnet_forward.24} parent=65 // loop_header_branch
                  %1588 = sbr.rel (%p1585) target = $region80
                $region77: #{geddnet_forward.24} parent=65 // loop_body
                  %v1592 = vld [vmem:[%s1590] sm:$0xf]
                  %1593 = vst [vmem:[%s1591] sm:$0xf] %v1592
                  %s1594 = sadd.s32 1, %s1589
                  %p1595 = scmp.ge.s32.totalorder %s1594, %s1577
                  %s1596 = scalar_select %p1595, 0, %s1594
                  %s1597 = smul.u32 %s1596, 4
                  %s1598 = smul.u32 %s1596, 4
                  %s1599 = scalar_lea.vmem %s1580, %s1597 [#allocation2]
                  %s1600 = scalar_lea.vmem %s1582, %s1598
                $region78: #{geddnet_forward.24} parent=65 // loop_footer
                  %s1586 = sadd.s32 %s1584, 1
                $region79: #{geddnet_forward.24} parent=65 // loop_footer_branch
                  %1583 = sbr.rel target = $region75
                $region80: #{geddnet_forward.24} parent=65 // loop_exit
                  _
              $region66: #{geddnet_forward.24} parent=43 // pred_fallthru
                _
            $region44: #{geddnet_forward.24} parent=39 // pred_fallthru
              _
            // Predicated region
            $region45: #{geddnet_forward.24} parent=39 // pred_check
              _
            $region46: #{geddnet_forward.24} parent=39 // pred_check_branch
              %1256 = sbr.rel (0) target = $region48
            $region47: #{geddnet_forward.24} parent=39 // pred_region
              %s1258 = sshrl.u32 %s1245, 6
              // While loop
              $region49: #{geddnet_forward.24} parent=47 // loop_pre_header
                _
              $region50: #{geddnet_forward.24} parent=47 // loop_header
                %s1260 = sphi 0, %s1262
                %p1261 = scmp.ge.s32.totalorder %s1260, %s1258
                %s1265 = sphi 0, %s1398
                %s1266 = sphi %s1238, %s1401
                %s1267 = sphi %s1249, %s1402
              $region51: #{geddnet_forward.24} parent=47 // loop_header_branch
                %1264 = sbr.rel (%p1261) target = $region55
              $region52: #{geddnet_forward.24} parent=47 // loop_body
                %v1268 = vld [vmem:[%s1266] sm:$0xf]
                %1269 = vst [vmem:[%s1267] sm:$0xf] %v1268
                %v1270 = vld [vmem:[%s1266 + $0x4] sm:$0xf]
                %1271 = vst [vmem:[%s1267 + $0x4] sm:$0xf] %v1270
                %v1272 = vld [vmem:[%s1266 + $0x8] sm:$0xf]
                %1273 = vst [vmem:[%s1267 + $0x8] sm:$0xf] %v1272
                %v1274 = vld [vmem:[%s1266 + $0xc] sm:$0xf]
                %1275 = vst [vmem:[%s1267 + $0xc] sm:$0xf] %v1274
                %v1276 = vld [vmem:[%s1266 + $0x10] sm:$0xf]
                %1277 = vst [vmem:[%s1267 + $0x10] sm:$0xf] %v1276
                %v1278 = vld [vmem:[%s1266 + $0x14] sm:$0xf]
                %1279 = vst [vmem:[%s1267 + $0x14] sm:$0xf] %v1278
                %v1280 = vld [vmem:[%s1266 + $0x18] sm:$0xf]
                %1281 = vst [vmem:[%s1267 + $0x18] sm:$0xf] %v1280
                %v1282 = vld [vmem:[%s1266 + $0x1c] sm:$0xf]
                %1283 = vst [vmem:[%s1267 + $0x1c] sm:$0xf] %v1282
                %v1284 = vld [vmem:[%s1266 + $0x20] sm:$0xf]
                %1285 = vst [vmem:[%s1267 + $0x20] sm:$0xf] %v1284
                %v1286 = vld [vmem:[%s1266 + $0x24] sm:$0xf]
                %1287 = vst [vmem:[%s1267 + $0x24] sm:$0xf] %v1286
                %v1288 = vld [vmem:[%s1266 + $0x28] sm:$0xf]
                %1289 = vst [vmem:[%s1267 + $0x28] sm:$0xf] %v1288
                %v1290 = vld [vmem:[%s1266 + $0x2c] sm:$0xf]
                %1291 = vst [vmem:[%s1267 + $0x2c] sm:$0xf] %v1290
                %v1292 = vld [vmem:[%s1266 + $0x30] sm:$0xf]
                %1293 = vst [vmem:[%s1267 + $0x30] sm:$0xf] %v1292
                %v1294 = vld [vmem:[%s1266 + $0x34] sm:$0xf]
                %1295 = vst [vmem:[%s1267 + $0x34] sm:$0xf] %v1294
                %v1296 = vld [vmem:[%s1266 + $0x38] sm:$0xf]
                %1297 = vst [vmem:[%s1267 + $0x38] sm:$0xf] %v1296
                %v1298 = vld [vmem:[%s1266 + $0x3c] sm:$0xf]
                %1299 = vst [vmem:[%s1267 + $0x3c] sm:$0xf] %v1298
                %v1300 = vld [vmem:[%s1266 + $0x40] sm:$0xf]
                %1301 = vst [vmem:[%s1267 + $0x40] sm:$0xf] %v1300
                %v1302 = vld [vmem:[%s1266 + $0x44] sm:$0xf]
                %1303 = vst [vmem:[%s1267 + $0x44] sm:$0xf] %v1302
                %v1304 = vld [vmem:[%s1266 + $0x48] sm:$0xf]
                %1305 = vst [vmem:[%s1267 + $0x48] sm:$0xf] %v1304
                %v1306 = vld [vmem:[%s1266 + $0x4c] sm:$0xf]
                %1307 = vst [vmem:[%s1267 + $0x4c] sm:$0xf] %v1306
                %v1308 = vld [vmem:[%s1266 + $0x50] sm:$0xf]
                %1309 = vst [vmem:[%s1267 + $0x50] sm:$0xf] %v1308
                %v1310 = vld [vmem:[%s1266 + $0x54] sm:$0xf]
                %1311 = vst [vmem:[%s1267 + $0x54] sm:$0xf] %v1310
                %v1312 = vld [vmem:[%s1266 + $0x58] sm:$0xf]
                %1313 = vst [vmem:[%s1267 + $0x58] sm:$0xf] %v1312
                %v1314 = vld [vmem:[%s1266 + $0x5c] sm:$0xf]
                %1315 = vst [vmem:[%s1267 + $0x5c] sm:$0xf] %v1314
                %v1316 = vld [vmem:[%s1266 + $0x60] sm:$0xf]
                %1317 = vst [vmem:[%s1267 + $0x60] sm:$0xf] %v1316
                %v1318 = vld [vmem:[%s1266 + $0x64] sm:$0xf]
                %1319 = vst [vmem:[%s1267 + $0x64] sm:$0xf] %v1318
                %v1320 = vld [vmem:[%s1266 + $0x68] sm:$0xf]
                %1321 = vst [vmem:[%s1267 + $0x68] sm:$0xf] %v1320
                %v1322 = vld [vmem:[%s1266 + $0x6c] sm:$0xf]
                %1323 = vst [vmem:[%s1267 + $0x6c] sm:$0xf] %v1322
                %v1324 = vld [vmem:[%s1266 + $0x70] sm:$0xf]
                %1325 = vst [vmem:[%s1267 + $0x70] sm:$0xf] %v1324
                %v1326 = vld [vmem:[%s1266 + $0x74] sm:$0xf]
                %1327 = vst [vmem:[%s1267 + $0x74] sm:$0xf] %v1326
                %v1328 = vld [vmem:[%s1266 + $0x78] sm:$0xf]
                %1329 = vst [vmem:[%s1267 + $0x78] sm:$0xf] %v1328
                %v1330 = vld [vmem:[%s1266 + $0x7c] sm:$0xf]
                %1331 = vst [vmem:[%s1267 + $0x7c] sm:$0xf] %v1330
                %v1332 = vld [vmem:[%s1266 + $0x80] sm:$0xf]
                %1333 = vst [vmem:[%s1267 + $0x80] sm:$0xf] %v1332
                %v1334 = vld [vmem:[%s1266 + $0x84] sm:$0xf]
                %1335 = vst [vmem:[%s1267 + $0x84] sm:$0xf] %v1334
                %v1336 = vld [vmem:[%s1266 + $0x88] sm:$0xf]
                %1337 = vst [vmem:[%s1267 + $0x88] sm:$0xf] %v1336
                %v1338 = vld [vmem:[%s1266 + $0x8c] sm:$0xf]
                %1339 = vst [vmem:[%s1267 + $0x8c] sm:$0xf] %v1338
                %v1340 = vld [vmem:[%s1266 + $0x90] sm:$0xf]
                %1341 = vst [vmem:[%s1267 + $0x90] sm:$0xf] %v1340
                %v1342 = vld [vmem:[%s1266 + $0x94] sm:$0xf]
                %1343 = vst [vmem:[%s1267 + $0x94] sm:$0xf] %v1342
                %v1344 = vld [vmem:[%s1266 + $0x98] sm:$0xf]
                %1345 = vst [vmem:[%s1267 + $0x98] sm:$0xf] %v1344
                %v1346 = vld [vmem:[%s1266 + $0x9c] sm:$0xf]
                %1347 = vst [vmem:[%s1267 + $0x9c] sm:$0xf] %v1346
                %v1348 = vld [vmem:[%s1266 + $0xa0] sm:$0xf]
                %1349 = vst [vmem:[%s1267 + $0xa0] sm:$0xf] %v1348
                %v1350 = vld [vmem:[%s1266 + $0xa4] sm:$0xf]
                %1351 = vst [vmem:[%s1267 + $0xa4] sm:$0xf] %v1350
                %v1352 = vld [vmem:[%s1266 + $0xa8] sm:$0xf]
                %1353 = vst [vmem:[%s1267 + $0xa8] sm:$0xf] %v1352
                %v1354 = vld [vmem:[%s1266 + $0xac] sm:$0xf]
                %1355 = vst [vmem:[%s1267 + $0xac] sm:$0xf] %v1354
                %v1356 = vld [vmem:[%s1266 + $0xb0] sm:$0xf]
                %1357 = vst [vmem:[%s1267 + $0xb0] sm:$0xf] %v1356
                %v1358 = vld [vmem:[%s1266 + $0xb4] sm:$0xf]
                %1359 = vst [vmem:[%s1267 + $0xb4] sm:$0xf] %v1358
                %v1360 = vld [vmem:[%s1266 + $0xb8] sm:$0xf]
                %1361 = vst [vmem:[%s1267 + $0xb8] sm:$0xf] %v1360
                %v1362 = vld [vmem:[%s1266 + $0xbc] sm:$0xf]
                %1363 = vst [vmem:[%s1267 + $0xbc] sm:$0xf] %v1362
                %v1364 = vld [vmem:[%s1266 + $0xc0] sm:$0xf]
                %1365 = vst [vmem:[%s1267 + $0xc0] sm:$0xf] %v1364
                %v1366 = vld [vmem:[%s1266 + $0xc4] sm:$0xf]
                %1367 = vst [vmem:[%s1267 + $0xc4] sm:$0xf] %v1366
                %v1368 = vld [vmem:[%s1266 + $0xc8] sm:$0xf]
                %1369 = vst [vmem:[%s1267 + $0xc8] sm:$0xf] %v1368
                %v1370 = vld [vmem:[%s1266 + $0xcc] sm:$0xf]
                %1371 = vst [vmem:[%s1267 + $0xcc] sm:$0xf] %v1370
                %v1372 = vld [vmem:[%s1266 + $0xd0] sm:$0xf]
                %1373 = vst [vmem:[%s1267 + $0xd0] sm:$0xf] %v1372
                %v1374 = vld [vmem:[%s1266 + $0xd4] sm:$0xf]
                %1375 = vst [vmem:[%s1267 + $0xd4] sm:$0xf] %v1374
                %v1376 = vld [vmem:[%s1266 + $0xd8] sm:$0xf]
                %1377 = vst [vmem:[%s1267 + $0xd8] sm:$0xf] %v1376
                %v1378 = vld [vmem:[%s1266 + $0xdc] sm:$0xf]
                %1379 = vst [vmem:[%s1267 + $0xdc] sm:$0xf] %v1378
                %v1380 = vld [vmem:[%s1266 + $0xe0] sm:$0xf]
                %1381 = vst [vmem:[%s1267 + $0xe0] sm:$0xf] %v1380
                %v1382 = vld [vmem:[%s1266 + $0xe4] sm:$0xf]
                %1383 = vst [vmem:[%s1267 + $0xe4] sm:$0xf] %v1382
                %v1384 = vld [vmem:[%s1266 + $0xe8] sm:$0xf]
                %1385 = vst [vmem:[%s1267 + $0xe8] sm:$0xf] %v1384
                %v1386 = vld [vmem:[%s1266 + $0xec] sm:$0xf]
                %1387 = vst [vmem:[%s1267 + $0xec] sm:$0xf] %v1386
                %v1388 = vld [vmem:[%s1266 + $0xf0] sm:$0xf]
                %1389 = vst [vmem:[%s1267 + $0xf0] sm:$0xf] %v1388
                %v1390 = vld [vmem:[%s1266 + $0xf4] sm:$0xf]
                %1391 = vst [vmem:[%s1267 + $0xf4] sm:$0xf] %v1390
                %v1392 = vld [vmem:[%s1266 + $0xf8] sm:$0xf]
                %1393 = vst [vmem:[%s1267 + $0xf8] sm:$0xf] %v1392
                %v1394 = vld [vmem:[%s1266 + $0xfc] sm:$0xf]
                %1395 = vst [vmem:[%s1267 + $0xfc] sm:$0xf] %v1394
                %s1396 = sadd.s32 1, %s1265
                %p1397 = scmp.ge.s32.totalorder %s1396, %s1258
                %s1398 = scalar_select %p1397, 0, %s1396
                %s1399 = smul.u32 %s1398, 256
                %s1400 = smul.u32 %s1398, 256
                %s1401 = scalar_lea.vmem %s1238, %s1399 [#allocation2]
                %s1402 = scalar_lea.vmem %s1249, %s1400
              $region53: #{geddnet_forward.24} parent=47 // loop_footer
                %s1262 = sadd.s32 %s1260, 1
              $region54: #{geddnet_forward.24} parent=47 // loop_footer_branch
                %1259 = sbr.rel target = $region50
              $region55: #{geddnet_forward.24} parent=47 // loop_exit
                _
              %s1403 = sshrl.u32 %s1245, 6
              %s1404 = sand.u32 %s1245, 63
              %s1405 = smul.u32 %s1403, 64
              %s1406 = smul.u32 4, %s1405
              %s1407 = scalar_lea.vmem %s1238, %s1406 [#allocation2]
              %s1408 = smul.u32 4, %s1405
              %s1409 = scalar_lea.vmem %s1249, %s1408
              // While loop
              $region56: #{geddnet_forward.24} parent=47 // loop_pre_header
                _
              $region57: #{geddnet_forward.24} parent=47 // loop_header
                %s1411 = sphi 0, %s1413
                %p1412 = scmp.ge.s32.totalorder %s1411, %s1404
                %s1416 = sphi 0, %s1423
                %s1417 = sphi %s1407, %s1426
                %s1418 = sphi %s1409, %s1427
              $region58: #{geddnet_forward.24} parent=47 // loop_header_branch
                %1415 = sbr.rel (%p1412) target = $region62
              $region59: #{geddnet_forward.24} parent=47 // loop_body
                %v1419 = vld [vmem:[%s1417] sm:$0xf]
                %1420 = vst [vmem:[%s1418] sm:$0xf] %v1419
                %s1421 = sadd.s32 1, %s1416
                %p1422 = scmp.ge.s32.totalorder %s1421, %s1404
                %s1423 = scalar_select %p1422, 0, %s1421
                %s1424 = smul.u32 %s1423, 4
                %s1425 = smul.u32 %s1423, 4
                %s1426 = scalar_lea.vmem %s1407, %s1424 [#allocation2]
                %s1427 = scalar_lea.vmem %s1409, %s1425
              $region60: #{geddnet_forward.24} parent=47 // loop_footer
                %s1413 = sadd.s32 %s1411, 1
              $region61: #{geddnet_forward.24} parent=47 // loop_footer_branch
                %1410 = sbr.rel target = $region57
              $region62: #{geddnet_forward.24} parent=47 // loop_exit
                _
            $region48: #{geddnet_forward.24} parent=39 // pred_fallthru
              _
          $region40: #{geddnet_forward.24} parent=35 // pred_fallthru
            _
          %1601 = vnop
        $region36: #{geddnet_forward.24} parent=31 // pred_fallthru
          _
      $region32: #{geddnet_forward.24} parent=5 // pred_fallthru
        _
      %p1602 = scmp.le.s32.totalorder 2, %s9
      // Predicated region
      $region81: #{geddnet_forward.24} parent=5 // pred_check
        %p1603 = pneg %p1602
      $region82: #{geddnet_forward.24} parent=5 // pred_check_branch
        %1605 = sbr.rel (%p1603) target = $region84
      $region83: #{geddnet_forward.24} parent=5 // pred_region
        %s1606 = ssub.s32 %s9, 2
        // Predicated region
        $region85: #{geddnet_forward.24} parent=83 // pred_check
          %p1607 = pneg %p106
        $region86: #{geddnet_forward.24} parent=83 // pred_check_branch
          %1609 = sbr.rel (%p1607) target = $region88
        $region87: #{geddnet_forward.24} parent=83 // pred_region
          %s1610 = sand.u32 %s91, 1
          %s1611 = sand.u32 %s91, 1
          %s1612 = smul.addr %s1611, 256
          %s1613 = scalar_lea.vmem [#allocation2], %s1612
        $region88: #{geddnet_forward.24} parent=83 // pred_fallthru
          _
      $region84: #{geddnet_forward.24} parent=5 // pred_fallthru
        _
    $region6: #{geddnet_forward.24} parent=1 // loop_footer
      %s13 = sadd.s32 1, %s9
    $region7: #{geddnet_forward.24} parent=1 // loop_footer_branch
      %8 = sbr.rel target = $region3
    $region8: #{geddnet_forward.24} parent=1 // loop_exit
      _

// kernel: geddnet_forward.25
$region0: #{geddnet_forward.25}
  #allocation0 [shape = 'u32[]', space=smem, size = 0x4, offset = 0x4, fixed_abs, tag = 'smem constant byte address 0x4 - core index']
  #allocation1 [shape = 'u32[144,128]{1,0:T(1,128)}', space=vmem, size = 0x12000, scoped, tag = 'internal scratch']
  %s0 = inlined_call_operand.vmem [shape: bf16[128,72], index: 0, kind: input, shape index: {}]
  %s1 = inlined_call_operand.vmem [shape: bf16[72,16], index: 1, kind: input, shape index: {}]
  %s2 = inlined_call_operand.vmem [shape: f32[1,16], index: 2, kind: input, shape index: {}]
  %s3 = inlined_call_operand.vmem [shape: bf16[128,16], index: 3, kind: output, shape index: {}]
  %s4 = sld [smem:[#allocation0]]
  $region22: #{geddnet_forward.25} parent=0
    _
  %s6 = ssub.s32 1, %s4
  %s7 = scalar_select 0, %s6, %s4
  // Predicated region
  $region2: #{geddnet_forward.25} parent=0 // pred_check
    _
  $region3: #{geddnet_forward.25} parent=0 // pred_check_branch
    %9 = sbr.rel (0) target = $region5
  $region4: #{geddnet_forward.25} parent=0 // pred_region
    _
  $region5: #{geddnet_forward.25} parent=0 // pred_fallthru
    _
  // Predicated region
  $region6: #{geddnet_forward.25} parent=0 // pred_check
    _
  $region7: #{geddnet_forward.25} parent=0 // pred_check_branch
    %11 = sbr.rel (0) target = $region9
  $region8: #{geddnet_forward.25} parent=0 // pred_region
    _
  $region9: #{geddnet_forward.25} parent=0 // pred_fallthru
    _
  // Predicated region
  $region10: #{geddnet_forward.25} parent=0 // pred_check
    _
  $region11: #{geddnet_forward.25} parent=0 // pred_check_branch
    %13 = sbr.rel (0) target = $region13
  $region12: #{geddnet_forward.25} parent=0 // pred_region
    _
  $region13: #{geddnet_forward.25} parent=0 // pred_fallthru
    _
  %v15 = vld [vmem:[%s0] sm:$0xf]
  %v16 = vld [vmem:[%s0 + $0x4] sm:$0xf]
  %v17 = vld [vmem:[%s0 + $0x8] sm:$0xf]
  %v18 = vld [vmem:[%s0 + $0xc] sm:$0xf]
  %v19 = vld [vmem:[%s0 + $0x10] sm:$0xf]
  %v20 = vld [vmem:[%s0 + $0x14] sm:$0xf]
  %v21 = vld [vmem:[%s0 + $0x18] sm:$0xf]
  %v22 = vld [vmem:[%s0 + $0x1c] sm:$0xf]
  %v23 = vld [vmem:[%s0 + $0x20] sm:$0xf]
  %v24 = vld [vmem:[%s0 + $0x24] sm:$0xf]
  %v25 = vld [vmem:[%s0 + $0x28] sm:$0xf]
  %v26 = vld [vmem:[%s0 + $0x2c] sm:$0xf]
  %v27 = vld [vmem:[%s0 + $0x30] sm:$0xf]
  %v28 = vld [vmem:[%s0 + $0x34] sm:$0xf]
  %v29 = vld [vmem:[%s0 + $0x38] sm:$0xf]
  %v30 = vld [vmem:[%s0 + $0x3c] sm:$0xf]
  %v31 = vld [vmem:[%s1] sm:$0xf]
  %v32 = vld [vmem:[%s1 + $0x4] sm:$0xf]
  %v33 = vld [vmem:[%s1 + $0x8] sm:$0xf]
  %v34 = vld [vmem:[%s1 + $0xc] sm:$0xf]
  %v35 = vld [vmem:[%s1 + $0x10] sm:$0xf]
  %v36 = vld [vmem:[%s1 + $0x14] sm:$0xf]
  %v37 = vld [vmem:[%s1 + $0x18] sm:$0xf]
  %v38 = vld [vmem:[%s1 + $0x1c] sm:$0xf]
  %v39 = vld [vmem:[%s1 + $0x20] sm:$0xf]
  %v40 = vld [vmem:[%s2] sm:$0x1]
  %v42 = vlaneseq
  %v43 = vshrl.u32 %v42, 7
  %v44 = vsub.s32 0, %v43
  %v45 = vrot.slane %v40, %v44
  %v63 = vunpack.c.l.b16 %v15
  %v64 = vunpack.c.l.b16 %v16
  %v65 = vunpack.c.l.b16 %v17
  %v66 = vunpack.c.l.b16 %v18
  %v67 = vunpack.c.l.b16 %v19
  %v68 = vunpack.c.l.b16 %v20
  %v69 = vunpack.c.l.b16 %v21
  %v70 = vunpack.c.l.b16 %v22
  %v71 = vunpack.c.l.b16 %v23
  %v72 = vunpack.c.l.b16 %v24
  %v73 = vunpack.c.l.b16 %v25
  %v74 = vunpack.c.l.b16 %v26
  %v75 = vunpack.c.l.b16 %v27
  %v76 = vunpack.c.l.b16 %v28
  %v77 = vunpack.c.l.b16 %v29
  %v78 = vunpack.c.l.b16 %v30
  %v79 = vpack.c.b16 %v64, %v63
  %v80 = vpack.c.b16 %v66, %v65
  %v81 = vpack.c.b16 %v68, %v67
  %v82 = vpack.c.b16 %v70, %v69
  %v83 = vpack.c.b16 %v72, %v71
  %v84 = vpack.c.b16 %v74, %v73
  %v85 = vpack.c.b16 %v76, %v75
  %v86 = vpack.c.b16 %v78, %v77
  %v96 = vunpack.c.l.b16 %v31
  %v97 = vunpack.c.l.b16 %v32
  %v98 = vunpack.c.l.b16 %v33
  %v99 = vunpack.c.l.b16 %v34
  %v100 = vunpack.c.l.b16 %v35
  %v101 = vunpack.c.l.b16 %v36
  %v102 = vunpack.c.l.b16 %v37
  %v103 = vunpack.c.l.b16 %v38
  %v104 = vunpack.c.l.b16 %v39
  %v105 = vpack.c.b16 %v97, %v96
  %v106 = vpack.c.b16 %v99, %v98
  %v107 = vpack.c.b16 %v101, %v100
  %v108 = vpack.c.b16 %v103, %v102
  %v109 = vpack.c.b16 %v104, %v104
  %vm114 = vcmask 588800
  %v116 = vsel %vm114, %v79, 0
  %v119 = vsel %vm114, %v80, 0
  %v122 = vsel %vm114, %v81, 0
  %v125 = vsel %vm114, %v82, 0
  %v128 = vsel %vm114, %v83, 0
  %v131 = vsel %vm114, %v84, 0
  %v134 = vsel %vm114, %v85, 0
  %v137 = vsel %vm114, %v86, 0
  %vm139 = vcmask 1043456
  %v141 = vsel %vm139, %v109, 0
  %143 = vmatprep.subr.bf16.mxu0 0
  %144 = vmatpush1.bf16.msra.mxu0 %v105
  %145 = vmatprep.subr.bf16.mxu0 0
  %146 = vmatpush1.bf16.msra.mxu0 %v106
  %147 = vmatprep.subr.bf16.mxu0 0
  %148 = vmatpush1.bf16.msra.mxu0 %v107
  %149 = vmatprep.subr.bf16.mxu0 0
  %150 = vmatpush1.bf16.msra.mxu0 %v108
  %151 = vmatprep.subr.bf16.mxu0 0
  %152 = vmatpush1.bf16.msra.mxu0 %v141
  %153 = vmatprep.subr.bf16.mxu0 0
  %154 = vmatpush1.bf16.msra.mxu0 0
  %155 = vmatprep.subr.bf16.mxu0 0
  %156 = vmatpush1.bf16.msra.mxu0 0
  %157 = vmatprep.subr.bf16.mxu0 0
  %158 = vmatpush1.bf16.msra.mxu0 0
  %159 = vmatprep.subr.bf16.mxu0 0
  %160 = vmatpush1.bf16.msra.mxu0 0
  %161 = vmatprep.subr.bf16.mxu0 0
  %162 = vmatpush1.bf16.msra.mxu0 0
  %163 = vmatprep.subr.bf16.mxu0 0
  %164 = vmatpush1.bf16.msra.mxu0 0
  %165 = vmatprep.subr.bf16.mxu0 0
  %166 = vmatpush1.bf16.msra.mxu0 0
  %167 = vmatprep.subr.bf16.mxu0 0
  %168 = vmatpush1.bf16.msra.mxu0 0
  %169 = vmatprep.subr.bf16.mxu0 0
  %170 = vmatpush1.bf16.msra.mxu0 0
  %171 = vmatprep.subr.bf16.mxu0 0
  %172 = vmatpush1.bf16.msra.mxu0 0
  %173 = vmatprep.subr.bf16.mxu0 0
  %174 = vmatpush1.bf16.msra.mxu0 0
  %175 = vmatprep.mubr.bf16.mxu0 0
  %176 = vmatmul.mubr.bf16.gmra.mrb[0].mxu0 %v116
  %v177 = vpop.f32.mrb[0].mxu0
  %v178 = vadd.f32 %v45, %v177
  %v179 = vpop.f32.mrb[0].mxu0
  %v180 = vpop.f32.mrb[0].mxu0
  %v181 = vadd.f32 %v45, %v180
  %v182 = vpop.f32.mrb[0].mxu0
  %183 = vmatprep.mubr.bf16.mxu0 0
  %184 = vmatmul.mubr.bf16.gmra.mrb[0].mxu0 %v119
  %v185 = vpop.f32.mrb[0].mxu0
  %v186 = vadd.f32 %v45, %v185
  %v187 = vpop.f32.mrb[0].mxu0
  %v188 = vpop.f32.mrb[0].mxu0
  %v189 = vadd.f32 %v45, %v188
  %v190 = vpop.f32.mrb[0].mxu0
  %191 = vmatprep.mubr.bf16.mxu0 0
  %192 = vmatmul.mubr.bf16.gmra.mrb[0].mxu0 %v122
  %v193 = vpop.f32.mrb[0].mxu0
  %v194 = vadd.f32 %v45, %v193
  %v195 = vpop.f32.mrb[0].mxu0
  %v196 = vpop.f32.mrb[0].mxu0
  %v197 = vadd.f32 %v45, %v196
  %v198 = vpop.f32.mrb[0].mxu0
  %199 = vmatprep.mubr.bf16.mxu0 0
  %200 = vmatmul.mubr.bf16.gmra.mrb[0].mxu0 %v125
  %v201 = vpop.f32.mrb[0].mxu0
  %v202 = vadd.f32 %v45, %v201
  %v203 = vpop.f32.mrb[0].mxu0
  %v204 = vpop.f32.mrb[0].mxu0
  %v205 = vadd.f32 %v45, %v204
  %v206 = vpop.f32.mrb[0].mxu0
  %207 = vmatprep.mubr.bf16.mxu0 0
  %208 = vmatmul.mubr.bf16.gmra.mrb[0].mxu0 %v128
  %v209 = vpop.f32.mrb[0].mxu0
  %v210 = vadd.f32 %v45, %v209
  %v211 = vpop.f32.mrb[0].mxu0
  %v212 = vpop.f32.mrb[0].mxu0
  %v213 = vadd.f32 %v45, %v212
  %v214 = vpop.f32.mrb[0].mxu0
  %215 = vmatprep.mubr.bf16.mxu0 0
  %216 = vmatmul.mubr.bf16.gmra.mrb[0].mxu0 %v131
  %v217 = vpop.f32.mrb[0].mxu0
  %v218 = vadd.f32 %v45, %v217
  %v219 = vpop.f32.mrb[0].mxu0
  %v220 = vpop.f32.mrb[0].mxu0
  %v221 = vadd.f32 %v45, %v220
  %v222 = vpop.f32.mrb[0].mxu0
  %223 = vmatprep.mubr.bf16.mxu0 0
  %224 = vmatmul.mubr.bf16.gmra.mrb[0].mxu0 %v134
  %v225 = vpop.f32.mrb[0].mxu0
  %v226 = vadd.f32 %v45, %v225
  %v227 = vpop.f32.mrb[0].mxu0
  %v228 = vpop.f32.mrb[0].mxu0
  %v229 = vadd.f32 %v45, %v228
  %v230 = vpop.f32.mrb[0].mxu0
  %231 = vmatprep.mubr.bf16.mxu0 0
  %232 = vmatmul.mubr.bf16.gmra.mrb[0].mxu0 %v137
  %v233 = vpop.f32.mrb[0].mxu0
  %v234 = vadd.f32 %v45, %v233
  %v235 = vpop.f32.mrb[0].mxu0
  %v236 = vpop.f32.mrb[0].mxu0
  %v237 = vadd.f32 %v45, %v236
  %v238 = vpop.f32.mrb[0].mxu0
  %239 = vdwg.mxu0
  %v240 = vmax.f32 %v178, 0.0
  %v241 = vmax.f32 %v181, 0.0
  %v242 = vmax.f32 %v186, 0.0
  %v243 = vmax.f32 %v189, 0.0
  %v244 = vmax.f32 %v194, 0.0
  %v245 = vmax.f32 %v197, 0.0
  %v246 = vmax.f32 %v202, 0.0
  %v247 = vmax.f32 %v205, 0.0
  %v248 = vmax.f32 %v210, 0.0
  %v249 = vmax.f32 %v213, 0.0
  %v250 = vmax.f32 %v218, 0.0
  %v251 = vmax.f32 %v221, 0.0
  %v252 = vmax.f32 %v226, 0.0
  %v253 = vmax.f32 %v229, 0.0
  %v254 = vmax.f32 %v234, 0.0
  %v255 = vmax.f32 %v237, 0.0
  %v256 = vpack.c.bf16 %v241, %v240
  %v257 = vpack.c.bf16 %v243, %v242
  %v258 = vpack.c.bf16 %v245, %v244
  %v259 = vpack.c.bf16 %v247, %v246
  %v260 = vpack.c.bf16 %v249, %v248
  %v261 = vpack.c.bf16 %v251, %v250
  %v262 = vpack.c.bf16 %v253, %v252
  %v263 = vpack.c.bf16 %v255, %v254
  %v272 = vunpack.c.l.b16 %v256
  %v273 = vunpack.c.h.b16 %v256
  %v274 = vunpack.c.l.b16 %v257
  %v275 = vunpack.c.h.b16 %v257
  %v276 = vunpack.c.l.b16 %v258
  %v277 = vunpack.c.h.b16 %v258
  %v278 = vunpack.c.l.b16 %v259
  %v279 = vunpack.c.h.b16 %v259
  %v280 = vunpack.c.l.b16 %v260
  %v281 = vunpack.c.h.b16 %v260
  %v282 = vunpack.c.l.b16 %v261
  %v283 = vunpack.c.h.b16 %v261
  %v284 = vunpack.c.l.b16 %v262
  %v285 = vunpack.c.h.b16 %v262
  %v286 = vunpack.c.l.b16 %v263
  %v287 = vunpack.c.h.b16 %v263
  %v288 = vpack.c.b16 %v272, %v272
  %v289 = vpack.c.b16 %v273, %v273
  %v290 = vpack.c.b16 %v274, %v274
  %v291 = vpack.c.b16 %v275, %v275
  %v292 = vpack.c.b16 %v276, %v276
  %v293 = vpack.c.b16 %v277, %v277
  %v294 = vpack.c.b16 %v278, %v278
  %v295 = vpack.c.b16 %v279, %v279
  %v296 = vpack.c.b16 %v280, %v280
  %v297 = vpack.c.b16 %v281, %v281
  %v298 = vpack.c.b16 %v282, %v282
  %v299 = vpack.c.b16 %v283, %v283
  %v300 = vpack.c.b16 %v284, %v284
  %v301 = vpack.c.b16 %v285, %v285
  %v302 = vpack.c.b16 %v286, %v286
  %v303 = vpack.c.b16 %v287, %v287
  %vm320 = vcmask 125952
  %321 = vst.msk [vmem:[%s3] sm:$0xf] %vm320, %v288
  %322 = vst.msk [vmem:[%s3 + $0x4] sm:$0xf] %vm320, %v289
  %323 = vst.msk [vmem:[%s3 + $0x8] sm:$0xf] %vm320, %v290
  %324 = vst.msk [vmem:[%s3 + $0xc] sm:$0xf] %vm320, %v291
  %325 = vst.msk [vmem:[%s3 + $0x10] sm:$0xf] %vm320, %v292
  %326 = vst.msk [vmem:[%s3 + $0x14] sm:$0xf] %vm320, %v293
  %327 = vst.msk [vmem:[%s3 + $0x18] sm:$0xf] %vm320, %v294
  %328 = vst.msk [vmem:[%s3 + $0x1c] sm:$0xf] %vm320, %v295
  %329 = vst.msk [vmem:[%s3 + $0x20] sm:$0xf] %vm320, %v296
  %330 = vst.msk [vmem:[%s3 + $0x24] sm:$0xf] %vm320, %v297
  %331 = vst.msk [vmem:[%s3 + $0x28] sm:$0xf] %vm320, %v298
  %332 = vst.msk [vmem:[%s3 + $0x2c] sm:$0xf] %vm320, %v299
  %333 = vst.msk [vmem:[%s3 + $0x30] sm:$0xf] %vm320, %v300
  %334 = vst.msk [vmem:[%s3 + $0x34] sm:$0xf] %vm320, %v301
  %335 = vst.msk [vmem:[%s3 + $0x38] sm:$0xf] %vm320, %v302
  %336 = vst.msk [vmem:[%s3 + $0x3c] sm:$0xf] %vm320, %v303
  // Predicated region
  $region14: #{geddnet_forward.25} parent=0 // pred_check
    _
  $region15: #{geddnet_forward.25} parent=0 // pred_check_branch
    %338 = sbr.rel (0) target = $region17
  $region16: #{geddnet_forward.25} parent=0 // pred_region
    _
  $region17: #{geddnet_forward.25} parent=0 // pred_fallthru
    _
  // Predicated region
  $region18: #{geddnet_forward.25} parent=0 // pred_check
    _
  $region19: #{geddnet_forward.25} parent=0 // pred_check_branch
    %340 = sbr.rel (0) target = $region21
  $region20: #{geddnet_forward.25} parent=0 // pred_region
    _
  $region21: #{geddnet_forward.25} parent=0 // pred_fallthru
    _

// kernel: geddnet_forward.26
$region0: #{geddnet_forward.26}
  #allocation0 [shape = 'u32[]', space=smem, size = 0x4, offset = 0x4, fixed_abs, tag = 'smem constant byte address 0x4 - core index']
  #allocation1 [shape = 'u32[144,128]{1,0:T(1,128)}', space=vmem, size = 0x12000, scoped, tag = 'internal scratch']
  %s0 = inlined_call_operand.vmem [shape: bf16[72,144], index: 0, kind: input, shape index: {}]
  %s1 = inlined_call_operand.vmem [shape: bf16[144,16], index: 1, kind: input, shape index: {}]
  %s2 = inlined_call_operand.vmem [shape: f32[1,16], index: 2, kind: input, shape index: {}]
  %s3 = inlined_call_operand.vmem [shape: bf16[72,16], index: 3, kind: output, shape index: {}]
  %s4 = sld [smem:[#allocation0]]
  $region22: #{geddnet_forward.26} parent=0
    _
  %s6 = ssub.s32 1, %s4
  %s7 = scalar_select 0, %s6, %s4
  // Predicated region
  $region2: #{geddnet_forward.26} parent=0 // pred_check
    _
  $region3: #{geddnet_forward.26} parent=0 // pred_check_branch
    %9 = sbr.rel (0) target = $region5
  $region4: #{geddnet_forward.26} parent=0 // pred_region
    _
  $region5: #{geddnet_forward.26} parent=0 // pred_fallthru
    _
  // Predicated region
  $region6: #{geddnet_forward.26} parent=0 // pred_check
    _
  $region7: #{geddnet_forward.26} parent=0 // pred_check_branch
    %11 = sbr.rel (0) target = $region9
  $region8: #{geddnet_forward.26} parent=0 // pred_region
    _
  $region9: #{geddnet_forward.26} parent=0 // pred_fallthru
    _
  // Predicated region
  $region10: #{geddnet_forward.26} parent=0 // pred_check
    _
  $region11: #{geddnet_forward.26} parent=0 // pred_check_branch
    %13 = sbr.rel (0) target = $region13
  $region12: #{geddnet_forward.26} parent=0 // pred_region
    _
  $region13: #{geddnet_forward.26} parent=0 // pred_fallthru
    _
  %v15 = vld [vmem:[%s0] sm:$0xff]
  %v16 = vld [vmem:[%s0 + $0x8] sm:$0xff]
  %v17 = vld [vmem:[%s0 + $0x10] sm:$0xff]
  %v18 = vld [vmem:[%s0 + $0x18] sm:$0xff]
  %v19 = vld [vmem:[%s0 + $0x20] sm:$0xff]
  %v20 = vld [vmem:[%s0 + $0x28] sm:$0xff]
  %v21 = vld [vmem:[%s0 + $0x30] sm:$0xff]
  %v22 = vld [vmem:[%s0 + $0x38] sm:$0xff]
  %v23 = vld [vmem:[%s0 + $0x40] sm:$0xff]
  %v24 = vld [vmem:[%s1] sm:$0xf]
  %v25 = vld [vmem:[%s1 + $0x4] sm:$0xf]
  %v26 = vld [vmem:[%s1 + $0x8] sm:$0xf]
  %v27 = vld [vmem:[%s1 + $0xc] sm:$0xf]
  %v28 = vld [vmem:[%s1 + $0x10] sm:$0xf]
  %v29 = vld [vmem:[%s1 + $0x14] sm:$0xf]
  %v30 = vld [vmem:[%s1 + $0x18] sm:$0xf]
  %v31 = vld [vmem:[%s1 + $0x1c] sm:$0xf]
  %v32 = vld [vmem:[%s1 + $0x20] sm:$0xf]
  %v33 = vld [vmem:[%s1 + $0x24] sm:$0xf]
  %v34 = vld [vmem:[%s1 + $0x28] sm:$0xf]
  %v35 = vld [vmem:[%s1 + $0x2c] sm:$0xf]
  %v36 = vld [vmem:[%s1 + $0x30] sm:$0xf]
  %v37 = vld [vmem:[%s1 + $0x34] sm:$0xf]
  %v38 = vld [vmem:[%s1 + $0x38] sm:$0xf]
  %v39 = vld [vmem:[%s1 + $0x3c] sm:$0xf]
  %v40 = vld [vmem:[%s1 + $0x40] sm:$0xf]
  %v41 = vld [vmem:[%s1 + $0x44] sm:$0xf]
  %v42 = vld [vmem:[%s2] sm:$0x1]
  %v44 = vlaneseq
  %v45 = vshrl.u32 %v44, 7
  %v46 = vsub.s32 0, %v45
  %v47 = vrot.slane %v42, %v46
  %v58 = vunpack.c.l.b16 %v15
  %v59 = vunpack.c.h.b16 %v15
  %v60 = vunpack.c.l.b16 %v16
  %v61 = vunpack.c.h.b16 %v16
  %v62 = vunpack.c.l.b16 %v17
  %v63 = vunpack.c.h.b16 %v17
  %v64 = vunpack.c.l.b16 %v18
  %v65 = vunpack.c.h.b16 %v18
  %v66 = vunpack.c.l.b16 %v19
  %v67 = vunpack.c.h.b16 %v19
  %v68 = vunpack.c.l.b16 %v20
  %v69 = vunpack.c.h.b16 %v20
  %v70 = vunpack.c.l.b16 %v21
  %v71 = vunpack.c.h.b16 %v21
  %v72 = vunpack.c.l.b16 %v22
  %v73 = vunpack.c.h.b16 %v22
  %v74 = vunpack.c.l.b16 %v23
  %v75 = vunpack.c.h.b16 %v23
  %v76 = vpack.c.b16 %v60, %v58
  %v77 = vpack.c.b16 %v61, %v59
  %v78 = vpack.c.b16 %v64, %v62
  %v79 = vpack.c.b16 %v65, %v63
  %v80 = vpack.c.b16 %v68, %v66
  %v81 = vpack.c.b16 %v69, %v67
  %v82 = vpack.c.b16 %v72, %v70
  %v83 = vpack.c.b16 %v73, %v71
  %v84 = vpack.c.b16 %v74, %v74
  %v85 = vpack.c.b16 %v75, %v75
  %v109 = vunpack.c.l.b16 %v24
  %v110 = vunpack.c.l.b16 %v25
  %v111 = vunpack.c.l.b16 %v26
  %v112 = vunpack.c.l.b16 %v27
  %v113 = vunpack.c.l.b16 %v28
  %v114 = vunpack.c.l.b16 %v29
  %v115 = vunpack.c.l.b16 %v30
  %v116 = vunpack.c.l.b16 %v31
  %v117 = vunpack.c.l.b16 %v32
  %v118 = vunpack.c.l.b16 %v33
  %v119 = vunpack.c.l.b16 %v34
  %v120 = vunpack.c.l.b16 %v35
  %v121 = vunpack.c.l.b16 %v36
  %v122 = vunpack.c.l.b16 %v37
  %v123 = vunpack.c.l.b16 %v38
  %v124 = vunpack.c.l.b16 %v39
  %v125 = vunpack.c.l.b16 %v40
  %v126 = vunpack.c.l.b16 %v41
  %v127 = vpack.c.b16 %v110, %v109
  %v128 = vpack.c.b16 %v112, %v111
  %v129 = vpack.c.b16 %v114, %v113
  %v130 = vpack.c.b16 %v116, %v115
  %v131 = vpack.c.b16 %v118, %v117
  %v132 = vpack.c.b16 %v120, %v119
  %v133 = vpack.c.b16 %v122, %v121
  %v134 = vpack.c.b16 %v124, %v123
  %v135 = vpack.c.b16 %v126, %v125
  %vm145 = vcmask 130048
  %v147 = vsel %vm145, %v77, 0
  %v150 = vsel %vm145, %v79, 0
  %v153 = vsel %vm145, %v81, 0
  %v156 = vsel %vm145, %v83, 0
  %v159 = vsel %vm145, %v85, 0
  %161 = vmatprep.subr.bf16.mxu0 0
  %162 = vmatpush1.bf16.msra.mxu0 %v127
  %163 = vmatprep.subr.bf16.mxu0 0
  %164 = vmatpush1.bf16.msra.mxu0 %v128
  %165 = vmatprep.subr.bf16.mxu0 0
  %166 = vmatpush1.bf16.msra.mxu0 %v129
  %167 = vmatprep.subr.bf16.mxu0 0
  %168 = vmatpush1.bf16.msra.mxu0 %v130
  %169 = vmatprep.subr.bf16.mxu0 0
  %170 = vmatpush1.bf16.msra.mxu0 %v131
  %171 = vmatprep.subr.bf16.mxu0 0
  %172 = vmatpush1.bf16.msra.mxu0 %v132
  %173 = vmatprep.subr.bf16.mxu0 0
  %174 = vmatpush1.bf16.msra.mxu0 %v133
  %175 = vmatprep.subr.bf16.mxu0 0
  %176 = vmatpush1.bf16.msra.mxu0 %v134
  %177 = vmatprep.subr.bf16.mxu0 0
  %178 = vmatpush1.bf16.msra.mxu0 %v135
  %179 = vmatprep.subr.bf16.mxu0 0
  %180 = vmatpush1.bf16.msra.mxu0 0
  %181 = vmatprep.subr.bf16.mxu0 0
  %182 = vmatpush1.bf16.msra.mxu0 0
  %183 = vmatprep.subr.bf16.mxu0 0
  %184 = vmatpush1.bf16.msra.mxu0 0
  %185 = vmatprep.subr.bf16.mxu0 0
  %186 = vmatpush1.bf16.msra.mxu0 0
  %187 = vmatprep.subr.bf16.mxu0 0
  %188 = vmatpush1.bf16.msra.mxu0 0
  %189 = vmatprep.subr.bf16.mxu0 0
  %190 = vmatpush1.bf16.msra.mxu0 0
  %191 = vmatprep.subr.bf16.mxu0 0
  %192 = vmatpush1.bf16.msra.mxu0 0
  %193 = vmatprep.mubr.bf16.mxu0 %v147
  %194 = vmatmul.mubr.bf16.gmra.mrb[0].mxu0 %v76
  %v195 = vpop.f32.mrb[0].mxu0
  %v196 = vadd.f32 %v47, %v195
  %v197 = vpop.f32.mrb[0].mxu0
  %v198 = vpop.f32.mrb[0].mxu0
  %v199 = vadd.f32 %v47, %v198
  %v200 = vpop.f32.mrb[0].mxu0
  %201 = vmatprep.mubr.bf16.mxu0 %v150
  %202 = vmatmul.mubr.bf16.gmra.mrb[0].mxu0 %v78
  %v203 = vpop.f32.mrb[0].mxu0
  %v204 = vadd.f32 %v47, %v203
  %v205 = vpop.f32.mrb[0].mxu0
  %v206 = vpop.f32.mrb[0].mxu0
  %v207 = vadd.f32 %v47, %v206
  %v208 = vpop.f32.mrb[0].mxu0
  %209 = vmatprep.mubr.bf16.mxu0 %v153
  %210 = vmatmul.mubr.bf16.gmra.mrb[0].mxu0 %v80
  %v211 = vpop.f32.mrb[0].mxu0
  %v212 = vadd.f32 %v47, %v211
  %v213 = vpop.f32.mrb[0].mxu0
  %v214 = vpop.f32.mrb[0].mxu0
  %v215 = vadd.f32 %v47, %v214
  %v216 = vpop.f32.mrb[0].mxu0
  %217 = vmatprep.mubr.bf16.mxu0 %v156
  %218 = vmatmul.mubr.bf16.gmra.mrb[0].mxu0 %v82
  %v219 = vpop.f32.mrb[0].mxu0
  %v220 = vadd.f32 %v47, %v219
  %v221 = vpop.f32.mrb[0].mxu0
  %v222 = vpop.f32.mrb[0].mxu0
  %v223 = vadd.f32 %v47, %v222
  %v224 = vpop.f32.mrb[0].mxu0
  %225 = vmatprep.mubr.bf16.mxu0 %v159
  %226 = vmatmul.mubr.bf16.gmra.mrb[0].mxu0 %v84
  %v227 = vpop.f32.mrb[0].mxu0
  %v228 = vadd.f32 %v47, %v227
  %v229 = vpop.f32.mrb[0].mxu0
  %v230 = vpop.f32.mrb[0].mxu0
  %v231 = vpop.f32.mrb[0].mxu0
  %232 = vdwg.mxu0
  %v233 = vmax.f32 %v196, 0.0
  %v234 = vmax.f32 %v199, 0.0
  %v235 = vmax.f32 %v204, 0.0
  %v236 = vmax.f32 %v207, 0.0
  %v237 = vmax.f32 %v212, 0.0
  %v238 = vmax.f32 %v215, 0.0
  %v239 = vmax.f32 %v220, 0.0
  %v240 = vmax.f32 %v223, 0.0
  %v241 = vmax.f32 %v228, 0.0
  %v242 = vmul.f32 %v233, 0.01
  %v243 = vmul.f32 %v234, 0.01
  %v244 = vmul.f32 %v235, 0.01
  %v245 = vmul.f32 %v236, 0.01
  %v246 = vmul.f32 %v237, 0.01
  %v247 = vmul.f32 %v238, 0.01
  %v248 = vmul.f32 %v239, 0.01
  %v249 = vmul.f32 %v240, 0.01
  %v250 = vmul.f32 %v241, 0.01
  %v251 = vpack.c.bf16 %v243, %v242
  %v252 = vpack.c.bf16 %v245, %v244
  %v253 = vpack.c.bf16 %v247, %v246
  %v254 = vpack.c.bf16 %v249, %v248
  %v255 = vpack.c.bf16 %v250, %v250
  %v261 = vunpack.c.l.b16 %v251
  %v262 = vunpack.c.h.b16 %v251
  %v263 = vunpack.c.l.b16 %v252
  %v264 = vunpack.c.h.b16 %v252
  %v265 = vunpack.c.l.b16 %v253
  %v266 = vunpack.c.h.b16 %v253
  %v267 = vunpack.c.l.b16 %v254
  %v268 = vunpack.c.h.b16 %v254
  %v269 = vunpack.c.l.b16 %v255
  %v270 = vpack.c.b16 %v261, %v261
  %v271 = vpack.c.b16 %v262, %v262
  %v272 = vpack.c.b16 %v263, %v263
  %v273 = vpack.c.b16 %v264, %v264
  %v274 = vpack.c.b16 %v265, %v265
  %v275 = vpack.c.b16 %v266, %v266
  %v276 = vpack.c.b16 %v267, %v267
  %v277 = vpack.c.b16 %v268, %v268
  %v278 = vpack.c.b16 %v269, %v269
  %vm288 = vcmask 125952
  %289 = vst.msk [vmem:[%s3] sm:$0xf] %vm288, %v270
  %290 = vst.msk [vmem:[%s3 + $0x4] sm:$0xf] %vm288, %v271
  %291 = vst.msk [vmem:[%s3 + $0x8] sm:$0xf] %vm288, %v272
  %292 = vst.msk [vmem:[%s3 + $0xc] sm:$0xf] %vm288, %v273
  %293 = vst.msk [vmem:[%s3 + $0x10] sm:$0xf] %vm288, %v274
  %294 = vst.msk [vmem:[%s3 + $0x14] sm:$0xf] %vm288, %v275
  %295 = vst.msk [vmem:[%s3 + $0x18] sm:$0xf] %vm288, %v276
  %296 = vst.msk [vmem:[%s3 + $0x1c] sm:$0xf] %vm288, %v277
  %297 = vst.msk [vmem:[%s3 + $0x20] sm:$0xf] %vm288, %v278
  // Predicated region
  $region14: #{geddnet_forward.26} parent=0 // pred_check
    _
  $region15: #{geddnet_forward.26} parent=0 // pred_check_branch
    %299 = sbr.rel (0) target = $region17
  $region16: #{geddnet_forward.26} parent=0 // pred_region
    _
  $region17: #{geddnet_forward.26} parent=0 // pred_fallthru
    _
  // Predicated region
  $region18: #{geddnet_forward.26} parent=0 // pred_check
    _
  $region19: #{geddnet_forward.26} parent=0 // pred_check_branch
    %301 = sbr.rel (0) target = $region21
  $region20: #{geddnet_forward.26} parent=0 // pred_region
    _
  $region21: #{geddnet_forward.26} parent=0 // pred_fallthru
    _

// kernel: geddnet_forward.27
$region0: #{geddnet_forward.27}
  #allocation0 [shape = 'u32[]', space=smem, size = 0x4, offset = 0x4, fixed_abs, tag = 'smem constant byte address 0x4 - core index']
  #allocation1 [shape = 'u32[144,128]{1,0:T(1,128)}', space=vmem, size = 0x12000, scoped, tag = 'internal scratch']
  %s0 = inlined_call_operand.vmem [shape: bf16[72,16], index: 0, kind: input, shape index: {}]
  %s1 = inlined_call_operand.vmem [shape: bf16[16,8], index: 1, kind: input, shape index: {}]
  %s2 = inlined_call_operand.vmem [shape: f32[1,8], index: 2, kind: input, shape index: {}]
  %s3 = inlined_call_operand.vmem [shape: f32[1,8], index: 3, kind: input, shape index: {}]
  %s4 = inlined_call_operand.vmem [shape: f32[1,8], index: 4, kind: input, shape index: {}]
  %s5 = inlined_call_operand.vmem [shape: bf16[72,8], index: 5, kind: output, shape index: {}]
  %s6 = sld [smem:[#allocation0]]
  $region30: #{geddnet_forward.27} parent=0
    _
  %s8 = ssub.s32 1, %s6
  %s9 = scalar_select 0, %s8, %s6
  // Predicated region
  $region2: #{geddnet_forward.27} parent=0 // pred_check
    _
  $region3: #{geddnet_forward.27} parent=0 // pred_check_branch
    %11 = sbr.rel (0) target = $region5
  $region4: #{geddnet_forward.27} parent=0 // pred_region
    _
  $region5: #{geddnet_forward.27} parent=0 // pred_fallthru
    _
  // Predicated region
  $region6: #{geddnet_forward.27} parent=0 // pred_check
    _
  $region7: #{geddnet_forward.27} parent=0 // pred_check_branch
    %13 = sbr.rel (0) target = $region9
  $region8: #{geddnet_forward.27} parent=0 // pred_region
    _
  $region9: #{geddnet_forward.27} parent=0 // pred_fallthru
    _
  // Predicated region
  $region10: #{geddnet_forward.27} parent=0 // pred_check
    _
  $region11: #{geddnet_forward.27} parent=0 // pred_check_branch
    %15 = sbr.rel (0) target = $region13
  $region12: #{geddnet_forward.27} parent=0 // pred_region
    _
  $region13: #{geddnet_forward.27} parent=0 // pred_fallthru
    _
  // Predicated region
  $region14: #{geddnet_forward.27} parent=0 // pred_check
    _
  $region15: #{geddnet_forward.27} parent=0 // pred_check_branch
    %17 = sbr.rel (0) target = $region17
  $region16: #{geddnet_forward.27} parent=0 // pred_region
    _
  $region17: #{geddnet_forward.27} parent=0 // pred_fallthru
    _
  // Predicated region
  $region18: #{geddnet_forward.27} parent=0 // pred_check
    _
  $region19: #{geddnet_forward.27} parent=0 // pred_check_branch
    %19 = sbr.rel (0) target = $region21
  $region20: #{geddnet_forward.27} parent=0 // pred_region
    _
  $region21: #{geddnet_forward.27} parent=0 // pred_fallthru
    _
  %v21 = vld [vmem:[%s0] sm:$0xf]
  %v22 = vld [vmem:[%s0 + $0x4] sm:$0xf]
  %v23 = vld [vmem:[%s0 + $0x8] sm:$0xf]
  %v24 = vld [vmem:[%s0 + $0xc] sm:$0xf]
  %v25 = vld [vmem:[%s0 + $0x10] sm:$0xf]
  %v26 = vld [vmem:[%s0 + $0x14] sm:$0xf]
  %v27 = vld [vmem:[%s0 + $0x18] sm:$0xf]
  %v28 = vld [vmem:[%s0 + $0x1c] sm:$0xf]
  %v29 = vld [vmem:[%s0 + $0x20] sm:$0xf]
  %v30 = vld [vmem:[%s1] sm:$0xf]
  %v31 = vld [vmem:[%s1 + $0x4] sm:$0xf]
  %v32 = vld [vmem:[%s2] sm:$0x1]
  %v34 = vlaneseq
  %v35 = vshrl.u32 %v34, 7
  %v36 = vsub.s32 0, %v35
  %v37 = vrot.slane %v32, %v36
  %v48 = vunpack.c.l.b16 %v21
  %v49 = vunpack.c.l.b16 %v22
  %v50 = vunpack.c.l.b16 %v23
  %v51 = vunpack.c.l.b16 %v24
  %v52 = vunpack.c.l.b16 %v25
  %v53 = vunpack.c.l.b16 %v26
  %v54 = vunpack.c.l.b16 %v27
  %v55 = vunpack.c.l.b16 %v28
  %v56 = vunpack.c.l.b16 %v29
  %v57 = vpack.c.b16 %v49, %v48
  %v58 = vpack.c.b16 %v51, %v50
  %v59 = vpack.c.b16 %v53, %v52
  %v60 = vpack.c.b16 %v55, %v54
  %v61 = vpack.c.b16 %v56, %v56
  %v64 = vunpack.c.l.b16 %v30
  %v65 = vunpack.c.l.b16 %v31
  %v66 = vpack.c.b16 %v65, %v64
  %vm68 = vcmask 130048
  %v70 = vsel %vm68, %v57, 0
  %v73 = vsel %vm68, %v58, 0
  %v76 = vsel %vm68, %v59, 0
  %v79 = vsel %vm68, %v60, 0
  %v82 = vsel %vm68, %v61, 0
  %84 = vmatprep.subr.bf16.mxu0 0
  %85 = vmatpush1.bf16.msra.mxu0 %v66
  %86 = vmatprep.subr.bf16.mxu0 0
  %87 = vmatpush1.bf16.msra.mxu0 0
  %88 = vmatprep.subr.bf16.mxu0 0
  %89 = vmatpush1.bf16.msra.mxu0 0
  %90 = vmatprep.subr.bf16.mxu0 0
  %91 = vmatpush1.bf16.msra.mxu0 0
  %92 = vmatprep.subr.bf16.mxu0 0
  %93 = vmatpush1.bf16.msra.mxu0 0
  %94 = vmatprep.subr.bf16.mxu0 0
  %95 = vmatpush1.bf16.msra.mxu0 0
  %96 = vmatprep.subr.bf16.mxu0 0
  %97 = vmatpush1.bf16.msra.mxu0 0
  %98 = vmatprep.subr.bf16.mxu0 0
  %99 = vmatpush1.bf16.msra.mxu0 0
  %100 = vmatprep.subr.bf16.mxu0 0
  %101 = vmatpush1.bf16.msra.mxu0 0
  %102 = vmatprep.subr.bf16.mxu0 0
  %103 = vmatpush1.bf16.msra.mxu0 0
  %104 = vmatprep.subr.bf16.mxu0 0
  %105 = vmatpush1.bf16.msra.mxu0 0
  %106 = vmatprep.subr.bf16.mxu0 0
  %107 = vmatpush1.bf16.msra.mxu0 0
  %108 = vmatprep.subr.bf16.mxu0 0
  %109 = vmatpush1.bf16.msra.mxu0 0
  %110 = vmatprep.subr.bf16.mxu0 0
  %111 = vmatpush1.bf16.msra.mxu0 0
  %112 = vmatprep.subr.bf16.mxu0 0
  %113 = vmatpush1.bf16.msra.mxu0 0
  %114 = vmatprep.subr.bf16.mxu0 0
  %115 = vmatpush1.bf16.msra.mxu0 0
  %116 = vmatprep.mubr.bf16.mxu0 0
  %117 = vmatmul.mubr.bf16.gmra.mrb[0].mxu0 %v70
  %v118 = vpop.f32.mrb[0].mxu0
  %v119 = vadd.f32 %v37, %v118
  %v120 = vpop.f32.mrb[0].mxu0
  %v121 = vpop.f32.mrb[0].mxu0
  %v122 = vadd.f32 %v37, %v121
  %v123 = vpop.f32.mrb[0].mxu0
  %124 = vmatprep.mubr.bf16.mxu0 0
  %125 = vmatmul.mubr.bf16.gmra.mrb[0].mxu0 %v73
  %v126 = vpop.f32.mrb[0].mxu0
  %v127 = vadd.f32 %v37, %v126
  %v128 = vpop.f32.mrb[0].mxu0
  %v129 = vpop.f32.mrb[0].mxu0
  %v130 = vadd.f32 %v37, %v129
  %v131 = vpop.f32.mrb[0].mxu0
  %132 = vmatprep.mubr.bf16.mxu0 0
  %133 = vmatmul.mubr.bf16.gmra.mrb[0].mxu0 %v76
  %v134 = vpop.f32.mrb[0].mxu0
  %v135 = vadd.f32 %v37, %v134
  %v136 = vpop.f32.mrb[0].mxu0
  %v137 = vpop.f32.mrb[0].mxu0
  %v138 = vadd.f32 %v37, %v137
  %v139 = vpop.f32.mrb[0].mxu0
  %140 = vmatprep.mubr.bf16.mxu0 0
  %141 = vmatmul.mubr.bf16.gmra.mrb[0].mxu0 %v79
  %v142 = vpop.f32.mrb[0].mxu0
  %v143 = vadd.f32 %v37, %v142
  %v144 = vpop.f32.mrb[0].mxu0
  %v145 = vpop.f32.mrb[0].mxu0
  %v146 = vadd.f32 %v37, %v145
  %v147 = vpop.f32.mrb[0].mxu0
  %148 = vmatprep.mubr.bf16.mxu0 0
  %149 = vmatmul.mubr.bf16.gmra.mrb[0].mxu0 %v82
  %v150 = vpop.f32.mrb[0].mxu0
  %v151 = vadd.f32 %v37, %v150
  %v152 = vpop.f32.mrb[0].mxu0
  %v153 = vpop.f32.mrb[0].mxu0
  %v154 = vpop.f32.mrb[0].mxu0
  %155 = vdwg.mxu0
  %v156 = vmax.f32 %v119, 0.0
  %v157 = vmax.f32 %v122, 0.0
  %v158 = vmax.f32 %v127, 0.0
  %v159 = vmax.f32 %v130, 0.0
  %v160 = vmax.f32 %v135, 0.0
  %v161 = vmax.f32 %v138, 0.0
  %v162 = vmax.f32 %v143, 0.0
  %v163 = vmax.f32 %v146, 0.0
  %v164 = vmax.f32 %v151, 0.0
  %v165 = vld [vmem:[%s3] sm:$0x1]
  %v167 = vlaneseq
  %v168 = vshrl.u32 %v167, 7
  %v169 = vsub.s32 0, %v168
  %v170 = vrot.slane %v165, %v169
  %v172 = vmul.f32 %v156, %v170
  %v173 = vmul.f32 %v157, %v170
  %v174 = vmul.f32 %v158, %v170
  %v175 = vmul.f32 %v159, %v170
  %v176 = vmul.f32 %v160, %v170
  %v177 = vmul.f32 %v161, %v170
  %v178 = vmul.f32 %v162, %v170
  %v179 = vmul.f32 %v163, %v170
  %v180 = vmul.f32 %v164, %v170
  %v181 = vld [vmem:[%s4] sm:$0x1]
  %v183 = vlaneseq
  %v184 = vshrl.u32 %v183, 7
  %v185 = vsub.s32 0, %v184
  %v186 = vrot.slane %v181, %v185
  %v188 = vadd.f32 %v172, %v186
  %v189 = vadd.f32 %v173, %v186
  %v190 = vadd.f32 %v174, %v186
  %v191 = vadd.f32 %v175, %v186
  %v192 = vadd.f32 %v176, %v186
  %v193 = vadd.f32 %v177, %v186
  %v194 = vadd.f32 %v178, %v186
  %v195 = vadd.f32 %v179, %v186
  %v196 = vadd.f32 %v180, %v186
  %v197 = vpack.c.bf16 %v189, %v188
  %v198 = vpack.c.bf16 %v191, %v190
  %v199 = vpack.c.bf16 %v193, %v192
  %v200 = vpack.c.bf16 %v195, %v194
  %v201 = vpack.c.bf16 %v196, %v196
  %v207 = vunpack.c.l.b16 %v197
  %v208 = vunpack.c.h.b16 %v197
  %v209 = vunpack.c.l.b16 %v198
  %v210 = vunpack.c.h.b16 %v198
  %v211 = vunpack.c.l.b16 %v199
  %v212 = vunpack.c.h.b16 %v199
  %v213 = vunpack.c.l.b16 %v200
  %v214 = vunpack.c.h.b16 %v200
  %v215 = vunpack.c.l.b16 %v201
  %v216 = vpack.c.b16 %v207, %v207
  %v217 = vpack.c.b16 %v208, %v208
  %v218 = vpack.c.b16 %v209, %v209
  %v219 = vpack.c.b16 %v210, %v210
  %v220 = vpack.c.b16 %v211, %v211
  %v221 = vpack.c.b16 %v212, %v212
  %v222 = vpack.c.b16 %v213, %v213
  %v223 = vpack.c.b16 %v214, %v214
  %v224 = vpack.c.b16 %v215, %v215
  %vm234 = vcmask 60416
  %235 = vst.msk [vmem:[%s5] sm:$0xf] %vm234, %v216
  %236 = vst.msk [vmem:[%s5 + $0x4] sm:$0xf] %vm234, %v217
  %237 = vst.msk [vmem:[%s5 + $0x8] sm:$0xf] %vm234, %v218
  %238 = vst.msk [vmem:[%s5 + $0xc] sm:$0xf] %vm234, %v219
  %239 = vst.msk [vmem:[%s5 + $0x10] sm:$0xf] %vm234, %v220
  %240 = vst.msk [vmem:[%s5 + $0x14] sm:$0xf] %vm234, %v221
  %241 = vst.msk [vmem:[%s5 + $0x18] sm:$0xf] %vm234, %v222
  %242 = vst.msk [vmem:[%s5 + $0x1c] sm:$0xf] %vm234, %v223
  %243 = vst.msk [vmem:[%s5 + $0x20] sm:$0xf] %vm234, %v224
  // Predicated region
  $region22: #{geddnet_forward.27} parent=0 // pred_check
    _
  $region23: #{geddnet_forward.27} parent=0 // pred_check_branch
    %245 = sbr.rel (0) target = $region25
  $region24: #{geddnet_forward.27} parent=0 // pred_region
    _
  $region25: #{geddnet_forward.27} parent=0 // pred_fallthru
    _
  // Predicated region
  $region26: #{geddnet_forward.27} parent=0 // pred_check
    _
  $region27: #{geddnet_forward.27} parent=0 // pred_check_branch
    %247 = sbr.rel (0) target = $region29
  $region28: #{geddnet_forward.27} parent=0 // pred_region
    _
  $region29: #{geddnet_forward.27} parent=0 // pred_fallthru
    _

// kernel: geddnet_forward.28
$region0: #{geddnet_forward.28}
  #allocation0 [shape = 'u32[]', space=smem, size = 0x4, offset = 0x4, fixed_abs, tag = 'smem constant byte address 0x4 - core index']
  #allocation1 [shape = 'u32[144,128]{1,0:T(1,128)}', space=vmem, size = 0x12000, scoped, tag = 'internal scratch']
  %s0 = inlined_call_operand.vmem [shape: bf16[72,72], index: 0, kind: input, shape index: {}]
  %s1 = inlined_call_operand.vmem [shape: bf16[72,8], index: 1, kind: input, shape index: {}]
  %s2 = inlined_call_operand.vmem [shape: f32[1,8], index: 2, kind: input, shape index: {}]
  %s3 = inlined_call_operand.vmem [shape: f32[1,8], index: 3, kind: input, shape index: {}]
  %s4 = inlined_call_operand.vmem [shape: f32[1,8], index: 4, kind: input, shape index: {}]
  %s5 = inlined_call_operand.vmem [shape: bf16[72,8], index: 5, kind: output, shape index: {}]
  %s6 = sld [smem:[#allocation0]]
  $region30: #{geddnet_forward.28} parent=0
    _
  %s8 = ssub.s32 1, %s6
  %s9 = scalar_select 0, %s8, %s6
  // Predicated region
  $region2: #{geddnet_forward.28} parent=0 // pred_check
    _
  $region3: #{geddnet_forward.28} parent=0 // pred_check_branch
    %11 = sbr.rel (0) target = $region5
  $region4: #{geddnet_forward.28} parent=0 // pred_region
    _
  $region5: #{geddnet_forward.28} parent=0 // pred_fallthru
    _
  // Predicated region
  $region6: #{geddnet_forward.28} parent=0 // pred_check
    _
  $region7: #{geddnet_forward.28} parent=0 // pred_check_branch
    %13 = sbr.rel (0) target = $region9
  $region8: #{geddnet_forward.28} parent=0 // pred_region
    _
  $region9: #{geddnet_forward.28} parent=0 // pred_fallthru
    _
  // Predicated region
  $region10: #{geddnet_forward.28} parent=0 // pred_check
    _
  $region11: #{geddnet_forward.28} parent=0 // pred_check_branch
    %15 = sbr.rel (0) target = $region13
  $region12: #{geddnet_forward.28} parent=0 // pred_region
    _
  $region13: #{geddnet_forward.28} parent=0 // pred_fallthru
    _
  // Predicated region
  $region14: #{geddnet_forward.28} parent=0 // pred_check
    _
  $region15: #{geddnet_forward.28} parent=0 // pred_check_branch
    %17 = sbr.rel (0) target = $region17
  $region16: #{geddnet_forward.28} parent=0 // pred_region
    _
  $region17: #{geddnet_forward.28} parent=0 // pred_fallthru
    _
  // Predicated region
  $region18: #{geddnet_forward.28} parent=0 // pred_check
    _
  $region19: #{geddnet_forward.28} parent=0 // pred_check_branch
    %19 = sbr.rel (0) target = $region21
  $region20: #{geddnet_forward.28} parent=0 // pred_region
    _
  $region21: #{geddnet_forward.28} parent=0 // pred_fallthru
    _
  %v21 = vld [vmem:[%s0] sm:$0xf]
  %v22 = vld [vmem:[%s0 + $0x4] sm:$0xf]
  %v23 = vld [vmem:[%s0 + $0x8] sm:$0xf]
  %v24 = vld [vmem:[%s0 + $0xc] sm:$0xf]
  %v25 = vld [vmem:[%s0 + $0x10] sm:$0xf]
  %v26 = vld [vmem:[%s0 + $0x14] sm:$0xf]
  %v27 = vld [vmem:[%s0 + $0x18] sm:$0xf]
  %v28 = vld [vmem:[%s0 + $0x1c] sm:$0xf]
  %v29 = vld [vmem:[%s0 + $0x20] sm:$0xf]
  %v30 = vld [vmem:[%s1] sm:$0xf]
  %v31 = vld [vmem:[%s1 + $0x4] sm:$0xf]
  %v32 = vld [vmem:[%s1 + $0x8] sm:$0xf]
  %v33 = vld [vmem:[%s1 + $0xc] sm:$0xf]
  %v34 = vld [vmem:[%s1 + $0x10] sm:$0xf]
  %v35 = vld [vmem:[%s1 + $0x14] sm:$0xf]
  %v36 = vld [vmem:[%s1 + $0x18] sm:$0xf]
  %v37 = vld [vmem:[%s1 + $0x1c] sm:$0xf]
  %v38 = vld [vmem:[%s1 + $0x20] sm:$0xf]
  %v39 = vld [vmem:[%s2] sm:$0x1]
  %v41 = vlaneseq
  %v42 = vshrl.u32 %v41, 7
  %v43 = vsub.s32 0, %v42
  %v44 = vrot.slane %v39, %v43
  %v55 = vunpack.c.l.b16 %v21
  %v56 = vunpack.c.l.b16 %v22
  %v57 = vunpack.c.l.b16 %v23
  %v58 = vunpack.c.l.b16 %v24
  %v59 = vunpack.c.l.b16 %v25
  %v60 = vunpack.c.l.b16 %v26
  %v61 = vunpack.c.l.b16 %v27
  %v62 = vunpack.c.l.b16 %v28
  %v63 = vunpack.c.l.b16 %v29
  %v64 = vpack.c.b16 %v56, %v55
  %v65 = vpack.c.b16 %v58, %v57
  %v66 = vpack.c.b16 %v60, %v59
  %v67 = vpack.c.b16 %v62, %v61
  %v68 = vpack.c.b16 %v63, %v63
  %v78 = vunpack.c.l.b16 %v30
  %v79 = vunpack.c.l.b16 %v31
  %v80 = vunpack.c.l.b16 %v32
  %v81 = vunpack.c.l.b16 %v33
  %v82 = vunpack.c.l.b16 %v34
  %v83 = vunpack.c.l.b16 %v35
  %v84 = vunpack.c.l.b16 %v36
  %v85 = vunpack.c.l.b16 %v37
  %v86 = vunpack.c.l.b16 %v38
  %v87 = vpack.c.b16 %v79, %v78
  %v88 = vpack.c.b16 %v81, %v80
  %v89 = vpack.c.b16 %v83, %v82
  %v90 = vpack.c.b16 %v85, %v84
  %v91 = vpack.c.b16 %v86, %v86
  %vm96 = vcmask 588800
  %v98 = vsel %vm96, %v64, 0
  %v101 = vsel %vm96, %v65, 0
  %v104 = vsel %vm96, %v66, 0
  %v107 = vsel %vm96, %v67, 0
  %v110 = vsel %vm96, %v68, 0
  %vm112 = vcmask 1043456
  %v114 = vsel %vm112, %v91, 0
  %116 = vmatprep.subr.bf16.mxu0 0
  %117 = vmatpush1.bf16.msra.mxu0 %v87
  %118 = vmatprep.subr.bf16.mxu0 0
  %119 = vmatpush1.bf16.msra.mxu0 %v88
  %120 = vmatprep.subr.bf16.mxu0 0
  %121 = vmatpush1.bf16.msra.mxu0 %v89
  %122 = vmatprep.subr.bf16.mxu0 0
  %123 = vmatpush1.bf16.msra.mxu0 %v90
  %124 = vmatprep.subr.bf16.mxu0 0
  %125 = vmatpush1.bf16.msra.mxu0 %v114
  %126 = vmatprep.subr.bf16.mxu0 0
  %127 = vmatpush1.bf16.msra.mxu0 0
  %128 = vmatprep.subr.bf16.mxu0 0
  %129 = vmatpush1.bf16.msra.mxu0 0
  %130 = vmatprep.subr.bf16.mxu0 0
  %131 = vmatpush1.bf16.msra.mxu0 0
  %132 = vmatprep.subr.bf16.mxu0 0
  %133 = vmatpush1.bf16.msra.mxu0 0
  %134 = vmatprep.subr.bf16.mxu0 0
  %135 = vmatpush1.bf16.msra.mxu0 0
  %136 = vmatprep.subr.bf16.mxu0 0
  %137 = vmatpush1.bf16.msra.mxu0 0
  %138 = vmatprep.subr.bf16.mxu0 0
  %139 = vmatpush1.bf16.msra.mxu0 0
  %140 = vmatprep.subr.bf16.mxu0 0
  %141 = vmatpush1.bf16.msra.mxu0 0
  %142 = vmatprep.subr.bf16.mxu0 0
  %143 = vmatpush1.bf16.msra.mxu0 0
  %144 = vmatprep.subr.bf16.mxu0 0
  %145 = vmatpush1.bf16.msra.mxu0 0
  %146 = vmatprep.subr.bf16.mxu0 0
  %147 = vmatpush1.bf16.msra.mxu0 0
  %148 = vmatprep.mubr.bf16.mxu0 0
  %149 = vmatmul.mubr.bf16.gmra.mrb[0].mxu0 %v98
  %v150 = vpop.f32.mrb[0].mxu0
  %v151 = vadd.f32 %v44, %v150
  %v152 = vpop.f32.mrb[0].mxu0
  %v153 = vpop.f32.mrb[0].mxu0
  %v154 = vadd.f32 %v44, %v153
  %v155 = vpop.f32.mrb[0].mxu0
  %156 = vmatprep.mubr.bf16.mxu0 0
  %157 = vmatmul.mubr.bf16.gmra.mrb[0].mxu0 %v101
  %v158 = vpop.f32.mrb[0].mxu0
  %v159 = vadd.f32 %v44, %v158
  %v160 = vpop.f32.mrb[0].mxu0
  %v161 = vpop.f32.mrb[0].mxu0
  %v162 = vadd.f32 %v44, %v161
  %v163 = vpop.f32.mrb[0].mxu0
  %164 = vmatprep.mubr.bf16.mxu0 0
  %165 = vmatmul.mubr.bf16.gmra.mrb[0].mxu0 %v104
  %v166 = vpop.f32.mrb[0].mxu0
  %v167 = vadd.f32 %v44, %v166
  %v168 = vpop.f32.mrb[0].mxu0
  %v169 = vpop.f32.mrb[0].mxu0
  %v170 = vadd.f32 %v44, %v169
  %v171 = vpop.f32.mrb[0].mxu0
  %172 = vmatprep.mubr.bf16.mxu0 0
  %173 = vmatmul.mubr.bf16.gmra.mrb[0].mxu0 %v107
  %v174 = vpop.f32.mrb[0].mxu0
  %v175 = vadd.f32 %v44, %v174
  %v176 = vpop.f32.mrb[0].mxu0
  %v177 = vpop.f32.mrb[0].mxu0
  %v178 = vadd.f32 %v44, %v177
  %v179 = vpop.f32.mrb[0].mxu0
  %180 = vmatprep.mubr.bf16.mxu0 0
  %181 = vmatmul.mubr.bf16.gmra.mrb[0].mxu0 %v110
  %v182 = vpop.f32.mrb[0].mxu0
  %v183 = vadd.f32 %v44, %v182
  %v184 = vpop.f32.mrb[0].mxu0
  %v185 = vpop.f32.mrb[0].mxu0
  %v186 = vpop.f32.mrb[0].mxu0
  %187 = vdwg.mxu0
  %v188 = vmax.f32 %v151, 0.0
  %v189 = vmax.f32 %v154, 0.0
  %v190 = vmax.f32 %v159, 0.0
  %v191 = vmax.f32 %v162, 0.0
  %v192 = vmax.f32 %v167, 0.0
  %v193 = vmax.f32 %v170, 0.0
  %v194 = vmax.f32 %v175, 0.0
  %v195 = vmax.f32 %v178, 0.0
  %v196 = vmax.f32 %v183, 0.0
  %v197 = vld [vmem:[%s3] sm:$0x1]
  %v199 = vlaneseq
  %v200 = vshrl.u32 %v199, 7
  %v201 = vsub.s32 0, %v200
  %v202 = vrot.slane %v197, %v201
  %v204 = vmul.f32 %v188, %v202
  %v205 = vmul.f32 %v189, %v202
  %v206 = vmul.f32 %v190, %v202
  %v207 = vmul.f32 %v191, %v202
  %v208 = vmul.f32 %v192, %v202
  %v209 = vmul.f32 %v193, %v202
  %v210 = vmul.f32 %v194, %v202
  %v211 = vmul.f32 %v195, %v202
  %v212 = vmul.f32 %v196, %v202
  %v213 = vld [vmem:[%s4] sm:$0x1]
  %v215 = vlaneseq
  %v216 = vshrl.u32 %v215, 7
  %v217 = vsub.s32 0, %v216
  %v218 = vrot.slane %v213, %v217
  %v220 = vadd.f32 %v204, %v218
  %v221 = vadd.f32 %v205, %v218
  %v222 = vadd.f32 %v206, %v218
  %v223 = vadd.f32 %v207, %v218
  %v224 = vadd.f32 %v208, %v218
  %v225 = vadd.f32 %v209, %v218
  %v226 = vadd.f32 %v210, %v218
  %v227 = vadd.f32 %v211, %v218
  %v228 = vadd.f32 %v212, %v218
  %v229 = vpack.c.bf16 %v221, %v220
  %v230 = vpack.c.bf16 %v223, %v222
  %v231 = vpack.c.bf16 %v225, %v224
  %v232 = vpack.c.bf16 %v227, %v226
  %v233 = vpack.c.bf16 %v228, %v228
  %v239 = vunpack.c.l.b16 %v229
  %v240 = vunpack.c.h.b16 %v229
  %v241 = vunpack.c.l.b16 %v230
  %v242 = vunpack.c.h.b16 %v230
  %v243 = vunpack.c.l.b16 %v231
  %v244 = vunpack.c.h.b16 %v231
  %v245 = vunpack.c.l.b16 %v232
  %v246 = vunpack.c.h.b16 %v232
  %v247 = vunpack.c.l.b16 %v233
  %v248 = vpack.c.b16 %v239, %v239
  %v249 = vpack.c.b16 %v240, %v240
  %v250 = vpack.c.b16 %v241, %v241
  %v251 = vpack.c.b16 %v242, %v242
  %v252 = vpack.c.b16 %v243, %v243
  %v253 = vpack.c.b16 %v244, %v244
  %v254 = vpack.c.b16 %v245, %v245
  %v255 = vpack.c.b16 %v246, %v246
  %v256 = vpack.c.b16 %v247, %v247
  %vm266 = vcmask 60416
  %267 = vst.msk [vmem:[%s5] sm:$0xf] %vm266, %v248
  %268 = vst.msk [vmem:[%s5 + $0x4] sm:$0xf] %vm266, %v249
  %269 = vst.msk [vmem:[%s5 + $0x8] sm:$0xf] %vm266, %v250
  %270 = vst.msk [vmem:[%s5 + $0xc] sm:$0xf] %vm266, %v251
  %271 = vst.msk [vmem:[%s5 + $0x10] sm:$0xf] %vm266, %v252
  %272 = vst.msk [vmem:[%s5 + $0x14] sm:$0xf] %vm266, %v253
  %273 = vst.msk [vmem:[%s5 + $0x18] sm:$0xf] %vm266, %v254
  %274 = vst.msk [vmem:[%s5 + $0x1c] sm:$0xf] %vm266, %v255
  %275 = vst.msk [vmem:[%s5 + $0x20] sm:$0xf] %vm266, %v256
  // Predicated region
  $region22: #{geddnet_forward.28} parent=0 // pred_check
    _
  $region23: #{geddnet_forward.28} parent=0 // pred_check_branch
    %277 = sbr.rel (0) target = $region25
  $region24: #{geddnet_forward.28} parent=0 // pred_region
    _
  $region25: #{geddnet_forward.28} parent=0 // pred_fallthru
    _
  // Predicated region
  $region26: #{geddnet_forward.28} parent=0 // pred_check
    _
  $region27: #{geddnet_forward.28} parent=0 // pred_check_branch
    %279 = sbr.rel (0) target = $region29
  $region28: #{geddnet_forward.28} parent=0 // pred_region
    _
  $region29: #{geddnet_forward.28} parent=0 // pred_fallthru
    _

// kernel: geddnet_forward.30
$region0: #{geddnet_forward.30}
  #allocation0 [shape = 'u32[]', space=smem, size = 0x4, offset = 0x4, fixed_abs, tag = 'smem constant byte address 0x4 - core index']
  #allocation1 [shape = 'u32[144,128]{1,0:T(1,128)}', space=vmem, size = 0x12000, scoped, tag = 'internal scratch']
  %s0 = inlined_call_operand.vmem [shape: bf16[72,72], index: 0, kind: input, shape index: {}]
  %s1 = inlined_call_operand.vmem [shape: bf16[72,16], index: 1, kind: input, shape index: {}]
  %s2 = inlined_call_operand.vmem [shape: f32[1,16], index: 2, kind: input, shape index: {}]
  %s3 = inlined_call_operand.vmem [shape: f32[1,16], index: 3, kind: input, shape index: {}]
  %s4 = inlined_call_operand.vmem [shape: f32[1,16], index: 4, kind: input, shape index: {}]
  %s5 = inlined_call_operand.vmem [shape: bf16[72,16], index: 5, kind: output, shape index: {}]
  %s6 = sld [smem:[#allocation0]]
  $region30: #{geddnet_forward.30} parent=0
    _
  %s8 = ssub.s32 1, %s6
  %s9 = scalar_select 0, %s8, %s6
  // Predicated region
  $region2: #{geddnet_forward.30} parent=0 // pred_check
    _
  $region3: #{geddnet_forward.30} parent=0 // pred_check_branch
    %11 = sbr.rel (0) target = $region5
  $region4: #{geddnet_forward.30} parent=0 // pred_region
    _
  $region5: #{geddnet_forward.30} parent=0 // pred_fallthru
    _
  // Predicated region
  $region6: #{geddnet_forward.30} parent=0 // pred_check
    _
  $region7: #{geddnet_forward.30} parent=0 // pred_check_branch
    %13 = sbr.rel (0) target = $region9
  $region8: #{geddnet_forward.30} parent=0 // pred_region
    _
  $region9: #{geddnet_forward.30} parent=0 // pred_fallthru
    _
  // Predicated region
  $region10: #{geddnet_forward.30} parent=0 // pred_check
    _
  $region11: #{geddnet_forward.30} parent=0 // pred_check_branch
    %15 = sbr.rel (0) target = $region13
  $region12: #{geddnet_forward.30} parent=0 // pred_region
    _
  $region13: #{geddnet_forward.30} parent=0 // pred_fallthru
    _
  // Predicated region
  $region14: #{geddnet_forward.30} parent=0 // pred_check
    _
  $region15: #{geddnet_forward.30} parent=0 // pred_check_branch
    %17 = sbr.rel (0) target = $region17
  $region16: #{geddnet_forward.30} parent=0 // pred_region
    _
  $region17: #{geddnet_forward.30} parent=0 // pred_fallthru
    _
  // Predicated region
  $region18: #{geddnet_forward.30} parent=0 // pred_check
    _
  $region19: #{geddnet_forward.30} parent=0 // pred_check_branch
    %19 = sbr.rel (0) target = $region21
  $region20: #{geddnet_forward.30} parent=0 // pred_region
    _
  $region21: #{geddnet_forward.30} parent=0 // pred_fallthru
    _
  %v21 = vld [vmem:[%s0] sm:$0xf]
  %v22 = vld [vmem:[%s0 + $0x4] sm:$0xf]
  %v23 = vld [vmem:[%s0 + $0x8] sm:$0xf]
  %v24 = vld [vmem:[%s0 + $0xc] sm:$0xf]
  %v25 = vld [vmem:[%s0 + $0x10] sm:$0xf]
  %v26 = vld [vmem:[%s0 + $0x14] sm:$0xf]
  %v27 = vld [vmem:[%s0 + $0x18] sm:$0xf]
  %v28 = vld [vmem:[%s0 + $0x1c] sm:$0xf]
  %v29 = vld [vmem:[%s0 + $0x20] sm:$0xf]
  %v30 = vld [vmem:[%s1] sm:$0xf]
  %v31 = vld [vmem:[%s1 + $0x4] sm:$0xf]
  %v32 = vld [vmem:[%s1 + $0x8] sm:$0xf]
  %v33 = vld [vmem:[%s1 + $0xc] sm:$0xf]
  %v34 = vld [vmem:[%s1 + $0x10] sm:$0xf]
  %v35 = vld [vmem:[%s1 + $0x14] sm:$0xf]
  %v36 = vld [vmem:[%s1 + $0x18] sm:$0xf]
  %v37 = vld [vmem:[%s1 + $0x1c] sm:$0xf]
  %v38 = vld [vmem:[%s1 + $0x20] sm:$0xf]
  %v39 = vld [vmem:[%s2] sm:$0x1]
  %v41 = vlaneseq
  %v42 = vshrl.u32 %v41, 7
  %v43 = vsub.s32 0, %v42
  %v44 = vrot.slane %v39, %v43
  %v55 = vunpack.c.l.b16 %v21
  %v56 = vunpack.c.l.b16 %v22
  %v57 = vunpack.c.l.b16 %v23
  %v58 = vunpack.c.l.b16 %v24
  %v59 = vunpack.c.l.b16 %v25
  %v60 = vunpack.c.l.b16 %v26
  %v61 = vunpack.c.l.b16 %v27
  %v62 = vunpack.c.l.b16 %v28
  %v63 = vunpack.c.l.b16 %v29
  %v64 = vpack.c.b16 %v56, %v55
  %v65 = vpack.c.b16 %v58, %v57
  %v66 = vpack.c.b16 %v60, %v59
  %v67 = vpack.c.b16 %v62, %v61
  %v68 = vpack.c.b16 %v63, %v63
  %v78 = vunpack.c.l.b16 %v30
  %v79 = vunpack.c.l.b16 %v31
  %v80 = vunpack.c.l.b16 %v32
  %v81 = vunpack.c.l.b16 %v33
  %v82 = vunpack.c.l.b16 %v34
  %v83 = vunpack.c.l.b16 %v35
  %v84 = vunpack.c.l.b16 %v36
  %v85 = vunpack.c.l.b16 %v37
  %v86 = vunpack.c.l.b16 %v38
  %v87 = vpack.c.b16 %v79, %v78
  %v88 = vpack.c.b16 %v81, %v80
  %v89 = vpack.c.b16 %v83, %v82
  %v90 = vpack.c.b16 %v85, %v84
  %v91 = vpack.c.b16 %v86, %v86
  %vm96 = vcmask 588800
  %v98 = vsel %vm96, %v64, 0
  %v101 = vsel %vm96, %v65, 0
  %v104 = vsel %vm96, %v66, 0
  %v107 = vsel %vm96, %v67, 0
  %v110 = vsel %vm96, %v68, 0
  %vm112 = vcmask 1043456
  %v114 = vsel %vm112, %v91, 0
  %116 = vmatprep.subr.bf16.mxu0 0
  %117 = vmatpush1.bf16.msra.mxu0 %v87
  %118 = vmatprep.subr.bf16.mxu0 0
  %119 = vmatpush1.bf16.msra.mxu0 %v88
  %120 = vmatprep.subr.bf16.mxu0 0
  %121 = vmatpush1.bf16.msra.mxu0 %v89
  %122 = vmatprep.subr.bf16.mxu0 0
  %123 = vmatpush1.bf16.msra.mxu0 %v90
  %124 = vmatprep.subr.bf16.mxu0 0
  %125 = vmatpush1.bf16.msra.mxu0 %v114
  %126 = vmatprep.subr.bf16.mxu0 0
  %127 = vmatpush1.bf16.msra.mxu0 0
  %128 = vmatprep.subr.bf16.mxu0 0
  %129 = vmatpush1.bf16.msra.mxu0 0
  %130 = vmatprep.subr.bf16.mxu0 0
  %131 = vmatpush1.bf16.msra.mxu0 0
  %132 = vmatprep.subr.bf16.mxu0 0
  %133 = vmatpush1.bf16.msra.mxu0 0
  %134 = vmatprep.subr.bf16.mxu0 0
  %135 = vmatpush1.bf16.msra.mxu0 0
  %136 = vmatprep.subr.bf16.mxu0 0
  %137 = vmatpush1.bf16.msra.mxu0 0
  %138 = vmatprep.subr.bf16.mxu0 0
  %139 = vmatpush1.bf16.msra.mxu0 0
  %140 = vmatprep.subr.bf16.mxu0 0
  %141 = vmatpush1.bf16.msra.mxu0 0
  %142 = vmatprep.subr.bf16.mxu0 0
  %143 = vmatpush1.bf16.msra.mxu0 0
  %144 = vmatprep.subr.bf16.mxu0 0
  %145 = vmatpush1.bf16.msra.mxu0 0
  %146 = vmatprep.subr.bf16.mxu0 0
  %147 = vmatpush1.bf16.msra.mxu0 0
  %148 = vmatprep.mubr.bf16.mxu0 0
  %149 = vmatmul.mubr.bf16.gmra.mrb[0].mxu0 %v98
  %v150 = vpop.f32.mrb[0].mxu0
  %v151 = vadd.f32 %v44, %v150
  %v152 = vpop.f32.mrb[0].mxu0
  %v153 = vpop.f32.mrb[0].mxu0
  %v154 = vadd.f32 %v44, %v153
  %v155 = vpop.f32.mrb[0].mxu0
  %156 = vmatprep.mubr.bf16.mxu0 0
  %157 = vmatmul.mubr.bf16.gmra.mrb[0].mxu0 %v101
  %v158 = vpop.f32.mrb[0].mxu0
  %v159 = vadd.f32 %v44, %v158
  %v160 = vpop.f32.mrb[0].mxu0
  %v161 = vpop.f32.mrb[0].mxu0
  %v162 = vadd.f32 %v44, %v161
  %v163 = vpop.f32.mrb[0].mxu0
  %164 = vmatprep.mubr.bf16.mxu0 0
  %165 = vmatmul.mubr.bf16.gmra.mrb[0].mxu0 %v104
  %v166 = vpop.f32.mrb[0].mxu0
  %v167 = vadd.f32 %v44, %v166
  %v168 = vpop.f32.mrb[0].mxu0
  %v169 = vpop.f32.mrb[0].mxu0
  %v170 = vadd.f32 %v44, %v169
  %v171 = vpop.f32.mrb[0].mxu0
  %172 = vmatprep.mubr.bf16.mxu0 0
  %173 = vmatmul.mubr.bf16.gmra.mrb[0].mxu0 %v107
  %v174 = vpop.f32.mrb[0].mxu0
  %v175 = vadd.f32 %v44, %v174
  %v176 = vpop.f32.mrb[0].mxu0
  %v177 = vpop.f32.mrb[0].mxu0
  %v178 = vadd.f32 %v44, %v177
  %v179 = vpop.f32.mrb[0].mxu0
  %180 = vmatprep.mubr.bf16.mxu0 0
  %181 = vmatmul.mubr.bf16.gmra.mrb[0].mxu0 %v110
  %v182 = vpop.f32.mrb[0].mxu0
  %v183 = vadd.f32 %v44, %v182
  %v184 = vpop.f32.mrb[0].mxu0
  %v185 = vpop.f32.mrb[0].mxu0
  %v186 = vpop.f32.mrb[0].mxu0
  %187 = vdwg.mxu0
  %v188 = vmax.f32 %v151, 0.0
  %v189 = vmax.f32 %v154, 0.0
  %v190 = vmax.f32 %v159, 0.0
  %v191 = vmax.f32 %v162, 0.0
  %v192 = vmax.f32 %v167, 0.0
  %v193 = vmax.f32 %v170, 0.0
  %v194 = vmax.f32 %v175, 0.0
  %v195 = vmax.f32 %v178, 0.0
  %v196 = vmax.f32 %v183, 0.0
  %v197 = vld [vmem:[%s3] sm:$0x1]
  %v199 = vlaneseq
  %v200 = vshrl.u32 %v199, 7
  %v201 = vsub.s32 0, %v200
  %v202 = vrot.slane %v197, %v201
  %v204 = vmul.f32 %v188, %v202
  %v205 = vmul.f32 %v189, %v202
  %v206 = vmul.f32 %v190, %v202
  %v207 = vmul.f32 %v191, %v202
  %v208 = vmul.f32 %v192, %v202
  %v209 = vmul.f32 %v193, %v202
  %v210 = vmul.f32 %v194, %v202
  %v211 = vmul.f32 %v195, %v202
  %v212 = vmul.f32 %v196, %v202
  %v213 = vld [vmem:[%s4] sm:$0x1]
  %v215 = vlaneseq
  %v216 = vshrl.u32 %v215, 7
  %v217 = vsub.s32 0, %v216
  %v218 = vrot.slane %v213, %v217
  %v220 = vadd.f32 %v204, %v218
  %v221 = vadd.f32 %v205, %v218
  %v222 = vadd.f32 %v206, %v218
  %v223 = vadd.f32 %v207, %v218
  %v224 = vadd.f32 %v208, %v218
  %v225 = vadd.f32 %v209, %v218
  %v226 = vadd.f32 %v210, %v218
  %v227 = vadd.f32 %v211, %v218
  %v228 = vadd.f32 %v212, %v218
  %v229 = vpack.c.bf16 %v221, %v220
  %v230 = vpack.c.bf16 %v223, %v222
  %v231 = vpack.c.bf16 %v225, %v224
  %v232 = vpack.c.bf16 %v227, %v226
  %v233 = vpack.c.bf16 %v228, %v228
  %v239 = vunpack.c.l.b16 %v229
  %v240 = vunpack.c.h.b16 %v229
  %v241 = vunpack.c.l.b16 %v230
  %v242 = vunpack.c.h.b16 %v230
  %v243 = vunpack.c.l.b16 %v231
  %v244 = vunpack.c.h.b16 %v231
  %v245 = vunpack.c.l.b16 %v232
  %v246 = vunpack.c.h.b16 %v232
  %v247 = vunpack.c.l.b16 %v233
  %v248 = vpack.c.b16 %v239, %v239
  %v249 = vpack.c.b16 %v240, %v240
  %v250 = vpack.c.b16 %v241, %v241
  %v251 = vpack.c.b16 %v242, %v242
  %v252 = vpack.c.b16 %v243, %v243
  %v253 = vpack.c.b16 %v244, %v244
  %v254 = vpack.c.b16 %v245, %v245
  %v255 = vpack.c.b16 %v246, %v246
  %v256 = vpack.c.b16 %v247, %v247
  %vm266 = vcmask 125952
  %267 = vst.msk [vmem:[%s5] sm:$0xf] %vm266, %v248
  %268 = vst.msk [vmem:[%s5 + $0x4] sm:$0xf] %vm266, %v249
  %269 = vst.msk [vmem:[%s5 + $0x8] sm:$0xf] %vm266, %v250
  %270 = vst.msk [vmem:[%s5 + $0xc] sm:$0xf] %vm266, %v251
  %271 = vst.msk [vmem:[%s5 + $0x10] sm:$0xf] %vm266, %v252
  %272 = vst.msk [vmem:[%s5 + $0x14] sm:$0xf] %vm266, %v253
  %273 = vst.msk [vmem:[%s5 + $0x18] sm:$0xf] %vm266, %v254
  %274 = vst.msk [vmem:[%s5 + $0x1c] sm:$0xf] %vm266, %v255
  %275 = vst.msk [vmem:[%s5 + $0x20] sm:$0xf] %vm266, %v256
  // Predicated region
  $region22: #{geddnet_forward.30} parent=0 // pred_check
    _
  $region23: #{geddnet_forward.30} parent=0 // pred_check_branch
    %277 = sbr.rel (0) target = $region25
  $region24: #{geddnet_forward.30} parent=0 // pred_region
    _
  $region25: #{geddnet_forward.30} parent=0 // pred_fallthru
    _
  // Predicated region
  $region26: #{geddnet_forward.30} parent=0 // pred_check
    _
  $region27: #{geddnet_forward.30} parent=0 // pred_check_branch
    %279 = sbr.rel (0) target = $region29
  $region28: #{geddnet_forward.30} parent=0 // pred_region
    _
  $region29: #{geddnet_forward.30} parent=0 // pred_fallthru
    _

// kernel: geddnet_forward.31
$region0: #{geddnet_forward.31}
  #allocation0 [shape = 'u32[]', space=smem, size = 0x4, offset = 0x4, fixed_abs, tag = 'smem constant byte address 0x4 - core index']
  #allocation1 [shape = 'u32[144,128]{1,0:T(1,128)}', space=vmem, size = 0x12000, scoped, tag = 'internal scratch']
  %s0 = inlined_call_operand.vmem [shape: bf16[72,144], index: 0, kind: input, shape index: {}]
  %s1 = inlined_call_operand.vmem [shape: bf16[144,16], index: 1, kind: input, shape index: {}]
  %s2 = inlined_call_operand.vmem [shape: f32[1,16], index: 2, kind: input, shape index: {}]
  %s3 = inlined_call_operand.vmem [shape: f32[1,16], index: 3, kind: input, shape index: {}]
  %s4 = inlined_call_operand.vmem [shape: f32[1,16], index: 4, kind: input, shape index: {}]
  %s5 = inlined_call_operand.vmem [shape: bf16[72,16], index: 5, kind: output, shape index: {}]
  %s6 = sld [smem:[#allocation0]]
  $region30: #{geddnet_forward.31} parent=0
    _
  %s8 = ssub.s32 1, %s6
  %s9 = scalar_select 0, %s8, %s6
  // Predicated region
  $region2: #{geddnet_forward.31} parent=0 // pred_check
    _
  $region3: #{geddnet_forward.31} parent=0 // pred_check_branch
    %11 = sbr.rel (0) target = $region5
  $region4: #{geddnet_forward.31} parent=0 // pred_region
    _
  $region5: #{geddnet_forward.31} parent=0 // pred_fallthru
    _
  // Predicated region
  $region6: #{geddnet_forward.31} parent=0 // pred_check
    _
  $region7: #{geddnet_forward.31} parent=0 // pred_check_branch
    %13 = sbr.rel (0) target = $region9
  $region8: #{geddnet_forward.31} parent=0 // pred_region
    _
  $region9: #{geddnet_forward.31} parent=0 // pred_fallthru
    _
  // Predicated region
  $region10: #{geddnet_forward.31} parent=0 // pred_check
    _
  $region11: #{geddnet_forward.31} parent=0 // pred_check_branch
    %15 = sbr.rel (0) target = $region13
  $region12: #{geddnet_forward.31} parent=0 // pred_region
    _
  $region13: #{geddnet_forward.31} parent=0 // pred_fallthru
    _
  // Predicated region
  $region14: #{geddnet_forward.31} parent=0 // pred_check
    _
  $region15: #{geddnet_forward.31} parent=0 // pred_check_branch
    %17 = sbr.rel (0) target = $region17
  $region16: #{geddnet_forward.31} parent=0 // pred_region
    _
  $region17: #{geddnet_forward.31} parent=0 // pred_fallthru
    _
  // Predicated region
  $region18: #{geddnet_forward.31} parent=0 // pred_check
    _
  $region19: #{geddnet_forward.31} parent=0 // pred_check_branch
    %19 = sbr.rel (0) target = $region21
  $region20: #{geddnet_forward.31} parent=0 // pred_region
    _
  $region21: #{geddnet_forward.31} parent=0 // pred_fallthru
    _
  %v21 = vld [vmem:[%s0] sm:$0xff]
  %v22 = vld [vmem:[%s0 + $0x8] sm:$0xff]
  %v23 = vld [vmem:[%s0 + $0x10] sm:$0xff]
  %v24 = vld [vmem:[%s0 + $0x18] sm:$0xff]
  %v25 = vld [vmem:[%s0 + $0x20] sm:$0xff]
  %v26 = vld [vmem:[%s0 + $0x28] sm:$0xff]
  %v27 = vld [vmem:[%s0 + $0x30] sm:$0xff]
  %v28 = vld [vmem:[%s0 + $0x38] sm:$0xff]
  %v29 = vld [vmem:[%s0 + $0x40] sm:$0xff]
  %v30 = vld [vmem:[%s1] sm:$0xf]
  %v31 = vld [vmem:[%s1 + $0x4] sm:$0xf]
  %v32 = vld [vmem:[%s1 + $0x8] sm:$0xf]
  %v33 = vld [vmem:[%s1 + $0xc] sm:$0xf]
  %v34 = vld [vmem:[%s1 + $0x10] sm:$0xf]
  %v35 = vld [vmem:[%s1 + $0x14] sm:$0xf]
  %v36 = vld [vmem:[%s1 + $0x18] sm:$0xf]
  %v37 = vld [vmem:[%s1 + $0x1c] sm:$0xf]
  %v38 = vld [vmem:[%s1 + $0x20] sm:$0xf]
  %v39 = vld [vmem:[%s1 + $0x24] sm:$0xf]
  %v40 = vld [vmem:[%s1 + $0x28] sm:$0xf]
  %v41 = vld [vmem:[%s1 + $0x2c] sm:$0xf]
  %v42 = vld [vmem:[%s1 + $0x30] sm:$0xf]
  %v43 = vld [vmem:[%s1 + $0x34] sm:$0xf]
  %v44 = vld [vmem:[%s1 + $0x38] sm:$0xf]
  %v45 = vld [vmem:[%s1 + $0x3c] sm:$0xf]
  %v46 = vld [vmem:[%s1 + $0x40] sm:$0xf]
  %v47 = vld [vmem:[%s1 + $0x44] sm:$0xf]
  %v48 = vld [vmem:[%s2] sm:$0x1]
  %v50 = vlaneseq
  %v51 = vshrl.u32 %v50, 7
  %v52 = vsub.s32 0, %v51
  %v53 = vrot.slane %v48, %v52
  %v64 = vunpack.c.l.b16 %v21
  %v65 = vunpack.c.h.b16 %v21
  %v66 = vunpack.c.l.b16 %v22
  %v67 = vunpack.c.h.b16 %v22
  %v68 = vunpack.c.l.b16 %v23
  %v69 = vunpack.c.h.b16 %v23
  %v70 = vunpack.c.l.b16 %v24
  %v71 = vunpack.c.h.b16 %v24
  %v72 = vunpack.c.l.b16 %v25
  %v73 = vunpack.c.h.b16 %v25
  %v74 = vunpack.c.l.b16 %v26
  %v75 = vunpack.c.h.b16 %v26
  %v76 = vunpack.c.l.b16 %v27
  %v77 = vunpack.c.h.b16 %v27
  %v78 = vunpack.c.l.b16 %v28
  %v79 = vunpack.c.h.b16 %v28
  %v80 = vunpack.c.l.b16 %v29
  %v81 = vunpack.c.h.b16 %v29
  %v82 = vpack.c.b16 %v66, %v64
  %v83 = vpack.c.b16 %v67, %v65
  %v84 = vpack.c.b16 %v70, %v68
  %v85 = vpack.c.b16 %v71, %v69
  %v86 = vpack.c.b16 %v74, %v72
  %v87 = vpack.c.b16 %v75, %v73
  %v88 = vpack.c.b16 %v78, %v76
  %v89 = vpack.c.b16 %v79, %v77
  %v90 = vpack.c.b16 %v80, %v80
  %v91 = vpack.c.b16 %v81, %v81
  %v115 = vunpack.c.l.b16 %v30
  %v116 = vunpack.c.l.b16 %v31
  %v117 = vunpack.c.l.b16 %v32
  %v118 = vunpack.c.l.b16 %v33
  %v119 = vunpack.c.l.b16 %v34
  %v120 = vunpack.c.l.b16 %v35
  %v121 = vunpack.c.l.b16 %v36
  %v122 = vunpack.c.l.b16 %v37
  %v123 = vunpack.c.l.b16 %v38
  %v124 = vunpack.c.l.b16 %v39
  %v125 = vunpack.c.l.b16 %v40
  %v126 = vunpack.c.l.b16 %v41
  %v127 = vunpack.c.l.b16 %v42
  %v128 = vunpack.c.l.b16 %v43
  %v129 = vunpack.c.l.b16 %v44
  %v130 = vunpack.c.l.b16 %v45
  %v131 = vunpack.c.l.b16 %v46
  %v132 = vunpack.c.l.b16 %v47
  %v133 = vpack.c.b16 %v116, %v115
  %v134 = vpack.c.b16 %v118, %v117
  %v135 = vpack.c.b16 %v120, %v119
  %v136 = vpack.c.b16 %v122, %v121
  %v137 = vpack.c.b16 %v124, %v123
  %v138 = vpack.c.b16 %v126, %v125
  %v139 = vpack.c.b16 %v128, %v127
  %v140 = vpack.c.b16 %v130, %v129
  %v141 = vpack.c.b16 %v132, %v131
  %vm151 = vcmask 130048
  %v153 = vsel %vm151, %v83, 0
  %v156 = vsel %vm151, %v85, 0
  %v159 = vsel %vm151, %v87, 0
  %v162 = vsel %vm151, %v89, 0
  %v165 = vsel %vm151, %v91, 0
  %167 = vmatprep.subr.bf16.mxu0 0
  %168 = vmatpush1.bf16.msra.mxu0 %v133
  %169 = vmatprep.subr.bf16.mxu0 0
  %170 = vmatpush1.bf16.msra.mxu0 %v134
  %171 = vmatprep.subr.bf16.mxu0 0
  %172 = vmatpush1.bf16.msra.mxu0 %v135
  %173 = vmatprep.subr.bf16.mxu0 0
  %174 = vmatpush1.bf16.msra.mxu0 %v136
  %175 = vmatprep.subr.bf16.mxu0 0
  %176 = vmatpush1.bf16.msra.mxu0 %v137
  %177 = vmatprep.subr.bf16.mxu0 0
  %178 = vmatpush1.bf16.msra.mxu0 %v138
  %179 = vmatprep.subr.bf16.mxu0 0
  %180 = vmatpush1.bf16.msra.mxu0 %v139
  %181 = vmatprep.subr.bf16.mxu0 0
  %182 = vmatpush1.bf16.msra.mxu0 %v140
  %183 = vmatprep.subr.bf16.mxu0 0
  %184 = vmatpush1.bf16.msra.mxu0 %v141
  %185 = vmatprep.subr.bf16.mxu0 0
  %186 = vmatpush1.bf16.msra.mxu0 0
  %187 = vmatprep.subr.bf16.mxu0 0
  %188 = vmatpush1.bf16.msra.mxu0 0
  %189 = vmatprep.subr.bf16.mxu0 0
  %190 = vmatpush1.bf16.msra.mxu0 0
  %191 = vmatprep.subr.bf16.mxu0 0
  %192 = vmatpush1.bf16.msra.mxu0 0
  %193 = vmatprep.subr.bf16.mxu0 0
  %194 = vmatpush1.bf16.msra.mxu0 0
  %195 = vmatprep.subr.bf16.mxu0 0
  %196 = vmatpush1.bf16.msra.mxu0 0
  %197 = vmatprep.subr.bf16.mxu0 0
  %198 = vmatpush1.bf16.msra.mxu0 0
  %199 = vmatprep.mubr.bf16.mxu0 %v153
  %200 = vmatmul.mubr.bf16.gmra.mrb[0].mxu0 %v82
  %v201 = vpop.f32.mrb[0].mxu0
  %v202 = vadd.f32 %v53, %v201
  %v203 = vpop.f32.mrb[0].mxu0
  %v204 = vpop.f32.mrb[0].mxu0
  %v205 = vadd.f32 %v53, %v204
  %v206 = vpop.f32.mrb[0].mxu0
  %207 = vmatprep.mubr.bf16.mxu0 %v156
  %208 = vmatmul.mubr.bf16.gmra.mrb[0].mxu0 %v84
  %v209 = vpop.f32.mrb[0].mxu0
  %v210 = vadd.f32 %v53, %v209
  %v211 = vpop.f32.mrb[0].mxu0
  %v212 = vpop.f32.mrb[0].mxu0
  %v213 = vadd.f32 %v53, %v212
  %v214 = vpop.f32.mrb[0].mxu0
  %215 = vmatprep.mubr.bf16.mxu0 %v159
  %216 = vmatmul.mubr.bf16.gmra.mrb[0].mxu0 %v86
  %v217 = vpop.f32.mrb[0].mxu0
  %v218 = vadd.f32 %v53, %v217
  %v219 = vpop.f32.mrb[0].mxu0
  %v220 = vpop.f32.mrb[0].mxu0
  %v221 = vadd.f32 %v53, %v220
  %v222 = vpop.f32.mrb[0].mxu0
  %223 = vmatprep.mubr.bf16.mxu0 %v162
  %224 = vmatmul.mubr.bf16.gmra.mrb[0].mxu0 %v88
  %v225 = vpop.f32.mrb[0].mxu0
  %v226 = vadd.f32 %v53, %v225
  %v227 = vpop.f32.mrb[0].mxu0
  %v228 = vpop.f32.mrb[0].mxu0
  %v229 = vadd.f32 %v53, %v228
  %v230 = vpop.f32.mrb[0].mxu0
  %231 = vmatprep.mubr.bf16.mxu0 %v165
  %232 = vmatmul.mubr.bf16.gmra.mrb[0].mxu0 %v90
  %v233 = vpop.f32.mrb[0].mxu0
  %v234 = vadd.f32 %v53, %v233
  %v235 = vpop.f32.mrb[0].mxu0
  %v236 = vpop.f32.mrb[0].mxu0
  %v237 = vpop.f32.mrb[0].mxu0
  %238 = vdwg.mxu0
  %v239 = vmax.f32 %v202, 0.0
  %v240 = vmax.f32 %v205, 0.0
  %v241 = vmax.f32 %v210, 0.0
  %v242 = vmax.f32 %v213, 0.0
  %v243 = vmax.f32 %v218, 0.0
  %v244 = vmax.f32 %v221, 0.0
  %v245 = vmax.f32 %v226, 0.0
  %v246 = vmax.f32 %v229, 0.0
  %v247 = vmax.f32 %v234, 0.0
  %v248 = vld [vmem:[%s3] sm:$0x1]
  %v250 = vlaneseq
  %v251 = vshrl.u32 %v250, 7
  %v252 = vsub.s32 0, %v251
  %v253 = vrot.slane %v248, %v252
  %v255 = vmul.f32 %v239, %v253
  %v256 = vmul.f32 %v240, %v253
  %v257 = vmul.f32 %v241, %v253
  %v258 = vmul.f32 %v242, %v253
  %v259 = vmul.f32 %v243, %v253
  %v260 = vmul.f32 %v244, %v253
  %v261 = vmul.f32 %v245, %v253
  %v262 = vmul.f32 %v246, %v253
  %v263 = vmul.f32 %v247, %v253
  %v264 = vld [vmem:[%s4] sm:$0x1]
  %v266 = vlaneseq
  %v267 = vshrl.u32 %v266, 7
  %v268 = vsub.s32 0, %v267
  %v269 = vrot.slane %v264, %v268
  %v271 = vadd.f32 %v255, %v269
  %v272 = vadd.f32 %v256, %v269
  %v273 = vadd.f32 %v257, %v269
  %v274 = vadd.f32 %v258, %v269
  %v275 = vadd.f32 %v259, %v269
  %v276 = vadd.f32 %v260, %v269
  %v277 = vadd.f32 %v261, %v269
  %v278 = vadd.f32 %v262, %v269
  %v279 = vadd.f32 %v263, %v269
  %v280 = vpack.c.bf16 %v272, %v271
  %v281 = vpack.c.bf16 %v274, %v273
  %v282 = vpack.c.bf16 %v276, %v275
  %v283 = vpack.c.bf16 %v278, %v277
  %v284 = vpack.c.bf16 %v279, %v279
  %v290 = vunpack.c.l.b16 %v280
  %v291 = vunpack.c.h.b16 %v280
  %v292 = vunpack.c.l.b16 %v281
  %v293 = vunpack.c.h.b16 %v281
  %v294 = vunpack.c.l.b16 %v282
  %v295 = vunpack.c.h.b16 %v282
  %v296 = vunpack.c.l.b16 %v283
  %v297 = vunpack.c.h.b16 %v283
  %v298 = vunpack.c.l.b16 %v284
  %v299 = vpack.c.b16 %v290, %v290
  %v300 = vpack.c.b16 %v291, %v291
  %v301 = vpack.c.b16 %v292, %v292
  %v302 = vpack.c.b16 %v293, %v293
  %v303 = vpack.c.b16 %v294, %v294
  %v304 = vpack.c.b16 %v295, %v295
  %v305 = vpack.c.b16 %v296, %v296
  %v306 = vpack.c.b16 %v297, %v297
  %v307 = vpack.c.b16 %v298, %v298
  %vm317 = vcmask 125952
  %318 = vst.msk [vmem:[%s5] sm:$0xf] %vm317, %v299
  %319 = vst.msk [vmem:[%s5 + $0x4] sm:$0xf] %vm317, %v300
  %320 = vst.msk [vmem:[%s5 + $0x8] sm:$0xf] %vm317, %v301
  %321 = vst.msk [vmem:[%s5 + $0xc] sm:$0xf] %vm317, %v302
  %322 = vst.msk [vmem:[%s5 + $0x10] sm:$0xf] %vm317, %v303
  %323 = vst.msk [vmem:[%s5 + $0x14] sm:$0xf] %vm317, %v304
  %324 = vst.msk [vmem:[%s5 + $0x18] sm:$0xf] %vm317, %v305
  %325 = vst.msk [vmem:[%s5 + $0x1c] sm:$0xf] %vm317, %v306
  %326 = vst.msk [vmem:[%s5 + $0x20] sm:$0xf] %vm317, %v307
  // Predicated region
  $region22: #{geddnet_forward.31} parent=0 // pred_check
    _
  $region23: #{geddnet_forward.31} parent=0 // pred_check_branch
    %328 = sbr.rel (0) target = $region25
  $region24: #{geddnet_forward.31} parent=0 // pred_region
    _
  $region25: #{geddnet_forward.31} parent=0 // pred_fallthru
    _
  // Predicated region
  $region26: #{geddnet_forward.31} parent=0 // pred_check
    _
  $region27: #{geddnet_forward.31} parent=0 // pred_check_branch
    %330 = sbr.rel (0) target = $region29
  $region28: #{geddnet_forward.31} parent=0 // pred_region
    _
  $region29: #{geddnet_forward.31} parent=0 // pred_fallthru
    _

// kernel: geddnet_forward.33
$region0: #{geddnet_forward.33}
  #allocation0 [shape = 'u32[]', space=smem, size = 0x4, offset = 0x4, fixed_abs, tag = 'smem constant byte address 0x4 - core index']
  #allocation1 [shape = 'u32[144,128]{1,0:T(1,128)}', space=vmem, size = 0x12000, scoped, tag = 'internal scratch']
  %s0 = inlined_call_operand.vmem [shape: bf16[2,32], index: 0, kind: input, shape index: {}]
  %s1 = inlined_call_operand.vmem [shape: bf16[32,16], index: 1, kind: input, shape index: {}]
  %s2 = inlined_call_operand.vmem [shape: f32[1,16], index: 2, kind: input, shape index: {}]
  %s3 = inlined_call_operand.vmem [shape: bf16[2,16], index: 3, kind: output, shape index: {}]
  %s4 = sld [smem:[#allocation0]]
  $region22: #{geddnet_forward.33} parent=0
    _
  %s6 = ssub.s32 1, %s4
  %s7 = scalar_select 0, %s6, %s4
  // Predicated region
  $region2: #{geddnet_forward.33} parent=0 // pred_check
    _
  $region3: #{geddnet_forward.33} parent=0 // pred_check_branch
    %9 = sbr.rel (0) target = $region5
  $region4: #{geddnet_forward.33} parent=0 // pred_region
    _
  $region5: #{geddnet_forward.33} parent=0 // pred_fallthru
    _
  // Predicated region
  $region6: #{geddnet_forward.33} parent=0 // pred_check
    _
  $region7: #{geddnet_forward.33} parent=0 // pred_check_branch
    %11 = sbr.rel (0) target = $region9
  $region8: #{geddnet_forward.33} parent=0 // pred_region
    _
  $region9: #{geddnet_forward.33} parent=0 // pred_fallthru
    _
  // Predicated region
  $region10: #{geddnet_forward.33} parent=0 // pred_check
    _
  $region11: #{geddnet_forward.33} parent=0 // pred_check_branch
    %13 = sbr.rel (0) target = $region13
  $region12: #{geddnet_forward.33} parent=0 // pred_region
    _
  $region13: #{geddnet_forward.33} parent=0 // pred_fallthru
    _
  %v15 = vld [vmem:[%s0] sm:$0x1]
  %v16 = vld [vmem:[%s1] sm:$0xf]
  %v17 = vld [vmem:[%s1 + $0x4] sm:$0xf]
  %v18 = vld [vmem:[%s1 + $0x8] sm:$0xf]
  %v19 = vld [vmem:[%s1 + $0xc] sm:$0xf]
  %v20 = vld [vmem:[%s2] sm:$0x1]
  %v22 = vlaneseq
  %v23 = vshrl.u32 %v22, 7
  %v24 = vsub.s32 0, %v23
  %v25 = vrot.slane %v20, %v24
  %v31 = vunpack.c.l.b16 %v16
  %v32 = vunpack.c.l.b16 %v17
  %v33 = vunpack.c.l.b16 %v18
  %v34 = vunpack.c.l.b16 %v19
  %v35 = vpack.c.b16 %v32, %v31
  %v36 = vpack.c.b16 %v34, %v33
  %vm39 = vcmask 261120
  %v41 = vsel %vm39, %v15, 0
  %43 = vmatprep.subr.bf16.mxu0 0
  %44 = vmatpush1.bf16.msra.mxu0 %v35
  %45 = vmatprep.subr.bf16.mxu0 0
  %46 = vmatpush1.bf16.msra.mxu0 %v36
  %47 = vmatprep.subr.bf16.mxu0 0
  %48 = vmatpush1.bf16.msra.mxu0 0
  %49 = vmatprep.subr.bf16.mxu0 0
  %50 = vmatpush1.bf16.msra.mxu0 0
  %51 = vmatprep.subr.bf16.mxu0 0
  %52 = vmatpush1.bf16.msra.mxu0 0
  %53 = vmatprep.subr.bf16.mxu0 0
  %54 = vmatpush1.bf16.msra.mxu0 0
  %55 = vmatprep.subr.bf16.mxu0 0
  %56 = vmatpush1.bf16.msra.mxu0 0
  %57 = vmatprep.subr.bf16.mxu0 0
  %58 = vmatpush1.bf16.msra.mxu0 0
  %59 = vmatprep.subr.bf16.mxu0 0
  %60 = vmatpush1.bf16.msra.mxu0 0
  %61 = vmatprep.subr.bf16.mxu0 0
  %62 = vmatpush1.bf16.msra.mxu0 0
  %63 = vmatprep.subr.bf16.mxu0 0
  %64 = vmatpush1.bf16.msra.mxu0 0
  %65 = vmatprep.subr.bf16.mxu0 0
  %66 = vmatpush1.bf16.msra.mxu0 0
  %67 = vmatprep.subr.bf16.mxu0 0
  %68 = vmatpush1.bf16.msra.mxu0 0
  %69 = vmatprep.subr.bf16.mxu0 0
  %70 = vmatpush1.bf16.msra.mxu0 0
  %71 = vmatprep.subr.bf16.mxu0 0
  %72 = vmatpush1.bf16.msra.mxu0 0
  %73 = vmatprep.subr.bf16.mxu0 0
  %74 = vmatpush1.bf16.msra.mxu0 0
  %75 = vmatprep.mubr.bf16.mxu0 0
  %76 = vmatmul.mubr.bf16.gmra.mrb[0].mxu0 %v41
  %v77 = vpop.f32.mrb[0].mxu0
  %v78 = vadd.f32 %v25, %v77
  %v79 = vpop.f32.mrb[0].mxu0
  %v80 = vpop.f32.mrb[0].mxu0
  %v81 = vpop.f32.mrb[0].mxu0
  %82 = vdwg.mxu0
  %v83 = vmax.f32 %v78, 0.0
  %v84 = vpack.c.bf16 %v83, %v83
  %vm85 = vcmask 122880
  %86 = vst.msk [vmem:[%s3] sm:$0x1] %vm85, %v84
  // Predicated region
  $region14: #{geddnet_forward.33} parent=0 // pred_check
    _
  $region15: #{geddnet_forward.33} parent=0 // pred_check_branch
    %88 = sbr.rel (0) target = $region17
  $region16: #{geddnet_forward.33} parent=0 // pred_region
    _
  $region17: #{geddnet_forward.33} parent=0 // pred_fallthru
    _
  // Predicated region
  $region18: #{geddnet_forward.33} parent=0 // pred_check
    _
  $region19: #{geddnet_forward.33} parent=0 // pred_check_branch
    %90 = sbr.rel (0) target = $region21
  $region20: #{geddnet_forward.33} parent=0 // pred_region
    _
  $region21: #{geddnet_forward.33} parent=0 // pred_fallthru
    _

// kernel: geddnet_forward.32
$region0: #{geddnet_forward.32}
  #allocation0 [shape = 'u32[]', space=smem, size = 0x4, offset = 0x4, fixed_abs, tag = 'smem constant byte address 0x4 - core index']
  #allocation1 [shape = 'u32[144,128]{1,0:T(1,128)}', space=vmem, size = 0x12000, scoped, tag = 'internal scratch']
  %s0 = inlined_call_operand.vmem [shape: bf16[2,576], index: 0, kind: input, shape index: {}]
  %s1 = inlined_call_operand.vmem [shape: bf16[576,32], index: 1, kind: input, shape index: {}]
  %s2 = inlined_call_operand.vmem [shape: f32[1,32], index: 2, kind: input, shape index: {}]
  %s3 = inlined_call_operand.vmem [shape: bf16[2,32], index: 3, kind: output, shape index: {}]
  %s4 = sld [smem:[#allocation0]]
  $region22: #{geddnet_forward.32} parent=0
    _
  %s6 = ssub.s32 1, %s4
  %s7 = scalar_select 0, %s6, %s4
  // Predicated region
  $region2: #{geddnet_forward.32} parent=0 // pred_check
    _
  $region3: #{geddnet_forward.32} parent=0 // pred_check_branch
    %9 = sbr.rel (0) target = $region5
  $region4: #{geddnet_forward.32} parent=0 // pred_region
    _
  $region5: #{geddnet_forward.32} parent=0 // pred_fallthru
    _
  // Predicated region
  $region6: #{geddnet_forward.32} parent=0 // pred_check
    _
  $region7: #{geddnet_forward.32} parent=0 // pred_check_branch
    %11 = sbr.rel (0) target = $region9
  $region8: #{geddnet_forward.32} parent=0 // pred_region
    _
  $region9: #{geddnet_forward.32} parent=0 // pred_fallthru
    _
  // Predicated region
  $region10: #{geddnet_forward.32} parent=0 // pred_check
    _
  $region11: #{geddnet_forward.32} parent=0 // pred_check_branch
    %13 = sbr.rel (0) target = $region13
  $region12: #{geddnet_forward.32} parent=0 // pred_region
    _
  $region13: #{geddnet_forward.32} parent=0 // pred_fallthru
    _
  %v15 = vld [vmem:[%s0] sm:$0x1f]
  %v16 = vld [vmem:[%s1] sm:$0xf]
  %v17 = vld [vmem:[%s1 + $0x4] sm:$0xf]
  %v18 = vld [vmem:[%s1 + $0x8] sm:$0xf]
  %v19 = vld [vmem:[%s1 + $0xc] sm:$0xf]
  %v20 = vld [vmem:[%s1 + $0x10] sm:$0xf]
  %v21 = vld [vmem:[%s1 + $0x14] sm:$0xf]
  %v22 = vld [vmem:[%s1 + $0x18] sm:$0xf]
  %v23 = vld [vmem:[%s1 + $0x1c] sm:$0xf]
  %v24 = vld [vmem:[%s1 + $0x20] sm:$0xf]
  %v25 = vld [vmem:[%s1 + $0x24] sm:$0xf]
  %v26 = vld [vmem:[%s1 + $0x28] sm:$0xf]
  %v27 = vld [vmem:[%s1 + $0x2c] sm:$0xf]
  %v28 = vld [vmem:[%s1 + $0x30] sm:$0xf]
  %v29 = vld [vmem:[%s1 + $0x34] sm:$0xf]
  %v30 = vld [vmem:[%s1 + $0x38] sm:$0xf]
  %v31 = vld [vmem:[%s1 + $0x3c] sm:$0xf]
  %v32 = vld [vmem:[%s1 + $0x40] sm:$0xf]
  %v33 = vld [vmem:[%s1 + $0x44] sm:$0xf]
  %v34 = vld [vmem:[%s1 + $0x48] sm:$0xf]
  %v35 = vld [vmem:[%s1 + $0x4c] sm:$0xf]
  %v36 = vld [vmem:[%s1 + $0x50] sm:$0xf]
  %v37 = vld [vmem:[%s1 + $0x54] sm:$0xf]
  %v38 = vld [vmem:[%s1 + $0x58] sm:$0xf]
  %v39 = vld [vmem:[%s1 + $0x5c] sm:$0xf]
  %v40 = vld [vmem:[%s1 + $0x60] sm:$0xf]
  %v41 = vld [vmem:[%s1 + $0x64] sm:$0xf]
  %v42 = vld [vmem:[%s1 + $0x68] sm:$0xf]
  %v43 = vld [vmem:[%s1 + $0x6c] sm:$0xf]
  %v44 = vld [vmem:[%s1 + $0x70] sm:$0xf]
  %v45 = vld [vmem:[%s1 + $0x74] sm:$0xf]
  %v46 = vld [vmem:[%s1 + $0x78] sm:$0xf]
  %v47 = vld [vmem:[%s1 + $0x7c] sm:$0xf]
  %v48 = vld [vmem:[%s1 + $0x80] sm:$0xf]
  %v49 = vld [vmem:[%s1 + $0x84] sm:$0xf]
  %v50 = vld [vmem:[%s1 + $0x88] sm:$0xf]
  %v51 = vld [vmem:[%s1 + $0x8c] sm:$0xf]
  %v52 = vld [vmem:[%s1 + $0x90] sm:$0xf]
  %v53 = vld [vmem:[%s1 + $0x94] sm:$0xf]
  %v54 = vld [vmem:[%s1 + $0x98] sm:$0xf]
  %v55 = vld [vmem:[%s1 + $0x9c] sm:$0xf]
  %v56 = vld [vmem:[%s1 + $0xa0] sm:$0xf]
  %v57 = vld [vmem:[%s1 + $0xa4] sm:$0xf]
  %v58 = vld [vmem:[%s1 + $0xa8] sm:$0xf]
  %v59 = vld [vmem:[%s1 + $0xac] sm:$0xf]
  %v60 = vld [vmem:[%s1 + $0xb0] sm:$0xf]
  %v61 = vld [vmem:[%s1 + $0xb4] sm:$0xf]
  %v62 = vld [vmem:[%s1 + $0xb8] sm:$0xf]
  %v63 = vld [vmem:[%s1 + $0xbc] sm:$0xf]
  %v64 = vld [vmem:[%s1 + $0xc0] sm:$0xf]
  %v65 = vld [vmem:[%s1 + $0xc4] sm:$0xf]
  %v66 = vld [vmem:[%s1 + $0xc8] sm:$0xf]
  %v67 = vld [vmem:[%s1 + $0xcc] sm:$0xf]
  %v68 = vld [vmem:[%s1 + $0xd0] sm:$0xf]
  %v69 = vld [vmem:[%s1 + $0xd4] sm:$0xf]
  %v70 = vld [vmem:[%s1 + $0xd8] sm:$0xf]
  %v71 = vld [vmem:[%s1 + $0xdc] sm:$0xf]
  %v72 = vld [vmem:[%s1 + $0xe0] sm:$0xf]
  %v73 = vld [vmem:[%s1 + $0xe4] sm:$0xf]
  %v74 = vld [vmem:[%s1 + $0xe8] sm:$0xf]
  %v75 = vld [vmem:[%s1 + $0xec] sm:$0xf]
  %v76 = vld [vmem:[%s1 + $0xf0] sm:$0xf]
  %v77 = vld [vmem:[%s1 + $0xf4] sm:$0xf]
  %v78 = vld [vmem:[%s1 + $0xf8] sm:$0xf]
  %v79 = vld [vmem:[%s1 + $0xfc] sm:$0xf]
  %v80 = vld [vmem:[%s1 + $0x100] sm:$0xf]
  %v81 = vld [vmem:[%s1 + $0x104] sm:$0xf]
  %v82 = vld [vmem:[%s1 + $0x108] sm:$0xf]
  %v83 = vld [vmem:[%s1 + $0x10c] sm:$0xf]
  %v84 = vld [vmem:[%s1 + $0x110] sm:$0xf]
  %v85 = vld [vmem:[%s1 + $0x114] sm:$0xf]
  %v86 = vld [vmem:[%s1 + $0x118] sm:$0xf]
  %v87 = vld [vmem:[%s1 + $0x11c] sm:$0xf]
  %v88 = vld [vmem:[%s2] sm:$0x1]
  %v90 = vlaneseq
  %v91 = vshrl.u32 %v90, 7
  %v92 = vsub.s32 0, %v91
  %v93 = vrot.slane %v88, %v92
  %v96 = vcombine.high %v15, %v15
  %v98 = vunpack.c.l.s4 1966171168
  %v99 = vunpack.c.0.s8 %v98
  %v100 = vlaneseq
  %v101 = vshrl.u32 %v100, 7
  %v102 = vsub.s32 %v99, %v101
  %v103 = vrot.slane %v15, %v102
  %v105 = vunpack.c.l.s4 1966171168
  %v106 = vunpack.c.0.s8 %v105
  %v107 = vlaneseq
  %v108 = vshrl.u32 %v107, 7
  %v109 = vsub.s32 %v106, %v108
  %v110 = vrot.slane %v96, %v109
  %v111 = vcombine.high %v103, %v103
  %v113 = vunpack.c.l.s4 1966171168
  %v114 = vunpack.c.0.s8 %v113
  %v115 = vlaneseq
  %v116 = vshrl.u32 %v115, 7
  %v117 = vsub.s32 %v114, %v116
  %v118 = vrot.slane %v103, %v117
  %v120 = vunpack.c.l.s4 1966171168
  %v121 = vunpack.c.0.s8 %v120
  %v122 = vlaneseq
  %v123 = vshrl.u32 %v122, 7
  %v124 = vsub.s32 %v121, %v123
  %v125 = vrot.slane %v110, %v124
  %v127 = vunpack.c.l.s4 1966171168
  %v128 = vunpack.c.0.s8 %v127
  %v129 = vlaneseq
  %v130 = vshrl.u32 %v129, 7
  %v131 = vsub.s32 %v128, %v130
  %v132 = vrot.slane %v111, %v131
  %v133 = vcombine.high %v118, %v118
  %v134 = vcombine.high %v132, %v132
  %v211 = vunpack.c.l.b16 %v16
  %v212 = vunpack.c.l.b16 %v17
  %v213 = vunpack.c.l.b16 %v18
  %v214 = vunpack.c.l.b16 %v19
  %v215 = vunpack.c.l.b16 %v20
  %v216 = vunpack.c.l.b16 %v21
  %v217 = vunpack.c.l.b16 %v22
  %v218 = vunpack.c.l.b16 %v23
  %v219 = vunpack.c.l.b16 %v24
  %v220 = vunpack.c.l.b16 %v25
  %v221 = vunpack.c.l.b16 %v26
  %v222 = vunpack.c.l.b16 %v27
  %v223 = vunpack.c.l.b16 %v28
  %v224 = vunpack.c.l.b16 %v29
  %v225 = vunpack.c.l.b16 %v30
  %v226 = vunpack.c.l.b16 %v31
  %v227 = vunpack.c.l.b16 %v32
  %v228 = vunpack.c.l.b16 %v33
  %v229 = vunpack.c.l.b16 %v34
  %v230 = vunpack.c.l.b16 %v35
  %v231 = vunpack.c.l.b16 %v36
  %v232 = vunpack.c.l.b16 %v37
  %v233 = vunpack.c.l.b16 %v38
  %v234 = vunpack.c.l.b16 %v39
  %v235 = vunpack.c.l.b16 %v40
  %v236 = vunpack.c.l.b16 %v41
  %v237 = vunpack.c.l.b16 %v42
  %v238 = vunpack.c.l.b16 %v43
  %v239 = vunpack.c.l.b16 %v44
  %v240 = vunpack.c.l.b16 %v45
  %v241 = vunpack.c.l.b16 %v46
  %v242 = vunpack.c.l.b16 %v47
  %v243 = vunpack.c.l.b16 %v48
  %v244 = vunpack.c.l.b16 %v49
  %v245 = vunpack.c.l.b16 %v50
  %v246 = vunpack.c.l.b16 %v51
  %v247 = vunpack.c.l.b16 %v52
  %v248 = vunpack.c.l.b16 %v53
  %v249 = vunpack.c.l.b16 %v54
  %v250 = vunpack.c.l.b16 %v55
  %v251 = vunpack.c.l.b16 %v56
  %v252 = vunpack.c.l.b16 %v57
  %v253 = vunpack.c.l.b16 %v58
  %v254 = vunpack.c.l.b16 %v59
  %v255 = vunpack.c.l.b16 %v60
  %v256 = vunpack.c.l.b16 %v61
  %v257 = vunpack.c.l.b16 %v62
  %v258 = vunpack.c.l.b16 %v63
  %v259 = vunpack.c.l.b16 %v64
  %v260 = vunpack.c.l.b16 %v65
  %v261 = vunpack.c.l.b16 %v66
  %v262 = vunpack.c.l.b16 %v67
  %v263 = vunpack.c.l.b16 %v68
  %v264 = vunpack.c.l.b16 %v69
  %v265 = vunpack.c.l.b16 %v70
  %v266 = vunpack.c.l.b16 %v71
  %v267 = vunpack.c.l.b16 %v72
  %v268 = vunpack.c.l.b16 %v73
  %v269 = vunpack.c.l.b16 %v74
  %v270 = vunpack.c.l.b16 %v75
  %v271 = vunpack.c.l.b16 %v76
  %v272 = vunpack.c.l.b16 %v77
  %v273 = vunpack.c.l.b16 %v78
  %v274 = vunpack.c.l.b16 %v79
  %v275 = vunpack.c.l.b16 %v80
  %v276 = vunpack.c.l.b16 %v81
  %v277 = vunpack.c.l.b16 %v82
  %v278 = vunpack.c.l.b16 %v83
  %v279 = vunpack.c.l.b16 %v84
  %v280 = vunpack.c.l.b16 %v85
  %v281 = vunpack.c.l.b16 %v86
  %v282 = vunpack.c.l.b16 %v87
  %v283 = vpack.c.b16 %v212, %v211
  %v284 = vpack.c.b16 %v214, %v213
  %v285 = vpack.c.b16 %v216, %v215
  %v286 = vpack.c.b16 %v218, %v217
  %v287 = vpack.c.b16 %v220, %v219
  %v288 = vpack.c.b16 %v222, %v221
  %v289 = vpack.c.b16 %v224, %v223
  %v290 = vpack.c.b16 %v226, %v225
  %v291 = vpack.c.b16 %v228, %v227
  %v292 = vpack.c.b16 %v230, %v229
  %v293 = vpack.c.b16 %v232, %v231
  %v294 = vpack.c.b16 %v234, %v233
  %v295 = vpack.c.b16 %v236, %v235
  %v296 = vpack.c.b16 %v238, %v237
  %v297 = vpack.c.b16 %v240, %v239
  %v298 = vpack.c.b16 %v242, %v241
  %v299 = vpack.c.b16 %v244, %v243
  %v300 = vpack.c.b16 %v246, %v245
  %v301 = vpack.c.b16 %v248, %v247
  %v302 = vpack.c.b16 %v250, %v249
  %v303 = vpack.c.b16 %v252, %v251
  %v304 = vpack.c.b16 %v254, %v253
  %v305 = vpack.c.b16 %v256, %v255
  %v306 = vpack.c.b16 %v258, %v257
  %v307 = vpack.c.b16 %v260, %v259
  %v308 = vpack.c.b16 %v262, %v261
  %v309 = vpack.c.b16 %v264, %v263
  %v310 = vpack.c.b16 %v266, %v265
  %v311 = vpack.c.b16 %v268, %v267
  %v312 = vpack.c.b16 %v270, %v269
  %v313 = vpack.c.b16 %v272, %v271
  %v314 = vpack.c.b16 %v274, %v273
  %v315 = vpack.c.b16 %v276, %v275
  %v316 = vpack.c.b16 %v278, %v277
  %v317 = vpack.c.b16 %v280, %v279
  %v318 = vpack.c.b16 %v282, %v281
  %vm355 = vcmask 523264
  %v357 = vsel %vm355, %v125, 0
  %359 = vmatprep.subr.bf16.mxu0 0
  %360 = vmatpush1.bf16.msra.mxu0 %v283
  %361 = vmatprep.subr.bf16.mxu0 0
  %362 = vmatpush1.bf16.msra.mxu0 %v284
  %363 = vmatprep.subr.bf16.mxu0 0
  %364 = vmatpush1.bf16.msra.mxu0 %v285
  %365 = vmatprep.subr.bf16.mxu0 0
  %366 = vmatpush1.bf16.msra.mxu0 %v286
  %367 = vmatprep.subr.bf16.mxu0 0
  %368 = vmatpush1.bf16.msra.mxu0 %v287
  %369 = vmatprep.subr.bf16.mxu0 0
  %370 = vmatpush1.bf16.msra.mxu0 %v288
  %371 = vmatprep.subr.bf16.mxu0 0
  %372 = vmatpush1.bf16.msra.mxu0 %v289
  %373 = vmatprep.subr.bf16.mxu0 0
  %374 = vmatpush1.bf16.msra.mxu0 %v290
  %375 = vmatprep.subr.bf16.mxu0 0
  %376 = vmatpush1.bf16.msra.mxu0 %v291
  %377 = vmatprep.subr.bf16.mxu0 0
  %378 = vmatpush1.bf16.msra.mxu0 %v292
  %379 = vmatprep.subr.bf16.mxu0 0
  %380 = vmatpush1.bf16.msra.mxu0 %v293
  %381 = vmatprep.subr.bf16.mxu0 0
  %382 = vmatpush1.bf16.msra.mxu0 %v294
  %383 = vmatprep.subr.bf16.mxu0 0
  %384 = vmatpush1.bf16.msra.mxu0 %v295
  %385 = vmatprep.subr.bf16.mxu0 0
  %386 = vmatpush1.bf16.msra.mxu0 %v296
  %387 = vmatprep.subr.bf16.mxu0 0
  %388 = vmatpush1.bf16.msra.mxu0 %v297
  %389 = vmatprep.subr.bf16.mxu0 0
  %390 = vmatpush1.bf16.msra.mxu0 %v298
  %391 = vmatprep.mubr.bf16.mxu0 %v132
  %392 = vmatmul.mubr.bf16.gmra.mrb[0].mxu0 %v118
  %v393 = vpop.f32.mrb[0].mxu0
  %v394 = vadd.f32 %v93, %v393
  %v395 = vpop.f32.mrb[0].mxu0
  %v396 = vpop.f32.mrb[0].mxu0
  %v397 = vpop.f32.mrb[0].mxu0
  %398 = vdwg.mxu0
  %399 = vmatprep.subr.bf16.mxu0 0
  %400 = vmatpush1.bf16.msra.mxu0 %v299
  %401 = vmatprep.subr.bf16.mxu0 0
  %402 = vmatpush1.bf16.msra.mxu0 %v300
  %403 = vmatprep.subr.bf16.mxu0 0
  %404 = vmatpush1.bf16.msra.mxu0 %v301
  %405 = vmatprep.subr.bf16.mxu0 0
  %406 = vmatpush1.bf16.msra.mxu0 %v302
  %407 = vmatprep.subr.bf16.mxu0 0
  %408 = vmatpush1.bf16.msra.mxu0 %v303
  %409 = vmatprep.subr.bf16.mxu0 0
  %410 = vmatpush1.bf16.msra.mxu0 %v304
  %411 = vmatprep.subr.bf16.mxu0 0
  %412 = vmatpush1.bf16.msra.mxu0 %v305
  %413 = vmatprep.subr.bf16.mxu0 0
  %414 = vmatpush1.bf16.msra.mxu0 %v306
  %415 = vmatprep.subr.bf16.mxu0 0
  %416 = vmatpush1.bf16.msra.mxu0 %v307
  %417 = vmatprep.subr.bf16.mxu0 0
  %418 = vmatpush1.bf16.msra.mxu0 %v308
  %419 = vmatprep.subr.bf16.mxu0 0
  %420 = vmatpush1.bf16.msra.mxu0 %v309
  %421 = vmatprep.subr.bf16.mxu0 0
  %422 = vmatpush1.bf16.msra.mxu0 %v310
  %423 = vmatprep.subr.bf16.mxu0 0
  %424 = vmatpush1.bf16.msra.mxu0 %v311
  %425 = vmatprep.subr.bf16.mxu0 0
  %426 = vmatpush1.bf16.msra.mxu0 %v312
  %427 = vmatprep.subr.bf16.mxu0 0
  %428 = vmatpush1.bf16.msra.mxu0 %v313
  %429 = vmatprep.subr.bf16.mxu0 0
  %430 = vmatpush1.bf16.msra.mxu0 %v314
  %431 = vmatprep.mubr.bf16.mxu0 %v134
  %432 = vmatmul.mubr.bf16.gmra.mrb[0].mxu0 %v133
  %v433 = vpop.f32.mrb[0].mxu0
  %v434 = vadd.f32 %v394, %v433
  %v435 = vpop.f32.mrb[0].mxu0
  %v436 = vpop.f32.mrb[0].mxu0
  %v437 = vpop.f32.mrb[0].mxu0
  %438 = vdwg.mxu0
  %439 = vmatprep.subr.bf16.mxu0 0
  %440 = vmatpush1.bf16.msra.mxu0 %v315
  %441 = vmatprep.subr.bf16.mxu0 0
  %442 = vmatpush1.bf16.msra.mxu0 %v316
  %443 = vmatprep.subr.bf16.mxu0 0
  %444 = vmatpush1.bf16.msra.mxu0 %v317
  %445 = vmatprep.subr.bf16.mxu0 0
  %446 = vmatpush1.bf16.msra.mxu0 %v318
  %447 = vmatprep.subr.bf16.mxu0 0
  %448 = vmatpush1.bf16.msra.mxu0 0
  %449 = vmatprep.subr.bf16.mxu0 0
  %450 = vmatpush1.bf16.msra.mxu0 0
  %451 = vmatprep.subr.bf16.mxu0 0
  %452 = vmatpush1.bf16.msra.mxu0 0
  %453 = vmatprep.subr.bf16.mxu0 0
  %454 = vmatpush1.bf16.msra.mxu0 0
  %455 = vmatprep.subr.bf16.mxu0 0
  %456 = vmatpush1.bf16.msra.mxu0 0
  %457 = vmatprep.subr.bf16.mxu0 0
  %458 = vmatpush1.bf16.msra.mxu0 0
  %459 = vmatprep.subr.bf16.mxu0 0
  %460 = vmatpush1.bf16.msra.mxu0 0
  %461 = vmatprep.subr.bf16.mxu0 0
  %462 = vmatpush1.bf16.msra.mxu0 0
  %463 = vmatprep.subr.bf16.mxu0 0
  %464 = vmatpush1.bf16.msra.mxu0 0
  %465 = vmatprep.subr.bf16.mxu0 0
  %466 = vmatpush1.bf16.msra.mxu0 0
  %467 = vmatprep.subr.bf16.mxu0 0
  %468 = vmatpush1.bf16.msra.mxu0 0
  %469 = vmatprep.subr.bf16.mxu0 0
  %470 = vmatpush1.bf16.msra.mxu0 0
  %471 = vmatprep.mubr.bf16.mxu0 0
  %472 = vmatmul.mubr.bf16.gmra.mrb[0].mxu0 %v357
  %v473 = vpop.f32.mrb[0].mxu0
  %v474 = vadd.f32 %v434, %v473
  %v475 = vpop.f32.mrb[0].mxu0
  %v476 = vpop.f32.mrb[0].mxu0
  %v477 = vpop.f32.mrb[0].mxu0
  %478 = vdwg.mxu0
  %v479 = vmax.f32 %v474, 0.0
  %v480 = vpack.c.bf16 %v479, %v479
  %vm481 = vcmask 253952
  %482 = vst.msk [vmem:[%s3] sm:$0x1] %vm481, %v480
  // Predicated region
  $region14: #{geddnet_forward.32} parent=0 // pred_check
    _
  $region15: #{geddnet_forward.32} parent=0 // pred_check_branch
    %484 = sbr.rel (0) target = $region17
  $region16: #{geddnet_forward.32} parent=0 // pred_region
    _
  $region17: #{geddnet_forward.32} parent=0 // pred_fallthru
    _
  // Predicated region
  $region18: #{geddnet_forward.32} parent=0 // pred_check
    _
  $region19: #{geddnet_forward.32} parent=0 // pred_check_branch
    %486 = sbr.rel (0) target = $region21
  $region20: #{geddnet_forward.32} parent=0 // pred_region
    _
  $region21: #{geddnet_forward.32} parent=0 // pred_fallthru
    _

// kernel: geddnet_forward.34
$region0: #{geddnet_forward.34}
  #allocation0 [shape = 'u32[]', space=smem, size = 0x4, offset = 0x4, fixed_abs, tag = 'smem constant byte address 0x4 - core index']
  #allocation1 [shape = 'u32[144,128]{1,0:T(1,128)}', space=vmem, size = 0x12000, scoped, tag = 'internal scratch']
  %s0 = inlined_call_operand.vmem [shape: bf16[48,64], index: 0, kind: input, shape index: {}]
  %s1 = inlined_call_operand.vmem [shape: bf16[64,16], index: 1, kind: input, shape index: {}]
  %s2 = inlined_call_operand.vmem [shape: f32[1,16], index: 2, kind: input, shape index: {}]
  %s3 = inlined_call_operand.vmem [shape: f32[1,16], index: 3, kind: input, shape index: {}]
  %s4 = inlined_call_operand.vmem [shape: f32[1,16], index: 4, kind: input, shape index: {}]
  %s5 = inlined_call_operand.vmem [shape: bf16[48,16], index: 5, kind: output, shape index: {}]
  %s6 = sld [smem:[#allocation0]]
  $region30: #{geddnet_forward.34} parent=0
    _
  %s8 = ssub.s32 1, %s6
  %s9 = scalar_select 0, %s8, %s6
  // Predicated region
  $region2: #{geddnet_forward.34} parent=0 // pred_check
    _
  $region3: #{geddnet_forward.34} parent=0 // pred_check_branch
    %11 = sbr.rel (0) target = $region5
  $region4: #{geddnet_forward.34} parent=0 // pred_region
    _
  $region5: #{geddnet_forward.34} parent=0 // pred_fallthru
    _
  // Predicated region
  $region6: #{geddnet_forward.34} parent=0 // pred_check
    _
  $region7: #{geddnet_forward.34} parent=0 // pred_check_branch
    %13 = sbr.rel (0) target = $region9
  $region8: #{geddnet_forward.34} parent=0 // pred_region
    _
  $region9: #{geddnet_forward.34} parent=0 // pred_fallthru
    _
  // Predicated region
  $region10: #{geddnet_forward.34} parent=0 // pred_check
    _
  $region11: #{geddnet_forward.34} parent=0 // pred_check_branch
    %15 = sbr.rel (0) target = $region13
  $region12: #{geddnet_forward.34} parent=0 // pred_region
    _
  $region13: #{geddnet_forward.34} parent=0 // pred_fallthru
    _
  // Predicated region
  $region14: #{geddnet_forward.34} parent=0 // pred_check
    _
  $region15: #{geddnet_forward.34} parent=0 // pred_check_branch
    %17 = sbr.rel (0) target = $region17
  $region16: #{geddnet_forward.34} parent=0 // pred_region
    _
  $region17: #{geddnet_forward.34} parent=0 // pred_fallthru
    _
  // Predicated region
  $region18: #{geddnet_forward.34} parent=0 // pred_check
    _
  $region19: #{geddnet_forward.34} parent=0 // pred_check_branch
    %19 = sbr.rel (0) target = $region21
  $region20: #{geddnet_forward.34} parent=0 // pred_region
    _
  $region21: #{geddnet_forward.34} parent=0 // pred_fallthru
    _
  %v21 = vld [vmem:[%s0] sm:$0xf]
  %v22 = vld [vmem:[%s0 + $0x4] sm:$0xf]
  %v23 = vld [vmem:[%s0 + $0x8] sm:$0xf]
  %v24 = vld [vmem:[%s0 + $0xc] sm:$0xf]
  %v25 = vld [vmem:[%s0 + $0x10] sm:$0xf]
  %v26 = vld [vmem:[%s0 + $0x14] sm:$0xf]
  %v27 = vld [vmem:[%s1] sm:$0xf]
  %v28 = vld [vmem:[%s1 + $0x4] sm:$0xf]
  %v29 = vld [vmem:[%s1 + $0x8] sm:$0xf]
  %v30 = vld [vmem:[%s1 + $0xc] sm:$0xf]
  %v31 = vld [vmem:[%s1 + $0x10] sm:$0xf]
  %v32 = vld [vmem:[%s1 + $0x14] sm:$0xf]
  %v33 = vld [vmem:[%s1 + $0x18] sm:$0xf]
  %v34 = vld [vmem:[%s1 + $0x1c] sm:$0xf]
  %v35 = vld [vmem:[%s2] sm:$0x1]
  %v37 = vlaneseq
  %v38 = vshrl.u32 %v37, 7
  %v39 = vsub.s32 0, %v38
  %v40 = vrot.slane %v35, %v39
  %v48 = vunpack.c.l.b16 %v21
  %v49 = vunpack.c.l.b16 %v22
  %v50 = vunpack.c.l.b16 %v23
  %v51 = vunpack.c.l.b16 %v24
  %v52 = vunpack.c.l.b16 %v25
  %v53 = vunpack.c.l.b16 %v26
  %v54 = vpack.c.b16 %v49, %v48
  %v55 = vpack.c.b16 %v51, %v50
  %v56 = vpack.c.b16 %v53, %v52
  %v65 = vunpack.c.l.b16 %v27
  %v66 = vunpack.c.l.b16 %v28
  %v67 = vunpack.c.l.b16 %v29
  %v68 = vunpack.c.l.b16 %v30
  %v69 = vunpack.c.l.b16 %v31
  %v70 = vunpack.c.l.b16 %v32
  %v71 = vunpack.c.l.b16 %v33
  %v72 = vunpack.c.l.b16 %v34
  %v73 = vpack.c.b16 %v66, %v65
  %v74 = vpack.c.b16 %v68, %v67
  %v75 = vpack.c.b16 %v70, %v69
  %v76 = vpack.c.b16 %v72, %v71
  %vm81 = vcmask 523264
  %v83 = vsel %vm81, %v54, 0
  %v86 = vsel %vm81, %v55, 0
  %v89 = vsel %vm81, %v56, 0
  %91 = vmatprep.subr.bf16.mxu0 0
  %92 = vmatpush1.bf16.msra.mxu0 %v73
  %93 = vmatprep.subr.bf16.mxu0 0
  %94 = vmatpush1.bf16.msra.mxu0 %v74
  %95 = vmatprep.subr.bf16.mxu0 0
  %96 = vmatpush1.bf16.msra.mxu0 %v75
  %97 = vmatprep.subr.bf16.mxu0 0
  %98 = vmatpush1.bf16.msra.mxu0 %v76
  %99 = vmatprep.subr.bf16.mxu0 0
  %100 = vmatpush1.bf16.msra.mxu0 0
  %101 = vmatprep.subr.bf16.mxu0 0
  %102 = vmatpush1.bf16.msra.mxu0 0
  %103 = vmatprep.subr.bf16.mxu0 0
  %104 = vmatpush1.bf16.msra.mxu0 0
  %105 = vmatprep.subr.bf16.mxu0 0
  %106 = vmatpush1.bf16.msra.mxu0 0
  %107 = vmatprep.subr.bf16.mxu0 0
  %108 = vmatpush1.bf16.msra.mxu0 0
  %109 = vmatprep.subr.bf16.mxu0 0
  %110 = vmatpush1.bf16.msra.mxu0 0
  %111 = vmatprep.subr.bf16.mxu0 0
  %112 = vmatpush1.bf16.msra.mxu0 0
  %113 = vmatprep.subr.bf16.mxu0 0
  %114 = vmatpush1.bf16.msra.mxu0 0
  %115 = vmatprep.subr.bf16.mxu0 0
  %116 = vmatpush1.bf16.msra.mxu0 0
  %117 = vmatprep.subr.bf16.mxu0 0
  %118 = vmatpush1.bf16.msra.mxu0 0
  %119 = vmatprep.subr.bf16.mxu0 0
  %120 = vmatpush1.bf16.msra.mxu0 0
  %121 = vmatprep.subr.bf16.mxu0 0
  %122 = vmatpush1.bf16.msra.mxu0 0
  %123 = vmatprep.mubr.bf16.mxu0 0
  %124 = vmatmul.mubr.bf16.gmra.mrb[0].mxu0 %v83
  %v125 = vpop.f32.mrb[0].mxu0
  %v126 = vadd.f32 %v40, %v125
  %v127 = vpop.f32.mrb[0].mxu0
  %v128 = vpop.f32.mrb[0].mxu0
  %v129 = vadd.f32 %v40, %v128
  %v130 = vpop.f32.mrb[0].mxu0
  %131 = vmatprep.mubr.bf16.mxu0 0
  %132 = vmatmul.mubr.bf16.gmra.mrb[0].mxu0 %v86
  %v133 = vpop.f32.mrb[0].mxu0
  %v134 = vadd.f32 %v40, %v133
  %v135 = vpop.f32.mrb[0].mxu0
  %v136 = vpop.f32.mrb[0].mxu0
  %v137 = vadd.f32 %v40, %v136
  %v138 = vpop.f32.mrb[0].mxu0
  %139 = vmatprep.mubr.bf16.mxu0 0
  %140 = vmatmul.mubr.bf16.gmra.mrb[0].mxu0 %v89
  %v141 = vpop.f32.mrb[0].mxu0
  %v142 = vadd.f32 %v40, %v141
  %v143 = vpop.f32.mrb[0].mxu0
  %v144 = vpop.f32.mrb[0].mxu0
  %v145 = vadd.f32 %v40, %v144
  %v146 = vpop.f32.mrb[0].mxu0
  %147 = vdwg.mxu0
  %v148 = vmax.f32 %v126, 0.0
  %v149 = vmax.f32 %v129, 0.0
  %v150 = vmax.f32 %v134, 0.0
  %v151 = vmax.f32 %v137, 0.0
  %v152 = vmax.f32 %v142, 0.0
  %v153 = vmax.f32 %v145, 0.0
  %v154 = vld [vmem:[%s3] sm:$0x1]
  %v156 = vlaneseq
  %v157 = vshrl.u32 %v156, 7
  %v158 = vsub.s32 0, %v157
  %v159 = vrot.slane %v154, %v158
  %v161 = vmul.f32 %v148, %v159
  %v162 = vmul.f32 %v149, %v159
  %v163 = vmul.f32 %v150, %v159
  %v164 = vmul.f32 %v151, %v159
  %v165 = vmul.f32 %v152, %v159
  %v166 = vmul.f32 %v153, %v159
  %v167 = vld [vmem:[%s4] sm:$0x1]
  %v169 = vlaneseq
  %v170 = vshrl.u32 %v169, 7
  %v171 = vsub.s32 0, %v170
  %v172 = vrot.slane %v167, %v171
  %v174 = vadd.f32 %v161, %v172
  %v175 = vadd.f32 %v162, %v172
  %v176 = vadd.f32 %v163, %v172
  %v177 = vadd.f32 %v164, %v172
  %v178 = vadd.f32 %v165, %v172
  %v179 = vadd.f32 %v166, %v172
  %v180 = vpack.c.bf16 %v175, %v174
  %v181 = vpack.c.bf16 %v177, %v176
  %v182 = vpack.c.bf16 %v179, %v178
  %v186 = vunpack.c.l.b16 %v180
  %v187 = vunpack.c.h.b16 %v180
  %v188 = vunpack.c.l.b16 %v181
  %v189 = vunpack.c.h.b16 %v181
  %v190 = vunpack.c.l.b16 %v182
  %v191 = vunpack.c.h.b16 %v182
  %v192 = vpack.c.b16 %v186, %v186
  %v193 = vpack.c.b16 %v187, %v187
  %v194 = vpack.c.b16 %v188, %v188
  %v195 = vpack.c.b16 %v189, %v189
  %v196 = vpack.c.b16 %v190, %v190
  %v197 = vpack.c.b16 %v191, %v191
  %vm204 = vcmask 125952
  %205 = vst.msk [vmem:[%s5] sm:$0xf] %vm204, %v192
  %206 = vst.msk [vmem:[%s5 + $0x4] sm:$0xf] %vm204, %v193
  %207 = vst.msk [vmem:[%s5 + $0x8] sm:$0xf] %vm204, %v194
  %208 = vst.msk [vmem:[%s5 + $0xc] sm:$0xf] %vm204, %v195
  %209 = vst.msk [vmem:[%s5 + $0x10] sm:$0xf] %vm204, %v196
  %210 = vst.msk [vmem:[%s5 + $0x14] sm:$0xf] %vm204, %v197
  // Predicated region
  $region22: #{geddnet_forward.34} parent=0 // pred_check
    _
  $region23: #{geddnet_forward.34} parent=0 // pred_check_branch
    %212 = sbr.rel (0) target = $region25
  $region24: #{geddnet_forward.34} parent=0 // pred_region
    _
  $region25: #{geddnet_forward.34} parent=0 // pred_fallthru
    _
  // Predicated region
  $region26: #{geddnet_forward.34} parent=0 // pred_check
    _
  $region27: #{geddnet_forward.34} parent=0 // pred_check_branch
    %214 = sbr.rel (0) target = $region29
  $region28: #{geddnet_forward.34} parent=0 // pred_region
    _
  $region29: #{geddnet_forward.34} parent=0 // pred_fallthru
    _

// kernel: geddnet_forward.36
$region0: #{geddnet_forward.36}
  #allocation0 [shape = 'u32[]', space=smem, size = 0x4, offset = 0x4, fixed_abs, tag = 'smem constant byte address 0x4 - core index']
  #allocation1 [shape = 'u32[144,128]{1,0:T(1,128)}', space=vmem, size = 0x12000, scoped, tag = 'internal scratch']
  %s0 = inlined_call_operand.vmem [shape: bf16[2,80], index: 0, kind: input, shape index: {}]
  %s1 = inlined_call_operand.vmem [shape: bf16[80,32], index: 1, kind: input, shape index: {}]
  %s2 = inlined_call_operand.vmem [shape: f32[1,32], index: 2, kind: input, shape index: {}]
  %s3 = inlined_call_operand.vmem [shape: bf16[2,32], index: 3, kind: output, shape index: {}]
  %s4 = sld [smem:[#allocation0]]
  $region22: #{geddnet_forward.36} parent=0
    _
  %s6 = ssub.s32 1, %s4
  %s7 = scalar_select 0, %s6, %s4
  // Predicated region
  $region2: #{geddnet_forward.36} parent=0 // pred_check
    _
  $region3: #{geddnet_forward.36} parent=0 // pred_check_branch
    %9 = sbr.rel (0) target = $region5
  $region4: #{geddnet_forward.36} parent=0 // pred_region
    _
  $region5: #{geddnet_forward.36} parent=0 // pred_fallthru
    _
  // Predicated region
  $region6: #{geddnet_forward.36} parent=0 // pred_check
    _
  $region7: #{geddnet_forward.36} parent=0 // pred_check_branch
    %11 = sbr.rel (0) target = $region9
  $region8: #{geddnet_forward.36} parent=0 // pred_region
    _
  $region9: #{geddnet_forward.36} parent=0 // pred_fallthru
    _
  // Predicated region
  $region10: #{geddnet_forward.36} parent=0 // pred_check
    _
  $region11: #{geddnet_forward.36} parent=0 // pred_check_branch
    %13 = sbr.rel (0) target = $region13
  $region12: #{geddnet_forward.36} parent=0 // pred_region
    _
  $region13: #{geddnet_forward.36} parent=0 // pred_fallthru
    _
  %v15 = vld [vmem:[%s0] sm:$0x1]
  %v16 = vld [vmem:[%s1] sm:$0xf]
  %v17 = vld [vmem:[%s1 + $0x4] sm:$0xf]
  %v18 = vld [vmem:[%s1 + $0x8] sm:$0xf]
  %v19 = vld [vmem:[%s1 + $0xc] sm:$0xf]
  %v20 = vld [vmem:[%s1 + $0x10] sm:$0xf]
  %v21 = vld [vmem:[%s1 + $0x14] sm:$0xf]
  %v22 = vld [vmem:[%s1 + $0x18] sm:$0xf]
  %v23 = vld [vmem:[%s1 + $0x1c] sm:$0xf]
  %v24 = vld [vmem:[%s1 + $0x20] sm:$0xf]
  %v25 = vld [vmem:[%s1 + $0x24] sm:$0xf]
  %v26 = vld [vmem:[%s2] sm:$0x1]
  %v28 = vlaneseq
  %v29 = vshrl.u32 %v28, 7
  %v30 = vsub.s32 0, %v29
  %v31 = vrot.slane %v26, %v30
  %v43 = vunpack.c.l.b16 %v16
  %v44 = vunpack.c.l.b16 %v17
  %v45 = vunpack.c.l.b16 %v18
  %v46 = vunpack.c.l.b16 %v19
  %v47 = vunpack.c.l.b16 %v20
  %v48 = vunpack.c.l.b16 %v21
  %v49 = vunpack.c.l.b16 %v22
  %v50 = vunpack.c.l.b16 %v23
  %v51 = vunpack.c.l.b16 %v24
  %v52 = vunpack.c.l.b16 %v25
  %v53 = vpack.c.b16 %v44, %v43
  %v54 = vpack.c.b16 %v46, %v45
  %v55 = vpack.c.b16 %v48, %v47
  %v56 = vpack.c.b16 %v50, %v49
  %v57 = vpack.c.b16 %v52, %v51
  %vm63 = vcmask 654336
  %v65 = vsel %vm63, %v15, 0
  %67 = vmatprep.subr.bf16.mxu0 0
  %68 = vmatpush1.bf16.msra.mxu0 %v53
  %69 = vmatprep.subr.bf16.mxu0 0
  %70 = vmatpush1.bf16.msra.mxu0 %v54
  %71 = vmatprep.subr.bf16.mxu0 0
  %72 = vmatpush1.bf16.msra.mxu0 %v55
  %73 = vmatprep.subr.bf16.mxu0 0
  %74 = vmatpush1.bf16.msra.mxu0 %v56
  %75 = vmatprep.subr.bf16.mxu0 0
  %76 = vmatpush1.bf16.msra.mxu0 %v57
  %77 = vmatprep.subr.bf16.mxu0 0
  %78 = vmatpush1.bf16.msra.mxu0 0
  %79 = vmatprep.subr.bf16.mxu0 0
  %80 = vmatpush1.bf16.msra.mxu0 0
  %81 = vmatprep.subr.bf16.mxu0 0
  %82 = vmatpush1.bf16.msra.mxu0 0
  %83 = vmatprep.subr.bf16.mxu0 0
  %84 = vmatpush1.bf16.msra.mxu0 0
  %85 = vmatprep.subr.bf16.mxu0 0
  %86 = vmatpush1.bf16.msra.mxu0 0
  %87 = vmatprep.subr.bf16.mxu0 0
  %88 = vmatpush1.bf16.msra.mxu0 0
  %89 = vmatprep.subr.bf16.mxu0 0
  %90 = vmatpush1.bf16.msra.mxu0 0
  %91 = vmatprep.subr.bf16.mxu0 0
  %92 = vmatpush1.bf16.msra.mxu0 0
  %93 = vmatprep.subr.bf16.mxu0 0
  %94 = vmatpush1.bf16.msra.mxu0 0
  %95 = vmatprep.subr.bf16.mxu0 0
  %96 = vmatpush1.bf16.msra.mxu0 0
  %97 = vmatprep.subr.bf16.mxu0 0
  %98 = vmatpush1.bf16.msra.mxu0 0
  %99 = vmatprep.mubr.bf16.mxu0 0
  %100 = vmatmul.mubr.bf16.gmra.mrb[0].mxu0 %v65
  %v101 = vpop.f32.mrb[0].mxu0
  %v102 = vadd.f32 %v31, %v101
  %v103 = vpop.f32.mrb[0].mxu0
  %v104 = vpop.f32.mrb[0].mxu0
  %v105 = vpop.f32.mrb[0].mxu0
  %106 = vdwg.mxu0
  %v107 = vmax.f32 %v102, 0.0
  %v108 = vpack.c.bf16 %v107, %v107
  %vm109 = vcmask 253952
  %110 = vst.msk [vmem:[%s3] sm:$0x1] %vm109, %v108
  // Predicated region
  $region14: #{geddnet_forward.36} parent=0 // pred_check
    _
  $region15: #{geddnet_forward.36} parent=0 // pred_check_branch
    %112 = sbr.rel (0) target = $region17
  $region16: #{geddnet_forward.36} parent=0 // pred_region
    _
  $region17: #{geddnet_forward.36} parent=0 // pred_fallthru
    _
  // Predicated region
  $region18: #{geddnet_forward.36} parent=0 // pred_check
    _
  $region19: #{geddnet_forward.36} parent=0 // pred_check_branch
    %114 = sbr.rel (0) target = $region21
  $region20: #{geddnet_forward.36} parent=0 // pred_region
    _
  $region21: #{geddnet_forward.36} parent=0 // pred_fallthru
    _

// kernel: geddnet_forward.35
$region0: #{geddnet_forward.35}
  #allocation0 [shape = 'u32[]', space=smem, size = 0x4, offset = 0x4, fixed_abs, tag = 'smem constant byte address 0x4 - core index']
  #allocation1 [shape = 'u32[144,128]{1,0:T(1,128)}', space=vmem, size = 0x12000, scoped, tag = 'internal scratch']
  %s0 = inlined_call_operand.vmem [shape: bf16[4,192], index: 0, kind: input, shape index: {}]
  %s1 = inlined_call_operand.vmem [shape: bf16[192,64], index: 1, kind: input, shape index: {}]
  %s2 = inlined_call_operand.vmem [shape: f32[1,64], index: 2, kind: input, shape index: {}]
  %s3 = inlined_call_operand.vmem [shape: bf16[4,64], index: 3, kind: output, shape index: {}]
  %s4 = sld [smem:[#allocation0]]
  $region22: #{geddnet_forward.35} parent=0
    _
  %s6 = ssub.s32 1, %s4
  %s7 = scalar_select 0, %s6, %s4
  // Predicated region
  $region2: #{geddnet_forward.35} parent=0 // pred_check
    _
  $region3: #{geddnet_forward.35} parent=0 // pred_check_branch
    %9 = sbr.rel (0) target = $region5
  $region4: #{geddnet_forward.35} parent=0 // pred_region
    _
  $region5: #{geddnet_forward.35} parent=0 // pred_fallthru
    _
  // Predicated region
  $region6: #{geddnet_forward.35} parent=0 // pred_check
    _
  $region7: #{geddnet_forward.35} parent=0 // pred_check_branch
    %11 = sbr.rel (0) target = $region9
  $region8: #{geddnet_forward.35} parent=0 // pred_region
    _
  $region9: #{geddnet_forward.35} parent=0 // pred_fallthru
    _
  // Predicated region
  $region10: #{geddnet_forward.35} parent=0 // pred_check
    _
  $region11: #{geddnet_forward.35} parent=0 // pred_check_branch
    %13 = sbr.rel (0) target = $region13
  $region12: #{geddnet_forward.35} parent=0 // pred_region
    _
  $region13: #{geddnet_forward.35} parent=0 // pred_fallthru
    _
  %v15 = vld [vmem:[%s0] sm:$0xf]
  %v16 = vld [vmem:[%s1] sm:$0xf]
  %v17 = vld [vmem:[%s1 + $0x4] sm:$0xf]
  %v18 = vld [vmem:[%s1 + $0x8] sm:$0xf]
  %v19 = vld [vmem:[%s1 + $0xc] sm:$0xf]
  %v20 = vld [vmem:[%s1 + $0x10] sm:$0xf]
  %v21 = vld [vmem:[%s1 + $0x14] sm:$0xf]
  %v22 = vld [vmem:[%s1 + $0x18] sm:$0xf]
  %v23 = vld [vmem:[%s1 + $0x1c] sm:$0xf]
  %v24 = vld [vmem:[%s1 + $0x20] sm:$0xf]
  %v25 = vld [vmem:[%s1 + $0x24] sm:$0xf]
  %v26 = vld [vmem:[%s1 + $0x28] sm:$0xf]
  %v27 = vld [vmem:[%s1 + $0x2c] sm:$0xf]
  %v28 = vld [vmem:[%s1 + $0x30] sm:$0xf]
  %v29 = vld [vmem:[%s1 + $0x34] sm:$0xf]
  %v30 = vld [vmem:[%s1 + $0x38] sm:$0xf]
  %v31 = vld [vmem:[%s1 + $0x3c] sm:$0xf]
  %v32 = vld [vmem:[%s1 + $0x40] sm:$0xf]
  %v33 = vld [vmem:[%s1 + $0x44] sm:$0xf]
  %v34 = vld [vmem:[%s1 + $0x48] sm:$0xf]
  %v35 = vld [vmem:[%s1 + $0x4c] sm:$0xf]
  %v36 = vld [vmem:[%s1 + $0x50] sm:$0xf]
  %v37 = vld [vmem:[%s1 + $0x54] sm:$0xf]
  %v38 = vld [vmem:[%s1 + $0x58] sm:$0xf]
  %v39 = vld [vmem:[%s1 + $0x5c] sm:$0xf]
  %v40 = vld [vmem:[%s2] sm:$0x1]
  %v42 = vlaneseq
  %v43 = vshrl.u32 %v42, 7
  %v44 = vsub.s32 0, %v43
  %v45 = vrot.slane %v40, %v44
  %v49 = vunpack.c.l.s4 1983009808
  %v50 = vunpack.c.0.s8 %v49
  %v51 = vlaneseq
  %v52 = vshrl.u32 %v51, 7
  %v53 = vsub.s32 %v50, %v52
  %v54 = vrot.slane %v15, %v53
  %v55 = vcombine.high %v54, %v54
  %v81 = vunpack.c.l.b16 %v16
  %v82 = vunpack.c.l.b16 %v17
  %v83 = vunpack.c.l.b16 %v18
  %v84 = vunpack.c.l.b16 %v19
  %v85 = vunpack.c.l.b16 %v20
  %v86 = vunpack.c.l.b16 %v21
  %v87 = vunpack.c.l.b16 %v22
  %v88 = vunpack.c.l.b16 %v23
  %v89 = vunpack.c.l.b16 %v24
  %v90 = vunpack.c.l.b16 %v25
  %v91 = vunpack.c.l.b16 %v26
  %v92 = vunpack.c.l.b16 %v27
  %v93 = vunpack.c.l.b16 %v28
  %v94 = vunpack.c.l.b16 %v29
  %v95 = vunpack.c.l.b16 %v30
  %v96 = vunpack.c.l.b16 %v31
  %v97 = vunpack.c.l.b16 %v32
  %v98 = vunpack.c.l.b16 %v33
  %v99 = vunpack.c.l.b16 %v34
  %v100 = vunpack.c.l.b16 %v35
  %v101 = vunpack.c.l.b16 %v36
  %v102 = vunpack.c.l.b16 %v37
  %v103 = vunpack.c.l.b16 %v38
  %v104 = vunpack.c.l.b16 %v39
  %v105 = vpack.c.b16 %v82, %v81
  %v106 = vpack.c.b16 %v84, %v83
  %v107 = vpack.c.b16 %v86, %v85
  %v108 = vpack.c.b16 %v88, %v87
  %v109 = vpack.c.b16 %v90, %v89
  %v110 = vpack.c.b16 %v92, %v91
  %v111 = vpack.c.b16 %v94, %v93
  %v112 = vpack.c.b16 %v96, %v95
  %v113 = vpack.c.b16 %v98, %v97
  %v114 = vpack.c.b16 %v100, %v99
  %v115 = vpack.c.b16 %v102, %v101
  %v116 = vpack.c.b16 %v104, %v103
  %vm129 = vcmask 523264
  %v131 = vsel %vm129, %v55, 0
  %133 = vmatprep.subr.bf16.mxu0 0
  %134 = vmatpush1.bf16.msra.mxu0 %v105
  %135 = vmatprep.subr.bf16.mxu0 0
  %136 = vmatpush1.bf16.msra.mxu0 %v106
  %137 = vmatprep.subr.bf16.mxu0 0
  %138 = vmatpush1.bf16.msra.mxu0 %v107
  %139 = vmatprep.subr.bf16.mxu0 0
  %140 = vmatpush1.bf16.msra.mxu0 %v108
  %141 = vmatprep.subr.bf16.mxu0 0
  %142 = vmatpush1.bf16.msra.mxu0 %v109
  %143 = vmatprep.subr.bf16.mxu0 0
  %144 = vmatpush1.bf16.msra.mxu0 %v110
  %145 = vmatprep.subr.bf16.mxu0 0
  %146 = vmatpush1.bf16.msra.mxu0 %v111
  %147 = vmatprep.subr.bf16.mxu0 0
  %148 = vmatpush1.bf16.msra.mxu0 %v112
  %149 = vmatprep.subr.bf16.mxu0 0
  %150 = vmatpush1.bf16.msra.mxu0 %v113
  %151 = vmatprep.subr.bf16.mxu0 0
  %152 = vmatpush1.bf16.msra.mxu0 %v114
  %153 = vmatprep.subr.bf16.mxu0 0
  %154 = vmatpush1.bf16.msra.mxu0 %v115
  %155 = vmatprep.subr.bf16.mxu0 0
  %156 = vmatpush1.bf16.msra.mxu0 %v116
  %157 = vmatprep.subr.bf16.mxu0 0
  %158 = vmatpush1.bf16.msra.mxu0 0
  %159 = vmatprep.subr.bf16.mxu0 0
  %160 = vmatpush1.bf16.msra.mxu0 0
  %161 = vmatprep.subr.bf16.mxu0 0
  %162 = vmatpush1.bf16.msra.mxu0 0
  %163 = vmatprep.subr.bf16.mxu0 0
  %164 = vmatpush1.bf16.msra.mxu0 0
  %165 = vmatprep.mubr.bf16.mxu0 %v131
  %166 = vmatmul.mubr.bf16.gmra.mrb[0].mxu0 %v54
  %v167 = vpop.f32.mrb[0].mxu0
  %v168 = vadd.f32 %v45, %v167
  %v169 = vpop.f32.mrb[0].mxu0
  %v170 = vpop.f32.mrb[0].mxu0
  %v171 = vpop.f32.mrb[0].mxu0
  %172 = vdwg.mxu0
  %v173 = vmax.f32 %v168, 0.0
  %v174 = vpack.c.bf16 %v173, %v173
  %vm175 = vcmask 517120
  %176 = vst.msk [vmem:[%s3] sm:$0x3] %vm175, %v174
  // Predicated region
  $region14: #{geddnet_forward.35} parent=0 // pred_check
    _
  $region15: #{geddnet_forward.35} parent=0 // pred_check_branch
    %178 = sbr.rel (0) target = $region17
  $region16: #{geddnet_forward.35} parent=0 // pred_region
    _
  $region17: #{geddnet_forward.35} parent=0 // pred_fallthru
    _
  // Predicated region
  $region18: #{geddnet_forward.35} parent=0 // pred_check
    _
  $region19: #{geddnet_forward.35} parent=0 // pred_check_branch
    %180 = sbr.rel (0) target = $region21
  $region20: #{geddnet_forward.35} parent=0 // pred_region
    _
  $region21: #{geddnet_forward.35} parent=0 // pred_fallthru
    _

// kernel: geddnet_forward.37
$region0: #{geddnet_forward.37}
  #allocation0 [shape = 'u32[]', space=smem, size = 0x4, offset = 0x4, fixed_abs, tag = 'smem constant byte address 0x4 - core index']
  #allocation1 [shape = 'u32[144,128]{1,0:T(1,128)}', space=vmem, size = 0x12000, scoped, tag = 'internal scratch']
  %s0 = inlined_call_operand.vmem [shape: bf16[2,32], index: 0, kind: input, shape index: {}]
  %s1 = inlined_call_operand.vmem [shape: bf16[32,2], index: 1, kind: input, shape index: {}]
  %s2 = inlined_call_operand.vmem [shape: f32[1,2], index: 2, kind: input, shape index: {}]
  %s3 = inlined_call_operand.vmem [shape: f32[2,2], index: 3, kind: output, shape index: {}]
  %s4 = sld [smem:[#allocation0]]
  $region22: #{geddnet_forward.37} parent=0
    _
  %s6 = ssub.s32 1, %s4
  %s7 = scalar_select 0, %s6, %s4
  // Predicated region
  $region2: #{geddnet_forward.37} parent=0 // pred_check
    _
  $region3: #{geddnet_forward.37} parent=0 // pred_check_branch
    %9 = sbr.rel (0) target = $region5
  $region4: #{geddnet_forward.37} parent=0 // pred_region
    _
  $region5: #{geddnet_forward.37} parent=0 // pred_fallthru
    _
  // Predicated region
  $region6: #{geddnet_forward.37} parent=0 // pred_check
    _
  $region7: #{geddnet_forward.37} parent=0 // pred_check_branch
    %11 = sbr.rel (0) target = $region9
  $region8: #{geddnet_forward.37} parent=0 // pred_region
    _
  $region9: #{geddnet_forward.37} parent=0 // pred_fallthru
    _
  // Predicated region
  $region10: #{geddnet_forward.37} parent=0 // pred_check
    _
  $region11: #{geddnet_forward.37} parent=0 // pred_check_branch
    %13 = sbr.rel (0) target = $region13
  $region12: #{geddnet_forward.37} parent=0 // pred_region
    _
  $region13: #{geddnet_forward.37} parent=0 // pred_fallthru
    _
  %v15 = vld [vmem:[%s0] sm:$0x1]
  %v16 = vld [vmem:[%s1] sm:$0xf]
  %v17 = vld [vmem:[%s1 + $0x4] sm:$0xf]
  %v18 = vld [vmem:[%s1 + $0x8] sm:$0xf]
  %v19 = vld [vmem:[%s1 + $0xc] sm:$0xf]
  %v20 = vld [vmem:[%s2] sm:$0x1]
  %v22 = vlaneseq
  %v23 = vshrl.u32 %v22, 7
  %v24 = vsub.s32 0, %v23
  %v25 = vrot.slane %v20, %v24
  %v31 = vunpack.c.l.b16 %v16
  %v32 = vunpack.c.l.b16 %v17
  %v33 = vunpack.c.l.b16 %v18
  %v34 = vunpack.c.l.b16 %v19
  %v35 = vpack.c.b16 %v32, %v31
  %v36 = vpack.c.b16 %v34, %v33
  %vm39 = vcmask 261120
  %v41 = vsel %vm39, %v15, 0
  %43 = vmatprep.subr.bf16.mxu0 0
  %44 = vmatpush1.bf16.msra.mxu0 %v35
  %45 = vmatprep.subr.bf16.mxu0 0
  %46 = vmatpush1.bf16.msra.mxu0 %v36
  %47 = vmatprep.subr.bf16.mxu0 0
  %48 = vmatpush1.bf16.msra.mxu0 0
  %49 = vmatprep.subr.bf16.mxu0 0
  %50 = vmatpush1.bf16.msra.mxu0 0
  %51 = vmatprep.subr.bf16.mxu0 0
  %52 = vmatpush1.bf16.msra.mxu0 0
  %53 = vmatprep.subr.bf16.mxu0 0
  %54 = vmatpush1.bf16.msra.mxu0 0
  %55 = vmatprep.subr.bf16.mxu0 0
  %56 = vmatpush1.bf16.msra.mxu0 0
  %57 = vmatprep.subr.bf16.mxu0 0
  %58 = vmatpush1.bf16.msra.mxu0 0
  %59 = vmatprep.subr.bf16.mxu0 0
  %60 = vmatpush1.bf16.msra.mxu0 0
  %61 = vmatprep.subr.bf16.mxu0 0
  %62 = vmatpush1.bf16.msra.mxu0 0
  %63 = vmatprep.subr.bf16.mxu0 0
  %64 = vmatpush1.bf16.msra.mxu0 0
  %65 = vmatprep.subr.bf16.mxu0 0
  %66 = vmatpush1.bf16.msra.mxu0 0
  %67 = vmatprep.subr.bf16.mxu0 0
  %68 = vmatpush1.bf16.msra.mxu0 0
  %69 = vmatprep.subr.bf16.mxu0 0
  %70 = vmatpush1.bf16.msra.mxu0 0
  %71 = vmatprep.subr.bf16.mxu0 0
  %72 = vmatpush1.bf16.msra.mxu0 0
  %73 = vmatprep.subr.bf16.mxu0 0
  %74 = vmatpush1.bf16.msra.mxu0 0
  %75 = vmatprep.mubr.bf16.mxu0 0
  %76 = vmatmul.mubr.bf16.gmra.mrb[0].mxu0 %v41
  %v77 = vpop.f32.mrb[0].mxu0
  %v78 = vadd.f32 %v25, %v77
  %v79 = vpop.f32.mrb[0].mxu0
  %v80 = vpop.f32.mrb[0].mxu0
  %v81 = vpop.f32.mrb[0].mxu0
  %82 = vdwg.mxu0
  %v83 = vmax.f32 %v78, 0.0
  %vm84 = vcmask 9216
  %85 = vst.msk [vmem:[%s3] sm:$0x3] %vm84, %v83
  // Predicated region
  $region14: #{geddnet_forward.37} parent=0 // pred_check
    _
  $region15: #{geddnet_forward.37} parent=0 // pred_check_branch
    %87 = sbr.rel (0) target = $region17
  $region16: #{geddnet_forward.37} parent=0 // pred_region
    _
  $region17: #{geddnet_forward.37} parent=0 // pred_fallthru
    _
  // Predicated region
  $region18: #{geddnet_forward.37} parent=0 // pred_check
    _
  $region19: #{geddnet_forward.37} parent=0 // pred_check_branch
    %89 = sbr.rel (0) target = $region21
  $region20: #{geddnet_forward.37} parent=0 // pred_region
    _
  $region21: #{geddnet_forward.37} parent=0 // pred_fallthru
    _

</llo_original>
